<compile_context>
chip_gen: v6e
topology: v6e:2x2x1
jax: 0.10.0
libtpu: 0.0.40
codegen_flags: <defaults>
</compile_context>

<pallas_src>
import functools
import math

import jax
import jax.numpy as jnp
from jax.experimental import pallas as pl
from jax.experimental.pallas import tpu as pltpu

# ---------------- config (small synthetic instantiation) ----------------
IN_CHANS = 3
IMAGE_SIZE = 64
EMBEDDER_CHANNELS = (8, 16, 32)   # three stride-2 stages -> stride-8 feature map
PATCH_SIZE = 4
EMBED_DIM = 32
NUM_HEADS = 4
HEAD_DIM = EMBED_DIM // NUM_HEADS
DEPTH = 2
MLP_RATIO = 4
NUM_CLASSES = 10
LN_EPS = 1e-6

# TODO(synk): pretrained timm checkpoint loading is intentionally replaced by
# deterministic synthetic initialization (no .pt/.pth access).


# ---------------- in-kernel math helpers ----------------
def _layernorm(x, g, b):
    mu = jnp.mean(x, axis=-1, keepdims=True)
    var = jnp.mean(jnp.square(x - mu), axis=-1, keepdims=True)
    return (x - mu) * jax.lax.rsqrt(var + LN_EPS) * g + b


def _gelu(x):  # exact GELU (erf), matches torch.nn.GELU default
    return 0.5 * x * (1.0 + jax.lax.erf(x * 0.7071067811865476))


# ---------------- conv GEMM kernel (bias + ReLU fused, M-tiled) ----------------
def _conv_gemm_kernel(x_ref, w_ref, b_ref, o_ref, *, relu):
    acc = jnp.dot(x_ref[...], w_ref[...], preferred_element_type=jnp.float32)
    acc = acc + b_ref[...]
    if relu:
        acc = jnp.maximum(acc, 0.0)
    o_ref[...] = acc.astype(o_ref.dtype)


def _pick_tile(m):
    for t in (512, 256, 128):
        if m % t == 0:
            return t
    return m


def pallas_conv_gemm(cols, w, b, relu):
    m, k = cols.shape
    n = w.shape[1]
    tm = _pick_tile(m)
    return pl.pallas_call(
        functools.partial(_conv_gemm_kernel, relu=relu),
        out_shape=jax.ShapeDtypeStruct((m, n), jnp.float32),
        grid=(m // tm,),
        in_specs=[
            pl.BlockSpec((tm, k), lambda i: (i, 0)),
            pl.BlockSpec((k, n), lambda i: (0, 0)),
            pl.BlockSpec((1, n), lambda i: (0, 0)),
        ],
        out_specs=pl.BlockSpec((tm, n), lambda i: (i, 0)),
        compiler_params=pltpu.CompilerParams(dimension_semantics=("parallel",)),
    )(cols, w, b.reshape(1, n))


# ---------------- im2col glue (plain JAX) ----------------
# TODO(synk): the overlapping-window patch gather stays as plain-JAX/XLA glue; only the
# GEMM (the hot path) runs in Pallas.  At these shapes the expanded tensor is < 256 KB.
def _im2col(x, ksize, stride, pad):
    # x: (B, H, W, C) NHWC -> (B*Ho*Wo, k*k*C) rows, row-major over (b, ho, wo),
    # column order (ki, kj, c) -- weight matrices use the same layout.
    if pad:
        x = jnp.pad(x, ((0, 0), (pad, pad), (pad, pad), (0, 0)))
    b, h, w, c = x.shape
    ho = (h - ksize) // stride + 1
    wo = (w - ksize) // stride + 1
    cols = []
    for i in range(ksize):
        for j in range(ksize):
            cols.append(x[:, i:i + (ho - 1) * stride + 1:stride,
                          j:j + (wo - 1) * stride + 1:stride, :])
    patches = jnp.stack(cols, axis=3)            # (B, Ho, Wo, k*k, C)
    return patches.reshape(b * ho * wo, ksize * ksize * c), ho, wo


def conv2d_pallas(x, w_mat, bias, ksize, stride, pad, relu):
    b = x.shape[0]
    cols, ho, wo = _im2col(x, ksize, stride, pad)
    out = pallas_conv_gemm(cols, w_mat, bias, relu)
    return out.reshape(b, ho, wo, w_mat.shape[1])


# ---------------- fused ViT kernel: proj + cls/pos + DEPTH blocks + norm + head ------
def _vit_kernel(cols_ref, pw_ref, addpos_ref,
                ln1g_ref, ln1b_ref, qkvw_ref, qkvb_ref, aw_ref, ab_ref,
                ln2g_ref, ln2b_ref, f1w_ref, f1b_ref, f2w_ref, f2b_ref,
                ng_ref, nb_ref, fcw_ref, fcb_ref, o_ref,
                *, num_heads, depth):
    d = pw_ref.shape[1]
    hd = d // num_heads
    g3 = 3 * num_heads
    scale = 1.0 / math.sqrt(hd)

    # HybridEmbed.proj as a GEMM.  The cls row of `cols` is all-zero and `addpos`
    # already folds cls_token / pos_embed / proj bias per token, so no concatenate
    # is needed inside the kernel.
    x = jnp.dot(cols_ref[0], pw_ref[...], preferred_element_type=jnp.float32)
    x = x + addpos_ref[...]                                   # (N, D)
    n = x.shape[0]

    ln1g, ln1b = ln1g_ref[...], ln1b_ref[...]
    qkvw, qkvb = qkvw_ref[...], qkvb_ref[...]
    aw, ab = aw_ref[...], ab_ref[...]
    ln2g, ln2b = ln2g_ref[...], ln2b_ref[...]
    f1w, f1b = f1w_ref[...], f1b_ref[...]
    f2w, f2b = f2w_ref[...], f2b_ref[...]

    for li in range(depth):
        # --- multi-head self-attention: head-batched einsums, no per-head loop ---
        h = _layernorm(x, ln1g[li], ln1b[li])
        hb = jnp.broadcast_to(h[None], (g3, n, d))
        qkv = jnp.einsum('gnd,gdc->gnc', hb, qkvw[li * g3:(li + 1) * g3],
                         preferred_element_type=jnp.float32)
        qkv = qkv + qkvb[li * g3:(li + 1) * g3]
        q = qkv[:num_heads] * scale                           # (H, N, hd), scale folded in
        k = qkv[num_heads:2 * num_heads]
        v = qkv[2 * num_heads:]
        s = jnp.einsum('hqc,hkc->hqk', q, k, preferred_element_type=jnp.float32)
        s = s - jnp.max(s, axis=-1, keepdims=True)
        e = jnp.exp(s)
        p = e * pl.reciprocal(jnp.sum(e, axis=-1, keepdims=True), approx=True)
        o = jnp.einsum('hqk,hkc->hqc', p, v, preferred_element_type=jnp.float32)
        proj = jnp.einsum('hnc,hcd->hnd', o, aw[li * num_heads:(li + 1) * num_heads],
                          preferred_element_type=jnp.float32)
        x = x + jnp.sum(proj, axis=0) + ab[li]

        # --- MLP ---
        h2 = _layernorm(x, ln2g[li], ln2b[li])
        h2 = jnp.dot(h2, f1w[li], preferred_element_type=jnp.float32) + f1b[li]
        h2 = _gelu(h2)
        h2 = jnp.dot(h2, f2w[li], preferred_element_type=jnp.float32) + f2b[li]
        x = x + h2

    # final LayerNorm on the cls token ('token' pooling, reset_classifier(0)) + fc head
    cls_tok = x[0:1, :]
    hc = _layernorm(cls_tok, ng_ref[...], nb_ref[...])
    logits = jnp.dot(hc, fcw_ref[...], preferred_element_type=jnp.float32) + fcb_ref[...]
    o_ref[0] = logits.astype(o_ref.dtype)


def pallas_vit_forward(cols3, kp):
    b, n_tok, kproj = cols3.shape
    args = (cols3, kp["proj_w"], kp["addpos"],
            kp["ln1_g"], kp["ln1_b"], kp["qkv_hw"], kp["qkv_hb"],
            kp["attn_hw"], kp["attn_pb"], kp["ln2_g"], kp["ln2_b"],
            kp["fc1_w"], kp["fc1_b"], kp["fc2_w"], kp["fc2_b"],
            kp["norm_g"], kp["norm_b"], kp["fc_w"], kp["fc_b"])
    in_specs = [pl.BlockSpec((1, n_tok, kproj), lambda i: (i, 0, 0))]
    in_specs += [pl.BlockSpec(a.shape, lambda i, r=a.ndim: (0,) * r) for a in args[1:]]
    out3 = pl.pallas_call(
        functools.partial(_vit_kernel, num_heads=NUM_HEADS, depth=DEPTH),
        out_shape=jax.ShapeDtypeStruct((b, 1, NUM_CLASSES), jnp.float32),
        grid=(b,),
        in_specs=in_specs,
        out_specs=pl.BlockSpec((1, 1, NUM_CLASSES), lambda i: (i, 0, 0)),
        compiler_params=pltpu.CompilerParams(dimension_semantics=("parallel",)),
    )(*args)
    return out3.reshape(b, NUM_CLASSES)


# ---------------- parameter init (deterministic, synthetic) ----------------
def init_params(key):
    keys = iter(jax.random.split(key, 64))

    def nrm(shape, scale=0.02):
        return scale * jax.random.normal(next(keys), shape, dtype=jnp.float32)

    params = {}
    c_prev = IN_CHANS
    params["embedder"] = []
    for cout in EMBEDDER_CHANNELS:
        params["embedder"].append({
            "w": nrm((3 * 3 * c_prev, cout), scale=math.sqrt(2.0 / (9 * c_prev))),
            "b": jnp.zeros((cout,), jnp.float32),
        })
        c_prev = cout

    params["proj_w"] = nrm((PATCH_SIZE * PATCH_SIZE * c_prev, EMBED_DIM),
                           scale=math.sqrt(2.0 / (PATCH_SIZE * PATCH_SIZE * c_prev)))
    params["proj_b"] = jnp.zeros((EMBED_DIM,), jnp.float32)

    feat = IMAGE_SIZE // 8
    num_patches = (feat // PATCH_SIZE) ** 2
    n_tok = num_patches + 1
    params["cls_token"] = nrm((1, 1, EMBED_DIM))
    params["pos_embed"] = nrm((1, n_tok, EMBED_DIM))

    d = EMBED_DIM
    hidden = d * MLP_RATIO
    blocks = []
    for _ in range(DEPTH):
        blocks.append({
            "ln1_g": jnp.ones((1, d), jnp.float32),
            "ln1_b": jnp.zeros((1, d), jnp.float32),
            "qkv_w": nrm((d, 3 * d)),
            "qkv_b": jnp.zeros((1, 3 * d), jnp.float32),
            "proj_w": nrm((d, d)),
            "proj_b": jnp.zeros((1, d), jnp.float32),
            "ln2_g": jnp.ones((1, d), jnp.float32),
            "ln2_b": jnp.zeros((1, d), jnp.float32),
            "fc1_w": nrm((d, hidden)),
            "fc1_b": jnp.zeros((1, hidden), jnp.float32),
            "fc2_w": nrm((hidden, d)),
            "fc2_b": jnp.zeros((1, d), jnp.float32),
        })
    params["blocks"] = blocks
    params["norm_g"] = jnp.ones((1, d), jnp.float32)
    params["norm_b"] = jnp.zeros((1, d), jnp.float32)
    params["fc_w"] = nrm((d, NUM_CLASSES))
    params["fc_b"] = jnp.zeros((1, NUM_CLASSES), jnp.float32)
    return params


def pack_vit_params(params):
    """Stack per-block weights along a leading axis and rearrange qkv / attn-proj
    into per-(q|k|v, head) slabs so the fused kernel batches attention over a
    leading dim (no in-kernel transposes or lane slices)."""
    d, nh, hd = EMBED_DIM, NUM_HEADS, HEAD_DIM

    def stack(name):
        return jnp.stack([blk[name] for blk in params["blocks"]], axis=0)

    qkv_w = stack("qkv_w")                                   # (DEPTH, D, 3D)
    qkv_b = stack("qkv_b")                                   # (DEPTH, 1, 3D)
    qkv_hw = (qkv_w.reshape(DEPTH, d, 3, nh, hd)
              .transpose(0, 2, 3, 1, 4)
              .reshape(DEPTH * 3 * nh, d, hd))               # (DEPTH*3H, D, hd)
    qkv_hb = qkv_b.reshape(DEPTH * 3 * nh, 1, hd)            # (DEPTH*3H, 1, hd)
    attn_hw = stack("proj_w").reshape(DEPTH * nh, hd, d)     # (DEPTH*H, hd, D)

    # cls_token / pos_embed / proj bias folded into one additive term per token:
    # the cls row of the projection GEMM input is all-zero, so x[0] = cls + pos[0].
    pos = params["pos_embed"][0]                             # (N, D)
    addpos = jnp.concatenate(
        [params["cls_token"].reshape(1, d) + pos[0:1],
         pos[1:] + params["proj_b"].reshape(1, d)], axis=0)  # (N, D)

    return {
        "embedder": params["embedder"],
        "proj_w": params["proj_w"],
        "addpos": addpos,
        "ln1_g": stack("ln1_g"), "ln1_b": stack("ln1_b"),
        "qkv_hw": qkv_hw, "qkv_hb": qkv_hb,
        "attn_hw": attn_hw, "attn_pb": stack("proj_b"),
        "ln2_g": stack("ln2_g"), "ln2_b": stack("ln2_b"),
        "fc1_w": stack("fc1_w"), "fc1_b": stack("fc1_b"),
        "fc2_w": stack("fc2_w"), "fc2_b": stack("fc2_b"),
        "norm_g": params["norm_g"], "norm_b": params["norm_b"],
        "fc_w": params["fc_w"], "fc_b": params["fc_b"],
    }


# ---------------- full forward pass ----------------
def hybrid_transformer_forward(images_nchw, kp):
    x = jnp.transpose(images_nchw, (0, 2, 3, 1))             # NCHW -> NHWC (once)
    # CNN embedder (features_only, out_indices=[2]): three stride-2 conv+ReLU stages
    for stage in kp["embedder"]:
        x = conv2d_pallas(x, stage["w"], stage["b"], ksize=3, stride=2, pad=1, relu=True)
    b = x.shape[0]
    # HybridEmbed.proj patches: k == stride -> non-overlapping windows (pure gather)
    cols, hp, wp = _im2col(x, PATCH_SIZE, PATCH_SIZE, 0)     # (B*P, 16*C)
    n_patches = hp * wp
    kproj = cols.shape[1]
    # Prepend an all-zero row per image at the cls position so the fused kernel can
    # build the [cls | patch] token sequence without any in-kernel concatenate.
    cols3 = jnp.concatenate(
        [jnp.zeros((b, 1, kproj), cols.dtype), cols.reshape(b, n_patches, kproj)],
        axis=1)                                              # (B, N, Kp)
    assert cols3.shape[1] == kp["addpos"].shape[0]
    # One fused pallas_call: proj GEMM + cls/pos + DEPTH blocks + final LN + fc head
    return pallas_vit_forward(cols3, kp)


if __name__ == "__main__":
    key = jax.random.PRNGKey(0)
    pkey, xkey = jax.random.split(key)
    params = init_params(pkey)
    kparams = pack_vit_params(params)                        # one-time weight repack
    # PyTorch-style NCHW input
    images = jax.random.normal(xkey, (2, IN_CHANS, IMAGE_SIZE, IMAGE_SIZE),
                               dtype=jnp.float32)
    logits = jax.jit(hybrid_transformer_forward)(images, kparams)
    jax.block_until_ready(logits)
    assert logits.shape == (2, NUM_CLASSES)
    assert bool(jnp.all(jnp.isfinite(logits)))
    print("KERNEL_OK")
</pallas_src>

<mosaic_0001>
module attributes {stable_mosaic.version = 11 : i64} {
  func.func @_conv_gemm_kernel(%arg0: i32, %arg1: memref<512x27xf32, #tpu.memory_space<vmem>>, %arg2: memref<27x8xf32, #tpu.memory_space<vmem>>, %arg3: memref<1x8xf32, #tpu.memory_space<vmem>>, %arg4: memref<512x8xf32, #tpu.memory_space<vmem>>) attributes {dimension_semantics = [#tpu.dimension_semantics<parallel>], iteration_bounds = array<i64: 4>, scalar_prefetch = 0 : i64, scratch_operands = 0 : i64, tpu.core_type = #tpu.core_type<tc>, window_params = [{transform_indices = @transform_0, window_bounds = array<i64: 512, 27>}, {pipeline_mode = #tpu.pipeline_mode<synchronous>, transform_indices = @transform_1, window_bounds = array<i64: 27, 8>}, {pipeline_mode = #tpu.pipeline_mode<synchronous>, transform_indices = @transform_2, window_bounds = array<i64: 1, 8>}, {transform_indices = @transform_3, window_bounds = array<i64: 512, 8>}]} {
    %c0 = arith.constant 0 : index
    %c0_0 = arith.constant 0 : index
    %0 = vector.load %arg1[%c0, %c0_0] : memref<512x27xf32, #tpu.memory_space<vmem>>, vector<512x27xf32>
    %c0_1 = arith.constant 0 : index
    %c0_2 = arith.constant 0 : index
    %1 = vector.load %arg2[%c0_1, %c0_2] : memref<27x8xf32, #tpu.memory_space<vmem>>, vector<27x8xf32>
    %cst = arith.constant dense<0.000000e+00> : vector<512x8xf32>
    %2 = tpu.matmul %0, %1, %cst {dimension_numbers = #tpu.dot_dimension_numbers<[1], [0], [0], [1], [0, 0, 1, 1], [], []>} : vector<512x27xf32>, vector<27x8xf32>, vector<512x8xf32> -> vector<512x8xf32>
    %c0_3 = arith.constant 0 : index
    %c0_4 = arith.constant 0 : index
    %3 = vector.load %arg3[%c0_3, %c0_4] : memref<1x8xf32, #tpu.memory_space<vmem>>, vector<1x8xf32>
    %4 = vector.broadcast %3 : vector<1x8xf32> to vector<512x8xf32>
    %5 = arith.addf %2, %4 : vector<512x8xf32>
    %cst_5 = arith.constant 0.000000e+00 : f32
    %6 = vector.broadcast %cst_5 : f32 to vector<512x8xf32>
    %7 = arith.maximumf %5, %6 : vector<512x8xf32>
    %c0_6 = arith.constant 0 : index
    %c0_7 = arith.constant 0 : index
    %8 = vector.load %arg4[%c0_6, %c0_7] : memref<512x8xf32, #tpu.memory_space<vmem>>, vector<512x8xf32>
    tpu.vector_store %arg4[%c0_6, %c0_7], %7 {strides = array<i32>} : memref<512x8xf32, #tpu.memory_space<vmem>>, vector<512x8xf32>,
    return
  }
  func.func @transform_0(%arg0: i32) -> (i32, i32) {
    %c0_i32 = arith.constant 0 : i32
    %c0_i32_0 = arith.constant 0 : i32
    return %arg0, %c0_i32 : i32, i32
  }
  func.func @transform_1(%arg0: i32) -> (i32, i32) {
    %c0_i32 = arith.constant 0 : i32
    %c0_i32_0 = arith.constant 0 : i32
    %c0_i32_1 = arith.constant 0 : i32
    return %c0_i32, %c0_i32_0 : i32, i32
  }
  func.func @transform_2(%arg0: i32) -> (i32, i32) {
    %c0_i32 = arith.constant 0 : i32
    %c0_i32_0 = arith.constant 0 : i32
    %c0_i32_1 = arith.constant 0 : i32
    return %c0_i32, %c0_i32_0 : i32, i32
  }
  func.func @transform_3(%arg0: i32) -> (i32, i32) {
    %c0_i32 = arith.constant 0 : i32
    %c0_i32_0 = arith.constant 0 : i32
    return %arg0, %c0_i32 : i32, i32
  }
}

module attributes {stable_mosaic.version = 11 : i64} {
  func.func @_conv_gemm_kernel(%arg0: i32, %arg1: memref<512x72xf32, #tpu.memory_space<vmem>>, %arg2: memref<72x16xf32, #tpu.memory_space<vmem>>, %arg3: memref<1x16xf32, #tpu.memory_space<vmem>>, %arg4: memref<512x16xf32, #tpu.memory_space<vmem>>) attributes {dimension_semantics = [#tpu.dimension_semantics<parallel>], iteration_bounds = array<i64: 1>, scalar_prefetch = 0 : i64, scratch_operands = 0 : i64, tpu.core_type = #tpu.core_type<tc>, window_params = [{transform_indices = @transform_0, window_bounds = array<i64: 512, 72>}, {pipeline_mode = #tpu.pipeline_mode<synchronous>, transform_indices = @transform_1, window_bounds = array<i64: 72, 16>}, {pipeline_mode = #tpu.pipeline_mode<synchronous>, transform_indices = @transform_2, window_bounds = array<i64: 1, 16>}, {transform_indices = @transform_3, window_bounds = array<i64: 512, 16>}]} {
    %c0 = arith.constant 0 : index
    %c0_0 = arith.constant 0 : index
    %0 = vector.load %arg1[%c0, %c0_0] : memref<512x72xf32, #tpu.memory_space<vmem>>, vector<512x72xf32>
    %c0_1 = arith.constant 0 : index
    %c0_2 = arith.constant 0 : index
    %1 = vector.load %arg2[%c0_1, %c0_2] : memref<72x16xf32, #tpu.memory_space<vmem>>, vector<72x16xf32>
    %cst = arith.constant dense<0.000000e+00> : vector<512x16xf32>
    %2 = tpu.matmul %0, %1, %cst {dimension_numbers = #tpu.dot_dimension_numbers<[1], [0], [0], [1], [0, 0, 1, 1], [], []>} : vector<512x72xf32>, vector<72x16xf32>, vector<512x16xf32> -> vector<512x16xf32>
    %c0_3 = arith.constant 0 : index
    %c0_4 = arith.constant 0 : index
    %3 = vector.load %arg3[%c0_3, %c0_4] : memref<1x16xf32, #tpu.memory_space<vmem>>, vector<1x16xf32>
    %4 = vector.broadcast %3 : vector<1x16xf32> to vector<512x16xf32>
    %5 = arith.addf %2, %4 : vector<512x16xf32>
    %cst_5 = arith.constant 0.000000e+00 : f32
    %6 = vector.broadcast %cst_5 : f32 to vector<512x16xf32>
    %7 = arith.maximumf %5, %6 : vector<512x16xf32>
    %c0_6 = arith.constant 0 : index
    %c0_7 = arith.constant 0 : index
    %8 = vector.load %arg4[%c0_6, %c0_7] : memref<512x16xf32, #tpu.memory_space<vmem>>, vector<512x16xf32>
    tpu.vector_store %arg4[%c0_6, %c0_7], %7 {strides = array<i32>} : memref<512x16xf32, #tpu.memory_space<vmem>>, vector<512x16xf32>,
    return
  }
  func.func @transform_0(%arg0: i32) -> (i32, i32) {
    %c0_i32 = arith.constant 0 : i32
    %c0_i32_0 = arith.constant 0 : i32
    return %arg0, %c0_i32 : i32, i32
  }
  func.func @transform_1(%arg0: i32) -> (i32, i32) {
    %c0_i32 = arith.constant 0 : i32
    %c0_i32_0 = arith.constant 0 : i32
    %c0_i32_1 = arith.constant 0 : i32
    return %c0_i32, %c0_i32_0 : i32, i32
  }
  func.func @transform_2(%arg0: i32) -> (i32, i32) {
    %c0_i32 = arith.constant 0 : i32
    %c0_i32_0 = arith.constant 0 : i32
    %c0_i32_1 = arith.constant 0 : i32
    return %c0_i32, %c0_i32_0 : i32, i32
  }
  func.func @transform_3(%arg0: i32) -> (i32, i32) {
    %c0_i32 = arith.constant 0 : i32
    %c0_i32_0 = arith.constant 0 : i32
    return %arg0, %c0_i32 : i32, i32
  }
}

module attributes {stable_mosaic.version = 11 : i64} {
  func.func @_conv_gemm_kernel(%arg0: i32, %arg1: memref<128x144xf32, #tpu.memory_space<vmem>>, %arg2: memref<144x32xf32, #tpu.memory_space<vmem>>, %arg3: memref<1x32xf32, #tpu.memory_space<vmem>>, %arg4: memref<128x32xf32, #tpu.memory_space<vmem>>) attributes {dimension_semantics = [#tpu.dimension_semantics<parallel>], iteration_bounds = array<i64: 1>, scalar_prefetch = 0 : i64, scratch_operands = 0 : i64, tpu.core_type = #tpu.core_type<tc>, window_params = [{transform_indices = @transform_0, window_bounds = array<i64: 128, 144>}, {pipeline_mode = #tpu.pipeline_mode<synchronous>, transform_indices = @transform_1, window_bounds = array<i64: 144, 32>}, {pipeline_mode = #tpu.pipeline_mode<synchronous>, transform_indices = @transform_2, window_bounds = array<i64: 1, 32>}, {transform_indices = @transform_3, window_bounds = array<i64: 128, 32>}]} {
    %c0 = arith.constant 0 : index
    %c0_0 = arith.constant 0 : index
    %0 = vector.load %arg1[%c0, %c0_0] : memref<128x144xf32, #tpu.memory_space<vmem>>, vector<128x144xf32>
    %c0_1 = arith.constant 0 : index
    %c0_2 = arith.constant 0 : index
    %1 = vector.load %arg2[%c0_1, %c0_2] : memref<144x32xf32, #tpu.memory_space<vmem>>, vector<144x32xf32>
    %cst = arith.constant dense<0.000000e+00> : vector<128x32xf32>
    %2 = tpu.matmul %0, %1, %cst {dimension_numbers = #tpu.dot_dimension_numbers<[1], [0], [0], [1], [0, 0, 1, 1], [], []>} : vector<128x144xf32>, vector<144x32xf32>, vector<128x32xf32> -> vector<128x32xf32>
    %c0_3 = arith.constant 0 : index
    %c0_4 = arith.constant 0 : index
    %3 = vector.load %arg3[%c0_3, %c0_4] : memref<1x32xf32, #tpu.memory_space<vmem>>, vector<1x32xf32>
    %4 = vector.broadcast %3 : vector<1x32xf32> to vector<128x32xf32>
    %5 = arith.addf %2, %4 : vector<128x32xf32>
    %cst_5 = arith.constant 0.000000e+00 : f32
    %6 = vector.broadcast %cst_5 : f32 to vector<128x32xf32>
    %7 = arith.maximumf %5, %6 : vector<128x32xf32>
    %c0_6 = arith.constant 0 : index
    %c0_7 = arith.constant 0 : index
    %8 = vector.load %arg4[%c0_6, %c0_7] : memref<128x32xf32, #tpu.memory_space<vmem>>, vector<128x32xf32>
    tpu.vector_store %arg4[%c0_6, %c0_7], %7 {strides = array<i32>} : memref<128x32xf32, #tpu.memory_space<vmem>>, vector<128x32xf32>,
    return
  }
  func.func @transform_0(%arg0: i32) -> (i32, i32) {
    %c0_i32 = arith.constant 0 : i32
    %c0_i32_0 = arith.constant 0 : i32
    return %arg0, %c0_i32 : i32, i32
  }
  func.func @transform_1(%arg0: i32) -> (i32, i32) {
    %c0_i32 = arith.constant 0 : i32
    %c0_i32_0 = arith.constant 0 : i32
    %c0_i32_1 = arith.constant 0 : i32
    return %c0_i32, %c0_i32_0 : i32, i32
  }
  func.func @transform_2(%arg0: i32) -> (i32, i32) {
    %c0_i32 = arith.constant 0 : i32
    %c0_i32_0 = arith.constant 0 : i32
    %c0_i32_1 = arith.constant 0 : i32
    return %c0_i32, %c0_i32_0 : i32, i32
  }
  func.func @transform_3(%arg0: i32) -> (i32, i32) {
    %c0_i32 = arith.constant 0 : i32
    %c0_i32_0 = arith.constant 0 : i32
    return %arg0, %c0_i32 : i32, i32
  }
}

module attributes {stable_mosaic.version = 11 : i64} {
  func.func @_vit_kernel(%arg0: i32, %arg1: memref<1x5x512xf32, #tpu.memory_space<vmem>>, %arg2: memref<512x32xf32, #tpu.memory_space<vmem>>, %arg3: memref<5x32xf32, #tpu.memory_space<vmem>>, %arg4: memref<2x1x32xf32, #tpu.memory_space<vmem>>, %arg5: memref<2x1x32xf32, #tpu.memory_space<vmem>>, %arg6: memref<24x32x8xf32, #tpu.memory_space<vmem>>, %arg7: memref<24x1x8xf32, #tpu.memory_space<vmem>>, %arg8: memref<8x8x32xf32, #tpu.memory_space<vmem>>, %arg9: memref<2x1x32xf32, #tpu.memory_space<vmem>>, %arg10: memref<2x1x32xf32, #tpu.memory_space<vmem>>, %arg11: memref<2x1x32xf32, #tpu.memory_space<vmem>>, %arg12: memref<2x32x128xf32, #tpu.memory_space<vmem>>, %arg13: memref<2x1x128xf32, #tpu.memory_space<vmem>>, %arg14: memref<2x128x32xf32, #tpu.memory_space<vmem>>, %arg15: memref<2x1x32xf32, #tpu.memory_space<vmem>>, %arg16: memref<1x32xf32, #tpu.memory_space<vmem>>, %arg17: memref<1x32xf32, #tpu.memory_space<vmem>>, %arg18: memref<32x10xf32, #tpu.memory_space<vmem>>, %arg19: memref<1x10xf32, #tpu.memory_space<vmem>>, %arg20: memref<1x1x10xf32, #tpu.memory_space<vmem>>) attributes {dimension_semantics = [#tpu.dimension_semantics<parallel>], iteration_bounds = array<i64: 2>, scalar_prefetch = 0 : i64, scratch_operands = 0 : i64, tpu.core_type = #tpu.core_type<tc>, window_params = [{transform_indices = @transform_0, window_bounds = array<i64: 1, 5, 512>}, {pipeline_mode = #tpu.pipeline_mode<synchronous>, transform_indices = @transform_1, window_bounds = array<i64: 512, 32>}, {pipeline_mode = #tpu.pipeline_mode<synchronous>, transform_indices = @transform_2, window_bounds = array<i64: 5, 32>}, {pipeline_mode = #tpu.pipeline_mode<synchronous>, transform_indices = @transform_3, window_bounds = array<i64: 2, 1, 32>}, {pipeline_mode = #tpu.pipeline_mode<synchronous>, transform_indices = @transform_4, window_bounds = array<i64: 2, 1, 32>}, {pipeline_mode = #tpu.pipeline_mode<synchronous>, transform_indices = @transform_5, window_bounds = array<i64: 24, 32, 8>}, {pipeline_mode = #tpu.pipeline_mode<synchronous>, transform_indices = @transform_6, window_bounds = array<i64: 24, 1, 8>}, {pipeline_mode = #tpu.pipeline_mode<synchronous>, transform_indices = @transform_7, window_bounds = array<i64: 8, 8, 32>}, {pipeline_mode = #tpu.pipeline_mode<synchronous>, transform_indices = @transform_8, window_bounds = array<i64: 2, 1, 32>}, {pipeline_mode = #tpu.pipeline_mode<synchronous>, transform_indices = @transform_9, window_bounds = array<i64: 2, 1, 32>}, {pipeline_mode = #tpu.pipeline_mode<synchronous>, transform_indices = @transform_10, window_bounds = array<i64: 2, 1, 32>}, {pipeline_mode = #tpu.pipeline_mode<synchronous>, transform_indices = @transform_11, window_bounds = array<i64: 2, 32, 128>}, {pipeline_mode = #tpu.pipeline_mode<synchronous>, transform_indices = @transform_12, window_bounds = array<i64: 2, 1, 128>}, {pipeline_mode = #tpu.pipeline_mode<synchronous>, transform_indices = @transform_13, window_bounds = array<i64: 2, 128, 32>}, {pipeline_mode = #tpu.pipeline_mode<synchronous>, transform_indices = @transform_14, window_bounds = array<i64: 2, 1, 32>}, {pipeline_mode = #tpu.pipeline_mode<synchronous>, transform_indices = @transform_15, window_bounds = array<i64: 1, 32>}, {pipeline_mode = #tpu.pipeline_mode<synchronous>, transform_indices = @transform_16, window_bounds = array<i64: 1, 32>}, {pipeline_mode = #tpu.pipeline_mode<synchronous>, transform_indices = @transform_17, window_bounds = array<i64: 32, 10>}, {pipeline_mode = #tpu.pipeline_mode<synchronous>, transform_indices = @transform_18, window_bounds = array<i64: 1, 10>}, {transform_indices = @transform_19, window_bounds = array<i64: 1, 1, 10>}]} {
    %c0 = arith.constant 0 : index
    %c0_0 = arith.constant 0 : index
    %c0_1 = arith.constant 0 : index
    %0 = vector.load %arg1[%c0, %c0_0, %c0_1] : memref<1x5x512xf32, #tpu.memory_space<vmem>>, vector<1x5x512xf32>
    %1 = vector.shape_cast %0 : vector<1x5x512xf32> to vector<5x512xf32>
    %c0_2 = arith.constant 0 : index
    %c0_3 = arith.constant 0 : index
    %2 = vector.load %arg2[%c0_2, %c0_3] : memref<512x32xf32, #tpu.memory_space<vmem>>, vector<512x32xf32>
    %cst = arith.constant dense<0.000000e+00> : vector<5x32xf32>
    %3 = tpu.matmul %1, %2, %cst {dimension_numbers = #tpu.dot_dimension_numbers<[1], [0], [0], [1], [0, 0, 1, 1], [], []>} : vector<5x512xf32>, vector<512x32xf32>, vector<5x32xf32> -> vector<5x32xf32>
    %c0_4 = arith.constant 0 : index
    %c0_5 = arith.constant 0 : index
    %4 = vector.load %arg3[%c0_4, %c0_5] : memref<5x32xf32, #tpu.memory_space<vmem>>, vector<5x32xf32>
    %5 = arith.addf %3, %4 : vector<5x32xf32>
    %c0_6 = arith.constant 0 : index
    %c0_7 = arith.constant 0 : index
    %c0_8 = arith.constant 0 : index
    %6 = vector.load %arg4[%c0_6, %c0_7, %c0_8] : memref<2x1x32xf32, #tpu.memory_space<vmem>>, vector<2x1x32xf32>
    %c0_9 = arith.constant 0 : index
    %c0_10 = arith.constant 0 : index
    %c0_11 = arith.constant 0 : index
    %7 = vector.load %arg5[%c0_9, %c0_10, %c0_11] : memref<2x1x32xf32, #tpu.memory_space<vmem>>, vector<2x1x32xf32>
    %c0_12 = arith.constant 0 : index
    %c0_13 = arith.constant 0 : index
    %c0_14 = arith.constant 0 : index
    %8 = vector.load %arg6[%c0_12, %c0_13, %c0_14] : memref<24x32x8xf32, #tpu.memory_space<vmem>>, vector<24x32x8xf32>
    %c0_15 = arith.constant 0 : index
    %c0_16 = arith.constant 0 : index
    %c0_17 = arith.constant 0 : index
    %9 = vector.load %arg7[%c0_15, %c0_16, %c0_17] : memref<24x1x8xf32, #tpu.memory_space<vmem>>, vector<24x1x8xf32>
    %c0_18 = arith.constant 0 : index
    %c0_19 = arith.constant 0 : index
    %c0_20 = arith.constant 0 : index
    %10 = vector.load %arg8[%c0_18, %c0_19, %c0_20] : memref<8x8x32xf32, #tpu.memory_space<vmem>>, vector<8x8x32xf32>
    %c0_21 = arith.constant 0 : index
    %c0_22 = arith.constant 0 : index
    %c0_23 = arith.constant 0 : index
    %11 = vector.load %arg9[%c0_21, %c0_22, %c0_23] : memref<2x1x32xf32, #tpu.memory_space<vmem>>, vector<2x1x32xf32>
    %c0_24 = arith.constant 0 : index
    %c0_25 = arith.constant 0 : index
    %c0_26 = arith.constant 0 : index
    %12 = vector.load %arg10[%c0_24, %c0_25, %c0_26] : memref<2x1x32xf32, #tpu.memory_space<vmem>>, vector<2x1x32xf32>
    %c0_27 = arith.constant 0 : index
    %c0_28 = arith.constant 0 : index
    %c0_29 = arith.constant 0 : index
    %13 = vector.load %arg11[%c0_27, %c0_28, %c0_29] : memref<2x1x32xf32, #tpu.memory_space<vmem>>, vector<2x1x32xf32>
    %c0_30 = arith.constant 0 : index
    %c0_31 = arith.constant 0 : index
    %c0_32 = arith.constant 0 : index
    %14 = vector.load %arg12[%c0_30, %c0_31, %c0_32] : memref<2x32x128xf32, #tpu.memory_space<vmem>>, vector<2x32x128xf32>
    %c0_33 = arith.constant 0 : index
    %c0_34 = arith.constant 0 : index
    %c0_35 = arith.constant 0 : index
    %15 = vector.load %arg13[%c0_33, %c0_34, %c0_35] : memref<2x1x128xf32, #tpu.memory_space<vmem>>, vector<2x1x128xf32>
    %c0_36 = arith.constant 0 : index
    %c0_37 = arith.constant 0 : index
    %c0_38 = arith.constant 0 : index
    %16 = vector.load %arg14[%c0_36, %c0_37, %c0_38] : memref<2x128x32xf32, #tpu.memory_space<vmem>>, vector<2x128x32xf32>
    %c0_39 = arith.constant 0 : index
    %c0_40 = arith.constant 0 : index
    %c0_41 = arith.constant 0 : index
    %17 = vector.load %arg15[%c0_39, %c0_40, %c0_41] : memref<2x1x32xf32, #tpu.memory_space<vmem>>, vector<2x1x32xf32>
    %18 = vector.extract_strided_slice %6 {offsets = [0, 0, 0], sizes = [1, 1, 32], strides = [1, 1, 1]} : vector<2x1x32xf32> to vector<1x1x32xf32>
    %19 = vector.shape_cast %18 : vector<1x1x32xf32> to vector<1x32xf32>
    %20 = vector.extract_strided_slice %7 {offsets = [0, 0, 0], sizes = [1, 1, 32], strides = [1, 1, 1]} : vector<2x1x32xf32> to vector<1x1x32xf32>
    %21 = vector.shape_cast %20 : vector<1x1x32xf32> to vector<1x32xf32>
    %cst_42 = arith.constant dense<0.000000e+00> : vector<5xf32>
    %22 = vector.multi_reduction <add>, %5, %cst_42 [1] : vector<5x32xf32> to vector<5xf32>
    %23 = vector.shape_cast %22 : vector<5xf32> to vector<5x1xf32>
    %cst_43 = arith.constant 3.200000e+01 : f32
    %24 = vector.broadcast %cst_43 : f32 to vector<5x1xf32>
    %25 = arith.divf %23, %24 : vector<5x1xf32>
    %26 = vector.broadcast %25 : vector<5x1xf32> to vector<5x32xf32>
    %27 = arith.subf %5, %26 : vector<5x32xf32>
    %28 = arith.mulf %27, %27 : vector<5x32xf32>
    %cst_44 = arith.constant dense<0.000000e+00> : vector<5xf32>
    %29 = vector.multi_reduction <add>, %28, %cst_44 [1] : vector<5x32xf32> to vector<5xf32>
    %30 = vector.shape_cast %29 : vector<5xf32> to vector<5x1xf32>
    %cst_45 = arith.constant 3.200000e+01 : f32
    %31 = vector.broadcast %cst_45 : f32 to vector<5x1xf32>
    %32 = arith.divf %30, %31 : vector<5x1xf32>
    %33 = vector.broadcast %25 : vector<5x1xf32> to vector<5x32xf32>
    %34 = arith.subf %5, %33 : vector<5x32xf32>
    %cst_46 = arith.constant 9.99999997E-7 : f32
    %35 = vector.broadcast %cst_46 : f32 to vector<5x1xf32>
    %36 = arith.addf %32, %35 : vector<5x1xf32>
    %37 = math.rsqrt %36 : vector<5x1xf32>
    %38 = vector.broadcast %37 : vector<5x1xf32> to vector<5x32xf32>
    %39 = arith.mulf %34, %38 : vector<5x32xf32>
    %40 = vector.broadcast %19 : vector<1x32xf32> to vector<5x32xf32>
    %41 = arith.mulf %39, %40 : vector<5x32xf32>
    %42 = vector.broadcast %21 : vector<1x32xf32> to vector<5x32xf32>
    %43 = arith.addf %41, %42 : vector<5x32xf32>
    %44 = vector.shape_cast %43 : vector<5x32xf32> to vector<1x5x32xf32>
    %45 = vector.shape_cast %44 : vector<1x5x32xf32> to vector<1x5x32xf32>
    %46 = vector.broadcast %45 : vector<1x5x32xf32> to vector<12x5x32xf32>
    %47 = vector.extract_strided_slice %8 {offsets = [0, 0, 0], sizes = [12, 32, 8], strides = [1, 1, 1]} : vector<24x32x8xf32> to vector<12x32x8xf32>
    "tpu.trace_start"() <{level = 10 : i32, message = "gnd,gdc->gnc"}> : () -> ()
    %cst_47 = arith.constant dense<0.000000e+00> : vector<12x5x8xf32>
    %48 = tpu.matmul %46, %47, %cst_47 {dimension_numbers = #tpu.dot_dimension_numbers<[2], [1], [1], [2], [0, 0, 0, 1, 1, 2], [0], [0]>} : vector<12x5x32xf32>, vector<12x32x8xf32>, vector<12x5x8xf32> -> vector<12x5x8xf32>
    "tpu.trace_stop"() : () -> ()
    %49 = vector.extract_strided_slice %9 {offsets = [0, 0, 0], sizes = [12, 1, 8], strides = [1, 1, 1]} : vector<24x1x8xf32> to vector<12x1x8xf32>
    %50 = vector.broadcast %49 : vector<12x1x8xf32> to vector<12x5x8xf32>
    %51 = arith.addf %48, %50 : vector<12x5x8xf32>
    %52 = vector.extract_strided_slice %51 {offsets = [0, 0, 0], sizes = [4, 5, 8], strides = [1, 1, 1]} : vector<12x5x8xf32> to vector<4x5x8xf32>
    %cst_48 = arith.constant 0.353553385 : f32
    %53 = vector.broadcast %cst_48 : f32 to vector<4x5x8xf32>
    %54 = arith.mulf %52, %53 : vector<4x5x8xf32>
    %55 = vector.extract_strided_slice %51 {offsets = [4, 0, 0], sizes = [4, 5, 8], strides = [1, 1, 1]} : vector<12x5x8xf32> to vector<4x5x8xf32>
    %56 = vector.extract_strided_slice %51 {offsets = [8, 0, 0], sizes = [4, 5, 8], strides = [1, 1, 1]} : vector<12x5x8xf32> to vector<4x5x8xf32>
    "tpu.trace_start"() <{level = 10 : i32, message = "hqc,hkc->hqk"}> : () -> ()
    %cst_49 = arith.constant dense<0.000000e+00> : vector<4x5x5xf32>
    %57 = tpu.matmul %54, %55, %cst_49 {dimension_numbers = #tpu.dot_dimension_numbers<[2], [2], [1], [1], [0, 0, 0, 1, 1, 1], [0], [0]>} : vector<4x5x8xf32>, vector<4x5x8xf32>, vector<4x5x5xf32> -> vector<4x5x5xf32>
    "tpu.trace_stop"() : () -> ()
    %cst_50 = arith.constant dense<0xFF800000> : vector<4x5xf32>
    %58 = vector.multi_reduction <maximumf>, %57, %cst_50 [2] : vector<4x5x5xf32> to vector<4x5xf32>
    %59 = vector.shape_cast %58 : vector<4x5xf32> to vector<4x5x1xf32>
    %60 = vector.broadcast %59 : vector<4x5x1xf32> to vector<4x5x5xf32>
    %61 = arith.subf %57, %60 : vector<4x5x5xf32>
    %62 = math.exp %61 : vector<4x5x5xf32>
    %cst_51 = arith.constant dense<0.000000e+00> : vector<4x5xf32>
    %63 = vector.multi_reduction <add>, %62, %cst_51 [2] : vector<4x5x5xf32> to vector<4x5xf32>
    %64 = vector.shape_cast %63 : vector<4x5xf32> to vector<4x5x1xf32>
    %65 = tpu.reciprocal %64 {approx = true} : vector<4x5x1xf32> -> vector<4x5x1xf32>
    %66 = vector.broadcast %65 : vector<4x5x1xf32> to vector<4x5x5xf32>
    %67 = arith.mulf %62, %66 : vector<4x5x5xf32>
    "tpu.trace_start"() <{level = 10 : i32, message = "hqk,hkc->hqc"}> : () -> ()
    %cst_52 = arith.constant dense<0.000000e+00> : vector<4x5x8xf32>
    %68 = tpu.matmul %67, %56, %cst_52 {dimension_numbers = #tpu.dot_dimension_numbers<[2], [1], [1], [2], [0, 0, 0, 1, 1, 2], [0], [0]>} : vector<4x5x5xf32>, vector<4x5x8xf32>, vector<4x5x8xf32> -> vector<4x5x8xf32>
    "tpu.trace_stop"() : () -> ()
    %69 = vector.extract_strided_slice %10 {offsets = [0, 0, 0], sizes = [4, 8, 32], strides = [1, 1, 1]} : vector<8x8x32xf32> to vector<4x8x32xf32>
    "tpu.trace_start"() <{level = 10 : i32, message = "hnc,hcd->hnd"}> : () -> ()
    %cst_53 = arith.constant dense<0.000000e+00> : vector<4x5x32xf32>
    %70 = tpu.matmul %68, %69, %cst_53 {dimension_numbers = #tpu.dot_dimension_numbers<[2], [1], [1], [2], [0, 0, 0, 1, 1, 2], [0], [0]>} : vector<4x5x8xf32>, vector<4x8x32xf32>, vector<4x5x32xf32> -> vector<4x5x32xf32>
    "tpu.trace_stop"() : () -> ()
    %cst_54 = arith.constant dense<0.000000e+00> : vector<5x32xf32>
    %71 = vector.multi_reduction <add>, %70, %cst_54 [0] : vector<4x5x32xf32> to vector<5x32xf32>
    %72 = arith.addf %5, %71 : vector<5x32xf32>
    %73 = vector.extract_strided_slice %11 {offsets = [0, 0, 0], sizes = [1, 1, 32], strides = [1, 1, 1]} : vector<2x1x32xf32> to vector<1x1x32xf32>
    %74 = vector.shape_cast %73 : vector<1x1x32xf32> to vector<1x32xf32>
    %75 = vector.broadcast %74 : vector<1x32xf32> to vector<5x32xf32>
    %76 = arith.addf %72, %75 : vector<5x32xf32>
    %77 = vector.extract_strided_slice %12 {offsets = [0, 0, 0], sizes = [1, 1, 32], strides = [1, 1, 1]} : vector<2x1x32xf32> to vector<1x1x32xf32>
    %78 = vector.shape_cast %77 : vector<1x1x32xf32> to vector<1x32xf32>
    %79 = vector.extract_strided_slice %13 {offsets = [0, 0, 0], sizes = [1, 1, 32], strides = [1, 1, 1]} : vector<2x1x32xf32> to vector<1x1x32xf32>
    %80 = vector.shape_cast %79 : vector<1x1x32xf32> to vector<1x32xf32>
    %cst_55 = arith.constant dense<0.000000e+00> : vector<5xf32>
    %81 = vector.multi_reduction <add>, %76, %cst_55 [1] : vector<5x32xf32> to vector<5xf32>
    %82 = vector.shape_cast %81 : vector<5xf32> to vector<5x1xf32>
    %cst_56 = arith.constant 3.200000e+01 : f32
    %83 = vector.broadcast %cst_56 : f32 to vector<5x1xf32>
    %84 = arith.divf %82, %83 : vector<5x1xf32>
    %85 = vector.broadcast %84 : vector<5x1xf32> to vector<5x32xf32>
    %86 = arith.subf %76, %85 : vector<5x32xf32>
    %87 = arith.mulf %86, %86 : vector<5x32xf32>
    %cst_57 = arith.constant dense<0.000000e+00> : vector<5xf32>
    %88 = vector.multi_reduction <add>, %87, %cst_57 [1] : vector<5x32xf32> to vector<5xf32>
    %89 = vector.shape_cast %88 : vector<5xf32> to vector<5x1xf32>
    %cst_58 = arith.constant 3.200000e+01 : f32
    %90 = vector.broadcast %cst_58 : f32 to vector<5x1xf32>
    %91 = arith.divf %89, %90 : vector<5x1xf32>
    %92 = vector.broadcast %84 : vector<5x1xf32> to vector<5x32xf32>
    %93 = arith.subf %76, %92 : vector<5x32xf32>
    %cst_59 = arith.constant 9.99999997E-7 : f32
    %94 = vector.broadcast %cst_59 : f32 to vector<5x1xf32>
    %95 = arith.addf %91, %94 : vector<5x1xf32>
    %96 = math.rsqrt %95 : vector<5x1xf32>
    %97 = vector.broadcast %96 : vector<5x1xf32> to vector<5x32xf32>
    %98 = arith.mulf %93, %97 : vector<5x32xf32>
    %99 = vector.broadcast %78 : vector<1x32xf32> to vector<5x32xf32>
    %100 = arith.mulf %98, %99 : vector<5x32xf32>
    %101 = vector.broadcast %80 : vector<1x32xf32> to vector<5x32xf32>
    %102 = arith.addf %100, %101 : vector<5x32xf32>
    %103 = vector.extract_strided_slice %14 {offsets = [0, 0, 0], sizes = [1, 32, 128], strides = [1, 1, 1]} : vector<2x32x128xf32> to vector<1x32x128xf32>
    %104 = vector.shape_cast %103 : vector<1x32x128xf32> to vector<32x128xf32>
    %cst_60 = arith.constant dense<0.000000e+00> : vector<5x128xf32>
    %105 = tpu.matmul %102, %104, %cst_60 {dimension_numbers = #tpu.dot_dimension_numbers<[1], [0], [0], [1], [0, 0, 1, 1], [], []>} : vector<5x32xf32>, vector<32x128xf32>, vector<5x128xf32> -> vector<5x128xf32>
    %106 = vector.extract_strided_slice %15 {offsets = [0, 0, 0], sizes = [1, 1, 128], strides = [1, 1, 1]} : vector<2x1x128xf32> to vector<1x1x128xf32>
    %107 = vector.shape_cast %106 : vector<1x1x128xf32> to vector<1x128xf32>
    %108 = vector.broadcast %107 : vector<1x128xf32> to vector<5x128xf32>
    %109 = arith.addf %105, %108 : vector<5x128xf32>
    %cst_61 = arith.constant 5.000000e-01 : f32
    %110 = vector.broadcast %cst_61 : f32 to vector<5x128xf32>
    %111 = arith.mulf %110, %109 : vector<5x128xf32>
    %cst_62 = arith.constant 0.707106769 : f32
    %112 = vector.broadcast %cst_62 : f32 to vector<5x128xf32>
    %113 = arith.mulf %109, %112 : vector<5x128xf32>
    %114 = math.erf %113 : vector<5x128xf32>
    %cst_63 = arith.constant 1.000000e+00 : f32
    %115 = vector.broadcast %cst_63 : f32 to vector<5x128xf32>
    %116 = arith.addf %115, %114 : vector<5x128xf32>
    %117 = arith.mulf %111, %116 : vector<5x128xf32>
    %118 = vector.extract_strided_slice %16 {offsets = [0, 0, 0], sizes = [1, 128, 32], strides = [1, 1, 1]} : vector<2x128x32xf32> to vector<1x128x32xf32>
    %119 = vector.shape_cast %118 : vector<1x128x32xf32> to vector<128x32xf32>
    %cst_64 = arith.constant dense<0.000000e+00> : vector<5x32xf32>
    %120 = tpu.matmul %117, %119, %cst_64 {dimension_numbers = #tpu.dot_dimension_numbers<[1], [0], [0], [1], [0, 0, 1, 1], [], []>} : vector<5x128xf32>, vector<128x32xf32>, vector<5x32xf32> -> vector<5x32xf32>
    %121 = vector.extract_strided_slice %17 {offsets = [0, 0, 0], sizes = [1, 1, 32], strides = [1, 1, 1]} : vector<2x1x32xf32> to vector<1x1x32xf32>
    %122 = vector.shape_cast %121 : vector<1x1x32xf32> to vector<1x32xf32>
    %123 = vector.broadcast %122 : vector<1x32xf32> to vector<5x32xf32>
    %124 = arith.addf %120, %123 : vector<5x32xf32>
    %125 = arith.addf %76, %124 : vector<5x32xf32>
    %126 = vector.extract_strided_slice %6 {offsets = [1, 0, 0], sizes = [1, 1, 32], strides = [1, 1, 1]} : vector<2x1x32xf32> to vector<1x1x32xf32>
    %127 = vector.shape_cast %126 : vector<1x1x32xf32> to vector<1x32xf32>
    %128 = vector.extract_strided_slice %7 {offsets = [1, 0, 0], sizes = [1, 1, 32], strides = [1, 1, 1]} : vector<2x1x32xf32> to vector<1x1x32xf32>
    %129 = vector.shape_cast %128 : vector<1x1x32xf32> to vector<1x32xf32>
    %cst_65 = arith.constant dense<0.000000e+00> : vector<5xf32>
    %130 = vector.multi_reduction <add>, %125, %cst_65 [1] : vector<5x32xf32> to vector<5xf32>
    %131 = vector.shape_cast %130 : vector<5xf32> to vector<5x1xf32>
    %cst_66 = arith.constant 3.200000e+01 : f32
    %132 = vector.broadcast %cst_66 : f32 to vector<5x1xf32>
    %133 = arith.divf %131, %132 : vector<5x1xf32>
    %134 = vector.broadcast %133 : vector<5x1xf32> to vector<5x32xf32>
    %135 = arith.subf %125, %134 : vector<5x32xf32>
    %136 = arith.mulf %135, %135 : vector<5x32xf32>
    %cst_67 = arith.constant dense<0.000000e+00> : vector<5xf32>
    %137 = vector.multi_reduction <add>, %136, %cst_67 [1] : vector<5x32xf32> to vector<5xf32>
    %138 = vector.shape_cast %137 : vector<5xf32> to vector<5x1xf32>
    %cst_68 = arith.constant 3.200000e+01 : f32
    %139 = vector.broadcast %cst_68 : f32 to vector<5x1xf32>
    %140 = arith.divf %138, %139 : vector<5x1xf32>
    %141 = vector.broadcast %133 : vector<5x1xf32> to vector<5x32xf32>
    %142 = arith.subf %125, %141 : vector<5x32xf32>
    %cst_69 = arith.constant 9.99999997E-7 : f32
    %143 = vector.broadcast %cst_69 : f32 to vector<5x1xf32>
    %144 = arith.addf %140, %143 : vector<5x1xf32>
    %145 = math.rsqrt %144 : vector<5x1xf32>
    %146 = vector.broadcast %145 : vector<5x1xf32> to vector<5x32xf32>
    %147 = arith.mulf %142, %146 : vector<5x32xf32>
    %148 = vector.broadcast %127 : vector<1x32xf32> to vector<5x32xf32>
    %149 = arith.mulf %147, %148 : vector<5x32xf32>
    %150 = vector.broadcast %129 : vector<1x32xf32> to vector<5x32xf32>
    %151 = arith.addf %149, %150 : vector<5x32xf32>
    %152 = vector.shape_cast %151 : vector<5x32xf32> to vector<1x5x32xf32>
    %153 = vector.shape_cast %152 : vector<1x5x32xf32> to vector<1x5x32xf32>
    %154 = vector.broadcast %153 : vector<1x5x32xf32> to vector<12x5x32xf32>
    %155 = vector.extract_strided_slice %8 {offsets = [12, 0, 0], sizes = [12, 32, 8], strides = [1, 1, 1]} : vector<24x32x8xf32> to vector<12x32x8xf32>
    "tpu.trace_start"() <{level = 10 : i32, message = "gnd,gdc->gnc"}> : () -> ()
    %cst_70 = arith.constant dense<0.000000e+00> : vector<12x5x8xf32>
    %156 = tpu.matmul %154, %155, %cst_70 {dimension_numbers = #tpu.dot_dimension_numbers<[2], [1], [1], [2], [0, 0, 0, 1, 1, 2], [0], [0]>} : vector<12x5x32xf32>, vector<12x32x8xf32>, vector<12x5x8xf32> -> vector<12x5x8xf32>
    "tpu.trace_stop"() : () -> ()
    %157 = vector.extract_strided_slice %9 {offsets = [12, 0, 0], sizes = [12, 1, 8], strides = [1, 1, 1]} : vector<24x1x8xf32> to vector<12x1x8xf32>
    %158 = vector.broadcast %157 : vector<12x1x8xf32> to vector<12x5x8xf32>
    %159 = arith.addf %156, %158 : vector<12x5x8xf32>
    %160 = vector.extract_strided_slice %159 {offsets = [0, 0, 0], sizes = [4, 5, 8], strides = [1, 1, 1]} : vector<12x5x8xf32> to vector<4x5x8xf32>
    %cst_71 = arith.constant 0.353553385 : f32
    %161 = vector.broadcast %cst_71 : f32 to vector<4x5x8xf32>
    %162 = arith.mulf %160, %161 : vector<4x5x8xf32>
    %163 = vector.extract_strided_slice %159 {offsets = [4, 0, 0], sizes = [4, 5, 8], strides = [1, 1, 1]} : vector<12x5x8xf32> to vector<4x5x8xf32>
    %164 = vector.extract_strided_slice %159 {offsets = [8, 0, 0], sizes = [4, 5, 8], strides = [1, 1, 1]} : vector<12x5x8xf32> to vector<4x5x8xf32>
    "tpu.trace_start"() <{level = 10 : i32, message = "hqc,hkc->hqk"}> : () -> ()
    %cst_72 = arith.constant dense<0.000000e+00> : vector<4x5x5xf32>
    %165 = tpu.matmul %162, %163, %cst_72 {dimension_numbers = #tpu.dot_dimension_numbers<[2], [2], [1], [1], [0, 0, 0, 1, 1, 1], [0], [0]>} : vector<4x5x8xf32>, vector<4x5x8xf32>, vector<4x5x5xf32> -> vector<4x5x5xf32>
    "tpu.trace_stop"() : () -> ()
    %cst_73 = arith.constant dense<0xFF800000> : vector<4x5xf32>
    %166 = vector.multi_reduction <maximumf>, %165, %cst_73 [2] : vector<4x5x5xf32> to vector<4x5xf32>
    %167 = vector.shape_cast %166 : vector<4x5xf32> to vector<4x5x1xf32>
    %168 = vector.broadcast %167 : vector<4x5x1xf32> to vector<4x5x5xf32>
    %169 = arith.subf %165, %168 : vector<4x5x5xf32>
    %170 = math.exp %169 : vector<4x5x5xf32>
    %cst_74 = arith.constant dense<0.000000e+00> : vector<4x5xf32>
    %171 = vector.multi_reduction <add>, %170, %cst_74 [2] : vector<4x5x5xf32> to vector<4x5xf32>
    %172 = vector.shape_cast %171 : vector<4x5xf32> to vector<4x5x1xf32>
    %173 = tpu.reciprocal %172 {approx = true} : vector<4x5x1xf32> -> vector<4x5x1xf32>
    %174 = vector.broadcast %173 : vector<4x5x1xf32> to vector<4x5x5xf32>
    %175 = arith.mulf %170, %174 : vector<4x5x5xf32>
    "tpu.trace_start"() <{level = 10 : i32, message = "hqk,hkc->hqc"}> : () -> ()
    %cst_75 = arith.constant dense<0.000000e+00> : vector<4x5x8xf32>
    %176 = tpu.matmul %175, %164, %cst_75 {dimension_numbers = #tpu.dot_dimension_numbers<[2], [1], [1], [2], [0, 0, 0, 1, 1, 2], [0], [0]>} : vector<4x5x5xf32>, vector<4x5x8xf32>, vector<4x5x8xf32> -> vector<4x5x8xf32>
    "tpu.trace_stop"() : () -> ()
    %177 = vector.extract_strided_slice %10 {offsets = [4, 0, 0], sizes = [4, 8, 32], strides = [1, 1, 1]} : vector<8x8x32xf32> to vector<4x8x32xf32>
    "tpu.trace_start"() <{level = 10 : i32, message = "hnc,hcd->hnd"}> : () -> ()
    %cst_76 = arith.constant dense<0.000000e+00> : vector<4x5x32xf32>
    %178 = tpu.matmul %176, %177, %cst_76 {dimension_numbers = #tpu.dot_dimension_numbers<[2], [1], [1], [2], [0, 0, 0, 1, 1, 2], [0], [0]>} : vector<4x5x8xf32>, vector<4x8x32xf32>, vector<4x5x32xf32> -> vector<4x5x32xf32>
    "tpu.trace_stop"() : () -> ()
    %cst_77 = arith.constant dense<0.000000e+00> : vector<5x32xf32>
    %179 = vector.multi_reduction <add>, %178, %cst_77 [0] : vector<4x5x32xf32> to vector<5x32xf32>
    %180 = arith.addf %125, %179 : vector<5x32xf32>
    %181 = vector.extract_strided_slice %11 {offsets = [1, 0, 0], sizes = [1, 1, 32], strides = [1, 1, 1]} : vector<2x1x32xf32> to vector<1x1x32xf32>
    %182 = vector.shape_cast %181 : vector<1x1x32xf32> to vector<1x32xf32>
    %183 = vector.broadcast %182 : vector<1x32xf32> to vector<5x32xf32>
    %184 = arith.addf %180, %183 : vector<5x32xf32>
    %185 = vector.extract_strided_slice %12 {offsets = [1, 0, 0], sizes = [1, 1, 32], strides = [1, 1, 1]} : vector<2x1x32xf32> to vector<1x1x32xf32>
    %186 = vector.shape_cast %185 : vector<1x1x32xf32> to vector<1x32xf32>
    %187 = vector.extract_strided_slice %13 {offsets = [1, 0, 0], sizes = [1, 1, 32], strides = [1, 1, 1]} : vector<2x1x32xf32> to vector<1x1x32xf32>
    %188 = vector.shape_cast %187 : vector<1x1x32xf32> to vector<1x32xf32>
    %cst_78 = arith.constant dense<0.000000e+00> : vector<5xf32>
    %189 = vector.multi_reduction <add>, %184, %cst_78 [1] : vector<5x32xf32> to vector<5xf32>
    %190 = vector.shape_cast %189 : vector<5xf32> to vector<5x1xf32>
    %cst_79 = arith.constant 3.200000e+01 : f32
    %191 = vector.broadcast %cst_79 : f32 to vector<5x1xf32>
    %192 = arith.divf %190, %191 : vector<5x1xf32>
    %193 = vector.broadcast %192 : vector<5x1xf32> to vector<5x32xf32>
    %194 = arith.subf %184, %193 : vector<5x32xf32>
    %195 = arith.mulf %194, %194 : vector<5x32xf32>
    %cst_80 = arith.constant dense<0.000000e+00> : vector<5xf32>
    %196 = vector.multi_reduction <add>, %195, %cst_80 [1] : vector<5x32xf32> to vector<5xf32>
    %197 = vector.shape_cast %196 : vector<5xf32> to vector<5x1xf32>
    %cst_81 = arith.constant 3.200000e+01 : f32
    %198 = vector.broadcast %cst_81 : f32 to vector<5x1xf32>
    %199 = arith.divf %197, %198 : vector<5x1xf32>
    %200 = vector.broadcast %192 : vector<5x1xf32> to vector<5x32xf32>
    %201 = arith.subf %184, %200 : vector<5x32xf32>
    %cst_82 = arith.constant 9.99999997E-7 : f32
    %202 = vector.broadcast %cst_82 : f32 to vector<5x1xf32>
    %203 = arith.addf %199, %202 : vector<5x1xf32>
    %204 = math.rsqrt %203 : vector<5x1xf32>
    %205 = vector.broadcast %204 : vector<5x1xf32> to vector<5x32xf32>
    %206 = arith.mulf %201, %205 : vector<5x32xf32>
    %207 = vector.broadcast %186 : vector<1x32xf32> to vector<5x32xf32>
    %208 = arith.mulf %206, %207 : vector<5x32xf32>
    %209 = vector.broadcast %188 : vector<1x32xf32> to vector<5x32xf32>
    %210 = arith.addf %208, %209 : vector<5x32xf32>
    %211 = vector.extract_strided_slice %14 {offsets = [1, 0, 0], sizes = [1, 32, 128], strides = [1, 1, 1]} : vector<2x32x128xf32> to vector<1x32x128xf32>
    %212 = vector.shape_cast %211 : vector<1x32x128xf32> to vector<32x128xf32>
    %cst_83 = arith.constant dense<0.000000e+00> : vector<5x128xf32>
    %213 = tpu.matmul %210, %212, %cst_83 {dimension_numbers = #tpu.dot_dimension_numbers<[1], [0], [0], [1], [0, 0, 1, 1], [], []>} : vector<5x32xf32>, vector<32x128xf32>, vector<5x128xf32> -> vector<5x128xf32>
    %214 = vector.extract_strided_slice %15 {offsets = [1, 0, 0], sizes = [1, 1, 128], strides = [1, 1, 1]} : vector<2x1x128xf32> to vector<1x1x128xf32>
    %215 = vector.shape_cast %214 : vector<1x1x128xf32> to vector<1x128xf32>
    %216 = vector.broadcast %215 : vector<1x128xf32> to vector<5x128xf32>
    %217 = arith.addf %213, %216 : vector<5x128xf32>
    %cst_84 = arith.constant 5.000000e-01 : f32
    %218 = vector.broadcast %cst_84 : f32 to vector<5x128xf32>
    %219 = arith.mulf %218, %217 : vector<5x128xf32>
    %cst_85 = arith.constant 0.707106769 : f32
    %220 = vector.broadcast %cst_85 : f32 to vector<5x128xf32>
    %221 = arith.mulf %217, %220 : vector<5x128xf32>
    %222 = math.erf %221 : vector<5x128xf32>
    %cst_86 = arith.constant 1.000000e+00 : f32
    %223 = vector.broadcast %cst_86 : f32 to vector<5x128xf32>
    %224 = arith.addf %223, %222 : vector<5x128xf32>
    %225 = arith.mulf %219, %224 : vector<5x128xf32>
    %226 = vector.extract_strided_slice %16 {offsets = [1, 0, 0], sizes = [1, 128, 32], strides = [1, 1, 1]} : vector<2x128x32xf32> to vector<1x128x32xf32>
    %227 = vector.shape_cast %226 : vector<1x128x32xf32> to vector<128x32xf32>
    %cst_87 = arith.constant dense<0.000000e+00> : vector<5x32xf32>
    %228 = tpu.matmul %225, %227, %cst_87 {dimension_numbers = #tpu.dot_dimension_numbers<[1], [0], [0], [1], [0, 0, 1, 1], [], []>} : vector<5x128xf32>, vector<128x32xf32>, vector<5x32xf32> -> vector<5x32xf32>
    %229 = vector.extract_strided_slice %17 {offsets = [1, 0, 0], sizes = [1, 1, 32], strides = [1, 1, 1]} : vector<2x1x32xf32> to vector<1x1x32xf32>
    %230 = vector.shape_cast %229 : vector<1x1x32xf32> to vector<1x32xf32>
    %231 = vector.broadcast %230 : vector<1x32xf32> to vector<5x32xf32>
    %232 = arith.addf %228, %231 : vector<5x32xf32>
    %233 = arith.addf %184, %232 : vector<5x32xf32>
    %234 = vector.extract_strided_slice %233 {offsets = [0, 0], sizes = [1, 32], strides = [1, 1]} : vector<5x32xf32> to vector<1x32xf32>
    %c0_88 = arith.constant 0 : index
    %c0_89 = arith.constant 0 : index
    %235 = vector.load %arg16[%c0_88, %c0_89] : memref<1x32xf32, #tpu.memory_space<vmem>>, vector<1x32xf32>
    %c0_90 = arith.constant 0 : index
    %c0_91 = arith.constant 0 : index
    %236 = vector.load %arg17[%c0_90, %c0_91] : memref<1x32xf32, #tpu.memory_space<vmem>>, vector<1x32xf32>
    %cst_92 = arith.constant dense<0.000000e+00> : vector<1xf32>
    %237 = vector.multi_reduction <add>, %234, %cst_92 [1] : vector<1x32xf32> to vector<1xf32>
    %238 = vector.shape_cast %237 : vector<1xf32> to vector<1x1xf32>
    %cst_93 = arith.constant 3.200000e+01 : f32
    %239 = vector.broadcast %cst_93 : f32 to vector<1x1xf32>
    %240 = arith.divf %238, %239 : vector<1x1xf32>
    %241 = vector.broadcast %240 : vector<1x1xf32> to vector<1x32xf32>
    %242 = arith.subf %234, %241 : vector<1x32xf32>
    %243 = arith.mulf %242, %242 : vector<1x32xf32>
    %cst_94 = arith.constant dense<0.000000e+00> : vector<1xf32>
    %244 = vector.multi_reduction <add>, %243, %cst_94 [1] : vector<1x32xf32> to vector<1xf32>
    %245 = vector.shape_cast %244 : vector<1xf32> to vector<1x1xf32>
    %cst_95 = arith.constant 3.200000e+01 : f32
    %246 = vector.broadcast %cst_95 : f32 to vector<1x1xf32>
    %247 = arith.divf %245, %246 : vector<1x1xf32>
    %248 = vector.broadcast %240 : vector<1x1xf32> to vector<1x32xf32>
    %249 = arith.subf %234, %248 : vector<1x32xf32>
    %cst_96 = arith.constant 9.99999997E-7 : f32
    %250 = vector.broadcast %cst_96 : f32 to vector<1x1xf32>
    %251 = arith.addf %247, %250 : vector<1x1xf32>
    %252 = math.rsqrt %251 : vector<1x1xf32>
    %253 = vector.broadcast %252 : vector<1x1xf32> to vector<1x32xf32>
    %254 = arith.mulf %249, %253 : vector<1x32xf32>
    %255 = arith.mulf %254, %235 : vector<1x32xf32>
    %256 = arith.addf %255, %236 : vector<1x32xf32>
    %c0_97 = arith.constant 0 : index
    %c0_98 = arith.constant 0 : index
    %257 = vector.load %arg18[%c0_97, %c0_98] : memref<32x10xf32, #tpu.memory_space<vmem>>, vector<32x10xf32>
    %cst_99 = arith.constant dense<0.000000e+00> : vector<1x10xf32>
    %258 = tpu.matmul %256, %257, %cst_99 {dimension_numbers = #tpu.dot_dimension_numbers<[1], [0], [0], [1], [0, 0, 1, 1], [], []>} : vector<1x32xf32>, vector<32x10xf32>, vector<1x10xf32> -> vector<1x10xf32>
    %c0_100 = arith.constant 0 : index
    %c0_101 = arith.constant 0 : index
    %259 = vector.load %arg19[%c0_100, %c0_101] : memref<1x10xf32, #tpu.memory_space<vmem>>, vector<1x10xf32>
    %260 = arith.addf %258, %259 : vector<1x10xf32>
    %c0_102 = arith.constant 0 : index
    %c0_103 = arith.constant 0 : index
    %c0_104 = arith.constant 0 : index
    %261 = vector.load %arg20[%c0_102, %c0_103, %c0_104] : memref<1x1x10xf32, #tpu.memory_space<vmem>>, vector<1x1x10xf32>
    %262 = vector.shape_cast %261 : vector<1x1x10xf32> to vector<1x10xf32>
    %263 = vector.shape_cast %260 : vector<1x10xf32> to vector<1x1x10xf32>
    tpu.vector_store %arg20[%c0_102, %c0_103, %c0_104], %263 {strides = array<i32>} : memref<1x1x10xf32, #tpu.memory_space<vmem>>, vector<1x1x10xf32>,
    return
  }
  func.func @transform_0(%arg0: i32) -> (i32, i32, i32) {
    %c0_i32 = arith.constant 0 : i32
    %c0_i32_0 = arith.constant 0 : i32
    %c0_i32_1 = arith.constant 0 : i32
    return %arg0, %c0_i32, %c0_i32_0 : i32, i32, i32
  }
  func.func @transform_1(%arg0: i32) -> (i32, i32) {
    %c0_i32 = arith.constant 0 : i32
    %c0_i32_0 = arith.constant 0 : i32
    %c0_i32_1 = arith.constant 0 : i32
    return %c0_i32, %c0_i32_0 : i32, i32
  }
  func.func @transform_2(%arg0: i32) -> (i32, i32) {
    %c0_i32 = arith.constant 0 : i32
    %c0_i32_0 = arith.constant 0 : i32
    %c0_i32_1 = arith.constant 0 : i32
    return %c0_i32, %c0_i32_0 : i32, i32
  }
  func.func @transform_3(%arg0: i32) -> (i32, i32, i32) {
    %c0_i32 = arith.constant 0 : i32
    %c0_i32_0 = arith.constant 0 : i32
    %c0_i32_1 = arith.constant 0 : i32
    %c0_i32_2 = arith.constant 0 : i32
    return %c0_i32, %c0_i32_0, %c0_i32_1 : i32, i32, i32
  }
  func.func @transform_4(%arg0: i32) -> (i32, i32, i32) {
    %c0_i32 = arith.constant 0 : i32
    %c0_i32_0 = arith.constant 0 : i32
    %c0_i32_1 = arith.constant 0 : i32
    %c0_i32_2 = arith.constant 0 : i32
    return %c0_i32, %c0_i32_0, %c0_i32_1 : i32, i32, i32
  }
  func.func @transform_5(%arg0: i32) -> (i32, i32, i32) {
    %c0_i32 = arith.constant 0 : i32
    %c0_i32_0 = arith.constant 0 : i32
    %c0_i32_1 = arith.constant 0 : i32
    %c0_i32_2 = arith.constant 0 : i32
    return %c0_i32, %c0_i32_0, %c0_i32_1 : i32, i32, i32
  }
  func.func @transform_6(%arg0: i32) -> (i32, i32, i32) {
    %c0_i32 = arith.constant 0 : i32
    %c0_i32_0 = arith.constant 0 : i32
    %c0_i32_1 = arith.constant 0 : i32
    %c0_i32_2 = arith.constant 0 : i32
    return %c0_i32, %c0_i32_0, %c0_i32_1 : i32, i32, i32
  }
  func.func @transform_7(%arg0: i32) -> (i32, i32, i32) {
    %c0_i32 = arith.constant 0 : i32
    %c0_i32_0 = arith.constant 0 : i32
    %c0_i32_1 = arith.constant 0 : i32
    %c0_i32_2 = arith.constant 0 : i32
    return %c0_i32, %c0_i32_0, %c0_i32_1 : i32, i32, i32
  }
  func.func @transform_8(%arg0: i32) -> (i32, i32, i32) {
    %c0_i32 = arith.constant 0 : i32
    %c0_i32_0 = arith.constant 0 : i32
    %c0_i32_1 = arith.constant 0 : i32
    %c0_i32_2 = arith.constant 0 : i32
    return %c0_i32, %c0_i32_0, %c0_i32_1 : i32, i32, i32
  }
  func.func @transform_9(%arg0: i32) -> (i32, i32, i32) {
    %c0_i32 = arith.constant 0 : i32
    %c0_i32_0 = arith.constant 0 : i32
    %c0_i32_1 = arith.constant 0 : i32
    %c0_i32_2 = arith.constant 0 : i32
    return %c0_i32, %c0_i32_0, %c0_i32_1 : i32, i32, i32
  }
  func.func @transform_10(%arg0: i32) -> (i32, i32, i32) {
    %c0_i32 = arith.constant 0 : i32
    %c0_i32_0 = arith.constant 0 : i32
    %c0_i32_1 = arith.constant 0 : i32
    %c0_i32_2 = arith.constant 0 : i32
    return %c0_i32, %c0_i32_0, %c0_i32_1 : i32, i32, i32
  }
  func.func @transform_11(%arg0: i32) -> (i32, i32, i32) {
    %c0_i32 = arith.constant 0 : i32
    %c0_i32_0 = arith.constant 0 : i32
    %c0_i32_1 = arith.constant 0 : i32
    %c0_i32_2 = arith.constant 0 : i32
    return %c0_i32, %c0_i32_0, %c0_i32_1 : i32, i32, i32
  }
  func.func @transform_12(%arg0: i32) -> (i32, i32, i32) {
    %c0_i32 = arith.constant 0 : i32
    %c0_i32_0 = arith.constant 0 : i32
    %c0_i32_1 = arith.constant 0 : i32
    %c0_i32_2 = arith.constant 0 : i32
    return %c0_i32, %c0_i32_0, %c0_i32_1 : i32, i32, i32
  }
  func.func @transform_13(%arg0: i32) -> (i32, i32, i32) {
    %c0_i32 = arith.constant 0 : i32
    %c0_i32_0 = arith.constant 0 : i32
    %c0_i32_1 = arith.constant 0 : i32
    %c0_i32_2 = arith.constant 0 : i32
    return %c0_i32, %c0_i32_0, %c0_i32_1 : i32, i32, i32
  }
  func.func @transform_14(%arg0: i32) -> (i32, i32, i32) {
    %c0_i32 = arith.constant 0 : i32
    %c0_i32_0 = arith.constant 0 : i32
    %c0_i32_1 = arith.constant 0 : i32
    %c0_i32_2 = arith.constant 0 : i32
    return %c0_i32, %c0_i32_0, %c0_i32_1 : i32, i32, i32
  }
  func.func @transform_15(%arg0: i32) -> (i32, i32) {
    %c0_i32 = arith.constant 0 : i32
    %c0_i32_0 = arith.constant 0 : i32
    %c0_i32_1 = arith.constant 0 : i32
    return %c0_i32, %c0_i32_0 : i32, i32
  }
  func.func @transform_16(%arg0: i32) -> (i32, i32) {
    %c0_i32 = arith.constant 0 : i32
    %c0_i32_0 = arith.constant 0 : i32
    %c0_i32_1 = arith.constant 0 : i32
    return %c0_i32, %c0_i32_0 : i32, i32
  }
  func.func @transform_17(%arg0: i32) -> (i32, i32) {
    %c0_i32 = arith.constant 0 : i32
    %c0_i32_0 = arith.constant 0 : i32
    %c0_i32_1 = arith.constant 0 : i32
    return %c0_i32, %c0_i32_0 : i32, i32
  }
  func.func @transform_18(%arg0: i32) -> (i32, i32) {
    %c0_i32 = arith.constant 0 : i32
    %c0_i32_0 = arith.constant 0 : i32
    %c0_i32_1 = arith.constant 0 : i32
    return %c0_i32, %c0_i32_0 : i32, i32
  }
  func.func @transform_19(%arg0: i32) -> (i32, i32, i32) {
    %c0_i32 = arith.constant 0 : i32
    %c0_i32_0 = arith.constant 0 : i32
    %c0_i32_1 = arith.constant 0 : i32
    return %arg0, %c0_i32, %c0_i32_0 : i32, i32, i32
  }
}

</mosaic_0001>

<llo_original>
// kernel: hybrid_transformer_forward.4
$region0: #{hybrid_transformer_forward.4}
  #allocation0 [shape = 'u32[]', space=smem, size = 0x4, offset = 0x4, fixed_abs, tag = 'smem constant byte address 0x4 - core index']
  #allocation1 [shape = 'u32[144,128]{1,0:T(1,128)}', space=vmem, size = 0x12000, scoped, tag = 'internal scratch']
  %s0 = inlined_call_operand.vmem [shape: f32[2048,27], index: 0, kind: input, shape index: {}]
  %s1 = inlined_call_operand.vmem [shape: f32[27,8], index: 1, kind: input, shape index: {}]
  %s2 = inlined_call_operand.vmem [shape: f32[1,8], index: 2, kind: input, shape index: {}]
  %s3 = inlined_call_operand.vmem [shape: f32[2048,8], index: 3, kind: output, shape index: {}]
  %s4 = sld [smem:[#allocation0]]
  $region45: #{hybrid_transformer_forward.4} parent=0
    _
  %s6 = ssub.s32 1, %s4
  %s7 = scalar_select 0, %s6, %s4
  loop: start=0, step=1, limit=6
  $region2: #{hybrid_transformer_forward.4} parent=0 // loop_pre_header
    _
  $region3: #{hybrid_transformer_forward.4} parent=0 // loop_header
    %s9 = sphi 0, %s13
    %p10 = scmp.ge.s32.totalorder %s9, 6
    %s19 = sphi 0, %s21
    %s22 = sphi 0, %s19
    %s23 = sphi 0, %s22
    %s39 = sphi 0, %s23
    %s43 = sphi 0, %s43
    %s45 = sphi 0, %s43
    %s46 = sphi 0, %s45
    %s60 = sphi 0, %s46
    %s64 = sphi 0, %s64
    %s66 = sphi 0, %s64
    %s67 = sphi 0, %s66
    %s81 = sphi 0, %s67
    %s87 = sphi 0, %s89
    %s90 = sphi 0, %s87
    %s91 = sphi 0, %s90
    %s107 = sphi 0, %s91
  $region4: #{hybrid_transformer_forward.4} parent=0 // loop_header_branch
    %12 = sbr.rel (%p10) target = $region8
  $region5: #{hybrid_transformer_forward.4} parent=0 // loop_body
    %s14 = ssub.s32 %s9, 1
    %s15 = ssub.s32 %s9, 2
    %s16 = sadd.s32 %s9, 1
    %s17 = ssub.s32 %s9, %s16
    %p18 = scmp.eq.s32.totalorder %s17, 0
    %s20 = sadd.s32 %s19, 1
    %s21 = scalar_select %p18, %s19, %s20
    %p24 = pneg %p18
    %p25 = scmp.eq.s32.totalorder %s9, 3
    %p26 = por %p24, %p25
    %p27 = scmp.ne.s32.totalorder %s19, %s22
    %p28 = scmp.eq.s32.totalorder %s9, 0
    %p29 = por %p27, %p28
    %p30 = scmp.ne.s32.totalorder %s19, %s22
    %p31 = scmp.eq.s32.totalorder %s14, 3
    %p32 = por %p30, %p31
    %p33 = scmp.ne.s32.totalorder %s22, %s23
    %p34 = scmp.eq.s32.totalorder %s14, 0
    %p35 = por %p33, %p34
    %p36 = scmp.ne.s32.totalorder %s22, %s23
    %p37 = scmp.eq.s32.totalorder %s15, 3
    %p38 = por %p36, %p37
    %p40 = scmp.ne.s32.totalorder %s23, %s39
    %p41 = scmp.eq.s32.totalorder %s15, 0
    %p42 = por %p40, %p41
    %s44 = sadd.s32 %s43, 1
    %p47 = scmp.eq.s32.totalorder %s9, 3
    %p48 = scmp.ne.s32.totalorder %s43, %s45
    %p49 = scmp.eq.s32.totalorder %s9, 0
    %p50 = por %p48, %p49
    %p51 = scmp.ne.s32.totalorder %s43, %s45
    %p52 = scmp.eq.s32.totalorder %s14, 3
    %p53 = por %p51, %p52
    %p54 = scmp.ne.s32.totalorder %s45, %s46
    %p55 = scmp.eq.s32.totalorder %s14, 0
    %p56 = por %p54, %p55
    %p57 = scmp.ne.s32.totalorder %s45, %s46
    %p58 = scmp.eq.s32.totalorder %s15, 3
    %p59 = por %p57, %p58
    %p61 = scmp.ne.s32.totalorder %s46, %s60
    %p62 = scmp.eq.s32.totalorder %s15, 0
    %p63 = por %p61, %p62
    %s65 = sadd.s32 %s64, 1
    %p68 = scmp.eq.s32.totalorder %s9, 3
    %p69 = scmp.ne.s32.totalorder %s64, %s66
    %p70 = scmp.eq.s32.totalorder %s9, 0
    %p71 = por %p69, %p70
    %p72 = scmp.ne.s32.totalorder %s64, %s66
    %p73 = scmp.eq.s32.totalorder %s14, 3
    %p74 = por %p72, %p73
    %p75 = scmp.ne.s32.totalorder %s66, %s67
    %p76 = scmp.eq.s32.totalorder %s14, 0
    %p77 = por %p75, %p76
    %p78 = scmp.ne.s32.totalorder %s66, %s67
    %p79 = scmp.eq.s32.totalorder %s15, 3
    %p80 = por %p78, %p79
    %p82 = scmp.ne.s32.totalorder %s67, %s81
    %p83 = scmp.eq.s32.totalorder %s15, 0
    %p84 = por %p82, %p83
    %s85 = ssub.s32 %s9, %s16
    %p86 = scmp.eq.s32.totalorder %s85, 0
    %s88 = sadd.s32 %s87, 1
    %s89 = scalar_select %p86, %s87, %s88
    %p92 = pneg %p86
    %p93 = scmp.eq.s32.totalorder %s9, 3
    %p94 = por %p92, %p93
    %p95 = scmp.ne.s32.totalorder %s87, %s90
    %p96 = scmp.eq.s32.totalorder %s9, 0
    %p97 = por %p95, %p96
    %p98 = scmp.ne.s32.totalorder %s87, %s90
    %p99 = scmp.eq.s32.totalorder %s14, 3
    %p100 = por %p98, %p99
    %p101 = scmp.ne.s32.totalorder %s90, %s91
    %p102 = scmp.eq.s32.totalorder %s14, 0
    %p103 = por %p101, %p102
    %p104 = scmp.ne.s32.totalorder %s90, %s91
    %p105 = scmp.eq.s32.totalorder %s15, 3
    %p106 = por %p104, %p105
    %p108 = scmp.ne.s32.totalorder %s91, %s107
    %p109 = scmp.eq.s32.totalorder %s15, 0
    %p110 = por %p108, %p109
    %p111 = scmp.le.s32.totalorder 1, %s9
    %p112 = scmp.lt.s32.totalorder %s9, 5
    %p113 = pnand %p111, %p112
    %p114 = pneg %p113
    // Predicated region
    $region9: #{hybrid_transformer_forward.4} parent=5 // pred_check
      _
    $region10: #{hybrid_transformer_forward.4} parent=5 // pred_check_branch
      %116 = sbr.rel (%p113) target = $region12
    $region11: #{hybrid_transformer_forward.4} parent=5 // pred_region
      %s117 = ssub.s32 %s9, 1
      // Predicated region
      $region13: #{hybrid_transformer_forward.4} parent=11 // pred_check
        %p118 = pneg %p56
      $region14: #{hybrid_transformer_forward.4} parent=11 // pred_check_branch
        %120 = sbr.rel (%p118) target = $region16
      $region15: #{hybrid_transformer_forward.4} parent=11 // pred_region
        _
      $region16: #{hybrid_transformer_forward.4} parent=11 // pred_fallthru
        _
      // Predicated region
      $region17: #{hybrid_transformer_forward.4} parent=11 // pred_check
        %p121 = pneg %p77
      $region18: #{hybrid_transformer_forward.4} parent=11 // pred_check_branch
        %123 = sbr.rel (%p121) target = $region20
      $region19: #{hybrid_transformer_forward.4} parent=11 // pred_region
        _
      $region20: #{hybrid_transformer_forward.4} parent=11 // pred_fallthru
        _
    $region12: #{hybrid_transformer_forward.4} parent=5 // pred_fallthru
      _
    %p124 = scmp.lt.s32.totalorder %s9, 4
    // Predicated region
    $region21: #{hybrid_transformer_forward.4} parent=5 // pred_check
      %p125 = pneg %p124
    $region22: #{hybrid_transformer_forward.4} parent=5 // pred_check_branch
      %127 = sbr.rel (%p125) target = $region24
    $region23: #{hybrid_transformer_forward.4} parent=5 // pred_region
      // Predicated region
      $region25: #{hybrid_transformer_forward.4} parent=23 // pred_check
        %p128 = pneg %p29
      $region26: #{hybrid_transformer_forward.4} parent=23 // pred_check_branch
        %130 = sbr.rel (%p128) target = $region28
      $region27: #{hybrid_transformer_forward.4} parent=23 // pred_region
        %s131 = smul.u32 64, %s9
        %p132 = scmp.lt.s32.totalorder %s131, 255
        %s133 = scalar_select %p132, %s131, 255
        %s134 = smul.addr %s133, 8
        %s135 = scalar_lea.vmem %s0, %s134
        %s136 = smul.u32 64, %s9
      $region28: #{hybrid_transformer_forward.4} parent=23 // pred_fallthru
        _
    $region24: #{hybrid_transformer_forward.4} parent=5 // pred_fallthru
      _
    %p137 = scmp.le.s32.totalorder 1, %s9
    %p138 = scmp.lt.s32.totalorder %s9, 5
    %p139 = pnand %p137, %p138
    %p140 = pneg %p139
    // Predicated region
    $region29: #{hybrid_transformer_forward.4} parent=5 // pred_check
      _
    $region30: #{hybrid_transformer_forward.4} parent=5 // pred_check_branch
      %142 = sbr.rel (%p139) target = $region32
    $region31: #{hybrid_transformer_forward.4} parent=5 // pred_region
      %s143 = ssub.s32 %s9, 1
      %s144 = smul.u32 64, %s14
      %p145 = scmp.lt.s32.totalorder %s144, 255
      %s146 = scalar_select %p145, %s144, 255
      %s147 = smul.addr %s146, 8
      %s148 = scalar_lea.vmem %s0, %s147
      %p149 = pneg %p35
      %p150 = pneg %p32
      %p151 = pneg %p56
      %p152 = pneg %p53
      %p153 = pneg %p77
      %p154 = pneg %p74
      %p155 = pneg %p103
      %p156 = pneg %p100
      %s157 = smul.u32 64, %s14
      %p158 = scmp.lt.s32.totalorder %s157, 255
      %s159 = scalar_select %p158, %s157, 255
      %s160 = smul.addr %s159, 8
      %s161 = scalar_lea.vmem %s3, %s160
      %s162 = smul.u32 64, %s14
      %p163 = scmp.lt.s32.totalorder %s162, 255
      %s164 = scalar_select %p163, %s162, 255
      %s165 = smul.addr %s164, 8
      %s166 = scalar_lea.vmem %s0, %s165
      %s167 = smul.u32 64, %s14
      %s168 = smul.u32 64, %s14
      %p169 = scmp.lt.s32.totalorder %s168, 255
      %s170 = scalar_select %p169, %s168, 255
      %s171 = smul.addr %s170, 8
      %s172 = scalar_lea.vmem %s3, %s171
      %s173 = smul.u32 64, %s14
      %v174 = vld [vmem:[%s166] sm:$0xff]
      %v175 = vld [vmem:[%s166 + $0x8] sm:$0xff]
      %v176 = vld [vmem:[%s166 + $0x10] sm:$0xff]
      %v177 = vld [vmem:[%s166 + $0x18] sm:$0xff]
      %v178 = vld [vmem:[%s166 + $0x20] sm:$0xff]
      %v179 = vld [vmem:[%s166 + $0x28] sm:$0xff]
      %v180 = vld [vmem:[%s166 + $0x30] sm:$0xff]
      %v181 = vld [vmem:[%s166 + $0x38] sm:$0xff]
      %v182 = vld [vmem:[%s166 + $0x40] sm:$0xff]
      %v183 = vld [vmem:[%s166 + $0x48] sm:$0xff]
      %v184 = vld [vmem:[%s166 + $0x50] sm:$0xff]
      %v185 = vld [vmem:[%s166 + $0x58] sm:$0xff]
      %v186 = vld [vmem:[%s166 + $0x60] sm:$0xff]
      %v187 = vld [vmem:[%s166 + $0x68] sm:$0xff]
      %v188 = vld [vmem:[%s166 + $0x70] sm:$0xff]
      %v189 = vld [vmem:[%s166 + $0x78] sm:$0xff]
      %v190 = vld [vmem:[%s166 + $0x80] sm:$0xff]
      %v191 = vld [vmem:[%s166 + $0x88] sm:$0xff]
      %v192 = vld [vmem:[%s166 + $0x90] sm:$0xff]
      %v193 = vld [vmem:[%s166 + $0x98] sm:$0xff]
      %v194 = vld [vmem:[%s166 + $0xa0] sm:$0xff]
      %v195 = vld [vmem:[%s166 + $0xa8] sm:$0xff]
      %v196 = vld [vmem:[%s166 + $0xb0] sm:$0xff]
      %v197 = vld [vmem:[%s166 + $0xb8] sm:$0xff]
      %v198 = vld [vmem:[%s166 + $0xc0] sm:$0xff]
      %v199 = vld [vmem:[%s166 + $0xc8] sm:$0xff]
      %v200 = vld [vmem:[%s166 + $0xd0] sm:$0xff]
      %v201 = vld [vmem:[%s166 + $0xd8] sm:$0xff]
      %v202 = vld [vmem:[%s166 + $0xe0] sm:$0xff]
      %v203 = vld [vmem:[%s166 + $0xe8] sm:$0xff]
      %v204 = vld [vmem:[%s166 + $0xf0] sm:$0xff]
      %v205 = vld [vmem:[%s166 + $0xf8] sm:$0xff]
      %v206 = vld [vmem:[%s166 + $0x100] sm:$0xff]
      %v207 = vld [vmem:[%s166 + $0x108] sm:$0xff]
      %v208 = vld [vmem:[%s166 + $0x110] sm:$0xff]
      %v209 = vld [vmem:[%s166 + $0x118] sm:$0xff]
      %v210 = vld [vmem:[%s166 + $0x120] sm:$0xff]
      %v211 = vld [vmem:[%s166 + $0x128] sm:$0xff]
      %v212 = vld [vmem:[%s166 + $0x130] sm:$0xff]
      %v213 = vld [vmem:[%s166 + $0x138] sm:$0xff]
      %v214 = vld [vmem:[%s166 + $0x140] sm:$0xff]
      %v215 = vld [vmem:[%s166 + $0x148] sm:$0xff]
      %v216 = vld [vmem:[%s166 + $0x150] sm:$0xff]
      %v217 = vld [vmem:[%s166 + $0x158] sm:$0xff]
      %v218 = vld [vmem:[%s166 + $0x160] sm:$0xff]
      %v219 = vld [vmem:[%s166 + $0x168] sm:$0xff]
      %v220 = vld [vmem:[%s166 + $0x170] sm:$0xff]
      %v221 = vld [vmem:[%s166 + $0x178] sm:$0xff]
      %v222 = vld [vmem:[%s166 + $0x180] sm:$0xff]
      %v223 = vld [vmem:[%s166 + $0x188] sm:$0xff]
      %v224 = vld [vmem:[%s166 + $0x190] sm:$0xff]
      %v225 = vld [vmem:[%s166 + $0x198] sm:$0xff]
      %v226 = vld [vmem:[%s166 + $0x1a0] sm:$0xff]
      %v227 = vld [vmem:[%s166 + $0x1a8] sm:$0xff]
      %v228 = vld [vmem:[%s166 + $0x1b0] sm:$0xff]
      %v229 = vld [vmem:[%s166 + $0x1b8] sm:$0xff]
      %v230 = vld [vmem:[%s166 + $0x1c0] sm:$0xff]
      %v231 = vld [vmem:[%s166 + $0x1c8] sm:$0xff]
      %v232 = vld [vmem:[%s166 + $0x1d0] sm:$0xff]
      %v233 = vld [vmem:[%s166 + $0x1d8] sm:$0xff]
      %v234 = vld [vmem:[%s166 + $0x1e0] sm:$0xff]
      %v235 = vld [vmem:[%s166 + $0x1e8] sm:$0xff]
      %v236 = vld [vmem:[%s166 + $0x1f0] sm:$0xff]
      %v237 = vld [vmem:[%s166 + $0x1f8] sm:$0xff]
      %v238 = vld [vmem:[%s1] sm:$0xff]
      %v239 = vld [vmem:[%s1 + $0x8] sm:$0xff]
      %v240 = vld [vmem:[%s1 + $0x10] sm:$0xff]
      %v241 = vld [vmem:[%s1 + $0x18] sm:$0x7]
      %v242 = vld [vmem:[%s2] sm:$0x1]
      %v244 = vlaneseq
      %v245 = vshrl.u32 %v244, 7
      %v246 = vsub.s32 0, %v245
      %v247 = vrot.slane %v242, %v246
      %vm249 = vcmask 220160
      %v251 = vsel %vm249, %v174, 0
      %v254 = vsel %vm249, %v175, 0
      %v257 = vsel %vm249, %v176, 0
      %v260 = vsel %vm249, %v177, 0
      %v263 = vsel %vm249, %v178, 0
      %v266 = vsel %vm249, %v179, 0
      %v269 = vsel %vm249, %v180, 0
      %v272 = vsel %vm249, %v181, 0
      %v275 = vsel %vm249, %v182, 0
      %v278 = vsel %vm249, %v183, 0
      %v281 = vsel %vm249, %v184, 0
      %v284 = vsel %vm249, %v185, 0
      %v287 = vsel %vm249, %v186, 0
      %v290 = vsel %vm249, %v187, 0
      %v293 = vsel %vm249, %v188, 0
      %v296 = vsel %vm249, %v189, 0
      %v299 = vsel %vm249, %v190, 0
      %v302 = vsel %vm249, %v191, 0
      %v305 = vsel %vm249, %v192, 0
      %v308 = vsel %vm249, %v193, 0
      %v311 = vsel %vm249, %v194, 0
      %v314 = vsel %vm249, %v195, 0
      %v317 = vsel %vm249, %v196, 0
      %v320 = vsel %vm249, %v197, 0
      %v323 = vsel %vm249, %v198, 0
      %v326 = vsel %vm249, %v199, 0
      %v329 = vsel %vm249, %v200, 0
      %v332 = vsel %vm249, %v201, 0
      %v335 = vsel %vm249, %v202, 0
      %v338 = vsel %vm249, %v203, 0
      %v341 = vsel %vm249, %v204, 0
      %v344 = vsel %vm249, %v205, 0
      %v347 = vsel %vm249, %v206, 0
      %v350 = vsel %vm249, %v207, 0
      %v353 = vsel %vm249, %v208, 0
      %v356 = vsel %vm249, %v209, 0
      %v359 = vsel %vm249, %v210, 0
      %v362 = vsel %vm249, %v211, 0
      %v365 = vsel %vm249, %v212, 0
      %v368 = vsel %vm249, %v213, 0
      %v371 = vsel %vm249, %v214, 0
      %v374 = vsel %vm249, %v215, 0
      %v377 = vsel %vm249, %v216, 0
      %v380 = vsel %vm249, %v217, 0
      %v383 = vsel %vm249, %v218, 0
      %v386 = vsel %vm249, %v219, 0
      %v389 = vsel %vm249, %v220, 0
      %v392 = vsel %vm249, %v221, 0
      %v395 = vsel %vm249, %v222, 0
      %v398 = vsel %vm249, %v223, 0
      %v401 = vsel %vm249, %v224, 0
      %v404 = vsel %vm249, %v225, 0
      %v407 = vsel %vm249, %v226, 0
      %v410 = vsel %vm249, %v227, 0
      %v413 = vsel %vm249, %v228, 0
      %v416 = vsel %vm249, %v229, 0
      %v419 = vsel %vm249, %v230, 0
      %v422 = vsel %vm249, %v231, 0
      %v425 = vsel %vm249, %v232, 0
      %v428 = vsel %vm249, %v233, 0
      %v431 = vsel %vm249, %v234, 0
      %v434 = vsel %vm249, %v235, 0
      %v437 = vsel %vm249, %v236, 0
      %v440 = vsel %vm249, %v237, 0
      %vm442 = vcmask 1042432
      %v444 = vsel %vm442, %v241, 0
      %446 = vmatprep.subr.mxu0 0.0
      %447 = vmatpush1.msra.mxu0 0.0
      %448 = vmatprep.subr.mxu0 0.0
      %449 = vmatpush1.msra.mxu0 0.0
      %450 = vmatprep.subr.mxu0 0.0
      %451 = vmatpush1.msra.mxu0 0.0
      %452 = vmatprep.subr.mxu0 0.0
      %453 = vmatpush1.msra.mxu0 0.0
      %454 = vmatprep.subr.mxu0 0.0
      %455 = vmatpush1.msra.mxu0 0.0
      %456 = vmatprep.subr.mxu0 0.0
      %457 = vmatpush1.msra.mxu0 0.0
      %458 = vmatprep.subr.mxu0 0.0
      %459 = vmatpush1.msra.mxu0 0.0
      %460 = vmatprep.subr.mxu0 0.0
      %461 = vmatpush1.msra.mxu0 0.0
      %462 = vmatprep.subr.mxu0 0.0
      %463 = vmatpush1.msra.mxu0 0.0
      %464 = vmatprep.subr.mxu0 0.0
      %465 = vmatpush1.msra.mxu0 0.0
      %466 = vmatprep.subr.mxu0 0.0
      %467 = vmatpush1.msra.mxu0 0.0
      %468 = vmatprep.subr.mxu0 0.0
      %469 = vmatpush1.msra.mxu0 0.0
      %470 = vmatprep.subr.mxu0 0.0
      %471 = vmatpush1.msra.mxu0 %v444
      %472 = vmatprep.subr.mxu0 0.0
      %473 = vmatpush1.msra.mxu0 %v240
      %474 = vmatprep.subr.mxu0 0.0
      %475 = vmatpush1.msra.mxu0 %v239
      %476 = vmatprep.subr.mxu0 0.0
      %477 = vmatpush1.msra.mxu0 %v238
      %478 = vmatprep.subr.mxu0 0.0
      %479 = vmatpush2.msra.mxu0 0.0
      %480 = vmatprep.subr.mxu0 0.0
      %481 = vmatpush2.msra.mxu0 0.0
      %482 = vmatprep.subr.mxu0 0.0
      %483 = vmatpush2.msra.mxu0 0.0
      %484 = vmatprep.subr.mxu0 0.0
      %485 = vmatpush2.msra.mxu0 0.0
      %486 = vmatprep.subr.mxu0 0.0
      %487 = vmatpush2.msra.mxu0 0.0
      %488 = vmatprep.subr.mxu0 0.0
      %489 = vmatpush2.msra.mxu0 0.0
      %490 = vmatprep.subr.mxu0 0.0
      %491 = vmatpush2.msra.mxu0 0.0
      %492 = vmatprep.subr.mxu0 0.0
      %493 = vmatpush2.msra.mxu0 0.0
      %494 = vmatprep.subr.mxu0 0.0
      %495 = vmatpush2.msra.mxu0 0.0
      %496 = vmatprep.subr.mxu0 0.0
      %497 = vmatpush2.msra.mxu0 0.0
      %498 = vmatprep.subr.mxu0 0.0
      %499 = vmatpush2.msra.mxu0 0.0
      %500 = vmatprep.subr.mxu0 0.0
      %501 = vmatpush2.msra.mxu0 0.0
      %502 = vmatprep.subr.mxu0 0.0
      %503 = vmatpush2.msra.mxu0 0.0
      %504 = vmatprep.subr.mxu0 0.0
      %505 = vmatpush2.msra.mxu0 0.0
      %506 = vmatprep.subr.mxu0 0.0
      %507 = vmatpush2.msra.mxu0 0.0
      %508 = vmatprep.subr.mxu0 0.0
      %509 = vmatpush2.msra.mxu0 0.0
      %510 = vmatprep.mubr.f32.mxu0 0.0
      %511 = vmatmul.mubr.f32.gmra.mxu0 %v251
      %v512 = vpop.f32.mrf.mxu0
      %v513 = vadd.f32 %v247, %v512
      %v514 = vpop.f32.mrf.mxu0
      %515 = vmatprep.mubr.f32.mxu0 0.0
      %516 = vmatmul.mubr.f32.gmra.mxu0 %v254
      %v517 = vpop.f32.mrf.mxu0
      %v518 = vadd.f32 %v247, %v517
      %v519 = vpop.f32.mrf.mxu0
      %520 = vmatprep.mubr.f32.mxu0 0.0
      %521 = vmatmul.mubr.f32.gmra.mxu0 %v257
      %v522 = vpop.f32.mrf.mxu0
      %v523 = vadd.f32 %v247, %v522
      %v524 = vpop.f32.mrf.mxu0
      %525 = vmatprep.mubr.f32.mxu0 0.0
      %526 = vmatmul.mubr.f32.gmra.mxu0 %v260
      %v527 = vpop.f32.mrf.mxu0
      %v528 = vadd.f32 %v247, %v527
      %v529 = vpop.f32.mrf.mxu0
      %530 = vmatprep.mubr.f32.mxu0 0.0
      %531 = vmatmul.mubr.f32.gmra.mxu0 %v263
      %v532 = vpop.f32.mrf.mxu0
      %v533 = vadd.f32 %v247, %v532
      %v534 = vpop.f32.mrf.mxu0
      %535 = vmatprep.mubr.f32.mxu0 0.0
      %536 = vmatmul.mubr.f32.gmra.mxu0 %v266
      %v537 = vpop.f32.mrf.mxu0
      %v538 = vadd.f32 %v247, %v537
      %v539 = vpop.f32.mrf.mxu0
      %540 = vmatprep.mubr.f32.mxu0 0.0
      %541 = vmatmul.mubr.f32.gmra.mxu0 %v269
      %v542 = vpop.f32.mrf.mxu0
      %v543 = vadd.f32 %v247, %v542
      %v544 = vpop.f32.mrf.mxu0
      %545 = vmatprep.mubr.f32.mxu0 0.0
      %546 = vmatmul.mubr.f32.gmra.mxu0 %v272
      %v547 = vpop.f32.mrf.mxu0
      %v548 = vadd.f32 %v247, %v547
      %v549 = vpop.f32.mrf.mxu0
      %550 = vmatprep.mubr.f32.mxu0 0.0
      %551 = vmatmul.mubr.f32.gmra.mxu0 %v275
      %v552 = vpop.f32.mrf.mxu0
      %v553 = vadd.f32 %v247, %v552
      %v554 = vpop.f32.mrf.mxu0
      %555 = vmatprep.mubr.f32.mxu0 0.0
      %556 = vmatmul.mubr.f32.gmra.mxu0 %v278
      %v557 = vpop.f32.mrf.mxu0
      %v558 = vadd.f32 %v247, %v557
      %v559 = vpop.f32.mrf.mxu0
      %560 = vmatprep.mubr.f32.mxu0 0.0
      %561 = vmatmul.mubr.f32.gmra.mxu0 %v281
      %v562 = vpop.f32.mrf.mxu0
      %v563 = vadd.f32 %v247, %v562
      %v564 = vpop.f32.mrf.mxu0
      %565 = vmatprep.mubr.f32.mxu0 0.0
      %566 = vmatmul.mubr.f32.gmra.mxu0 %v284
      %v567 = vpop.f32.mrf.mxu0
      %v568 = vadd.f32 %v247, %v567
      %v569 = vpop.f32.mrf.mxu0
      %570 = vmatprep.mubr.f32.mxu0 0.0
      %571 = vmatmul.mubr.f32.gmra.mxu0 %v287
      %v572 = vpop.f32.mrf.mxu0
      %v573 = vadd.f32 %v247, %v572
      %v574 = vpop.f32.mrf.mxu0
      %575 = vmatprep.mubr.f32.mxu0 0.0
      %576 = vmatmul.mubr.f32.gmra.mxu0 %v290
      %v577 = vpop.f32.mrf.mxu0
      %v578 = vadd.f32 %v247, %v577
      %v579 = vpop.f32.mrf.mxu0
      %580 = vmatprep.mubr.f32.mxu0 0.0
      %581 = vmatmul.mubr.f32.gmra.mxu0 %v293
      %v582 = vpop.f32.mrf.mxu0
      %v583 = vadd.f32 %v247, %v582
      %v584 = vpop.f32.mrf.mxu0
      %585 = vmatprep.mubr.f32.mxu0 0.0
      %586 = vmatmul.mubr.f32.gmra.mxu0 %v296
      %v587 = vpop.f32.mrf.mxu0
      %v588 = vadd.f32 %v247, %v587
      %v589 = vpop.f32.mrf.mxu0
      %590 = vmatprep.mubr.f32.mxu0 0.0
      %591 = vmatmul.mubr.f32.gmra.mxu0 %v299
      %v592 = vpop.f32.mrf.mxu0
      %v593 = vadd.f32 %v247, %v592
      %v594 = vpop.f32.mrf.mxu0
      %595 = vmatprep.mubr.f32.mxu0 0.0
      %596 = vmatmul.mubr.f32.gmra.mxu0 %v302
      %v597 = vpop.f32.mrf.mxu0
      %v598 = vadd.f32 %v247, %v597
      %v599 = vpop.f32.mrf.mxu0
      %600 = vmatprep.mubr.f32.mxu0 0.0
      %601 = vmatmul.mubr.f32.gmra.mxu0 %v305
      %v602 = vpop.f32.mrf.mxu0
      %v603 = vadd.f32 %v247, %v602
      %v604 = vpop.f32.mrf.mxu0
      %605 = vmatprep.mubr.f32.mxu0 0.0
      %606 = vmatmul.mubr.f32.gmra.mxu0 %v308
      %v607 = vpop.f32.mrf.mxu0
      %v608 = vadd.f32 %v247, %v607
      %v609 = vpop.f32.mrf.mxu0
      %610 = vmatprep.mubr.f32.mxu0 0.0
      %611 = vmatmul.mubr.f32.gmra.mxu0 %v311
      %v612 = vpop.f32.mrf.mxu0
      %v613 = vadd.f32 %v247, %v612
      %v614 = vpop.f32.mrf.mxu0
      %615 = vmatprep.mubr.f32.mxu0 0.0
      %616 = vmatmul.mubr.f32.gmra.mxu0 %v314
      %v617 = vpop.f32.mrf.mxu0
      %v618 = vadd.f32 %v247, %v617
      %v619 = vpop.f32.mrf.mxu0
      %620 = vmatprep.mubr.f32.mxu0 0.0
      %621 = vmatmul.mubr.f32.gmra.mxu0 %v317
      %v622 = vpop.f32.mrf.mxu0
      %v623 = vadd.f32 %v247, %v622
      %v624 = vpop.f32.mrf.mxu0
      %625 = vmatprep.mubr.f32.mxu0 0.0
      %626 = vmatmul.mubr.f32.gmra.mxu0 %v320
      %v627 = vpop.f32.mrf.mxu0
      %v628 = vadd.f32 %v247, %v627
      %v629 = vpop.f32.mrf.mxu0
      %630 = vmatprep.mubr.f32.mxu0 0.0
      %631 = vmatmul.mubr.f32.gmra.mxu0 %v323
      %v632 = vpop.f32.mrf.mxu0
      %v633 = vadd.f32 %v247, %v632
      %v634 = vpop.f32.mrf.mxu0
      %635 = vmatprep.mubr.f32.mxu0 0.0
      %636 = vmatmul.mubr.f32.gmra.mxu0 %v326
      %v637 = vpop.f32.mrf.mxu0
      %v638 = vadd.f32 %v247, %v637
      %v639 = vpop.f32.mrf.mxu0
      %640 = vmatprep.mubr.f32.mxu0 0.0
      %641 = vmatmul.mubr.f32.gmra.mxu0 %v329
      %v642 = vpop.f32.mrf.mxu0
      %v643 = vadd.f32 %v247, %v642
      %v644 = vpop.f32.mrf.mxu0
      %645 = vmatprep.mubr.f32.mxu0 0.0
      %646 = vmatmul.mubr.f32.gmra.mxu0 %v332
      %v647 = vpop.f32.mrf.mxu0
      %v648 = vadd.f32 %v247, %v647
      %v649 = vpop.f32.mrf.mxu0
      %650 = vmatprep.mubr.f32.mxu0 0.0
      %651 = vmatmul.mubr.f32.gmra.mxu0 %v335
      %v652 = vpop.f32.mrf.mxu0
      %v653 = vadd.f32 %v247, %v652
      %v654 = vpop.f32.mrf.mxu0
      %655 = vmatprep.mubr.f32.mxu0 0.0
      %656 = vmatmul.mubr.f32.gmra.mxu0 %v338
      %v657 = vpop.f32.mrf.mxu0
      %v658 = vadd.f32 %v247, %v657
      %v659 = vpop.f32.mrf.mxu0
      %660 = vmatprep.mubr.f32.mxu0 0.0
      %661 = vmatmul.mubr.f32.gmra.mxu0 %v341
      %v662 = vpop.f32.mrf.mxu0
      %v663 = vadd.f32 %v247, %v662
      %v664 = vpop.f32.mrf.mxu0
      %665 = vmatprep.mubr.f32.mxu0 0.0
      %666 = vmatmul.mubr.f32.gmra.mxu0 %v344
      %v667 = vpop.f32.mrf.mxu0
      %v668 = vadd.f32 %v247, %v667
      %v669 = vpop.f32.mrf.mxu0
      %670 = vmatprep.mubr.f32.mxu0 0.0
      %671 = vmatmul.mubr.f32.gmra.mxu0 %v347
      %v672 = vpop.f32.mrf.mxu0
      %v673 = vadd.f32 %v247, %v672
      %v674 = vpop.f32.mrf.mxu0
      %675 = vmatprep.mubr.f32.mxu0 0.0
      %676 = vmatmul.mubr.f32.gmra.mxu0 %v350
      %v677 = vpop.f32.mrf.mxu0
      %v678 = vadd.f32 %v247, %v677
      %v679 = vpop.f32.mrf.mxu0
      %680 = vmatprep.mubr.f32.mxu0 0.0
      %681 = vmatmul.mubr.f32.gmra.mxu0 %v353
      %v682 = vpop.f32.mrf.mxu0
      %v683 = vadd.f32 %v247, %v682
      %v684 = vpop.f32.mrf.mxu0
      %685 = vmatprep.mubr.f32.mxu0 0.0
      %686 = vmatmul.mubr.f32.gmra.mxu0 %v356
      %v687 = vpop.f32.mrf.mxu0
      %v688 = vadd.f32 %v247, %v687
      %v689 = vpop.f32.mrf.mxu0
      %690 = vmatprep.mubr.f32.mxu0 0.0
      %691 = vmatmul.mubr.f32.gmra.mxu0 %v359
      %v692 = vpop.f32.mrf.mxu0
      %v693 = vadd.f32 %v247, %v692
      %v694 = vpop.f32.mrf.mxu0
      %695 = vmatprep.mubr.f32.mxu0 0.0
      %696 = vmatmul.mubr.f32.gmra.mxu0 %v362
      %v697 = vpop.f32.mrf.mxu0
      %v698 = vadd.f32 %v247, %v697
      %v699 = vpop.f32.mrf.mxu0
      %700 = vmatprep.mubr.f32.mxu0 0.0
      %701 = vmatmul.mubr.f32.gmra.mxu0 %v365
      %v702 = vpop.f32.mrf.mxu0
      %v703 = vadd.f32 %v247, %v702
      %v704 = vpop.f32.mrf.mxu0
      %705 = vmatprep.mubr.f32.mxu0 0.0
      %706 = vmatmul.mubr.f32.gmra.mxu0 %v368
      %v707 = vpop.f32.mrf.mxu0
      %v708 = vadd.f32 %v247, %v707
      %v709 = vpop.f32.mrf.mxu0
      %710 = vmatprep.mubr.f32.mxu0 0.0
      %711 = vmatmul.mubr.f32.gmra.mxu0 %v371
      %v712 = vpop.f32.mrf.mxu0
      %v713 = vadd.f32 %v247, %v712
      %v714 = vpop.f32.mrf.mxu0
      %715 = vmatprep.mubr.f32.mxu0 0.0
      %716 = vmatmul.mubr.f32.gmra.mxu0 %v374
      %v717 = vpop.f32.mrf.mxu0
      %v718 = vadd.f32 %v247, %v717
      %v719 = vpop.f32.mrf.mxu0
      %720 = vmatprep.mubr.f32.mxu0 0.0
      %721 = vmatmul.mubr.f32.gmra.mxu0 %v377
      %v722 = vpop.f32.mrf.mxu0
      %v723 = vadd.f32 %v247, %v722
      %v724 = vpop.f32.mrf.mxu0
      %725 = vmatprep.mubr.f32.mxu0 0.0
      %726 = vmatmul.mubr.f32.gmra.mxu0 %v380
      %v727 = vpop.f32.mrf.mxu0
      %v728 = vadd.f32 %v247, %v727
      %v729 = vpop.f32.mrf.mxu0
      %730 = vmatprep.mubr.f32.mxu0 0.0
      %731 = vmatmul.mubr.f32.gmra.mxu0 %v383
      %v732 = vpop.f32.mrf.mxu0
      %v733 = vadd.f32 %v247, %v732
      %v734 = vpop.f32.mrf.mxu0
      %735 = vmatprep.mubr.f32.mxu0 0.0
      %736 = vmatmul.mubr.f32.gmra.mxu0 %v386
      %v737 = vpop.f32.mrf.mxu0
      %v738 = vadd.f32 %v247, %v737
      %v739 = vpop.f32.mrf.mxu0
      %740 = vmatprep.mubr.f32.mxu0 0.0
      %741 = vmatmul.mubr.f32.gmra.mxu0 %v389
      %v742 = vpop.f32.mrf.mxu0
      %v743 = vadd.f32 %v247, %v742
      %v744 = vpop.f32.mrf.mxu0
      %745 = vmatprep.mubr.f32.mxu0 0.0
      %746 = vmatmul.mubr.f32.gmra.mxu0 %v392
      %v747 = vpop.f32.mrf.mxu0
      %v748 = vadd.f32 %v247, %v747
      %v749 = vpop.f32.mrf.mxu0
      %750 = vmatprep.mubr.f32.mxu0 0.0
      %751 = vmatmul.mubr.f32.gmra.mxu0 %v395
      %v752 = vpop.f32.mrf.mxu0
      %v753 = vadd.f32 %v247, %v752
      %v754 = vpop.f32.mrf.mxu0
      %755 = vmatprep.mubr.f32.mxu0 0.0
      %756 = vmatmul.mubr.f32.gmra.mxu0 %v398
      %v757 = vpop.f32.mrf.mxu0
      %v758 = vadd.f32 %v247, %v757
      %v759 = vpop.f32.mrf.mxu0
      %760 = vmatprep.mubr.f32.mxu0 0.0
      %761 = vmatmul.mubr.f32.gmra.mxu0 %v401
      %v762 = vpop.f32.mrf.mxu0
      %v763 = vadd.f32 %v247, %v762
      %v764 = vpop.f32.mrf.mxu0
      %765 = vmatprep.mubr.f32.mxu0 0.0
      %766 = vmatmul.mubr.f32.gmra.mxu0 %v404
      %v767 = vpop.f32.mrf.mxu0
      %v768 = vadd.f32 %v247, %v767
      %v769 = vpop.f32.mrf.mxu0
      %770 = vmatprep.mubr.f32.mxu0 0.0
      %771 = vmatmul.mubr.f32.gmra.mxu0 %v407
      %v772 = vpop.f32.mrf.mxu0
      %v773 = vadd.f32 %v247, %v772
      %v774 = vpop.f32.mrf.mxu0
      %775 = vmatprep.mubr.f32.mxu0 0.0
      %776 = vmatmul.mubr.f32.gmra.mxu0 %v410
      %v777 = vpop.f32.mrf.mxu0
      %v778 = vadd.f32 %v247, %v777
      %v779 = vpop.f32.mrf.mxu0
      %780 = vmatprep.mubr.f32.mxu0 0.0
      %781 = vmatmul.mubr.f32.gmra.mxu0 %v413
      %v782 = vpop.f32.mrf.mxu0
      %v783 = vadd.f32 %v247, %v782
      %v784 = vpop.f32.mrf.mxu0
      %785 = vmatprep.mubr.f32.mxu0 0.0
      %786 = vmatmul.mubr.f32.gmra.mxu0 %v416
      %v787 = vpop.f32.mrf.mxu0
      %v788 = vadd.f32 %v247, %v787
      %v789 = vpop.f32.mrf.mxu0
      %790 = vmatprep.mubr.f32.mxu0 0.0
      %791 = vmatmul.mubr.f32.gmra.mxu0 %v419
      %v792 = vpop.f32.mrf.mxu0
      %v793 = vadd.f32 %v247, %v792
      %v794 = vpop.f32.mrf.mxu0
      %795 = vmatprep.mubr.f32.mxu0 0.0
      %796 = vmatmul.mubr.f32.gmra.mxu0 %v422
      %v797 = vpop.f32.mrf.mxu0
      %v798 = vadd.f32 %v247, %v797
      %v799 = vpop.f32.mrf.mxu0
      %800 = vmatprep.mubr.f32.mxu0 0.0
      %801 = vmatmul.mubr.f32.gmra.mxu0 %v425
      %v802 = vpop.f32.mrf.mxu0
      %v803 = vadd.f32 %v247, %v802
      %v804 = vpop.f32.mrf.mxu0
      %805 = vmatprep.mubr.f32.mxu0 0.0
      %806 = vmatmul.mubr.f32.gmra.mxu0 %v428
      %v807 = vpop.f32.mrf.mxu0
      %v808 = vadd.f32 %v247, %v807
      %v809 = vpop.f32.mrf.mxu0
      %810 = vmatprep.mubr.f32.mxu0 0.0
      %811 = vmatmul.mubr.f32.gmra.mxu0 %v431
      %v812 = vpop.f32.mrf.mxu0
      %v813 = vadd.f32 %v247, %v812
      %v814 = vpop.f32.mrf.mxu0
      %815 = vmatprep.mubr.f32.mxu0 0.0
      %816 = vmatmul.mubr.f32.gmra.mxu0 %v434
      %v817 = vpop.f32.mrf.mxu0
      %v818 = vadd.f32 %v247, %v817
      %v819 = vpop.f32.mrf.mxu0
      %820 = vmatprep.mubr.f32.mxu0 0.0
      %821 = vmatmul.mubr.f32.gmra.mxu0 %v437
      %v822 = vpop.f32.mrf.mxu0
      %v823 = vadd.f32 %v247, %v822
      %v824 = vpop.f32.mrf.mxu0
      %825 = vmatprep.mubr.f32.mxu0 0.0
      %826 = vmatmul.mubr.f32.gmra.mxu0 %v440
      %v827 = vpop.f32.mrf.mxu0
      %v828 = vadd.f32 %v247, %v827
      %v829 = vpop.f32.mrf.mxu0
      %830 = vdwg.mxu0
      %v831 = vmax.f32 %v513, 0.0
      %v832 = vmax.f32 %v518, 0.0
      %v833 = vmax.f32 %v523, 0.0
      %v834 = vmax.f32 %v528, 0.0
      %v835 = vmax.f32 %v533, 0.0
      %v836 = vmax.f32 %v538, 0.0
      %v837 = vmax.f32 %v543, 0.0
      %v838 = vmax.f32 %v548, 0.0
      %v839 = vmax.f32 %v553, 0.0
      %v840 = vmax.f32 %v558, 0.0
      %v841 = vmax.f32 %v563, 0.0
      %v842 = vmax.f32 %v568, 0.0
      %v843 = vmax.f32 %v573, 0.0
      %v844 = vmax.f32 %v578, 0.0
      %v845 = vmax.f32 %v583, 0.0
      %v846 = vmax.f32 %v588, 0.0
      %v847 = vmax.f32 %v593, 0.0
      %v848 = vmax.f32 %v598, 0.0
      %v849 = vmax.f32 %v603, 0.0
      %v850 = vmax.f32 %v608, 0.0
      %v851 = vmax.f32 %v613, 0.0
      %v852 = vmax.f32 %v618, 0.0
      %v853 = vmax.f32 %v623, 0.0
      %v854 = vmax.f32 %v628, 0.0
      %v855 = vmax.f32 %v633, 0.0
      %v856 = vmax.f32 %v638, 0.0
      %v857 = vmax.f32 %v643, 0.0
      %v858 = vmax.f32 %v648, 0.0
      %v859 = vmax.f32 %v653, 0.0
      %v860 = vmax.f32 %v658, 0.0
      %v861 = vmax.f32 %v663, 0.0
      %v862 = vmax.f32 %v668, 0.0
      %v863 = vmax.f32 %v673, 0.0
      %v864 = vmax.f32 %v678, 0.0
      %v865 = vmax.f32 %v683, 0.0
      %v866 = vmax.f32 %v688, 0.0
      %v867 = vmax.f32 %v693, 0.0
      %v868 = vmax.f32 %v698, 0.0
      %v869 = vmax.f32 %v703, 0.0
      %v870 = vmax.f32 %v708, 0.0
      %v871 = vmax.f32 %v713, 0.0
      %v872 = vmax.f32 %v718, 0.0
      %v873 = vmax.f32 %v723, 0.0
      %v874 = vmax.f32 %v728, 0.0
      %v875 = vmax.f32 %v733, 0.0
      %v876 = vmax.f32 %v738, 0.0
      %v877 = vmax.f32 %v743, 0.0
      %v878 = vmax.f32 %v748, 0.0
      %v879 = vmax.f32 %v753, 0.0
      %v880 = vmax.f32 %v758, 0.0
      %v881 = vmax.f32 %v763, 0.0
      %v882 = vmax.f32 %v768, 0.0
      %v883 = vmax.f32 %v773, 0.0
      %v884 = vmax.f32 %v778, 0.0
      %v885 = vmax.f32 %v783, 0.0
      %v886 = vmax.f32 %v788, 0.0
      %v887 = vmax.f32 %v793, 0.0
      %v888 = vmax.f32 %v798, 0.0
      %v889 = vmax.f32 %v803, 0.0
      %v890 = vmax.f32 %v808, 0.0
      %v891 = vmax.f32 %v813, 0.0
      %v892 = vmax.f32 %v818, 0.0
      %v893 = vmax.f32 %v823, 0.0
      %v894 = vmax.f32 %v828, 0.0
      %vm895 = vcmask 64512
      %896 = vst.msk [vmem:[%s172] sm:$0xff] %vm895, %v831
      %897 = vst.msk [vmem:[%s172 + $0x8] sm:$0xff] %vm895, %v832
      %898 = vst.msk [vmem:[%s172 + $0x10] sm:$0xff] %vm895, %v833
      %899 = vst.msk [vmem:[%s172 + $0x18] sm:$0xff] %vm895, %v834
      %900 = vst.msk [vmem:[%s172 + $0x20] sm:$0xff] %vm895, %v835
      %901 = vst.msk [vmem:[%s172 + $0x28] sm:$0xff] %vm895, %v836
      %902 = vst.msk [vmem:[%s172 + $0x30] sm:$0xff] %vm895, %v837
      %903 = vst.msk [vmem:[%s172 + $0x38] sm:$0xff] %vm895, %v838
      %904 = vst.msk [vmem:[%s172 + $0x40] sm:$0xff] %vm895, %v839
      %905 = vst.msk [vmem:[%s172 + $0x48] sm:$0xff] %vm895, %v840
      %906 = vst.msk [vmem:[%s172 + $0x50] sm:$0xff] %vm895, %v841
      %907 = vst.msk [vmem:[%s172 + $0x58] sm:$0xff] %vm895, %v842
      %908 = vst.msk [vmem:[%s172 + $0x60] sm:$0xff] %vm895, %v843
      %909 = vst.msk [vmem:[%s172 + $0x68] sm:$0xff] %vm895, %v844
      %910 = vst.msk [vmem:[%s172 + $0x70] sm:$0xff] %vm895, %v845
      %911 = vst.msk [vmem:[%s172 + $0x78] sm:$0xff] %vm895, %v846
      %912 = vst.msk [vmem:[%s172 + $0x80] sm:$0xff] %vm895, %v847
      %913 = vst.msk [vmem:[%s172 + $0x88] sm:$0xff] %vm895, %v848
      %914 = vst.msk [vmem:[%s172 + $0x90] sm:$0xff] %vm895, %v849
      %915 = vst.msk [vmem:[%s172 + $0x98] sm:$0xff] %vm895, %v850
      %916 = vst.msk [vmem:[%s172 + $0xa0] sm:$0xff] %vm895, %v851
      %917 = vst.msk [vmem:[%s172 + $0xa8] sm:$0xff] %vm895, %v852
      %918 = vst.msk [vmem:[%s172 + $0xb0] sm:$0xff] %vm895, %v853
      %919 = vst.msk [vmem:[%s172 + $0xb8] sm:$0xff] %vm895, %v854
      %920 = vst.msk [vmem:[%s172 + $0xc0] sm:$0xff] %vm895, %v855
      %921 = vst.msk [vmem:[%s172 + $0xc8] sm:$0xff] %vm895, %v856
      %922 = vst.msk [vmem:[%s172 + $0xd0] sm:$0xff] %vm895, %v857
      %923 = vst.msk [vmem:[%s172 + $0xd8] sm:$0xff] %vm895, %v858
      %924 = vst.msk [vmem:[%s172 + $0xe0] sm:$0xff] %vm895, %v859
      %925 = vst.msk [vmem:[%s172 + $0xe8] sm:$0xff] %vm895, %v860
      %926 = vst.msk [vmem:[%s172 + $0xf0] sm:$0xff] %vm895, %v861
      %927 = vst.msk [vmem:[%s172 + $0xf8] sm:$0xff] %vm895, %v862
      %928 = vst.msk [vmem:[%s172 + $0x100] sm:$0xff] %vm895, %v863
      %929 = vst.msk [vmem:[%s172 + $0x108] sm:$0xff] %vm895, %v864
      %930 = vst.msk [vmem:[%s172 + $0x110] sm:$0xff] %vm895, %v865
      %931 = vst.msk [vmem:[%s172 + $0x118] sm:$0xff] %vm895, %v866
      %932 = vst.msk [vmem:[%s172 + $0x120] sm:$0xff] %vm895, %v867
      %933 = vst.msk [vmem:[%s172 + $0x128] sm:$0xff] %vm895, %v868
      %934 = vst.msk [vmem:[%s172 + $0x130] sm:$0xff] %vm895, %v869
      %935 = vst.msk [vmem:[%s172 + $0x138] sm:$0xff] %vm895, %v870
      %936 = vst.msk [vmem:[%s172 + $0x140] sm:$0xff] %vm895, %v871
      %937 = vst.msk [vmem:[%s172 + $0x148] sm:$0xff] %vm895, %v872
      %938 = vst.msk [vmem:[%s172 + $0x150] sm:$0xff] %vm895, %v873
      %939 = vst.msk [vmem:[%s172 + $0x158] sm:$0xff] %vm895, %v874
      %940 = vst.msk [vmem:[%s172 + $0x160] sm:$0xff] %vm895, %v875
      %941 = vst.msk [vmem:[%s172 + $0x168] sm:$0xff] %vm895, %v876
      %942 = vst.msk [vmem:[%s172 + $0x170] sm:$0xff] %vm895, %v877
      %943 = vst.msk [vmem:[%s172 + $0x178] sm:$0xff] %vm895, %v878
      %944 = vst.msk [vmem:[%s172 + $0x180] sm:$0xff] %vm895, %v879
      %945 = vst.msk [vmem:[%s172 + $0x188] sm:$0xff] %vm895, %v880
      %946 = vst.msk [vmem:[%s172 + $0x190] sm:$0xff] %vm895, %v881
      %947 = vst.msk [vmem:[%s172 + $0x198] sm:$0xff] %vm895, %v882
      %948 = vst.msk [vmem:[%s172 + $0x1a0] sm:$0xff] %vm895, %v883
      %949 = vst.msk [vmem:[%s172 + $0x1a8] sm:$0xff] %vm895, %v884
      %950 = vst.msk [vmem:[%s172 + $0x1b0] sm:$0xff] %vm895, %v885
      %951 = vst.msk [vmem:[%s172 + $0x1b8] sm:$0xff] %vm895, %v886
      %952 = vst.msk [vmem:[%s172 + $0x1c0] sm:$0xff] %vm895, %v887
      %953 = vst.msk [vmem:[%s172 + $0x1c8] sm:$0xff] %vm895, %v888
      %954 = vst.msk [vmem:[%s172 + $0x1d0] sm:$0xff] %vm895, %v889
      %955 = vst.msk [vmem:[%s172 + $0x1d8] sm:$0xff] %vm895, %v890
      %956 = vst.msk [vmem:[%s172 + $0x1e0] sm:$0xff] %vm895, %v891
      %957 = vst.msk [vmem:[%s172 + $0x1e8] sm:$0xff] %vm895, %v892
      %958 = vst.msk [vmem:[%s172 + $0x1f0] sm:$0xff] %vm895, %v893
      %959 = vst.msk [vmem:[%s172 + $0x1f8] sm:$0xff] %vm895, %v894
      %s960 = smul.u32 64, %s14
      %p961 = scmp.lt.s32.totalorder %s960, 255
      %s962 = scalar_select %p961, %s960, 255
      %s963 = smul.addr %s962, 8
      %s964 = scalar_lea.vmem %s3, %s963
      // Predicated region
      $region33: #{hybrid_transformer_forward.4} parent=31 // pred_check
        %p965 = pneg %p100
      $region34: #{hybrid_transformer_forward.4} parent=31 // pred_check_branch
        %967 = sbr.rel (%p965) target = $region36
      $region35: #{hybrid_transformer_forward.4} parent=31 // pred_region
        %s968 = smul.u32 64, %s14
      $region36: #{hybrid_transformer_forward.4} parent=31 // pred_fallthru
        _
    $region32: #{hybrid_transformer_forward.4} parent=5 // pred_fallthru
      _
    %p969 = scmp.le.s32.totalorder 2, %s9
    // Predicated region
    $region37: #{hybrid_transformer_forward.4} parent=5 // pred_check
      %p970 = pneg %p969
    $region38: #{hybrid_transformer_forward.4} parent=5 // pred_check_branch
      %972 = sbr.rel (%p970) target = $region40
    $region39: #{hybrid_transformer_forward.4} parent=5 // pred_region
      %s973 = ssub.s32 %s9, 2
      // Predicated region
      $region41: #{hybrid_transformer_forward.4} parent=39 // pred_check
        %p974 = pneg %p106
      $region42: #{hybrid_transformer_forward.4} parent=39 // pred_check_branch
        %976 = sbr.rel (%p974) target = $region44
      $region43: #{hybrid_transformer_forward.4} parent=39 // pred_region
        %s977 = smul.u32 64, %s15
        %p978 = scmp.lt.s32.totalorder %s977, 255
        %s979 = scalar_select %p978, %s977, 255
        %s980 = smul.addr %s979, 8
        %s981 = scalar_lea.vmem %s3, %s980
      $region44: #{hybrid_transformer_forward.4} parent=39 // pred_fallthru
        _
    $region40: #{hybrid_transformer_forward.4} parent=5 // pred_fallthru
      _
  $region6: #{hybrid_transformer_forward.4} parent=0 // loop_footer
    %s13 = sadd.s32 1, %s9
  $region7: #{hybrid_transformer_forward.4} parent=0 // loop_footer_branch
    %8 = sbr.rel target = $region3
  $region8: #{hybrid_transformer_forward.4} parent=0 // loop_exit
    _

// kernel: hybrid_transformer_forward.5
$region0: #{hybrid_transformer_forward.5}
  #allocation0 [shape = 'u32[]', space=smem, size = 0x4, offset = 0x4, fixed_abs, tag = 'smem constant byte address 0x4 - core index']
  #allocation1 [shape = 'u32[144,128]{1,0:T(1,128)}', space=vmem, size = 0x12000, scoped, tag = 'internal scratch']
  %s0 = inlined_call_operand.vmem [shape: f32[512,72], index: 0, kind: input, shape index: {}]
  %s1 = inlined_call_operand.vmem [shape: f32[72,16], index: 1, kind: input, shape index: {}]
  %s2 = inlined_call_operand.vmem [shape: f32[1,16], index: 2, kind: input, shape index: {}]
  %s3 = inlined_call_operand.vmem [shape: f32[512,16], index: 3, kind: output, shape index: {}]
  %s4 = sld [smem:[#allocation0]]
  $region22: #{hybrid_transformer_forward.5} parent=0
    _
  %s6 = ssub.s32 1, %s4
  %s7 = scalar_select 0, %s6, %s4
  // Predicated region
  $region2: #{hybrid_transformer_forward.5} parent=0 // pred_check
    _
  $region3: #{hybrid_transformer_forward.5} parent=0 // pred_check_branch
    %9 = sbr.rel (0) target = $region5
  $region4: #{hybrid_transformer_forward.5} parent=0 // pred_region
    _
  $region5: #{hybrid_transformer_forward.5} parent=0 // pred_fallthru
    _
  // Predicated region
  $region6: #{hybrid_transformer_forward.5} parent=0 // pred_check
    _
  $region7: #{hybrid_transformer_forward.5} parent=0 // pred_check_branch
    %11 = sbr.rel (0) target = $region9
  $region8: #{hybrid_transformer_forward.5} parent=0 // pred_region
    _
  $region9: #{hybrid_transformer_forward.5} parent=0 // pred_fallthru
    _
  // Predicated region
  $region10: #{hybrid_transformer_forward.5} parent=0 // pred_check
    _
  $region11: #{hybrid_transformer_forward.5} parent=0 // pred_check_branch
    %13 = sbr.rel (0) target = $region13
  $region12: #{hybrid_transformer_forward.5} parent=0 // pred_region
    _
  $region13: #{hybrid_transformer_forward.5} parent=0 // pred_fallthru
    _
  %v14 = vld [vmem:[%s0] sm:$0xff]
  %v15 = vld [vmem:[%s0 + $0x8] sm:$0xff]
  %v16 = vld [vmem:[%s0 + $0x10] sm:$0xff]
  %v17 = vld [vmem:[%s0 + $0x18] sm:$0xff]
  %v18 = vld [vmem:[%s0 + $0x20] sm:$0xff]
  %v19 = vld [vmem:[%s0 + $0x28] sm:$0xff]
  %v20 = vld [vmem:[%s0 + $0x30] sm:$0xff]
  %v21 = vld [vmem:[%s0 + $0x38] sm:$0xff]
  %v22 = vld [vmem:[%s0 + $0x40] sm:$0xff]
  %v23 = vld [vmem:[%s0 + $0x48] sm:$0xff]
  %v24 = vld [vmem:[%s0 + $0x50] sm:$0xff]
  %v25 = vld [vmem:[%s0 + $0x58] sm:$0xff]
  %v26 = vld [vmem:[%s0 + $0x60] sm:$0xff]
  %v27 = vld [vmem:[%s0 + $0x68] sm:$0xff]
  %v28 = vld [vmem:[%s0 + $0x70] sm:$0xff]
  %v29 = vld [vmem:[%s0 + $0x78] sm:$0xff]
  %v30 = vld [vmem:[%s0 + $0x80] sm:$0xff]
  %v31 = vld [vmem:[%s0 + $0x88] sm:$0xff]
  %v32 = vld [vmem:[%s0 + $0x90] sm:$0xff]
  %v33 = vld [vmem:[%s0 + $0x98] sm:$0xff]
  %v34 = vld [vmem:[%s0 + $0xa0] sm:$0xff]
  %v35 = vld [vmem:[%s0 + $0xa8] sm:$0xff]
  %v36 = vld [vmem:[%s0 + $0xb0] sm:$0xff]
  %v37 = vld [vmem:[%s0 + $0xb8] sm:$0xff]
  %v38 = vld [vmem:[%s0 + $0xc0] sm:$0xff]
  %v39 = vld [vmem:[%s0 + $0xc8] sm:$0xff]
  %v40 = vld [vmem:[%s0 + $0xd0] sm:$0xff]
  %v41 = vld [vmem:[%s0 + $0xd8] sm:$0xff]
  %v42 = vld [vmem:[%s0 + $0xe0] sm:$0xff]
  %v43 = vld [vmem:[%s0 + $0xe8] sm:$0xff]
  %v44 = vld [vmem:[%s0 + $0xf0] sm:$0xff]
  %v45 = vld [vmem:[%s0 + $0xf8] sm:$0xff]
  %v46 = vld [vmem:[%s0 + $0x100] sm:$0xff]
  %v47 = vld [vmem:[%s0 + $0x108] sm:$0xff]
  %v48 = vld [vmem:[%s0 + $0x110] sm:$0xff]
  %v49 = vld [vmem:[%s0 + $0x118] sm:$0xff]
  %v50 = vld [vmem:[%s0 + $0x120] sm:$0xff]
  %v51 = vld [vmem:[%s0 + $0x128] sm:$0xff]
  %v52 = vld [vmem:[%s0 + $0x130] sm:$0xff]
  %v53 = vld [vmem:[%s0 + $0x138] sm:$0xff]
  %v54 = vld [vmem:[%s0 + $0x140] sm:$0xff]
  %v55 = vld [vmem:[%s0 + $0x148] sm:$0xff]
  %v56 = vld [vmem:[%s0 + $0x150] sm:$0xff]
  %v57 = vld [vmem:[%s0 + $0x158] sm:$0xff]
  %v58 = vld [vmem:[%s0 + $0x160] sm:$0xff]
  %v59 = vld [vmem:[%s0 + $0x168] sm:$0xff]
  %v60 = vld [vmem:[%s0 + $0x170] sm:$0xff]
  %v61 = vld [vmem:[%s0 + $0x178] sm:$0xff]
  %v62 = vld [vmem:[%s0 + $0x180] sm:$0xff]
  %v63 = vld [vmem:[%s0 + $0x188] sm:$0xff]
  %v64 = vld [vmem:[%s0 + $0x190] sm:$0xff]
  %v65 = vld [vmem:[%s0 + $0x198] sm:$0xff]
  %v66 = vld [vmem:[%s0 + $0x1a0] sm:$0xff]
  %v67 = vld [vmem:[%s0 + $0x1a8] sm:$0xff]
  %v68 = vld [vmem:[%s0 + $0x1b0] sm:$0xff]
  %v69 = vld [vmem:[%s0 + $0x1b8] sm:$0xff]
  %v70 = vld [vmem:[%s0 + $0x1c0] sm:$0xff]
  %v71 = vld [vmem:[%s0 + $0x1c8] sm:$0xff]
  %v72 = vld [vmem:[%s0 + $0x1d0] sm:$0xff]
  %v73 = vld [vmem:[%s0 + $0x1d8] sm:$0xff]
  %v74 = vld [vmem:[%s0 + $0x1e0] sm:$0xff]
  %v75 = vld [vmem:[%s0 + $0x1e8] sm:$0xff]
  %v76 = vld [vmem:[%s0 + $0x1f0] sm:$0xff]
  %v77 = vld [vmem:[%s0 + $0x1f8] sm:$0xff]
  %v78 = vld [vmem:[%s1] sm:$0xff]
  %v79 = vld [vmem:[%s1 + $0x8] sm:$0xff]
  %v80 = vld [vmem:[%s1 + $0x10] sm:$0xff]
  %v81 = vld [vmem:[%s1 + $0x18] sm:$0xff]
  %v82 = vld [vmem:[%s1 + $0x20] sm:$0xff]
  %v83 = vld [vmem:[%s1 + $0x28] sm:$0xff]
  %v84 = vld [vmem:[%s1 + $0x30] sm:$0xff]
  %v85 = vld [vmem:[%s1 + $0x38] sm:$0xff]
  %v86 = vld [vmem:[%s1 + $0x40] sm:$0xff]
  %v87 = vld [vmem:[%s2] sm:$0x1]
  %v89 = vlaneseq
  %v90 = vshrl.u32 %v89, 7
  %v91 = vsub.s32 0, %v90
  %v92 = vrot.slane %v87, %v91
  %vm94 = vcmask 588800
  %v96 = vsel %vm94, %v14, 0
  %v99 = vsel %vm94, %v15, 0
  %v102 = vsel %vm94, %v16, 0
  %v105 = vsel %vm94, %v17, 0
  %v108 = vsel %vm94, %v18, 0
  %v111 = vsel %vm94, %v19, 0
  %v114 = vsel %vm94, %v20, 0
  %v117 = vsel %vm94, %v21, 0
  %v120 = vsel %vm94, %v22, 0
  %v123 = vsel %vm94, %v23, 0
  %v126 = vsel %vm94, %v24, 0
  %v129 = vsel %vm94, %v25, 0
  %v132 = vsel %vm94, %v26, 0
  %v135 = vsel %vm94, %v27, 0
  %v138 = vsel %vm94, %v28, 0
  %v141 = vsel %vm94, %v29, 0
  %v144 = vsel %vm94, %v30, 0
  %v147 = vsel %vm94, %v31, 0
  %v150 = vsel %vm94, %v32, 0
  %v153 = vsel %vm94, %v33, 0
  %v156 = vsel %vm94, %v34, 0
  %v159 = vsel %vm94, %v35, 0
  %v162 = vsel %vm94, %v36, 0
  %v165 = vsel %vm94, %v37, 0
  %v168 = vsel %vm94, %v38, 0
  %v171 = vsel %vm94, %v39, 0
  %v174 = vsel %vm94, %v40, 0
  %v177 = vsel %vm94, %v41, 0
  %v180 = vsel %vm94, %v42, 0
  %v183 = vsel %vm94, %v43, 0
  %v186 = vsel %vm94, %v44, 0
  %v189 = vsel %vm94, %v45, 0
  %v192 = vsel %vm94, %v46, 0
  %v195 = vsel %vm94, %v47, 0
  %v198 = vsel %vm94, %v48, 0
  %v201 = vsel %vm94, %v49, 0
  %v204 = vsel %vm94, %v50, 0
  %v207 = vsel %vm94, %v51, 0
  %v210 = vsel %vm94, %v52, 0
  %v213 = vsel %vm94, %v53, 0
  %v216 = vsel %vm94, %v54, 0
  %v219 = vsel %vm94, %v55, 0
  %v222 = vsel %vm94, %v56, 0
  %v225 = vsel %vm94, %v57, 0
  %v228 = vsel %vm94, %v58, 0
  %v231 = vsel %vm94, %v59, 0
  %v234 = vsel %vm94, %v60, 0
  %v237 = vsel %vm94, %v61, 0
  %v240 = vsel %vm94, %v62, 0
  %v243 = vsel %vm94, %v63, 0
  %v246 = vsel %vm94, %v64, 0
  %v249 = vsel %vm94, %v65, 0
  %v252 = vsel %vm94, %v66, 0
  %v255 = vsel %vm94, %v67, 0
  %v258 = vsel %vm94, %v68, 0
  %v261 = vsel %vm94, %v69, 0
  %v264 = vsel %vm94, %v70, 0
  %v267 = vsel %vm94, %v71, 0
  %v270 = vsel %vm94, %v72, 0
  %v273 = vsel %vm94, %v73, 0
  %v276 = vsel %vm94, %v74, 0
  %v279 = vsel %vm94, %v75, 0
  %v282 = vsel %vm94, %v76, 0
  %v285 = vsel %vm94, %v77, 0
  %287 = vmatprep.subr.mxu0 0.0
  %288 = vmatpush1.msra.mxu0 0.0
  %289 = vmatprep.subr.mxu0 0.0
  %290 = vmatpush1.msra.mxu0 0.0
  %291 = vmatprep.subr.mxu0 0.0
  %292 = vmatpush1.msra.mxu0 0.0
  %293 = vmatprep.subr.mxu0 0.0
  %294 = vmatpush1.msra.mxu0 0.0
  %295 = vmatprep.subr.mxu0 0.0
  %296 = vmatpush1.msra.mxu0 0.0
  %297 = vmatprep.subr.mxu0 0.0
  %298 = vmatpush1.msra.mxu0 0.0
  %299 = vmatprep.subr.mxu0 0.0
  %300 = vmatpush1.msra.mxu0 0.0
  %301 = vmatprep.subr.mxu0 0.0
  %302 = vmatpush1.msra.mxu0 %v86
  %303 = vmatprep.subr.mxu0 0.0
  %304 = vmatpush1.msra.mxu0 %v85
  %305 = vmatprep.subr.mxu0 0.0
  %306 = vmatpush1.msra.mxu0 %v84
  %307 = vmatprep.subr.mxu0 0.0
  %308 = vmatpush1.msra.mxu0 %v83
  %309 = vmatprep.subr.mxu0 0.0
  %310 = vmatpush1.msra.mxu0 %v82
  %311 = vmatprep.subr.mxu0 0.0
  %312 = vmatpush1.msra.mxu0 %v81
  %313 = vmatprep.subr.mxu0 0.0
  %314 = vmatpush1.msra.mxu0 %v80
  %315 = vmatprep.subr.mxu0 0.0
  %316 = vmatpush1.msra.mxu0 %v79
  %317 = vmatprep.subr.mxu0 0.0
  %318 = vmatpush1.msra.mxu0 %v78
  %319 = vmatprep.subr.mxu0 0.0
  %320 = vmatpush2.msra.mxu0 0.0
  %321 = vmatprep.subr.mxu0 0.0
  %322 = vmatpush2.msra.mxu0 0.0
  %323 = vmatprep.subr.mxu0 0.0
  %324 = vmatpush2.msra.mxu0 0.0
  %325 = vmatprep.subr.mxu0 0.0
  %326 = vmatpush2.msra.mxu0 0.0
  %327 = vmatprep.subr.mxu0 0.0
  %328 = vmatpush2.msra.mxu0 0.0
  %329 = vmatprep.subr.mxu0 0.0
  %330 = vmatpush2.msra.mxu0 0.0
  %331 = vmatprep.subr.mxu0 0.0
  %332 = vmatpush2.msra.mxu0 0.0
  %333 = vmatprep.subr.mxu0 0.0
  %334 = vmatpush2.msra.mxu0 0.0
  %335 = vmatprep.subr.mxu0 0.0
  %336 = vmatpush2.msra.mxu0 0.0
  %337 = vmatprep.subr.mxu0 0.0
  %338 = vmatpush2.msra.mxu0 0.0
  %339 = vmatprep.subr.mxu0 0.0
  %340 = vmatpush2.msra.mxu0 0.0
  %341 = vmatprep.subr.mxu0 0.0
  %342 = vmatpush2.msra.mxu0 0.0
  %343 = vmatprep.subr.mxu0 0.0
  %344 = vmatpush2.msra.mxu0 0.0
  %345 = vmatprep.subr.mxu0 0.0
  %346 = vmatpush2.msra.mxu0 0.0
  %347 = vmatprep.subr.mxu0 0.0
  %348 = vmatpush2.msra.mxu0 0.0
  %349 = vmatprep.subr.mxu0 0.0
  %350 = vmatpush2.msra.mxu0 0.0
  %351 = vmatprep.mubr.f32.mxu0 0.0
  %352 = vmatmul.mubr.f32.gmra.mxu0 %v96
  %v353 = vpop.f32.mrf.mxu0
  %v354 = vadd.f32 %v92, %v353
  %v355 = vpop.f32.mrf.mxu0
  %356 = vmatprep.mubr.f32.mxu0 0.0
  %357 = vmatmul.mubr.f32.gmra.mxu0 %v99
  %v358 = vpop.f32.mrf.mxu0
  %v359 = vadd.f32 %v92, %v358
  %v360 = vpop.f32.mrf.mxu0
  %361 = vmatprep.mubr.f32.mxu0 0.0
  %362 = vmatmul.mubr.f32.gmra.mxu0 %v102
  %v363 = vpop.f32.mrf.mxu0
  %v364 = vadd.f32 %v92, %v363
  %v365 = vpop.f32.mrf.mxu0
  %366 = vmatprep.mubr.f32.mxu0 0.0
  %367 = vmatmul.mubr.f32.gmra.mxu0 %v105
  %v368 = vpop.f32.mrf.mxu0
  %v369 = vadd.f32 %v92, %v368
  %v370 = vpop.f32.mrf.mxu0
  %371 = vmatprep.mubr.f32.mxu0 0.0
  %372 = vmatmul.mubr.f32.gmra.mxu0 %v108
  %v373 = vpop.f32.mrf.mxu0
  %v374 = vadd.f32 %v92, %v373
  %v375 = vpop.f32.mrf.mxu0
  %376 = vmatprep.mubr.f32.mxu0 0.0
  %377 = vmatmul.mubr.f32.gmra.mxu0 %v111
  %v378 = vpop.f32.mrf.mxu0
  %v379 = vadd.f32 %v92, %v378
  %v380 = vpop.f32.mrf.mxu0
  %381 = vmatprep.mubr.f32.mxu0 0.0
  %382 = vmatmul.mubr.f32.gmra.mxu0 %v114
  %v383 = vpop.f32.mrf.mxu0
  %v384 = vadd.f32 %v92, %v383
  %v385 = vpop.f32.mrf.mxu0
  %386 = vmatprep.mubr.f32.mxu0 0.0
  %387 = vmatmul.mubr.f32.gmra.mxu0 %v117
  %v388 = vpop.f32.mrf.mxu0
  %v389 = vadd.f32 %v92, %v388
  %v390 = vpop.f32.mrf.mxu0
  %391 = vmatprep.mubr.f32.mxu0 0.0
  %392 = vmatmul.mubr.f32.gmra.mxu0 %v120
  %v393 = vpop.f32.mrf.mxu0
  %v394 = vadd.f32 %v92, %v393
  %v395 = vpop.f32.mrf.mxu0
  %396 = vmatprep.mubr.f32.mxu0 0.0
  %397 = vmatmul.mubr.f32.gmra.mxu0 %v123
  %v398 = vpop.f32.mrf.mxu0
  %v399 = vadd.f32 %v92, %v398
  %v400 = vpop.f32.mrf.mxu0
  %401 = vmatprep.mubr.f32.mxu0 0.0
  %402 = vmatmul.mubr.f32.gmra.mxu0 %v126
  %v403 = vpop.f32.mrf.mxu0
  %v404 = vadd.f32 %v92, %v403
  %v405 = vpop.f32.mrf.mxu0
  %406 = vmatprep.mubr.f32.mxu0 0.0
  %407 = vmatmul.mubr.f32.gmra.mxu0 %v129
  %v408 = vpop.f32.mrf.mxu0
  %v409 = vadd.f32 %v92, %v408
  %v410 = vpop.f32.mrf.mxu0
  %411 = vmatprep.mubr.f32.mxu0 0.0
  %412 = vmatmul.mubr.f32.gmra.mxu0 %v132
  %v413 = vpop.f32.mrf.mxu0
  %v414 = vadd.f32 %v92, %v413
  %v415 = vpop.f32.mrf.mxu0
  %416 = vmatprep.mubr.f32.mxu0 0.0
  %417 = vmatmul.mubr.f32.gmra.mxu0 %v135
  %v418 = vpop.f32.mrf.mxu0
  %v419 = vadd.f32 %v92, %v418
  %v420 = vpop.f32.mrf.mxu0
  %421 = vmatprep.mubr.f32.mxu0 0.0
  %422 = vmatmul.mubr.f32.gmra.mxu0 %v138
  %v423 = vpop.f32.mrf.mxu0
  %v424 = vadd.f32 %v92, %v423
  %v425 = vpop.f32.mrf.mxu0
  %426 = vmatprep.mubr.f32.mxu0 0.0
  %427 = vmatmul.mubr.f32.gmra.mxu0 %v141
  %v428 = vpop.f32.mrf.mxu0
  %v429 = vadd.f32 %v92, %v428
  %v430 = vpop.f32.mrf.mxu0
  %431 = vmatprep.mubr.f32.mxu0 0.0
  %432 = vmatmul.mubr.f32.gmra.mxu0 %v144
  %v433 = vpop.f32.mrf.mxu0
  %v434 = vadd.f32 %v92, %v433
  %v435 = vpop.f32.mrf.mxu0
  %436 = vmatprep.mubr.f32.mxu0 0.0
  %437 = vmatmul.mubr.f32.gmra.mxu0 %v147
  %v438 = vpop.f32.mrf.mxu0
  %v439 = vadd.f32 %v92, %v438
  %v440 = vpop.f32.mrf.mxu0
  %441 = vmatprep.mubr.f32.mxu0 0.0
  %442 = vmatmul.mubr.f32.gmra.mxu0 %v150
  %v443 = vpop.f32.mrf.mxu0
  %v444 = vadd.f32 %v92, %v443
  %v445 = vpop.f32.mrf.mxu0
  %446 = vmatprep.mubr.f32.mxu0 0.0
  %447 = vmatmul.mubr.f32.gmra.mxu0 %v153
  %v448 = vpop.f32.mrf.mxu0
  %v449 = vadd.f32 %v92, %v448
  %v450 = vpop.f32.mrf.mxu0
  %451 = vmatprep.mubr.f32.mxu0 0.0
  %452 = vmatmul.mubr.f32.gmra.mxu0 %v156
  %v453 = vpop.f32.mrf.mxu0
  %v454 = vadd.f32 %v92, %v453
  %v455 = vpop.f32.mrf.mxu0
  %456 = vmatprep.mubr.f32.mxu0 0.0
  %457 = vmatmul.mubr.f32.gmra.mxu0 %v159
  %v458 = vpop.f32.mrf.mxu0
  %v459 = vadd.f32 %v92, %v458
  %v460 = vpop.f32.mrf.mxu0
  %461 = vmatprep.mubr.f32.mxu0 0.0
  %462 = vmatmul.mubr.f32.gmra.mxu0 %v162
  %v463 = vpop.f32.mrf.mxu0
  %v464 = vadd.f32 %v92, %v463
  %v465 = vpop.f32.mrf.mxu0
  %466 = vmatprep.mubr.f32.mxu0 0.0
  %467 = vmatmul.mubr.f32.gmra.mxu0 %v165
  %v468 = vpop.f32.mrf.mxu0
  %v469 = vadd.f32 %v92, %v468
  %v470 = vpop.f32.mrf.mxu0
  %471 = vmatprep.mubr.f32.mxu0 0.0
  %472 = vmatmul.mubr.f32.gmra.mxu0 %v168
  %v473 = vpop.f32.mrf.mxu0
  %v474 = vadd.f32 %v92, %v473
  %v475 = vpop.f32.mrf.mxu0
  %476 = vmatprep.mubr.f32.mxu0 0.0
  %477 = vmatmul.mubr.f32.gmra.mxu0 %v171
  %v478 = vpop.f32.mrf.mxu0
  %v479 = vadd.f32 %v92, %v478
  %v480 = vpop.f32.mrf.mxu0
  %481 = vmatprep.mubr.f32.mxu0 0.0
  %482 = vmatmul.mubr.f32.gmra.mxu0 %v174
  %v483 = vpop.f32.mrf.mxu0
  %v484 = vadd.f32 %v92, %v483
  %v485 = vpop.f32.mrf.mxu0
  %486 = vmatprep.mubr.f32.mxu0 0.0
  %487 = vmatmul.mubr.f32.gmra.mxu0 %v177
  %v488 = vpop.f32.mrf.mxu0
  %v489 = vadd.f32 %v92, %v488
  %v490 = vpop.f32.mrf.mxu0
  %491 = vmatprep.mubr.f32.mxu0 0.0
  %492 = vmatmul.mubr.f32.gmra.mxu0 %v180
  %v493 = vpop.f32.mrf.mxu0
  %v494 = vadd.f32 %v92, %v493
  %v495 = vpop.f32.mrf.mxu0
  %496 = vmatprep.mubr.f32.mxu0 0.0
  %497 = vmatmul.mubr.f32.gmra.mxu0 %v183
  %v498 = vpop.f32.mrf.mxu0
  %v499 = vadd.f32 %v92, %v498
  %v500 = vpop.f32.mrf.mxu0
  %501 = vmatprep.mubr.f32.mxu0 0.0
  %502 = vmatmul.mubr.f32.gmra.mxu0 %v186
  %v503 = vpop.f32.mrf.mxu0
  %v504 = vadd.f32 %v92, %v503
  %v505 = vpop.f32.mrf.mxu0
  %506 = vmatprep.mubr.f32.mxu0 0.0
  %507 = vmatmul.mubr.f32.gmra.mxu0 %v189
  %v508 = vpop.f32.mrf.mxu0
  %v509 = vadd.f32 %v92, %v508
  %v510 = vpop.f32.mrf.mxu0
  %511 = vmatprep.mubr.f32.mxu0 0.0
  %512 = vmatmul.mubr.f32.gmra.mxu0 %v192
  %v513 = vpop.f32.mrf.mxu0
  %v514 = vadd.f32 %v92, %v513
  %v515 = vpop.f32.mrf.mxu0
  %516 = vmatprep.mubr.f32.mxu0 0.0
  %517 = vmatmul.mubr.f32.gmra.mxu0 %v195
  %v518 = vpop.f32.mrf.mxu0
  %v519 = vadd.f32 %v92, %v518
  %v520 = vpop.f32.mrf.mxu0
  %521 = vmatprep.mubr.f32.mxu0 0.0
  %522 = vmatmul.mubr.f32.gmra.mxu0 %v198
  %v523 = vpop.f32.mrf.mxu0
  %v524 = vadd.f32 %v92, %v523
  %v525 = vpop.f32.mrf.mxu0
  %526 = vmatprep.mubr.f32.mxu0 0.0
  %527 = vmatmul.mubr.f32.gmra.mxu0 %v201
  %v528 = vpop.f32.mrf.mxu0
  %v529 = vadd.f32 %v92, %v528
  %v530 = vpop.f32.mrf.mxu0
  %531 = vmatprep.mubr.f32.mxu0 0.0
  %532 = vmatmul.mubr.f32.gmra.mxu0 %v204
  %v533 = vpop.f32.mrf.mxu0
  %v534 = vadd.f32 %v92, %v533
  %v535 = vpop.f32.mrf.mxu0
  %536 = vmatprep.mubr.f32.mxu0 0.0
  %537 = vmatmul.mubr.f32.gmra.mxu0 %v207
  %v538 = vpop.f32.mrf.mxu0
  %v539 = vadd.f32 %v92, %v538
  %v540 = vpop.f32.mrf.mxu0
  %541 = vmatprep.mubr.f32.mxu0 0.0
  %542 = vmatmul.mubr.f32.gmra.mxu0 %v210
  %v543 = vpop.f32.mrf.mxu0
  %v544 = vadd.f32 %v92, %v543
  %v545 = vpop.f32.mrf.mxu0
  %546 = vmatprep.mubr.f32.mxu0 0.0
  %547 = vmatmul.mubr.f32.gmra.mxu0 %v213
  %v548 = vpop.f32.mrf.mxu0
  %v549 = vadd.f32 %v92, %v548
  %v550 = vpop.f32.mrf.mxu0
  %551 = vmatprep.mubr.f32.mxu0 0.0
  %552 = vmatmul.mubr.f32.gmra.mxu0 %v216
  %v553 = vpop.f32.mrf.mxu0
  %v554 = vadd.f32 %v92, %v553
  %v555 = vpop.f32.mrf.mxu0
  %556 = vmatprep.mubr.f32.mxu0 0.0
  %557 = vmatmul.mubr.f32.gmra.mxu0 %v219
  %v558 = vpop.f32.mrf.mxu0
  %v559 = vadd.f32 %v92, %v558
  %v560 = vpop.f32.mrf.mxu0
  %561 = vmatprep.mubr.f32.mxu0 0.0
  %562 = vmatmul.mubr.f32.gmra.mxu0 %v222
  %v563 = vpop.f32.mrf.mxu0
  %v564 = vadd.f32 %v92, %v563
  %v565 = vpop.f32.mrf.mxu0
  %566 = vmatprep.mubr.f32.mxu0 0.0
  %567 = vmatmul.mubr.f32.gmra.mxu0 %v225
  %v568 = vpop.f32.mrf.mxu0
  %v569 = vadd.f32 %v92, %v568
  %v570 = vpop.f32.mrf.mxu0
  %571 = vmatprep.mubr.f32.mxu0 0.0
  %572 = vmatmul.mubr.f32.gmra.mxu0 %v228
  %v573 = vpop.f32.mrf.mxu0
  %v574 = vadd.f32 %v92, %v573
  %v575 = vpop.f32.mrf.mxu0
  %576 = vmatprep.mubr.f32.mxu0 0.0
  %577 = vmatmul.mubr.f32.gmra.mxu0 %v231
  %v578 = vpop.f32.mrf.mxu0
  %v579 = vadd.f32 %v92, %v578
  %v580 = vpop.f32.mrf.mxu0
  %581 = vmatprep.mubr.f32.mxu0 0.0
  %582 = vmatmul.mubr.f32.gmra.mxu0 %v234
  %v583 = vpop.f32.mrf.mxu0
  %v584 = vadd.f32 %v92, %v583
  %v585 = vpop.f32.mrf.mxu0
  %586 = vmatprep.mubr.f32.mxu0 0.0
  %587 = vmatmul.mubr.f32.gmra.mxu0 %v237
  %v588 = vpop.f32.mrf.mxu0
  %v589 = vadd.f32 %v92, %v588
  %v590 = vpop.f32.mrf.mxu0
  %591 = vmatprep.mubr.f32.mxu0 0.0
  %592 = vmatmul.mubr.f32.gmra.mxu0 %v240
  %v593 = vpop.f32.mrf.mxu0
  %v594 = vadd.f32 %v92, %v593
  %v595 = vpop.f32.mrf.mxu0
  %596 = vmatprep.mubr.f32.mxu0 0.0
  %597 = vmatmul.mubr.f32.gmra.mxu0 %v243
  %v598 = vpop.f32.mrf.mxu0
  %v599 = vadd.f32 %v92, %v598
  %v600 = vpop.f32.mrf.mxu0
  %601 = vmatprep.mubr.f32.mxu0 0.0
  %602 = vmatmul.mubr.f32.gmra.mxu0 %v246
  %v603 = vpop.f32.mrf.mxu0
  %v604 = vadd.f32 %v92, %v603
  %v605 = vpop.f32.mrf.mxu0
  %606 = vmatprep.mubr.f32.mxu0 0.0
  %607 = vmatmul.mubr.f32.gmra.mxu0 %v249
  %v608 = vpop.f32.mrf.mxu0
  %v609 = vadd.f32 %v92, %v608
  %v610 = vpop.f32.mrf.mxu0
  %611 = vmatprep.mubr.f32.mxu0 0.0
  %612 = vmatmul.mubr.f32.gmra.mxu0 %v252
  %v613 = vpop.f32.mrf.mxu0
  %v614 = vadd.f32 %v92, %v613
  %v615 = vpop.f32.mrf.mxu0
  %616 = vmatprep.mubr.f32.mxu0 0.0
  %617 = vmatmul.mubr.f32.gmra.mxu0 %v255
  %v618 = vpop.f32.mrf.mxu0
  %v619 = vadd.f32 %v92, %v618
  %v620 = vpop.f32.mrf.mxu0
  %621 = vmatprep.mubr.f32.mxu0 0.0
  %622 = vmatmul.mubr.f32.gmra.mxu0 %v258
  %v623 = vpop.f32.mrf.mxu0
  %v624 = vadd.f32 %v92, %v623
  %v625 = vpop.f32.mrf.mxu0
  %626 = vmatprep.mubr.f32.mxu0 0.0
  %627 = vmatmul.mubr.f32.gmra.mxu0 %v261
  %v628 = vpop.f32.mrf.mxu0
  %v629 = vadd.f32 %v92, %v628
  %v630 = vpop.f32.mrf.mxu0
  %631 = vmatprep.mubr.f32.mxu0 0.0
  %632 = vmatmul.mubr.f32.gmra.mxu0 %v264
  %v633 = vpop.f32.mrf.mxu0
  %v634 = vadd.f32 %v92, %v633
  %v635 = vpop.f32.mrf.mxu0
  %636 = vmatprep.mubr.f32.mxu0 0.0
  %637 = vmatmul.mubr.f32.gmra.mxu0 %v267
  %v638 = vpop.f32.mrf.mxu0
  %v639 = vadd.f32 %v92, %v638
  %v640 = vpop.f32.mrf.mxu0
  %641 = vmatprep.mubr.f32.mxu0 0.0
  %642 = vmatmul.mubr.f32.gmra.mxu0 %v270
  %v643 = vpop.f32.mrf.mxu0
  %v644 = vadd.f32 %v92, %v643
  %v645 = vpop.f32.mrf.mxu0
  %646 = vmatprep.mubr.f32.mxu0 0.0
  %647 = vmatmul.mubr.f32.gmra.mxu0 %v273
  %v648 = vpop.f32.mrf.mxu0
  %v649 = vadd.f32 %v92, %v648
  %v650 = vpop.f32.mrf.mxu0
  %651 = vmatprep.mubr.f32.mxu0 0.0
  %652 = vmatmul.mubr.f32.gmra.mxu0 %v276
  %v653 = vpop.f32.mrf.mxu0
  %v654 = vadd.f32 %v92, %v653
  %v655 = vpop.f32.mrf.mxu0
  %656 = vmatprep.mubr.f32.mxu0 0.0
  %657 = vmatmul.mubr.f32.gmra.mxu0 %v279
  %v658 = vpop.f32.mrf.mxu0
  %v659 = vadd.f32 %v92, %v658
  %v660 = vpop.f32.mrf.mxu0
  %661 = vmatprep.mubr.f32.mxu0 0.0
  %662 = vmatmul.mubr.f32.gmra.mxu0 %v282
  %v663 = vpop.f32.mrf.mxu0
  %v664 = vadd.f32 %v92, %v663
  %v665 = vpop.f32.mrf.mxu0
  %666 = vmatprep.mubr.f32.mxu0 0.0
  %667 = vmatmul.mubr.f32.gmra.mxu0 %v285
  %v668 = vpop.f32.mrf.mxu0
  %v669 = vadd.f32 %v92, %v668
  %v670 = vpop.f32.mrf.mxu0
  %671 = vdwg.mxu0
  %v672 = vmax.f32 %v354, 0.0
  %v673 = vmax.f32 %v359, 0.0
  %v674 = vmax.f32 %v364, 0.0
  %v675 = vmax.f32 %v369, 0.0
  %v676 = vmax.f32 %v374, 0.0
  %v677 = vmax.f32 %v379, 0.0
  %v678 = vmax.f32 %v384, 0.0
  %v679 = vmax.f32 %v389, 0.0
  %v680 = vmax.f32 %v394, 0.0
  %v681 = vmax.f32 %v399, 0.0
  %v682 = vmax.f32 %v404, 0.0
  %v683 = vmax.f32 %v409, 0.0
  %v684 = vmax.f32 %v414, 0.0
  %v685 = vmax.f32 %v419, 0.0
  %v686 = vmax.f32 %v424, 0.0
  %v687 = vmax.f32 %v429, 0.0
  %v688 = vmax.f32 %v434, 0.0
  %v689 = vmax.f32 %v439, 0.0
  %v690 = vmax.f32 %v444, 0.0
  %v691 = vmax.f32 %v449, 0.0
  %v692 = vmax.f32 %v454, 0.0
  %v693 = vmax.f32 %v459, 0.0
  %v694 = vmax.f32 %v464, 0.0
  %v695 = vmax.f32 %v469, 0.0
  %v696 = vmax.f32 %v474, 0.0
  %v697 = vmax.f32 %v479, 0.0
  %v698 = vmax.f32 %v484, 0.0
  %v699 = vmax.f32 %v489, 0.0
  %v700 = vmax.f32 %v494, 0.0
  %v701 = vmax.f32 %v499, 0.0
  %v702 = vmax.f32 %v504, 0.0
  %v703 = vmax.f32 %v509, 0.0
  %v704 = vmax.f32 %v514, 0.0
  %v705 = vmax.f32 %v519, 0.0
  %v706 = vmax.f32 %v524, 0.0
  %v707 = vmax.f32 %v529, 0.0
  %v708 = vmax.f32 %v534, 0.0
  %v709 = vmax.f32 %v539, 0.0
  %v710 = vmax.f32 %v544, 0.0
  %v711 = vmax.f32 %v549, 0.0
  %v712 = vmax.f32 %v554, 0.0
  %v713 = vmax.f32 %v559, 0.0
  %v714 = vmax.f32 %v564, 0.0
  %v715 = vmax.f32 %v569, 0.0
  %v716 = vmax.f32 %v574, 0.0
  %v717 = vmax.f32 %v579, 0.0
  %v718 = vmax.f32 %v584, 0.0
  %v719 = vmax.f32 %v589, 0.0
  %v720 = vmax.f32 %v594, 0.0
  %v721 = vmax.f32 %v599, 0.0
  %v722 = vmax.f32 %v604, 0.0
  %v723 = vmax.f32 %v609, 0.0
  %v724 = vmax.f32 %v614, 0.0
  %v725 = vmax.f32 %v619, 0.0
  %v726 = vmax.f32 %v624, 0.0
  %v727 = vmax.f32 %v629, 0.0
  %v728 = vmax.f32 %v634, 0.0
  %v729 = vmax.f32 %v639, 0.0
  %v730 = vmax.f32 %v644, 0.0
  %v731 = vmax.f32 %v649, 0.0
  %v732 = vmax.f32 %v654, 0.0
  %v733 = vmax.f32 %v659, 0.0
  %v734 = vmax.f32 %v664, 0.0
  %v735 = vmax.f32 %v669, 0.0
  %vm736 = vcmask 130048
  %737 = vst.msk [vmem:[%s3] sm:$0xff] %vm736, %v672
  %738 = vst.msk [vmem:[%s3 + $0x8] sm:$0xff] %vm736, %v673
  %739 = vst.msk [vmem:[%s3 + $0x10] sm:$0xff] %vm736, %v674
  %740 = vst.msk [vmem:[%s3 + $0x18] sm:$0xff] %vm736, %v675
  %741 = vst.msk [vmem:[%s3 + $0x20] sm:$0xff] %vm736, %v676
  %742 = vst.msk [vmem:[%s3 + $0x28] sm:$0xff] %vm736, %v677
  %743 = vst.msk [vmem:[%s3 + $0x30] sm:$0xff] %vm736, %v678
  %744 = vst.msk [vmem:[%s3 + $0x38] sm:$0xff] %vm736, %v679
  %745 = vst.msk [vmem:[%s3 + $0x40] sm:$0xff] %vm736, %v680
  %746 = vst.msk [vmem:[%s3 + $0x48] sm:$0xff] %vm736, %v681
  %747 = vst.msk [vmem:[%s3 + $0x50] sm:$0xff] %vm736, %v682
  %748 = vst.msk [vmem:[%s3 + $0x58] sm:$0xff] %vm736, %v683
  %749 = vst.msk [vmem:[%s3 + $0x60] sm:$0xff] %vm736, %v684
  %750 = vst.msk [vmem:[%s3 + $0x68] sm:$0xff] %vm736, %v685
  %751 = vst.msk [vmem:[%s3 + $0x70] sm:$0xff] %vm736, %v686
  %752 = vst.msk [vmem:[%s3 + $0x78] sm:$0xff] %vm736, %v687
  %753 = vst.msk [vmem:[%s3 + $0x80] sm:$0xff] %vm736, %v688
  %754 = vst.msk [vmem:[%s3 + $0x88] sm:$0xff] %vm736, %v689
  %755 = vst.msk [vmem:[%s3 + $0x90] sm:$0xff] %vm736, %v690
  %756 = vst.msk [vmem:[%s3 + $0x98] sm:$0xff] %vm736, %v691
  %757 = vst.msk [vmem:[%s3 + $0xa0] sm:$0xff] %vm736, %v692
  %758 = vst.msk [vmem:[%s3 + $0xa8] sm:$0xff] %vm736, %v693
  %759 = vst.msk [vmem:[%s3 + $0xb0] sm:$0xff] %vm736, %v694
  %760 = vst.msk [vmem:[%s3 + $0xb8] sm:$0xff] %vm736, %v695
  %761 = vst.msk [vmem:[%s3 + $0xc0] sm:$0xff] %vm736, %v696
  %762 = vst.msk [vmem:[%s3 + $0xc8] sm:$0xff] %vm736, %v697
  %763 = vst.msk [vmem:[%s3 + $0xd0] sm:$0xff] %vm736, %v698
  %764 = vst.msk [vmem:[%s3 + $0xd8] sm:$0xff] %vm736, %v699
  %765 = vst.msk [vmem:[%s3 + $0xe0] sm:$0xff] %vm736, %v700
  %766 = vst.msk [vmem:[%s3 + $0xe8] sm:$0xff] %vm736, %v701
  %767 = vst.msk [vmem:[%s3 + $0xf0] sm:$0xff] %vm736, %v702
  %768 = vst.msk [vmem:[%s3 + $0xf8] sm:$0xff] %vm736, %v703
  %769 = vst.msk [vmem:[%s3 + $0x100] sm:$0xff] %vm736, %v704
  %770 = vst.msk [vmem:[%s3 + $0x108] sm:$0xff] %vm736, %v705
  %771 = vst.msk [vmem:[%s3 + $0x110] sm:$0xff] %vm736, %v706
  %772 = vst.msk [vmem:[%s3 + $0x118] sm:$0xff] %vm736, %v707
  %773 = vst.msk [vmem:[%s3 + $0x120] sm:$0xff] %vm736, %v708
  %774 = vst.msk [vmem:[%s3 + $0x128] sm:$0xff] %vm736, %v709
  %775 = vst.msk [vmem:[%s3 + $0x130] sm:$0xff] %vm736, %v710
  %776 = vst.msk [vmem:[%s3 + $0x138] sm:$0xff] %vm736, %v711
  %777 = vst.msk [vmem:[%s3 + $0x140] sm:$0xff] %vm736, %v712
  %778 = vst.msk [vmem:[%s3 + $0x148] sm:$0xff] %vm736, %v713
  %779 = vst.msk [vmem:[%s3 + $0x150] sm:$0xff] %vm736, %v714
  %780 = vst.msk [vmem:[%s3 + $0x158] sm:$0xff] %vm736, %v715
  %781 = vst.msk [vmem:[%s3 + $0x160] sm:$0xff] %vm736, %v716
  %782 = vst.msk [vmem:[%s3 + $0x168] sm:$0xff] %vm736, %v717
  %783 = vst.msk [vmem:[%s3 + $0x170] sm:$0xff] %vm736, %v718
  %784 = vst.msk [vmem:[%s3 + $0x178] sm:$0xff] %vm736, %v719
  %785 = vst.msk [vmem:[%s3 + $0x180] sm:$0xff] %vm736, %v720
  %786 = vst.msk [vmem:[%s3 + $0x188] sm:$0xff] %vm736, %v721
  %787 = vst.msk [vmem:[%s3 + $0x190] sm:$0xff] %vm736, %v722
  %788 = vst.msk [vmem:[%s3 + $0x198] sm:$0xff] %vm736, %v723
  %789 = vst.msk [vmem:[%s3 + $0x1a0] sm:$0xff] %vm736, %v724
  %790 = vst.msk [vmem:[%s3 + $0x1a8] sm:$0xff] %vm736, %v725
  %791 = vst.msk [vmem:[%s3 + $0x1b0] sm:$0xff] %vm736, %v726
  %792 = vst.msk [vmem:[%s3 + $0x1b8] sm:$0xff] %vm736, %v727
  %793 = vst.msk [vmem:[%s3 + $0x1c0] sm:$0xff] %vm736, %v728
  %794 = vst.msk [vmem:[%s3 + $0x1c8] sm:$0xff] %vm736, %v729
  %795 = vst.msk [vmem:[%s3 + $0x1d0] sm:$0xff] %vm736, %v730
  %796 = vst.msk [vmem:[%s3 + $0x1d8] sm:$0xff] %vm736, %v731
  %797 = vst.msk [vmem:[%s3 + $0x1e0] sm:$0xff] %vm736, %v732
  %798 = vst.msk [vmem:[%s3 + $0x1e8] sm:$0xff] %vm736, %v733
  %799 = vst.msk [vmem:[%s3 + $0x1f0] sm:$0xff] %vm736, %v734
  %800 = vst.msk [vmem:[%s3 + $0x1f8] sm:$0xff] %vm736, %v735
  // Predicated region
  $region14: #{hybrid_transformer_forward.5} parent=0 // pred_check
    _
  $region15: #{hybrid_transformer_forward.5} parent=0 // pred_check_branch
    %802 = sbr.rel (0) target = $region17
  $region16: #{hybrid_transformer_forward.5} parent=0 // pred_region
    _
  $region17: #{hybrid_transformer_forward.5} parent=0 // pred_fallthru
    _
  // Predicated region
  $region18: #{hybrid_transformer_forward.5} parent=0 // pred_check
    _
  $region19: #{hybrid_transformer_forward.5} parent=0 // pred_check_branch
    %804 = sbr.rel (0) target = $region21
  $region20: #{hybrid_transformer_forward.5} parent=0 // pred_region
    _
  $region21: #{hybrid_transformer_forward.5} parent=0 // pred_fallthru
    _

// kernel: hybrid_transformer_forward.6
$region0: #{hybrid_transformer_forward.6}
  #allocation0 [shape = 'u32[]', space=smem, size = 0x4, offset = 0x4, fixed_abs, tag = 'smem constant byte address 0x4 - core index']
  #allocation1 [shape = 'u32[144,128]{1,0:T(1,128)}', space=vmem, size = 0x12000, scoped, tag = 'internal scratch']
  %s0 = inlined_call_operand.vmem [shape: f32[128,144], index: 0, kind: input, shape index: {}]
  %s1 = inlined_call_operand.vmem [shape: f32[144,32], index: 1, kind: input, shape index: {}]
  %s2 = inlined_call_operand.vmem [shape: f32[1,32], index: 2, kind: input, shape index: {}]
  %s3 = inlined_call_operand.vmem [shape: f32[128,32], index: 3, kind: output, shape index: {}]
  %s4 = sld [smem:[#allocation0]]
  $region22: #{hybrid_transformer_forward.6} parent=0
    _
  %s6 = ssub.s32 1, %s4
  %s7 = scalar_select 0, %s6, %s4
  // Predicated region
  $region2: #{hybrid_transformer_forward.6} parent=0 // pred_check
    _
  $region3: #{hybrid_transformer_forward.6} parent=0 // pred_check_branch
    %9 = sbr.rel (0) target = $region5
  $region4: #{hybrid_transformer_forward.6} parent=0 // pred_region
    _
  $region5: #{hybrid_transformer_forward.6} parent=0 // pred_fallthru
    _
  // Predicated region
  $region6: #{hybrid_transformer_forward.6} parent=0 // pred_check
    _
  $region7: #{hybrid_transformer_forward.6} parent=0 // pred_check_branch
    %11 = sbr.rel (0) target = $region9
  $region8: #{hybrid_transformer_forward.6} parent=0 // pred_region
    _
  $region9: #{hybrid_transformer_forward.6} parent=0 // pred_fallthru
    _
  // Predicated region
  $region10: #{hybrid_transformer_forward.6} parent=0 // pred_check
    _
  $region11: #{hybrid_transformer_forward.6} parent=0 // pred_check_branch
    %13 = sbr.rel (0) target = $region13
  $region12: #{hybrid_transformer_forward.6} parent=0 // pred_region
    _
  $region13: #{hybrid_transformer_forward.6} parent=0 // pred_fallthru
    _
  %v14 = vld [vmem:[%s0] sm:$0xff]
  %v15 = vld [vmem:[%s0 + $0x8] sm:$0xff]
  %v16 = vld [vmem:[%s0 + $0x10] sm:$0xff]
  %v17 = vld [vmem:[%s0 + $0x18] sm:$0xff]
  %v18 = vld [vmem:[%s0 + $0x20] sm:$0xff]
  %v19 = vld [vmem:[%s0 + $0x28] sm:$0xff]
  %v20 = vld [vmem:[%s0 + $0x30] sm:$0xff]
  %v21 = vld [vmem:[%s0 + $0x38] sm:$0xff]
  %v22 = vld [vmem:[%s0 + $0x40] sm:$0xff]
  %v23 = vld [vmem:[%s0 + $0x48] sm:$0xff]
  %v24 = vld [vmem:[%s0 + $0x50] sm:$0xff]
  %v25 = vld [vmem:[%s0 + $0x58] sm:$0xff]
  %v26 = vld [vmem:[%s0 + $0x60] sm:$0xff]
  %v27 = vld [vmem:[%s0 + $0x68] sm:$0xff]
  %v28 = vld [vmem:[%s0 + $0x70] sm:$0xff]
  %v29 = vld [vmem:[%s0 + $0x78] sm:$0xff]
  %v30 = vld [vmem:[%s0 + $0x80] sm:$0xff]
  %v31 = vld [vmem:[%s0 + $0x88] sm:$0xff]
  %v32 = vld [vmem:[%s0 + $0x90] sm:$0xff]
  %v33 = vld [vmem:[%s0 + $0x98] sm:$0xff]
  %v34 = vld [vmem:[%s0 + $0xa0] sm:$0xff]
  %v35 = vld [vmem:[%s0 + $0xa8] sm:$0xff]
  %v36 = vld [vmem:[%s0 + $0xb0] sm:$0xff]
  %v37 = vld [vmem:[%s0 + $0xb8] sm:$0xff]
  %v38 = vld [vmem:[%s0 + $0xc0] sm:$0xff]
  %v39 = vld [vmem:[%s0 + $0xc8] sm:$0xff]
  %v40 = vld [vmem:[%s0 + $0xd0] sm:$0xff]
  %v41 = vld [vmem:[%s0 + $0xd8] sm:$0xff]
  %v42 = vld [vmem:[%s0 + $0xe0] sm:$0xff]
  %v43 = vld [vmem:[%s0 + $0xe8] sm:$0xff]
  %v44 = vld [vmem:[%s0 + $0xf0] sm:$0xff]
  %v45 = vld [vmem:[%s0 + $0xf8] sm:$0xff]
  %v46 = vld [vmem:[%s1] sm:$0xff]
  %v47 = vld [vmem:[%s1 + $0x8] sm:$0xff]
  %v48 = vld [vmem:[%s1 + $0x10] sm:$0xff]
  %v49 = vld [vmem:[%s1 + $0x18] sm:$0xff]
  %v50 = vld [vmem:[%s1 + $0x20] sm:$0xff]
  %v51 = vld [vmem:[%s1 + $0x28] sm:$0xff]
  %v52 = vld [vmem:[%s1 + $0x30] sm:$0xff]
  %v53 = vld [vmem:[%s1 + $0x38] sm:$0xff]
  %v54 = vld [vmem:[%s1 + $0x40] sm:$0xff]
  %v55 = vld [vmem:[%s1 + $0x48] sm:$0xff]
  %v56 = vld [vmem:[%s1 + $0x50] sm:$0xff]
  %v57 = vld [vmem:[%s1 + $0x58] sm:$0xff]
  %v58 = vld [vmem:[%s1 + $0x60] sm:$0xff]
  %v59 = vld [vmem:[%s1 + $0x68] sm:$0xff]
  %v60 = vld [vmem:[%s1 + $0x70] sm:$0xff]
  %v61 = vld [vmem:[%s1 + $0x78] sm:$0xff]
  %v62 = vld [vmem:[%s1 + $0x80] sm:$0xff]
  %v63 = vld [vmem:[%s1 + $0x88] sm:$0xff]
  %v64 = vld [vmem:[%s2] sm:$0x1]
  %v66 = vlaneseq
  %v67 = vshrl.u32 %v66, 7
  %v68 = vsub.s32 0, %v67
  %v69 = vrot.slane %v64, %v68
  %vm71 = vcmask 130048
  %v73 = vsel %vm71, %v15, 0
  %v76 = vsel %vm71, %v17, 0
  %v79 = vsel %vm71, %v19, 0
  %v82 = vsel %vm71, %v21, 0
  %v85 = vsel %vm71, %v23, 0
  %v88 = vsel %vm71, %v25, 0
  %v91 = vsel %vm71, %v27, 0
  %v94 = vsel %vm71, %v29, 0
  %v97 = vsel %vm71, %v31, 0
  %v100 = vsel %vm71, %v33, 0
  %v103 = vsel %vm71, %v35, 0
  %v106 = vsel %vm71, %v37, 0
  %v109 = vsel %vm71, %v39, 0
  %v112 = vsel %vm71, %v41, 0
  %v115 = vsel %vm71, %v43, 0
  %v118 = vsel %vm71, %v45, 0
  %120 = vmatprep.subr.mxu0 0.0
  %121 = vmatpush1.msra.mxu0 %v61
  %122 = vmatprep.subr.mxu0 0.0
  %123 = vmatpush1.msra.mxu0 %v60
  %124 = vmatprep.subr.mxu0 0.0
  %125 = vmatpush1.msra.mxu0 %v59
  %126 = vmatprep.subr.mxu0 0.0
  %127 = vmatpush1.msra.mxu0 %v58
  %128 = vmatprep.subr.mxu0 0.0
  %129 = vmatpush1.msra.mxu0 %v57
  %130 = vmatprep.subr.mxu0 0.0
  %131 = vmatpush1.msra.mxu0 %v56
  %132 = vmatprep.subr.mxu0 0.0
  %133 = vmatpush1.msra.mxu0 %v55
  %134 = vmatprep.subr.mxu0 0.0
  %135 = vmatpush1.msra.mxu0 %v54
  %136 = vmatprep.subr.mxu0 0.0
  %137 = vmatpush1.msra.mxu0 %v53
  %138 = vmatprep.subr.mxu0 0.0
  %139 = vmatpush1.msra.mxu0 %v52
  %140 = vmatprep.subr.mxu0 0.0
  %141 = vmatpush1.msra.mxu0 %v51
  %142 = vmatprep.subr.mxu0 0.0
  %143 = vmatpush1.msra.mxu0 %v50
  %144 = vmatprep.subr.mxu0 0.0
  %145 = vmatpush1.msra.mxu0 %v49
  %146 = vmatprep.subr.mxu0 0.0
  %147 = vmatpush1.msra.mxu0 %v48
  %148 = vmatprep.subr.mxu0 0.0
  %149 = vmatpush1.msra.mxu0 %v47
  %150 = vmatprep.subr.mxu0 0.0
  %151 = vmatpush1.msra.mxu0 %v46
  %152 = vmatprep.subr.mxu0 0.0
  %153 = vmatpush2.msra.mxu0 0.0
  %154 = vmatprep.subr.mxu0 0.0
  %155 = vmatpush2.msra.mxu0 0.0
  %156 = vmatprep.subr.mxu0 0.0
  %157 = vmatpush2.msra.mxu0 0.0
  %158 = vmatprep.subr.mxu0 0.0
  %159 = vmatpush2.msra.mxu0 0.0
  %160 = vmatprep.subr.mxu0 0.0
  %161 = vmatpush2.msra.mxu0 0.0
  %162 = vmatprep.subr.mxu0 0.0
  %163 = vmatpush2.msra.mxu0 0.0
  %164 = vmatprep.subr.mxu0 0.0
  %165 = vmatpush2.msra.mxu0 0.0
  %166 = vmatprep.subr.mxu0 0.0
  %167 = vmatpush2.msra.mxu0 0.0
  %168 = vmatprep.subr.mxu0 0.0
  %169 = vmatpush2.msra.mxu0 0.0
  %170 = vmatprep.subr.mxu0 0.0
  %171 = vmatpush2.msra.mxu0 0.0
  %172 = vmatprep.subr.mxu0 0.0
  %173 = vmatpush2.msra.mxu0 0.0
  %174 = vmatprep.subr.mxu0 0.0
  %175 = vmatpush2.msra.mxu0 0.0
  %176 = vmatprep.subr.mxu0 0.0
  %177 = vmatpush2.msra.mxu0 0.0
  %178 = vmatprep.subr.mxu0 0.0
  %179 = vmatpush2.msra.mxu0 0.0
  %180 = vmatprep.subr.mxu0 0.0
  %181 = vmatpush2.msra.mxu0 %v63
  %182 = vmatprep.subr.mxu0 0.0
  %183 = vmatpush2.msra.mxu0 %v62
  %184 = vmatprep.mubr.f32.mxu0 %v73
  %185 = vmatmul.mubr.f32.gmra.mxu0 %v14
  %v186 = vpop.f32.mrf.mxu0
  %v187 = vadd.f32 %v69, %v186
  %v188 = vpop.f32.mrf.mxu0
  %189 = vmatprep.mubr.f32.mxu0 %v76
  %190 = vmatmul.mubr.f32.gmra.mxu0 %v16
  %v191 = vpop.f32.mrf.mxu0
  %v192 = vadd.f32 %v69, %v191
  %v193 = vpop.f32.mrf.mxu0
  %194 = vmatprep.mubr.f32.mxu0 %v79
  %195 = vmatmul.mubr.f32.gmra.mxu0 %v18
  %v196 = vpop.f32.mrf.mxu0
  %v197 = vadd.f32 %v69, %v196
  %v198 = vpop.f32.mrf.mxu0
  %199 = vmatprep.mubr.f32.mxu0 %v82
  %200 = vmatmul.mubr.f32.gmra.mxu0 %v20
  %v201 = vpop.f32.mrf.mxu0
  %v202 = vadd.f32 %v69, %v201
  %v203 = vpop.f32.mrf.mxu0
  %204 = vmatprep.mubr.f32.mxu0 %v85
  %205 = vmatmul.mubr.f32.gmra.mxu0 %v22
  %v206 = vpop.f32.mrf.mxu0
  %v207 = vadd.f32 %v69, %v206
  %v208 = vpop.f32.mrf.mxu0
  %209 = vmatprep.mubr.f32.mxu0 %v88
  %210 = vmatmul.mubr.f32.gmra.mxu0 %v24
  %v211 = vpop.f32.mrf.mxu0
  %v212 = vadd.f32 %v69, %v211
  %v213 = vpop.f32.mrf.mxu0
  %214 = vmatprep.mubr.f32.mxu0 %v91
  %215 = vmatmul.mubr.f32.gmra.mxu0 %v26
  %v216 = vpop.f32.mrf.mxu0
  %v217 = vadd.f32 %v69, %v216
  %v218 = vpop.f32.mrf.mxu0
  %219 = vmatprep.mubr.f32.mxu0 %v94
  %220 = vmatmul.mubr.f32.gmra.mxu0 %v28
  %v221 = vpop.f32.mrf.mxu0
  %v222 = vadd.f32 %v69, %v221
  %v223 = vpop.f32.mrf.mxu0
  %224 = vmatprep.mubr.f32.mxu0 %v97
  %225 = vmatmul.mubr.f32.gmra.mxu0 %v30
  %v226 = vpop.f32.mrf.mxu0
  %v227 = vadd.f32 %v69, %v226
  %v228 = vpop.f32.mrf.mxu0
  %229 = vmatprep.mubr.f32.mxu0 %v100
  %230 = vmatmul.mubr.f32.gmra.mxu0 %v32
  %v231 = vpop.f32.mrf.mxu0
  %v232 = vadd.f32 %v69, %v231
  %v233 = vpop.f32.mrf.mxu0
  %234 = vmatprep.mubr.f32.mxu0 %v103
  %235 = vmatmul.mubr.f32.gmra.mxu0 %v34
  %v236 = vpop.f32.mrf.mxu0
  %v237 = vadd.f32 %v69, %v236
  %v238 = vpop.f32.mrf.mxu0
  %239 = vmatprep.mubr.f32.mxu0 %v106
  %240 = vmatmul.mubr.f32.gmra.mxu0 %v36
  %v241 = vpop.f32.mrf.mxu0
  %v242 = vadd.f32 %v69, %v241
  %v243 = vpop.f32.mrf.mxu0
  %244 = vmatprep.mubr.f32.mxu0 %v109
  %245 = vmatmul.mubr.f32.gmra.mxu0 %v38
  %v246 = vpop.f32.mrf.mxu0
  %v247 = vadd.f32 %v69, %v246
  %v248 = vpop.f32.mrf.mxu0
  %249 = vmatprep.mubr.f32.mxu0 %v112
  %250 = vmatmul.mubr.f32.gmra.mxu0 %v40
  %v251 = vpop.f32.mrf.mxu0
  %v252 = vadd.f32 %v69, %v251
  %v253 = vpop.f32.mrf.mxu0
  %254 = vmatprep.mubr.f32.mxu0 %v115
  %255 = vmatmul.mubr.f32.gmra.mxu0 %v42
  %v256 = vpop.f32.mrf.mxu0
  %v257 = vadd.f32 %v69, %v256
  %v258 = vpop.f32.mrf.mxu0
  %259 = vmatprep.mubr.f32.mxu0 %v118
  %260 = vmatmul.mubr.f32.gmra.mxu0 %v44
  %v261 = vpop.f32.mrf.mxu0
  %v262 = vadd.f32 %v69, %v261
  %v263 = vpop.f32.mrf.mxu0
  %264 = vdwg.mxu0
  %v265 = vmax.f32 %v187, 0.0
  %v266 = vmax.f32 %v192, 0.0
  %v267 = vmax.f32 %v197, 0.0
  %v268 = vmax.f32 %v202, 0.0
  %v269 = vmax.f32 %v207, 0.0
  %v270 = vmax.f32 %v212, 0.0
  %v271 = vmax.f32 %v217, 0.0
  %v272 = vmax.f32 %v222, 0.0
  %v273 = vmax.f32 %v227, 0.0
  %v274 = vmax.f32 %v232, 0.0
  %v275 = vmax.f32 %v237, 0.0
  %v276 = vmax.f32 %v242, 0.0
  %v277 = vmax.f32 %v247, 0.0
  %v278 = vmax.f32 %v252, 0.0
  %v279 = vmax.f32 %v257, 0.0
  %v280 = vmax.f32 %v262, 0.0
  %vm281 = vcmask 261120
  %282 = vst.msk [vmem:[%s3] sm:$0xff] %vm281, %v265
  %283 = vst.msk [vmem:[%s3 + $0x8] sm:$0xff] %vm281, %v266
  %284 = vst.msk [vmem:[%s3 + $0x10] sm:$0xff] %vm281, %v267
  %285 = vst.msk [vmem:[%s3 + $0x18] sm:$0xff] %vm281, %v268
  %286 = vst.msk [vmem:[%s3 + $0x20] sm:$0xff] %vm281, %v269
  %287 = vst.msk [vmem:[%s3 + $0x28] sm:$0xff] %vm281, %v270
  %288 = vst.msk [vmem:[%s3 + $0x30] sm:$0xff] %vm281, %v271
  %289 = vst.msk [vmem:[%s3 + $0x38] sm:$0xff] %vm281, %v272
  %290 = vst.msk [vmem:[%s3 + $0x40] sm:$0xff] %vm281, %v273
  %291 = vst.msk [vmem:[%s3 + $0x48] sm:$0xff] %vm281, %v274
  %292 = vst.msk [vmem:[%s3 + $0x50] sm:$0xff] %vm281, %v275
  %293 = vst.msk [vmem:[%s3 + $0x58] sm:$0xff] %vm281, %v276
  %294 = vst.msk [vmem:[%s3 + $0x60] sm:$0xff] %vm281, %v277
  %295 = vst.msk [vmem:[%s3 + $0x68] sm:$0xff] %vm281, %v278
  %296 = vst.msk [vmem:[%s3 + $0x70] sm:$0xff] %vm281, %v279
  %297 = vst.msk [vmem:[%s3 + $0x78] sm:$0xff] %vm281, %v280
  // Predicated region
  $region14: #{hybrid_transformer_forward.6} parent=0 // pred_check
    _
  $region15: #{hybrid_transformer_forward.6} parent=0 // pred_check_branch
    %299 = sbr.rel (0) target = $region17
  $region16: #{hybrid_transformer_forward.6} parent=0 // pred_region
    _
  $region17: #{hybrid_transformer_forward.6} parent=0 // pred_fallthru
    _
  // Predicated region
  $region18: #{hybrid_transformer_forward.6} parent=0 // pred_check
    _
  $region19: #{hybrid_transformer_forward.6} parent=0 // pred_check_branch
    %301 = sbr.rel (0) target = $region21
  $region20: #{hybrid_transformer_forward.6} parent=0 // pred_region
    _
  $region21: #{hybrid_transformer_forward.6} parent=0 // pred_fallthru
    _

// kernel: hybrid_transformer_forward.7
$region0: #{hybrid_transformer_forward.7}
  #allocation0 [shape = 'u32[]', space=smem, size = 0x4, offset = 0x4, fixed_abs, tag = 'smem constant byte address 0x4 - core index']
  #allocation1 [shape = 'u32[144,128]{1,0:T(1,128)}', space=vmem, size = 0x12000, scoped, tag = 'internal scratch']
  %s0 = inlined_call_operand.vmem [shape: f32[2,5,512], index: 0, kind: input, shape index: {}]
  %s1 = inlined_call_operand.vmem [shape: f32[512,32], index: 1, kind: input, shape index: {}]
  %s2 = inlined_call_operand.vmem [shape: f32[5,32], index: 2, kind: input, shape index: {}]
  %s3 = inlined_call_operand.vmem [shape: f32[2,1,32], index: 3, kind: input, shape index: {}]
  %s4 = inlined_call_operand.vmem [shape: f32[2,1,32], index: 4, kind: input, shape index: {}]
  %s5 = inlined_call_operand.vmem [shape: f32[24,32,8], index: 5, kind: input, shape index: {}]
  %s6 = inlined_call_operand.vmem [shape: f32[24,1,8], index: 6, kind: input, shape index: {}]
  %s7 = inlined_call_operand.vmem [shape: f32[8,8,32], index: 7, kind: input, shape index: {}]
  %s8 = inlined_call_operand.vmem [shape: f32[2,1,32], index: 8, kind: input, shape index: {}]
  %s9 = inlined_call_operand.vmem [shape: f32[2,1,32], index: 9, kind: input, shape index: {}]
  %s10 = inlined_call_operand.vmem [shape: f32[2,1,32], index: 10, kind: input, shape index: {}]
  %s11 = inlined_call_operand.vmem [shape: f32[2,32,128], index: 11, kind: input, shape index: {}]
  %s12 = inlined_call_operand.vmem [shape: f32[2,1,128], index: 12, kind: input, shape index: {}]
  %s13 = inlined_call_operand.vmem [shape: f32[2,128,32], index: 13, kind: input, shape index: {}]
  %s14 = inlined_call_operand.vmem [shape: f32[2,1,32], index: 14, kind: input, shape index: {}]
  %s15 = inlined_call_operand.vmem [shape: f32[1,32], index: 15, kind: input, shape index: {}]
  %s16 = inlined_call_operand.vmem [shape: f32[1,32], index: 16, kind: input, shape index: {}]
  %s17 = inlined_call_operand.vmem [shape: f32[32,10], index: 17, kind: input, shape index: {}]
  %s18 = inlined_call_operand.vmem [shape: f32[1,10], index: 18, kind: input, shape index: {}]
  %s19 = inlined_call_operand.hbm [shape: f32[2,1,10], index: 19, kind: output, shape index: {}]
  %s20 = sld [smem:[#allocation0]]
  $region109: #{hybrid_transformer_forward.7} parent=0
    _
  %s22 = ssub.s32 1, %s20
  %s23 = scalar_select 0, %s22, %s20
  $region1: #{hybrid_transformer_forward.7} parent=0
    #allocation2 [shape = 'u8[1024]{0}', space=vmem, size = 0x400, scoped, tag = 'output window, operand 0']
    #allocation3 [shape = 's32[2]{0}', space=sflag, size = 0x8, scoped, tag = 'scoped memory for hybrid_transformer_forward.7']
    %24 = vsyncpa [#allocation3], 0
    %s25 = scalar_lea.sflag [#allocation3], 1
    %26 = vsyncpa %s25, 0
    loop: start=0, step=1, limit=4
    $region2: #{hybrid_transformer_forward.7} parent=1 // loop_pre_header
      _
    $region3: #{hybrid_transformer_forward.7} parent=1 // loop_header
      %s28 = sphi 0, %s32
      %p29 = scmp.ge.s32.totalorder %s28, 4
      %s38 = sphi 0, %s40
      %s41 = sphi 0, %s38
      %s42 = sphi 0, %s41
      %s58 = sphi 0, %s42
      %s62 = sphi 0, %s62
      %s64 = sphi 0, %s62
      %s65 = sphi 0, %s64
      %s79 = sphi 0, %s65
      %s83 = sphi 0, %s83
      %s85 = sphi 0, %s83
      %s86 = sphi 0, %s85
      %s100 = sphi 0, %s86
      %s104 = sphi 0, %s104
      %s106 = sphi 0, %s104
      %s107 = sphi 0, %s106
      %s121 = sphi 0, %s107
      %s125 = sphi 0, %s125
      %s127 = sphi 0, %s125
      %s128 = sphi 0, %s127
      %s142 = sphi 0, %s128
      %s146 = sphi 0, %s146
      %s148 = sphi 0, %s146
      %s149 = sphi 0, %s148
      %s163 = sphi 0, %s149
      %s167 = sphi 0, %s167
      %s169 = sphi 0, %s167
      %s170 = sphi 0, %s169
      %s184 = sphi 0, %s170
      %s188 = sphi 0, %s188
      %s190 = sphi 0, %s188
      %s191 = sphi 0, %s190
      %s205 = sphi 0, %s191
      %s209 = sphi 0, %s209
      %s211 = sphi 0, %s209
      %s212 = sphi 0, %s211
      %s226 = sphi 0, %s212
      %s230 = sphi 0, %s230
      %s232 = sphi 0, %s230
      %s233 = sphi 0, %s232
      %s247 = sphi 0, %s233
      %s251 = sphi 0, %s251
      %s253 = sphi 0, %s251
      %s254 = sphi 0, %s253
      %s268 = sphi 0, %s254
      %s272 = sphi 0, %s272
      %s274 = sphi 0, %s272
      %s275 = sphi 0, %s274
      %s289 = sphi 0, %s275
      %s293 = sphi 0, %s293
      %s295 = sphi 0, %s293
      %s296 = sphi 0, %s295
      %s310 = sphi 0, %s296
      %s314 = sphi 0, %s314
      %s316 = sphi 0, %s314
      %s317 = sphi 0, %s316
      %s331 = sphi 0, %s317
      %s335 = sphi 0, %s335
      %s337 = sphi 0, %s335
      %s338 = sphi 0, %s337
      %s352 = sphi 0, %s338
      %s356 = sphi 0, %s356
      %s358 = sphi 0, %s356
      %s359 = sphi 0, %s358
      %s373 = sphi 0, %s359
      %s377 = sphi 0, %s377
      %s379 = sphi 0, %s377
      %s380 = sphi 0, %s379
      %s394 = sphi 0, %s380
      %s398 = sphi 0, %s398
      %s400 = sphi 0, %s398
      %s401 = sphi 0, %s400
      %s415 = sphi 0, %s401
      %s419 = sphi 0, %s419
      %s421 = sphi 0, %s419
      %s422 = sphi 0, %s421
      %s436 = sphi 0, %s422
      %s442 = sphi 0, %s444
      %s445 = sphi 0, %s442
      %s446 = sphi 0, %s445
      %s462 = sphi 0, %s446
    $region4: #{hybrid_transformer_forward.7} parent=1 // loop_header_branch
      %31 = sbr.rel (%p29) target = $region8
    $region5: #{hybrid_transformer_forward.7} parent=1 // loop_body
      %s33 = ssub.s32 %s28, 1
      %s34 = ssub.s32 %s28, 2
      %s35 = sadd.s32 %s28, 1
      %s36 = ssub.s32 %s28, %s35
      %p37 = scmp.eq.s32.totalorder %s36, 0
      %s39 = sadd.s32 %s38, 1
      %s40 = scalar_select %p37, %s38, %s39
      %p43 = pneg %p37
      %p44 = scmp.eq.s32.totalorder %s28, 1
      %p45 = por %p43, %p44
      %p46 = scmp.ne.s32.totalorder %s38, %s41
      %p47 = scmp.eq.s32.totalorder %s28, 0
      %p48 = por %p46, %p47
      %p49 = scmp.ne.s32.totalorder %s38, %s41
      %p50 = scmp.eq.s32.totalorder %s33, 1
      %p51 = por %p49, %p50
      %p52 = scmp.ne.s32.totalorder %s41, %s42
      %p53 = scmp.eq.s32.totalorder %s33, 0
      %p54 = por %p52, %p53
      %p55 = scmp.ne.s32.totalorder %s41, %s42
      %p56 = scmp.eq.s32.totalorder %s34, 1
      %p57 = por %p55, %p56
      %p59 = scmp.ne.s32.totalorder %s42, %s58
      %p60 = scmp.eq.s32.totalorder %s34, 0
      %p61 = por %p59, %p60
      %s63 = sadd.s32 %s62, 1
      %p66 = scmp.eq.s32.totalorder %s28, 1
      %p67 = scmp.ne.s32.totalorder %s62, %s64
      %p68 = scmp.eq.s32.totalorder %s28, 0
      %p69 = por %p67, %p68
      %p70 = scmp.ne.s32.totalorder %s62, %s64
      %p71 = scmp.eq.s32.totalorder %s33, 1
      %p72 = por %p70, %p71
      %p73 = scmp.ne.s32.totalorder %s64, %s65
      %p74 = scmp.eq.s32.totalorder %s33, 0
      %p75 = por %p73, %p74
      %p76 = scmp.ne.s32.totalorder %s64, %s65
      %p77 = scmp.eq.s32.totalorder %s34, 1
      %p78 = por %p76, %p77
      %p80 = scmp.ne.s32.totalorder %s65, %s79
      %p81 = scmp.eq.s32.totalorder %s34, 0
      %p82 = por %p80, %p81
      %s84 = sadd.s32 %s83, 1
      %p87 = scmp.eq.s32.totalorder %s28, 1
      %p88 = scmp.ne.s32.totalorder %s83, %s85
      %p89 = scmp.eq.s32.totalorder %s28, 0
      %p90 = por %p88, %p89
      %p91 = scmp.ne.s32.totalorder %s83, %s85
      %p92 = scmp.eq.s32.totalorder %s33, 1
      %p93 = por %p91, %p92
      %p94 = scmp.ne.s32.totalorder %s85, %s86
      %p95 = scmp.eq.s32.totalorder %s33, 0
      %p96 = por %p94, %p95
      %p97 = scmp.ne.s32.totalorder %s85, %s86
      %p98 = scmp.eq.s32.totalorder %s34, 1
      %p99 = por %p97, %p98
      %p101 = scmp.ne.s32.totalorder %s86, %s100
      %p102 = scmp.eq.s32.totalorder %s34, 0
      %p103 = por %p101, %p102
      %s105 = sadd.s32 %s104, 1
      %p108 = scmp.eq.s32.totalorder %s28, 1
      %p109 = scmp.ne.s32.totalorder %s104, %s106
      %p110 = scmp.eq.s32.totalorder %s28, 0
      %p111 = por %p109, %p110
      %p112 = scmp.ne.s32.totalorder %s104, %s106
      %p113 = scmp.eq.s32.totalorder %s33, 1
      %p114 = por %p112, %p113
      %p115 = scmp.ne.s32.totalorder %s106, %s107
      %p116 = scmp.eq.s32.totalorder %s33, 0
      %p117 = por %p115, %p116
      %p118 = scmp.ne.s32.totalorder %s106, %s107
      %p119 = scmp.eq.s32.totalorder %s34, 1
      %p120 = por %p118, %p119
      %p122 = scmp.ne.s32.totalorder %s107, %s121
      %p123 = scmp.eq.s32.totalorder %s34, 0
      %p124 = por %p122, %p123
      %s126 = sadd.s32 %s125, 1
      %p129 = scmp.eq.s32.totalorder %s28, 1
      %p130 = scmp.ne.s32.totalorder %s125, %s127
      %p131 = scmp.eq.s32.totalorder %s28, 0
      %p132 = por %p130, %p131
      %p133 = scmp.ne.s32.totalorder %s125, %s127
      %p134 = scmp.eq.s32.totalorder %s33, 1
      %p135 = por %p133, %p134
      %p136 = scmp.ne.s32.totalorder %s127, %s128
      %p137 = scmp.eq.s32.totalorder %s33, 0
      %p138 = por %p136, %p137
      %p139 = scmp.ne.s32.totalorder %s127, %s128
      %p140 = scmp.eq.s32.totalorder %s34, 1
      %p141 = por %p139, %p140
      %p143 = scmp.ne.s32.totalorder %s128, %s142
      %p144 = scmp.eq.s32.totalorder %s34, 0
      %p145 = por %p143, %p144
      %s147 = sadd.s32 %s146, 1
      %p150 = scmp.eq.s32.totalorder %s28, 1
      %p151 = scmp.ne.s32.totalorder %s146, %s148
      %p152 = scmp.eq.s32.totalorder %s28, 0
      %p153 = por %p151, %p152
      %p154 = scmp.ne.s32.totalorder %s146, %s148
      %p155 = scmp.eq.s32.totalorder %s33, 1
      %p156 = por %p154, %p155
      %p157 = scmp.ne.s32.totalorder %s148, %s149
      %p158 = scmp.eq.s32.totalorder %s33, 0
      %p159 = por %p157, %p158
      %p160 = scmp.ne.s32.totalorder %s148, %s149
      %p161 = scmp.eq.s32.totalorder %s34, 1
      %p162 = por %p160, %p161
      %p164 = scmp.ne.s32.totalorder %s149, %s163
      %p165 = scmp.eq.s32.totalorder %s34, 0
      %p166 = por %p164, %p165
      %s168 = sadd.s32 %s167, 1
      %p171 = scmp.eq.s32.totalorder %s28, 1
      %p172 = scmp.ne.s32.totalorder %s167, %s169
      %p173 = scmp.eq.s32.totalorder %s28, 0
      %p174 = por %p172, %p173
      %p175 = scmp.ne.s32.totalorder %s167, %s169
      %p176 = scmp.eq.s32.totalorder %s33, 1
      %p177 = por %p175, %p176
      %p178 = scmp.ne.s32.totalorder %s169, %s170
      %p179 = scmp.eq.s32.totalorder %s33, 0
      %p180 = por %p178, %p179
      %p181 = scmp.ne.s32.totalorder %s169, %s170
      %p182 = scmp.eq.s32.totalorder %s34, 1
      %p183 = por %p181, %p182
      %p185 = scmp.ne.s32.totalorder %s170, %s184
      %p186 = scmp.eq.s32.totalorder %s34, 0
      %p187 = por %p185, %p186
      %s189 = sadd.s32 %s188, 1
      %p192 = scmp.eq.s32.totalorder %s28, 1
      %p193 = scmp.ne.s32.totalorder %s188, %s190
      %p194 = scmp.eq.s32.totalorder %s28, 0
      %p195 = por %p193, %p194
      %p196 = scmp.ne.s32.totalorder %s188, %s190
      %p197 = scmp.eq.s32.totalorder %s33, 1
      %p198 = por %p196, %p197
      %p199 = scmp.ne.s32.totalorder %s190, %s191
      %p200 = scmp.eq.s32.totalorder %s33, 0
      %p201 = por %p199, %p200
      %p202 = scmp.ne.s32.totalorder %s190, %s191
      %p203 = scmp.eq.s32.totalorder %s34, 1
      %p204 = por %p202, %p203
      %p206 = scmp.ne.s32.totalorder %s191, %s205
      %p207 = scmp.eq.s32.totalorder %s34, 0
      %p208 = por %p206, %p207
      %s210 = sadd.s32 %s209, 1
      %p213 = scmp.eq.s32.totalorder %s28, 1
      %p214 = scmp.ne.s32.totalorder %s209, %s211
      %p215 = scmp.eq.s32.totalorder %s28, 0
      %p216 = por %p214, %p215
      %p217 = scmp.ne.s32.totalorder %s209, %s211
      %p218 = scmp.eq.s32.totalorder %s33, 1
      %p219 = por %p217, %p218
      %p220 = scmp.ne.s32.totalorder %s211, %s212
      %p221 = scmp.eq.s32.totalorder %s33, 0
      %p222 = por %p220, %p221
      %p223 = scmp.ne.s32.totalorder %s211, %s212
      %p224 = scmp.eq.s32.totalorder %s34, 1
      %p225 = por %p223, %p224
      %p227 = scmp.ne.s32.totalorder %s212, %s226
      %p228 = scmp.eq.s32.totalorder %s34, 0
      %p229 = por %p227, %p228
      %s231 = sadd.s32 %s230, 1
      %p234 = scmp.eq.s32.totalorder %s28, 1
      %p235 = scmp.ne.s32.totalorder %s230, %s232
      %p236 = scmp.eq.s32.totalorder %s28, 0
      %p237 = por %p235, %p236
      %p238 = scmp.ne.s32.totalorder %s230, %s232
      %p239 = scmp.eq.s32.totalorder %s33, 1
      %p240 = por %p238, %p239
      %p241 = scmp.ne.s32.totalorder %s232, %s233
      %p242 = scmp.eq.s32.totalorder %s33, 0
      %p243 = por %p241, %p242
      %p244 = scmp.ne.s32.totalorder %s232, %s233
      %p245 = scmp.eq.s32.totalorder %s34, 1
      %p246 = por %p244, %p245
      %p248 = scmp.ne.s32.totalorder %s233, %s247
      %p249 = scmp.eq.s32.totalorder %s34, 0
      %p250 = por %p248, %p249
      %s252 = sadd.s32 %s251, 1
      %p255 = scmp.eq.s32.totalorder %s28, 1
      %p256 = scmp.ne.s32.totalorder %s251, %s253
      %p257 = scmp.eq.s32.totalorder %s28, 0
      %p258 = por %p256, %p257
      %p259 = scmp.ne.s32.totalorder %s251, %s253
      %p260 = scmp.eq.s32.totalorder %s33, 1
      %p261 = por %p259, %p260
      %p262 = scmp.ne.s32.totalorder %s253, %s254
      %p263 = scmp.eq.s32.totalorder %s33, 0
      %p264 = por %p262, %p263
      %p265 = scmp.ne.s32.totalorder %s253, %s254
      %p266 = scmp.eq.s32.totalorder %s34, 1
      %p267 = por %p265, %p266
      %p269 = scmp.ne.s32.totalorder %s254, %s268
      %p270 = scmp.eq.s32.totalorder %s34, 0
      %p271 = por %p269, %p270
      %s273 = sadd.s32 %s272, 1
      %p276 = scmp.eq.s32.totalorder %s28, 1
      %p277 = scmp.ne.s32.totalorder %s272, %s274
      %p278 = scmp.eq.s32.totalorder %s28, 0
      %p279 = por %p277, %p278
      %p280 = scmp.ne.s32.totalorder %s272, %s274
      %p281 = scmp.eq.s32.totalorder %s33, 1
      %p282 = por %p280, %p281
      %p283 = scmp.ne.s32.totalorder %s274, %s275
      %p284 = scmp.eq.s32.totalorder %s33, 0
      %p285 = por %p283, %p284
      %p286 = scmp.ne.s32.totalorder %s274, %s275
      %p287 = scmp.eq.s32.totalorder %s34, 1
      %p288 = por %p286, %p287
      %p290 = scmp.ne.s32.totalorder %s275, %s289
      %p291 = scmp.eq.s32.totalorder %s34, 0
      %p292 = por %p290, %p291
      %s294 = sadd.s32 %s293, 1
      %p297 = scmp.eq.s32.totalorder %s28, 1
      %p298 = scmp.ne.s32.totalorder %s293, %s295
      %p299 = scmp.eq.s32.totalorder %s28, 0
      %p300 = por %p298, %p299
      %p301 = scmp.ne.s32.totalorder %s293, %s295
      %p302 = scmp.eq.s32.totalorder %s33, 1
      %p303 = por %p301, %p302
      %p304 = scmp.ne.s32.totalorder %s295, %s296
      %p305 = scmp.eq.s32.totalorder %s33, 0
      %p306 = por %p304, %p305
      %p307 = scmp.ne.s32.totalorder %s295, %s296
      %p308 = scmp.eq.s32.totalorder %s34, 1
      %p309 = por %p307, %p308
      %p311 = scmp.ne.s32.totalorder %s296, %s310
      %p312 = scmp.eq.s32.totalorder %s34, 0
      %p313 = por %p311, %p312
      %s315 = sadd.s32 %s314, 1
      %p318 = scmp.eq.s32.totalorder %s28, 1
      %p319 = scmp.ne.s32.totalorder %s314, %s316
      %p320 = scmp.eq.s32.totalorder %s28, 0
      %p321 = por %p319, %p320
      %p322 = scmp.ne.s32.totalorder %s314, %s316
      %p323 = scmp.eq.s32.totalorder %s33, 1
      %p324 = por %p322, %p323
      %p325 = scmp.ne.s32.totalorder %s316, %s317
      %p326 = scmp.eq.s32.totalorder %s33, 0
      %p327 = por %p325, %p326
      %p328 = scmp.ne.s32.totalorder %s316, %s317
      %p329 = scmp.eq.s32.totalorder %s34, 1
      %p330 = por %p328, %p329
      %p332 = scmp.ne.s32.totalorder %s317, %s331
      %p333 = scmp.eq.s32.totalorder %s34, 0
      %p334 = por %p332, %p333
      %s336 = sadd.s32 %s335, 1
      %p339 = scmp.eq.s32.totalorder %s28, 1
      %p340 = scmp.ne.s32.totalorder %s335, %s337
      %p341 = scmp.eq.s32.totalorder %s28, 0
      %p342 = por %p340, %p341
      %p343 = scmp.ne.s32.totalorder %s335, %s337
      %p344 = scmp.eq.s32.totalorder %s33, 1
      %p345 = por %p343, %p344
      %p346 = scmp.ne.s32.totalorder %s337, %s338
      %p347 = scmp.eq.s32.totalorder %s33, 0
      %p348 = por %p346, %p347
      %p349 = scmp.ne.s32.totalorder %s337, %s338
      %p350 = scmp.eq.s32.totalorder %s34, 1
      %p351 = por %p349, %p350
      %p353 = scmp.ne.s32.totalorder %s338, %s352
      %p354 = scmp.eq.s32.totalorder %s34, 0
      %p355 = por %p353, %p354
      %s357 = sadd.s32 %s356, 1
      %p360 = scmp.eq.s32.totalorder %s28, 1
      %p361 = scmp.ne.s32.totalorder %s356, %s358
      %p362 = scmp.eq.s32.totalorder %s28, 0
      %p363 = por %p361, %p362
      %p364 = scmp.ne.s32.totalorder %s356, %s358
      %p365 = scmp.eq.s32.totalorder %s33, 1
      %p366 = por %p364, %p365
      %p367 = scmp.ne.s32.totalorder %s358, %s359
      %p368 = scmp.eq.s32.totalorder %s33, 0
      %p369 = por %p367, %p368
      %p370 = scmp.ne.s32.totalorder %s358, %s359
      %p371 = scmp.eq.s32.totalorder %s34, 1
      %p372 = por %p370, %p371
      %p374 = scmp.ne.s32.totalorder %s359, %s373
      %p375 = scmp.eq.s32.totalorder %s34, 0
      %p376 = por %p374, %p375
      %s378 = sadd.s32 %s377, 1
      %p381 = scmp.eq.s32.totalorder %s28, 1
      %p382 = scmp.ne.s32.totalorder %s377, %s379
      %p383 = scmp.eq.s32.totalorder %s28, 0
      %p384 = por %p382, %p383
      %p385 = scmp.ne.s32.totalorder %s377, %s379
      %p386 = scmp.eq.s32.totalorder %s33, 1
      %p387 = por %p385, %p386
      %p388 = scmp.ne.s32.totalorder %s379, %s380
      %p389 = scmp.eq.s32.totalorder %s33, 0
      %p390 = por %p388, %p389
      %p391 = scmp.ne.s32.totalorder %s379, %s380
      %p392 = scmp.eq.s32.totalorder %s34, 1
      %p393 = por %p391, %p392
      %p395 = scmp.ne.s32.totalorder %s380, %s394
      %p396 = scmp.eq.s32.totalorder %s34, 0
      %p397 = por %p395, %p396
      %s399 = sadd.s32 %s398, 1
      %p402 = scmp.eq.s32.totalorder %s28, 1
      %p403 = scmp.ne.s32.totalorder %s398, %s400
      %p404 = scmp.eq.s32.totalorder %s28, 0
      %p405 = por %p403, %p404
      %p406 = scmp.ne.s32.totalorder %s398, %s400
      %p407 = scmp.eq.s32.totalorder %s33, 1
      %p408 = por %p406, %p407
      %p409 = scmp.ne.s32.totalorder %s400, %s401
      %p410 = scmp.eq.s32.totalorder %s33, 0
      %p411 = por %p409, %p410
      %p412 = scmp.ne.s32.totalorder %s400, %s401
      %p413 = scmp.eq.s32.totalorder %s34, 1
      %p414 = por %p412, %p413
      %p416 = scmp.ne.s32.totalorder %s401, %s415
      %p417 = scmp.eq.s32.totalorder %s34, 0
      %p418 = por %p416, %p417
      %s420 = sadd.s32 %s419, 1
      %p423 = scmp.eq.s32.totalorder %s28, 1
      %p424 = scmp.ne.s32.totalorder %s419, %s421
      %p425 = scmp.eq.s32.totalorder %s28, 0
      %p426 = por %p424, %p425
      %p427 = scmp.ne.s32.totalorder %s419, %s421
      %p428 = scmp.eq.s32.totalorder %s33, 1
      %p429 = por %p427, %p428
      %p430 = scmp.ne.s32.totalorder %s421, %s422
      %p431 = scmp.eq.s32.totalorder %s33, 0
      %p432 = por %p430, %p431
      %p433 = scmp.ne.s32.totalorder %s421, %s422
      %p434 = scmp.eq.s32.totalorder %s34, 1
      %p435 = por %p433, %p434
      %p437 = scmp.ne.s32.totalorder %s422, %s436
      %p438 = scmp.eq.s32.totalorder %s34, 0
      %p439 = por %p437, %p438
      %s440 = ssub.s32 %s28, %s35
      %p441 = scmp.eq.s32.totalorder %s440, 0
      %s443 = sadd.s32 %s442, 1
      %s444 = scalar_select %p441, %s442, %s443
      %p447 = pneg %p441
      %p448 = scmp.eq.s32.totalorder %s28, 1
      %p449 = por %p447, %p448
      %p450 = scmp.ne.s32.totalorder %s442, %s445
      %p451 = scmp.eq.s32.totalorder %s28, 0
      %p452 = por %p450, %p451
      %p453 = scmp.ne.s32.totalorder %s442, %s445
      %p454 = scmp.eq.s32.totalorder %s33, 1
      %p455 = por %p453, %p454
      %p456 = scmp.ne.s32.totalorder %s445, %s446
      %p457 = scmp.eq.s32.totalorder %s33, 0
      %p458 = por %p456, %p457
      %p459 = scmp.ne.s32.totalorder %s445, %s446
      %p460 = scmp.eq.s32.totalorder %s34, 1
      %p461 = por %p459, %p460
      %p463 = scmp.ne.s32.totalorder %s446, %s462
      %p464 = scmp.eq.s32.totalorder %s34, 0
      %p465 = por %p463, %p464
      %p466 = scmp.le.s32.totalorder 1, %s28
      %p467 = scmp.lt.s32.totalorder %s28, 3
      %p468 = pnand %p466, %p467
      %p469 = pneg %p468
      // Predicated region
      $region9: #{hybrid_transformer_forward.7} parent=5 // pred_check
        _
      $region10: #{hybrid_transformer_forward.7} parent=5 // pred_check_branch
        %471 = sbr.rel (%p468) target = $region12
      $region11: #{hybrid_transformer_forward.7} parent=5 // pred_region
        %s472 = ssub.s32 %s28, 1
        // Predicated region
        $region13: #{hybrid_transformer_forward.7} parent=11 // pred_check
          %p473 = pneg %p75
        $region14: #{hybrid_transformer_forward.7} parent=11 // pred_check_branch
          %475 = sbr.rel (%p473) target = $region16
        $region15: #{hybrid_transformer_forward.7} parent=11 // pred_region
          _
        $region16: #{hybrid_transformer_forward.7} parent=11 // pred_fallthru
          _
        // Predicated region
        $region17: #{hybrid_transformer_forward.7} parent=11 // pred_check
          %p476 = pneg %p96
        $region18: #{hybrid_transformer_forward.7} parent=11 // pred_check_branch
          %478 = sbr.rel (%p476) target = $region20
        $region19: #{hybrid_transformer_forward.7} parent=11 // pred_region
          _
        $region20: #{hybrid_transformer_forward.7} parent=11 // pred_fallthru
          _
        // Predicated region
        $region21: #{hybrid_transformer_forward.7} parent=11 // pred_check
          %p479 = pneg %p117
        $region22: #{hybrid_transformer_forward.7} parent=11 // pred_check_branch
          %481 = sbr.rel (%p479) target = $region24
        $region23: #{hybrid_transformer_forward.7} parent=11 // pred_region
          _
        $region24: #{hybrid_transformer_forward.7} parent=11 // pred_fallthru
          _
        // Predicated region
        $region25: #{hybrid_transformer_forward.7} parent=11 // pred_check
          %p482 = pneg %p138
        $region26: #{hybrid_transformer_forward.7} parent=11 // pred_check_branch
          %484 = sbr.rel (%p482) target = $region28
        $region27: #{hybrid_transformer_forward.7} parent=11 // pred_region
          _
        $region28: #{hybrid_transformer_forward.7} parent=11 // pred_fallthru
          _
        // Predicated region
        $region29: #{hybrid_transformer_forward.7} parent=11 // pred_check
          %p485 = pneg %p159
        $region30: #{hybrid_transformer_forward.7} parent=11 // pred_check_branch
          %487 = sbr.rel (%p485) target = $region32
        $region31: #{hybrid_transformer_forward.7} parent=11 // pred_region
          _
        $region32: #{hybrid_transformer_forward.7} parent=11 // pred_fallthru
          _
        // Predicated region
        $region33: #{hybrid_transformer_forward.7} parent=11 // pred_check
          %p488 = pneg %p180
        $region34: #{hybrid_transformer_forward.7} parent=11 // pred_check_branch
          %490 = sbr.rel (%p488) target = $region36
        $region35: #{hybrid_transformer_forward.7} parent=11 // pred_region
          _
        $region36: #{hybrid_transformer_forward.7} parent=11 // pred_fallthru
          _
        // Predicated region
        $region37: #{hybrid_transformer_forward.7} parent=11 // pred_check
          %p491 = pneg %p201
        $region38: #{hybrid_transformer_forward.7} parent=11 // pred_check_branch
          %493 = sbr.rel (%p491) target = $region40
        $region39: #{hybrid_transformer_forward.7} parent=11 // pred_region
          _
        $region40: #{hybrid_transformer_forward.7} parent=11 // pred_fallthru
          _
        // Predicated region
        $region41: #{hybrid_transformer_forward.7} parent=11 // pred_check
          %p494 = pneg %p222
        $region42: #{hybrid_transformer_forward.7} parent=11 // pred_check_branch
          %496 = sbr.rel (%p494) target = $region44
        $region43: #{hybrid_transformer_forward.7} parent=11 // pred_region
          _
        $region44: #{hybrid_transformer_forward.7} parent=11 // pred_fallthru
          _
        // Predicated region
        $region45: #{hybrid_transformer_forward.7} parent=11 // pred_check
          %p497 = pneg %p243
        $region46: #{hybrid_transformer_forward.7} parent=11 // pred_check_branch
          %499 = sbr.rel (%p497) target = $region48
        $region47: #{hybrid_transformer_forward.7} parent=11 // pred_region
          _
        $region48: #{hybrid_transformer_forward.7} parent=11 // pred_fallthru
          _
        // Predicated region
        $region49: #{hybrid_transformer_forward.7} parent=11 // pred_check
          %p500 = pneg %p264
        $region50: #{hybrid_transformer_forward.7} parent=11 // pred_check_branch
          %502 = sbr.rel (%p500) target = $region52
        $region51: #{hybrid_transformer_forward.7} parent=11 // pred_region
          _
        $region52: #{hybrid_transformer_forward.7} parent=11 // pred_fallthru
          _
        // Predicated region
        $region53: #{hybrid_transformer_forward.7} parent=11 // pred_check
          %p503 = pneg %p285
        $region54: #{hybrid_transformer_forward.7} parent=11 // pred_check_branch
          %505 = sbr.rel (%p503) target = $region56
        $region55: #{hybrid_transformer_forward.7} parent=11 // pred_region
          _
        $region56: #{hybrid_transformer_forward.7} parent=11 // pred_fallthru
          _
        // Predicated region
        $region57: #{hybrid_transformer_forward.7} parent=11 // pred_check
          %p506 = pneg %p306
        $region58: #{hybrid_transformer_forward.7} parent=11 // pred_check_branch
          %508 = sbr.rel (%p506) target = $region60
        $region59: #{hybrid_transformer_forward.7} parent=11 // pred_region
          _
        $region60: #{hybrid_transformer_forward.7} parent=11 // pred_fallthru
          _
        // Predicated region
        $region61: #{hybrid_transformer_forward.7} parent=11 // pred_check
          %p509 = pneg %p327
        $region62: #{hybrid_transformer_forward.7} parent=11 // pred_check_branch
          %511 = sbr.rel (%p509) target = $region64
        $region63: #{hybrid_transformer_forward.7} parent=11 // pred_region
          _
        $region64: #{hybrid_transformer_forward.7} parent=11 // pred_fallthru
          _
        // Predicated region
        $region65: #{hybrid_transformer_forward.7} parent=11 // pred_check
          %p512 = pneg %p348
        $region66: #{hybrid_transformer_forward.7} parent=11 // pred_check_branch
          %514 = sbr.rel (%p512) target = $region68
        $region67: #{hybrid_transformer_forward.7} parent=11 // pred_region
          _
        $region68: #{hybrid_transformer_forward.7} parent=11 // pred_fallthru
          _
        // Predicated region
        $region69: #{hybrid_transformer_forward.7} parent=11 // pred_check
          %p515 = pneg %p369
        $region70: #{hybrid_transformer_forward.7} parent=11 // pred_check_branch
          %517 = sbr.rel (%p515) target = $region72
        $region71: #{hybrid_transformer_forward.7} parent=11 // pred_region
          _
        $region72: #{hybrid_transformer_forward.7} parent=11 // pred_fallthru
          _
        // Predicated region
        $region73: #{hybrid_transformer_forward.7} parent=11 // pred_check
          %p518 = pneg %p390
        $region74: #{hybrid_transformer_forward.7} parent=11 // pred_check_branch
          %520 = sbr.rel (%p518) target = $region76
        $region75: #{hybrid_transformer_forward.7} parent=11 // pred_region
          _
        $region76: #{hybrid_transformer_forward.7} parent=11 // pred_fallthru
          _
        // Predicated region
        $region77: #{hybrid_transformer_forward.7} parent=11 // pred_check
          %p521 = pneg %p411
        $region78: #{hybrid_transformer_forward.7} parent=11 // pred_check_branch
          %523 = sbr.rel (%p521) target = $region80
        $region79: #{hybrid_transformer_forward.7} parent=11 // pred_region
          _
        $region80: #{hybrid_transformer_forward.7} parent=11 // pred_fallthru
          _
        // Predicated region
        $region81: #{hybrid_transformer_forward.7} parent=11 // pred_check
          %p524 = pneg %p432
        $region82: #{hybrid_transformer_forward.7} parent=11 // pred_check_branch
          %526 = sbr.rel (%p524) target = $region84
        $region83: #{hybrid_transformer_forward.7} parent=11 // pred_region
          _
        $region84: #{hybrid_transformer_forward.7} parent=11 // pred_fallthru
          _
      $region12: #{hybrid_transformer_forward.7} parent=5 // pred_fallthru
        _
      %p527 = scmp.lt.s32.totalorder %s28, 2
      // Predicated region
      $region85: #{hybrid_transformer_forward.7} parent=5 // pred_check
        %p528 = pneg %p527
      $region86: #{hybrid_transformer_forward.7} parent=5 // pred_check_branch
        %530 = sbr.rel (%p528) target = $region88
      $region87: #{hybrid_transformer_forward.7} parent=5 // pred_region
        // Predicated region
        $region89: #{hybrid_transformer_forward.7} parent=87 // pred_check
          %p531 = pneg %p48
        $region90: #{hybrid_transformer_forward.7} parent=87 // pred_check_branch
          %533 = sbr.rel (%p531) target = $region92
        $region91: #{hybrid_transformer_forward.7} parent=87 // pred_region
          %p534 = scmp.lt.s32.totalorder %s28, 1
          %s535 = scalar_select %p534, %s28, 1
          %s536 = smul.addr %s535, 4
          %s537 = smul.addr %s536, 8
          %s538 = scalar_lea.vmem %s0, %s537
        $region92: #{hybrid_transformer_forward.7} parent=87 // pred_fallthru
          _
      $region88: #{hybrid_transformer_forward.7} parent=5 // pred_fallthru
        _
      %p539 = scmp.le.s32.totalorder 1, %s28
      %p540 = scmp.lt.s32.totalorder %s28, 3
      %p541 = pnand %p539, %p540
      %p542 = pneg %p541
      // Predicated region
      $region93: #{hybrid_transformer_forward.7} parent=5 // pred_check
        _
      $region94: #{hybrid_transformer_forward.7} parent=5 // pred_check_branch
        %544 = sbr.rel (%p541) target = $region96
      $region95: #{hybrid_transformer_forward.7} parent=5 // pred_region
        %s545 = ssub.s32 %s28, 1
        %p546 = scmp.lt.s32.totalorder %s33, 1
        %s547 = scalar_select %p546, %s33, 1
        %s548 = smul.addr %s547, 4
        %s549 = smul.addr %s548, 8
        %s550 = scalar_lea.vmem %s0, %s549
        %p551 = pneg %p54
        %p552 = pneg %p51
        %p553 = pneg %p75
        %p554 = pneg %p72
        %p555 = pneg %p96
        %p556 = pneg %p93
        %p557 = pneg %p117
        %p558 = pneg %p114
        %p559 = pneg %p138
        %p560 = pneg %p135
        %p561 = pneg %p159
        %p562 = pneg %p156
        %p563 = pneg %p180
        %p564 = pneg %p177
        %p565 = pneg %p201
        %p566 = pneg %p198
        %p567 = pneg %p222
        %p568 = pneg %p219
        %p569 = pneg %p243
        %p570 = pneg %p240
        %p571 = pneg %p264
        %p572 = pneg %p261
        %p573 = pneg %p285
        %p574 = pneg %p282
        %p575 = pneg %p306
        %p576 = pneg %p303
        %p577 = pneg %p327
        %p578 = pneg %p324
        %p579 = pneg %p348
        %p580 = pneg %p345
        %p581 = pneg %p369
        %p582 = pneg %p366
        %p583 = pneg %p390
        %p584 = pneg %p387
        %p585 = pneg %p411
        %p586 = pneg %p408
        %p587 = pneg %p432
        %p588 = pneg %p429
        %p589 = pneg %p458
        %p590 = pneg %p455
        %s591 = sand.u32 %s445, 1
        %s592 = scalar_lea.sflag [#allocation3], %s591
        %s593 = sand.u32 %s445, 1
        %s594 = scalar_lea.vmem [#allocation2], %s593
        %p595 = scmp.lt.s32.totalorder %s33, 1
        %s596 = scalar_select %p595, %s33, 1
        %s597 = smul.addr %s596, 4
        %s598 = smul.addr %s597, 8
        %s599 = scalar_lea.vmem %s0, %s598
        %v600 = vld [vmem:[%s599] sm:$0x1f]
        %v601 = vld [vmem:[%s599 + $0x8] sm:$0x1f]
        %v602 = vld [vmem:[%s599 + $0x10] sm:$0x1f]
        %v603 = vld [vmem:[%s599 + $0x18] sm:$0x1f]
        %v604 = vld [vmem:[%s1] sm:$0xff]
        %v605 = vld [vmem:[%s1 + $0x8] sm:$0xff]
        %v606 = vld [vmem:[%s1 + $0x10] sm:$0xff]
        %v607 = vld [vmem:[%s1 + $0x18] sm:$0xff]
        %v608 = vld [vmem:[%s1 + $0x20] sm:$0xff]
        %v609 = vld [vmem:[%s1 + $0x28] sm:$0xff]
        %v610 = vld [vmem:[%s1 + $0x30] sm:$0xff]
        %v611 = vld [vmem:[%s1 + $0x38] sm:$0xff]
        %v612 = vld [vmem:[%s1 + $0x40] sm:$0xff]
        %v613 = vld [vmem:[%s1 + $0x48] sm:$0xff]
        %v614 = vld [vmem:[%s1 + $0x50] sm:$0xff]
        %v615 = vld [vmem:[%s1 + $0x58] sm:$0xff]
        %v616 = vld [vmem:[%s1 + $0x60] sm:$0xff]
        %v617 = vld [vmem:[%s1 + $0x68] sm:$0xff]
        %v618 = vld [vmem:[%s1 + $0x70] sm:$0xff]
        %v619 = vld [vmem:[%s1 + $0x78] sm:$0xff]
        %v620 = vld [vmem:[%s1 + $0x80] sm:$0xff]
        %v621 = vld [vmem:[%s1 + $0x88] sm:$0xff]
        %v622 = vld [vmem:[%s1 + $0x90] sm:$0xff]
        %v623 = vld [vmem:[%s1 + $0x98] sm:$0xff]
        %v624 = vld [vmem:[%s1 + $0xa0] sm:$0xff]
        %v625 = vld [vmem:[%s1 + $0xa8] sm:$0xff]
        %v626 = vld [vmem:[%s1 + $0xb0] sm:$0xff]
        %v627 = vld [vmem:[%s1 + $0xb8] sm:$0xff]
        %v628 = vld [vmem:[%s1 + $0xc0] sm:$0xff]
        %v629 = vld [vmem:[%s1 + $0xc8] sm:$0xff]
        %v630 = vld [vmem:[%s1 + $0xd0] sm:$0xff]
        %v631 = vld [vmem:[%s1 + $0xd8] sm:$0xff]
        %v632 = vld [vmem:[%s1 + $0xe0] sm:$0xff]
        %v633 = vld [vmem:[%s1 + $0xe8] sm:$0xff]
        %v634 = vld [vmem:[%s1 + $0xf0] sm:$0xff]
        %v635 = vld [vmem:[%s1 + $0xf8] sm:$0xff]
        %v636 = vld [vmem:[%s1 + $0x100] sm:$0xff]
        %v637 = vld [vmem:[%s1 + $0x108] sm:$0xff]
        %v638 = vld [vmem:[%s1 + $0x110] sm:$0xff]
        %v639 = vld [vmem:[%s1 + $0x118] sm:$0xff]
        %v640 = vld [vmem:[%s1 + $0x120] sm:$0xff]
        %v641 = vld [vmem:[%s1 + $0x128] sm:$0xff]
        %v642 = vld [vmem:[%s1 + $0x130] sm:$0xff]
        %v643 = vld [vmem:[%s1 + $0x138] sm:$0xff]
        %v644 = vld [vmem:[%s1 + $0x140] sm:$0xff]
        %v645 = vld [vmem:[%s1 + $0x148] sm:$0xff]
        %v646 = vld [vmem:[%s1 + $0x150] sm:$0xff]
        %v647 = vld [vmem:[%s1 + $0x158] sm:$0xff]
        %v648 = vld [vmem:[%s1 + $0x160] sm:$0xff]
        %v649 = vld [vmem:[%s1 + $0x168] sm:$0xff]
        %v650 = vld [vmem:[%s1 + $0x170] sm:$0xff]
        %v651 = vld [vmem:[%s1 + $0x178] sm:$0xff]
        %v652 = vld [vmem:[%s1 + $0x180] sm:$0xff]
        %v653 = vld [vmem:[%s1 + $0x188] sm:$0xff]
        %v654 = vld [vmem:[%s1 + $0x190] sm:$0xff]
        %v655 = vld [vmem:[%s1 + $0x198] sm:$0xff]
        %v656 = vld [vmem:[%s1 + $0x1a0] sm:$0xff]
        %v657 = vld [vmem:[%s1 + $0x1a8] sm:$0xff]
        %v658 = vld [vmem:[%s1 + $0x1b0] sm:$0xff]
        %v659 = vld [vmem:[%s1 + $0x1b8] sm:$0xff]
        %v660 = vld [vmem:[%s1 + $0x1c0] sm:$0xff]
        %v661 = vld [vmem:[%s1 + $0x1c8] sm:$0xff]
        %v662 = vld [vmem:[%s1 + $0x1d0] sm:$0xff]
        %v663 = vld [vmem:[%s1 + $0x1d8] sm:$0xff]
        %v664 = vld [vmem:[%s1 + $0x1e0] sm:$0xff]
        %v665 = vld [vmem:[%s1 + $0x1e8] sm:$0xff]
        %v666 = vld [vmem:[%s1 + $0x1f0] sm:$0xff]
        %v667 = vld [vmem:[%s1 + $0x1f8] sm:$0xff]
        %v668 = vld [vmem:[%s2] sm:$0x1f]
        %669 = vmatprep.subr.mxu0 0.0
        %670 = vmatpush1.msra.mxu0 %v619
        %671 = vmatprep.subr.mxu0 0.0
        %672 = vmatpush1.msra.mxu0 %v618
        %673 = vmatprep.subr.mxu0 0.0
        %674 = vmatpush1.msra.mxu0 %v617
        %675 = vmatprep.subr.mxu0 0.0
        %676 = vmatpush1.msra.mxu0 %v616
        %677 = vmatprep.subr.mxu0 0.0
        %678 = vmatpush1.msra.mxu0 %v615
        %679 = vmatprep.subr.mxu0 0.0
        %680 = vmatpush1.msra.mxu0 %v614
        %681 = vmatprep.subr.mxu0 0.0
        %682 = vmatpush1.msra.mxu0 %v613
        %683 = vmatprep.subr.mxu0 0.0
        %684 = vmatpush1.msra.mxu0 %v612
        %685 = vmatprep.subr.mxu0 0.0
        %686 = vmatpush1.msra.mxu0 %v611
        %687 = vmatprep.subr.mxu0 0.0
        %688 = vmatpush1.msra.mxu0 %v610
        %689 = vmatprep.subr.mxu0 0.0
        %690 = vmatpush1.msra.mxu0 %v609
        %691 = vmatprep.subr.mxu0 0.0
        %692 = vmatpush1.msra.mxu0 %v608
        %693 = vmatprep.subr.mxu0 0.0
        %694 = vmatpush1.msra.mxu0 %v607
        %695 = vmatprep.subr.mxu0 0.0
        %696 = vmatpush1.msra.mxu0 %v606
        %697 = vmatprep.subr.mxu0 0.0
        %698 = vmatpush1.msra.mxu0 %v605
        %699 = vmatprep.subr.mxu0 0.0
        %700 = vmatpush1.msra.mxu0 %v604
        %701 = vmatprep.subr.mxu0 0.0
        %702 = vmatpush2.msra.mxu0 %v635
        %703 = vmatprep.subr.mxu0 0.0
        %704 = vmatpush2.msra.mxu0 %v634
        %705 = vmatprep.subr.mxu0 0.0
        %706 = vmatpush2.msra.mxu0 %v633
        %707 = vmatprep.subr.mxu0 0.0
        %708 = vmatpush2.msra.mxu0 %v632
        %709 = vmatprep.subr.mxu0 0.0
        %710 = vmatpush2.msra.mxu0 %v631
        %711 = vmatprep.subr.mxu0 0.0
        %712 = vmatpush2.msra.mxu0 %v630
        %713 = vmatprep.subr.mxu0 0.0
        %714 = vmatpush2.msra.mxu0 %v629
        %715 = vmatprep.subr.mxu0 0.0
        %716 = vmatpush2.msra.mxu0 %v628
        %717 = vmatprep.subr.mxu0 0.0
        %718 = vmatpush2.msra.mxu0 %v627
        %719 = vmatprep.subr.mxu0 0.0
        %720 = vmatpush2.msra.mxu0 %v626
        %721 = vmatprep.subr.mxu0 0.0
        %722 = vmatpush2.msra.mxu0 %v625
        %723 = vmatprep.subr.mxu0 0.0
        %724 = vmatpush2.msra.mxu0 %v624
        %725 = vmatprep.subr.mxu0 0.0
        %726 = vmatpush2.msra.mxu0 %v623
        %727 = vmatprep.subr.mxu0 0.0
        %728 = vmatpush2.msra.mxu0 %v622
        %729 = vmatprep.subr.mxu0 0.0
        %730 = vmatpush2.msra.mxu0 %v621
        %731 = vmatprep.subr.mxu0 0.0
        %732 = vmatpush2.msra.mxu0 %v620
        %733 = vmatprep.mubr.f32.mxu0 %v601
        %734 = vmatmul.mubr.f32.gmra.mxu0 %v600
        %v735 = vpop.f32.mrf.mxu0
        %v736 = vadd.f32 %v668, %v735
        %v737 = vpop.f32.mrf.mxu0
        %738 = vdwg.mxu0
        %739 = vmatprep.subr.mxu0 0.0
        %740 = vmatpush1.msra.mxu0 %v651
        %741 = vmatprep.subr.mxu0 0.0
        %742 = vmatpush1.msra.mxu0 %v650
        %743 = vmatprep.subr.mxu0 0.0
        %744 = vmatpush1.msra.mxu0 %v649
        %745 = vmatprep.subr.mxu0 0.0
        %746 = vmatpush1.msra.mxu0 %v648
        %747 = vmatprep.subr.mxu0 0.0
        %748 = vmatpush1.msra.mxu0 %v647
        %749 = vmatprep.subr.mxu0 0.0
        %750 = vmatpush1.msra.mxu0 %v646
        %751 = vmatprep.subr.mxu0 0.0
        %752 = vmatpush1.msra.mxu0 %v645
        %753 = vmatprep.subr.mxu0 0.0
        %754 = vmatpush1.msra.mxu0 %v644
        %755 = vmatprep.subr.mxu0 0.0
        %756 = vmatpush1.msra.mxu0 %v643
        %757 = vmatprep.subr.mxu0 0.0
        %758 = vmatpush1.msra.mxu0 %v642
        %759 = vmatprep.subr.mxu0 0.0
        %760 = vmatpush1.msra.mxu0 %v641
        %761 = vmatprep.subr.mxu0 0.0
        %762 = vmatpush1.msra.mxu0 %v640
        %763 = vmatprep.subr.mxu0 0.0
        %764 = vmatpush1.msra.mxu0 %v639
        %765 = vmatprep.subr.mxu0 0.0
        %766 = vmatpush1.msra.mxu0 %v638
        %767 = vmatprep.subr.mxu0 0.0
        %768 = vmatpush1.msra.mxu0 %v637
        %769 = vmatprep.subr.mxu0 0.0
        %770 = vmatpush1.msra.mxu0 %v636
        %771 = vmatprep.subr.mxu0 0.0
        %772 = vmatpush2.msra.mxu0 %v667
        %773 = vmatprep.subr.mxu0 0.0
        %774 = vmatpush2.msra.mxu0 %v666
        %775 = vmatprep.subr.mxu0 0.0
        %776 = vmatpush2.msra.mxu0 %v665
        %777 = vmatprep.subr.mxu0 0.0
        %778 = vmatpush2.msra.mxu0 %v664
        %779 = vmatprep.subr.mxu0 0.0
        %780 = vmatpush2.msra.mxu0 %v663
        %781 = vmatprep.subr.mxu0 0.0
        %782 = vmatpush2.msra.mxu0 %v662
        %783 = vmatprep.subr.mxu0 0.0
        %784 = vmatpush2.msra.mxu0 %v661
        %785 = vmatprep.subr.mxu0 0.0
        %786 = vmatpush2.msra.mxu0 %v660
        %787 = vmatprep.subr.mxu0 0.0
        %788 = vmatpush2.msra.mxu0 %v659
        %789 = vmatprep.subr.mxu0 0.0
        %790 = vmatpush2.msra.mxu0 %v658
        %791 = vmatprep.subr.mxu0 0.0
        %792 = vmatpush2.msra.mxu0 %v657
        %793 = vmatprep.subr.mxu0 0.0
        %794 = vmatpush2.msra.mxu0 %v656
        %795 = vmatprep.subr.mxu0 0.0
        %796 = vmatpush2.msra.mxu0 %v655
        %797 = vmatprep.subr.mxu0 0.0
        %798 = vmatpush2.msra.mxu0 %v654
        %799 = vmatprep.subr.mxu0 0.0
        %800 = vmatpush2.msra.mxu0 %v653
        %801 = vmatprep.subr.mxu0 0.0
        %802 = vmatpush2.msra.mxu0 %v652
        %803 = vmatprep.mubr.f32.mxu0 %v603
        %804 = vmatmul.mubr.f32.gmra.mxu0 %v602
        %v805 = vpop.f32.mrf.mxu0
        %v806 = vadd.f32 %v736, %v805
        %v807 = vpop.f32.mrf.mxu0
        %808 = vdwg.mxu0
        %v809 = vld [vmem:[%s3] sm:$0x1]
        %v810 = vld [vmem:[%s3 + $0x1] sm:$0x1]
        %v811 = vld [vmem:[%s4] sm:$0x1]
        %v812 = vld [vmem:[%s4 + $0x1] sm:$0x1]
        %v813 = vld [vmem:[%s5] sm:$0xff]
        %v814 = vld [vmem:[%s5 + $0x8] sm:$0xff]
        %v815 = vld [vmem:[%s5 + $0x10] sm:$0xff]
        %v816 = vld [vmem:[%s5 + $0x18] sm:$0xff]
        %v817 = vld [vmem:[%s5 + $0x20] sm:$0xff]
        %v818 = vld [vmem:[%s5 + $0x28] sm:$0xff]
        %v819 = vld [vmem:[%s5 + $0x30] sm:$0xff]
        %v820 = vld [vmem:[%s5 + $0x38] sm:$0xff]
        %v821 = vld [vmem:[%s5 + $0x40] sm:$0xff]
        %v822 = vld [vmem:[%s5 + $0x48] sm:$0xff]
        %v823 = vld [vmem:[%s5 + $0x50] sm:$0xff]
        %v824 = vld [vmem:[%s5 + $0x58] sm:$0xff]
        %v825 = vld [vmem:[%s5 + $0x60] sm:$0xff]
        %v826 = vld [vmem:[%s5 + $0x68] sm:$0xff]
        %v827 = vld [vmem:[%s5 + $0x70] sm:$0xff]
        %v828 = vld [vmem:[%s5 + $0x78] sm:$0xff]
        %v829 = vld [vmem:[%s5 + $0x80] sm:$0xff]
        %v830 = vld [vmem:[%s5 + $0x88] sm:$0xff]
        %v831 = vld [vmem:[%s5 + $0x90] sm:$0xff]
        %v832 = vld [vmem:[%s5 + $0x98] sm:$0xff]
        %v833 = vld [vmem:[%s5 + $0xa0] sm:$0xff]
        %v834 = vld [vmem:[%s5 + $0xa8] sm:$0xff]
        %v835 = vld [vmem:[%s5 + $0xb0] sm:$0xff]
        %v836 = vld [vmem:[%s5 + $0xb8] sm:$0xff]
        %v837 = vld [vmem:[%s5 + $0xc0] sm:$0xff]
        %v838 = vld [vmem:[%s5 + $0xc8] sm:$0xff]
        %v839 = vld [vmem:[%s5 + $0xd0] sm:$0xff]
        %v840 = vld [vmem:[%s5 + $0xd8] sm:$0xff]
        %v841 = vld [vmem:[%s5 + $0xe0] sm:$0xff]
        %v842 = vld [vmem:[%s5 + $0xe8] sm:$0xff]
        %v843 = vld [vmem:[%s5 + $0xf0] sm:$0xff]
        %v844 = vld [vmem:[%s5 + $0xf8] sm:$0xff]
        %v845 = vld [vmem:[%s5 + $0x100] sm:$0xff]
        %v846 = vld [vmem:[%s5 + $0x108] sm:$0xff]
        %v847 = vld [vmem:[%s5 + $0x110] sm:$0xff]
        %v848 = vld [vmem:[%s5 + $0x118] sm:$0xff]
        %v849 = vld [vmem:[%s5 + $0x120] sm:$0xff]
        %v850 = vld [vmem:[%s5 + $0x128] sm:$0xff]
        %v851 = vld [vmem:[%s5 + $0x130] sm:$0xff]
        %v852 = vld [vmem:[%s5 + $0x138] sm:$0xff]
        %v853 = vld [vmem:[%s5 + $0x140] sm:$0xff]
        %v854 = vld [vmem:[%s5 + $0x148] sm:$0xff]
        %v855 = vld [vmem:[%s5 + $0x150] sm:$0xff]
        %v856 = vld [vmem:[%s5 + $0x158] sm:$0xff]
        %v857 = vld [vmem:[%s5 + $0x160] sm:$0xff]
        %v858 = vld [vmem:[%s5 + $0x168] sm:$0xff]
        %v859 = vld [vmem:[%s5 + $0x170] sm:$0xff]
        %v860 = vld [vmem:[%s5 + $0x178] sm:$0xff]
        %v861 = vld [vmem:[%s5 + $0x180] sm:$0xff]
        %v862 = vld [vmem:[%s5 + $0x188] sm:$0xff]
        %v863 = vld [vmem:[%s5 + $0x190] sm:$0xff]
        %v864 = vld [vmem:[%s5 + $0x198] sm:$0xff]
        %v865 = vld [vmem:[%s5 + $0x1a0] sm:$0xff]
        %v866 = vld [vmem:[%s5 + $0x1a8] sm:$0xff]
        %v867 = vld [vmem:[%s5 + $0x1b0] sm:$0xff]
        %v868 = vld [vmem:[%s5 + $0x1b8] sm:$0xff]
        %v869 = vld [vmem:[%s5 + $0x1c0] sm:$0xff]
        %v870 = vld [vmem:[%s5 + $0x1c8] sm:$0xff]
        %v871 = vld [vmem:[%s5 + $0x1d0] sm:$0xff]
        %v872 = vld [vmem:[%s5 + $0x1d8] sm:$0xff]
        %v873 = vld [vmem:[%s5 + $0x1e0] sm:$0xff]
        %v874 = vld [vmem:[%s5 + $0x1e8] sm:$0xff]
        %v875 = vld [vmem:[%s5 + $0x1f0] sm:$0xff]
        %v876 = vld [vmem:[%s5 + $0x1f8] sm:$0xff]
        %v877 = vld [vmem:[%s5 + $0x200] sm:$0xff]
        %v878 = vld [vmem:[%s5 + $0x208] sm:$0xff]
        %v879 = vld [vmem:[%s5 + $0x210] sm:$0xff]
        %v880 = vld [vmem:[%s5 + $0x218] sm:$0xff]
        %v881 = vld [vmem:[%s5 + $0x220] sm:$0xff]
        %v882 = vld [vmem:[%s5 + $0x228] sm:$0xff]
        %v883 = vld [vmem:[%s5 + $0x230] sm:$0xff]
        %v884 = vld [vmem:[%s5 + $0x238] sm:$0xff]
        %v885 = vld [vmem:[%s5 + $0x240] sm:$0xff]
        %v886 = vld [vmem:[%s5 + $0x248] sm:$0xff]
        %v887 = vld [vmem:[%s5 + $0x250] sm:$0xff]
        %v888 = vld [vmem:[%s5 + $0x258] sm:$0xff]
        %v889 = vld [vmem:[%s5 + $0x260] sm:$0xff]
        %v890 = vld [vmem:[%s5 + $0x268] sm:$0xff]
        %v891 = vld [vmem:[%s5 + $0x270] sm:$0xff]
        %v892 = vld [vmem:[%s5 + $0x278] sm:$0xff]
        %v893 = vld [vmem:[%s5 + $0x280] sm:$0xff]
        %v894 = vld [vmem:[%s5 + $0x288] sm:$0xff]
        %v895 = vld [vmem:[%s5 + $0x290] sm:$0xff]
        %v896 = vld [vmem:[%s5 + $0x298] sm:$0xff]
        %v897 = vld [vmem:[%s5 + $0x2a0] sm:$0xff]
        %v898 = vld [vmem:[%s5 + $0x2a8] sm:$0xff]
        %v899 = vld [vmem:[%s5 + $0x2b0] sm:$0xff]
        %v900 = vld [vmem:[%s5 + $0x2b8] sm:$0xff]
        %v901 = vld [vmem:[%s5 + $0x2c0] sm:$0xff]
        %v902 = vld [vmem:[%s5 + $0x2c8] sm:$0xff]
        %v903 = vld [vmem:[%s5 + $0x2d0] sm:$0xff]
        %v904 = vld [vmem:[%s5 + $0x2d8] sm:$0xff]
        %v905 = vld [vmem:[%s5 + $0x2e0] sm:$0xff]
        %v906 = vld [vmem:[%s5 + $0x2e8] sm:$0xff]
        %v907 = vld [vmem:[%s5 + $0x2f0] sm:$0xff]
        %v908 = vld [vmem:[%s5 + $0x2f8] sm:$0xff]
        %v909 = vld [vmem:[%s6] sm:$0x1]
        %v910 = vld [vmem:[%s6 + $0x1] sm:$0x1]
        %v911 = vld [vmem:[%s6 + $0x2] sm:$0x1]
        %v912 = vld [vmem:[%s6 + $0x3] sm:$0x1]
        %v913 = vld [vmem:[%s6 + $0x4] sm:$0x1]
        %v914 = vld [vmem:[%s6 + $0x5] sm:$0x1]
        %v915 = vld [vmem:[%s6 + $0x6] sm:$0x1]
        %v916 = vld [vmem:[%s6 + $0x7] sm:$0x1]
        %v917 = vld [vmem:[%s6 + $0x8] sm:$0x1]
        %v918 = vld [vmem:[%s6 + $0x9] sm:$0x1]
        %v919 = vld [vmem:[%s6 + $0xa] sm:$0x1]
        %v920 = vld [vmem:[%s6 + $0xb] sm:$0x1]
        %v921 = vld [vmem:[%s6 + $0xc] sm:$0x1]
        %v922 = vld [vmem:[%s6 + $0xd] sm:$0x1]
        %v923 = vld [vmem:[%s6 + $0xe] sm:$0x1]
        %v924 = vld [vmem:[%s6 + $0xf] sm:$0x1]
        %v925 = vld [vmem:[%s6 + $0x10] sm:$0x1]
        %v926 = vld [vmem:[%s6 + $0x11] sm:$0x1]
        %v927 = vld [vmem:[%s6 + $0x12] sm:$0x1]
        %v928 = vld [vmem:[%s6 + $0x13] sm:$0x1]
        %v929 = vld [vmem:[%s6 + $0x14] sm:$0x1]
        %v930 = vld [vmem:[%s6 + $0x15] sm:$0x1]
        %v931 = vld [vmem:[%s6 + $0x16] sm:$0x1]
        %v932 = vld [vmem:[%s6 + $0x17] sm:$0x1]
        %v933 = vld [vmem:[%s7] sm:$0xff]
        %v934 = vld [vmem:[%s7 + $0x8] sm:$0xff]
        %v935 = vld [vmem:[%s7 + $0x10] sm:$0xff]
        %v936 = vld [vmem:[%s7 + $0x18] sm:$0xff]
        %v937 = vld [vmem:[%s7 + $0x20] sm:$0xff]
        %v938 = vld [vmem:[%s7 + $0x28] sm:$0xff]
        %v939 = vld [vmem:[%s7 + $0x30] sm:$0xff]
        %v940 = vld [vmem:[%s7 + $0x38] sm:$0xff]
        %v941 = vld [vmem:[%s8] sm:$0x1]
        %v942 = vld [vmem:[%s8 + $0x1] sm:$0x1]
        %v943 = vld [vmem:[%s9] sm:$0x1]
        %v944 = vld [vmem:[%s9 + $0x1] sm:$0x1]
        %v945 = vld [vmem:[%s10] sm:$0x1]
        %v946 = vld [vmem:[%s10 + $0x1] sm:$0x1]
        %v947 = vld [vmem:[%s11] sm:$0xff]
        %v948 = vld [vmem:[%s11 + $0x8] sm:$0xff]
        %v949 = vld [vmem:[%s11 + $0x10] sm:$0xff]
        %v950 = vld [vmem:[%s11 + $0x18] sm:$0xff]
        %v951 = vld [vmem:[%s11 + $0x20] sm:$0xff]
        %v952 = vld [vmem:[%s11 + $0x28] sm:$0xff]
        %v953 = vld [vmem:[%s11 + $0x30] sm:$0xff]
        %v954 = vld [vmem:[%s11 + $0x38] sm:$0xff]
        %v955 = vld [vmem:[%s12] sm:$0x1]
        %v956 = vld [vmem:[%s12 + $0x1] sm:$0x1]
        %v957 = vld [vmem:[%s13] sm:$0xff]
        %v958 = vld [vmem:[%s13 + $0x8] sm:$0xff]
        %v959 = vld [vmem:[%s13 + $0x10] sm:$0xff]
        %v960 = vld [vmem:[%s13 + $0x18] sm:$0xff]
        %v961 = vld [vmem:[%s13 + $0x20] sm:$0xff]
        %v962 = vld [vmem:[%s13 + $0x28] sm:$0xff]
        %v963 = vld [vmem:[%s13 + $0x30] sm:$0xff]
        %v964 = vld [vmem:[%s13 + $0x38] sm:$0xff]
        %v965 = vld [vmem:[%s13 + $0x40] sm:$0xff]
        %v966 = vld [vmem:[%s13 + $0x48] sm:$0xff]
        %v967 = vld [vmem:[%s13 + $0x50] sm:$0xff]
        %v968 = vld [vmem:[%s13 + $0x58] sm:$0xff]
        %v969 = vld [vmem:[%s13 + $0x60] sm:$0xff]
        %v970 = vld [vmem:[%s13 + $0x68] sm:$0xff]
        %v971 = vld [vmem:[%s13 + $0x70] sm:$0xff]
        %v972 = vld [vmem:[%s13 + $0x78] sm:$0xff]
        %v973 = vld [vmem:[%s13 + $0x80] sm:$0xff]
        %v974 = vld [vmem:[%s13 + $0x88] sm:$0xff]
        %v975 = vld [vmem:[%s13 + $0x90] sm:$0xff]
        %v976 = vld [vmem:[%s13 + $0x98] sm:$0xff]
        %v977 = vld [vmem:[%s13 + $0xa0] sm:$0xff]
        %v978 = vld [vmem:[%s13 + $0xa8] sm:$0xff]
        %v979 = vld [vmem:[%s13 + $0xb0] sm:$0xff]
        %v980 = vld [vmem:[%s13 + $0xb8] sm:$0xff]
        %v981 = vld [vmem:[%s13 + $0xc0] sm:$0xff]
        %v982 = vld [vmem:[%s13 + $0xc8] sm:$0xff]
        %v983 = vld [vmem:[%s13 + $0xd0] sm:$0xff]
        %v984 = vld [vmem:[%s13 + $0xd8] sm:$0xff]
        %v985 = vld [vmem:[%s13 + $0xe0] sm:$0xff]
        %v986 = vld [vmem:[%s13 + $0xe8] sm:$0xff]
        %v987 = vld [vmem:[%s13 + $0xf0] sm:$0xff]
        %v988 = vld [vmem:[%s13 + $0xf8] sm:$0xff]
        %v989 = vld [vmem:[%s14] sm:$0x1]
        %v990 = vld [vmem:[%s14 + $0x1] sm:$0x1]
        %vm991 = vcmask 258048
        %v992 = vsel %vm991, %v806, 0.0
        %993 = vadd.xlane.f32.xlu0 %v992
        %v994 = vpop.xlane.xlu0 %993
        %v995 = vrcp.pop 32.0
        %v996 = vmul.f32 %v994, %v995
        %v997 = vsub.f32 %v806, %v996
        %v998 = vmul.f32 %v997, %v997
        %v999 = vsel %vm991, %v998, 0.0
        %1000 = vadd.xlane.f32.xlu0 %v999
        %v1001 = vpop.xlane.xlu0 %1000
        %v1002 = vmul.f32 %v1001, %v995
        %v1003 = vadd.f32 %v1002, 1e-06
        %v1004 = vrsqrt.pop %v1003
        %v1005 = vmul.f32 %v997, %v1004
        %v1007 = vlaneseq
        %v1008 = vshrl.u32 %v1007, 7
        %v1009 = vsub.s32 0, %v1008
        %v1010 = vrot.slane %v809, %v1009
        %v1012 = vmul.f32 %v1005, %v1010
        %v1014 = vlaneseq
        %v1015 = vshrl.u32 %v1014, 7
        %v1016 = vsub.s32 0, %v1015
        %v1017 = vrot.slane %v811, %v1016
        %v1019 = vadd.f32 %v1012, %v1017
        %v1032 = vlaneseq
        %v1033 = vshrl.u32 %v1032, 7
        %v1034 = vsub.s32 0, %v1033
        %v1035 = vrot.slane %v909, %v1034
        %v1036 = vlaneseq
        %v1037 = vshrl.u32 %v1036, 7
        %v1038 = vsub.s32 0, %v1037
        %v1039 = vrot.slane %v910, %v1038
        %v1040 = vlaneseq
        %v1041 = vshrl.u32 %v1040, 7
        %v1042 = vsub.s32 0, %v1041
        %v1043 = vrot.slane %v911, %v1042
        %v1044 = vlaneseq
        %v1045 = vshrl.u32 %v1044, 7
        %v1046 = vsub.s32 0, %v1045
        %v1047 = vrot.slane %v912, %v1046
        %v1048 = vlaneseq
        %v1049 = vshrl.u32 %v1048, 7
        %v1050 = vsub.s32 0, %v1049
        %v1051 = vrot.slane %v913, %v1050
        %v1052 = vlaneseq
        %v1053 = vshrl.u32 %v1052, 7
        %v1054 = vsub.s32 0, %v1053
        %v1055 = vrot.slane %v914, %v1054
        %v1056 = vlaneseq
        %v1057 = vshrl.u32 %v1056, 7
        %v1058 = vsub.s32 0, %v1057
        %v1059 = vrot.slane %v915, %v1058
        %v1060 = vlaneseq
        %v1061 = vshrl.u32 %v1060, 7
        %v1062 = vsub.s32 0, %v1061
        %v1063 = vrot.slane %v916, %v1062
        %v1064 = vlaneseq
        %v1065 = vshrl.u32 %v1064, 7
        %v1066 = vsub.s32 0, %v1065
        %v1067 = vrot.slane %v917, %v1066
        %v1068 = vlaneseq
        %v1069 = vshrl.u32 %v1068, 7
        %v1070 = vsub.s32 0, %v1069
        %v1071 = vrot.slane %v918, %v1070
        %v1072 = vlaneseq
        %v1073 = vshrl.u32 %v1072, 7
        %v1074 = vsub.s32 0, %v1073
        %v1075 = vrot.slane %v919, %v1074
        %v1076 = vlaneseq
        %v1077 = vshrl.u32 %v1076, 7
        %v1078 = vsub.s32 0, %v1077
        %v1079 = vrot.slane %v920, %v1078
        %vm1092 = vcmask 261120
        %v1094 = vsel %vm1092, %v1019, 0
        %1096 = vmatprep.subr.mxu0 0.0
        %1097 = vmatpush1.msra.mxu0 0.0
        %1098 = vmatprep.subr.mxu0 0.0
        %1099 = vmatpush1.msra.mxu0 0.0
        %1100 = vmatprep.subr.mxu0 0.0
        %1101 = vmatpush1.msra.mxu0 0.0
        %1102 = vmatprep.subr.mxu0 0.0
        %1103 = vmatpush1.msra.mxu0 0.0
        %1104 = vmatprep.subr.mxu0 0.0
        %1105 = vmatpush1.msra.mxu0 0.0
        %1106 = vmatprep.subr.mxu0 0.0
        %1107 = vmatpush1.msra.mxu0 0.0
        %1108 = vmatprep.subr.mxu0 0.0
        %1109 = vmatpush1.msra.mxu0 0.0
        %1110 = vmatprep.subr.mxu0 0.0
        %1111 = vmatpush1.msra.mxu0 0.0
        %1112 = vmatprep.subr.mxu0 0.0
        %1113 = vmatpush1.msra.mxu0 0.0
        %1114 = vmatprep.subr.mxu0 0.0
        %1115 = vmatpush1.msra.mxu0 0.0
        %1116 = vmatprep.subr.mxu0 0.0
        %1117 = vmatpush1.msra.mxu0 0.0
        %1118 = vmatprep.subr.mxu0 0.0
        %1119 = vmatpush1.msra.mxu0 0.0
        %1120 = vmatprep.subr.mxu0 0.0
        %1121 = vmatpush1.msra.mxu0 %v816
        %1122 = vmatprep.subr.mxu0 0.0
        %1123 = vmatpush1.msra.mxu0 %v815
        %1124 = vmatprep.subr.mxu0 0.0
        %1125 = vmatpush1.msra.mxu0 %v814
        %1126 = vmatprep.subr.mxu0 0.0
        %1127 = vmatpush1.msra.mxu0 %v813
        %1128 = vmatprep.subr.mxu0 0.0
        %1129 = vmatpush2.msra.mxu0 0.0
        %1130 = vmatprep.subr.mxu0 0.0
        %1131 = vmatpush2.msra.mxu0 0.0
        %1132 = vmatprep.subr.mxu0 0.0
        %1133 = vmatpush2.msra.mxu0 0.0
        %1134 = vmatprep.subr.mxu0 0.0
        %1135 = vmatpush2.msra.mxu0 0.0
        %1136 = vmatprep.subr.mxu0 0.0
        %1137 = vmatpush2.msra.mxu0 0.0
        %1138 = vmatprep.subr.mxu0 0.0
        %1139 = vmatpush2.msra.mxu0 0.0
        %1140 = vmatprep.subr.mxu0 0.0
        %1141 = vmatpush2.msra.mxu0 0.0
        %1142 = vmatprep.subr.mxu0 0.0
        %1143 = vmatpush2.msra.mxu0 0.0
        %1144 = vmatprep.subr.mxu0 0.0
        %1145 = vmatpush2.msra.mxu0 0.0
        %1146 = vmatprep.subr.mxu0 0.0
        %1147 = vmatpush2.msra.mxu0 0.0
        %1148 = vmatprep.subr.mxu0 0.0
        %1149 = vmatpush2.msra.mxu0 0.0
        %1150 = vmatprep.subr.mxu0 0.0
        %1151 = vmatpush2.msra.mxu0 0.0
        %1152 = vmatprep.subr.mxu0 0.0
        %1153 = vmatpush2.msra.mxu0 0.0
        %1154 = vmatprep.subr.mxu0 0.0
        %1155 = vmatpush2.msra.mxu0 0.0
        %1156 = vmatprep.subr.mxu0 0.0
        %1157 = vmatpush2.msra.mxu0 0.0
        %1158 = vmatprep.subr.mxu0 0.0
        %1159 = vmatpush2.msra.mxu0 0.0
        %1160 = vmatprep.mubr.f32.mxu0 0.0
        %1161 = vmatmul.mubr.f32.gmra.mxu0 %v1094
        %v1162 = vpop.f32.mrf.mxu0
        %v1163 = vadd.f32 %v1035, %v1162
        %v1164 = vpop.f32.mrf.mxu0
        %1165 = vdwg.mxu0
        %1166 = vmatprep.subr.mxu0 0.0
        %1167 = vmatpush1.msra.mxu0 0.0
        %1168 = vmatprep.subr.mxu0 0.0
        %1169 = vmatpush1.msra.mxu0 0.0
        %1170 = vmatprep.subr.mxu0 0.0
        %1171 = vmatpush1.msra.mxu0 0.0
        %1172 = vmatprep.subr.mxu0 0.0
        %1173 = vmatpush1.msra.mxu0 0.0
        %1174 = vmatprep.subr.mxu0 0.0
        %1175 = vmatpush1.msra.mxu0 0.0
        %1176 = vmatprep.subr.mxu0 0.0
        %1177 = vmatpush1.msra.mxu0 0.0
        %1178 = vmatprep.subr.mxu0 0.0
        %1179 = vmatpush1.msra.mxu0 0.0
        %1180 = vmatprep.subr.mxu0 0.0
        %1181 = vmatpush1.msra.mxu0 0.0
        %1182 = vmatprep.subr.mxu0 0.0
        %1183 = vmatpush1.msra.mxu0 0.0
        %1184 = vmatprep.subr.mxu0 0.0
        %1185 = vmatpush1.msra.mxu0 0.0
        %1186 = vmatprep.subr.mxu0 0.0
        %1187 = vmatpush1.msra.mxu0 0.0
        %1188 = vmatprep.subr.mxu0 0.0
        %1189 = vmatpush1.msra.mxu0 0.0
        %1190 = vmatprep.subr.mxu0 0.0
        %1191 = vmatpush1.msra.mxu0 %v820
        %1192 = vmatprep.subr.mxu0 0.0
        %1193 = vmatpush1.msra.mxu0 %v819
        %1194 = vmatprep.subr.mxu0 0.0
        %1195 = vmatpush1.msra.mxu0 %v818
        %1196 = vmatprep.subr.mxu0 0.0
        %1197 = vmatpush1.msra.mxu0 %v817
        %1198 = vmatprep.subr.mxu0 0.0
        %1199 = vmatpush2.msra.mxu0 0.0
        %1200 = vmatprep.subr.mxu0 0.0
        %1201 = vmatpush2.msra.mxu0 0.0
        %1202 = vmatprep.subr.mxu0 0.0
        %1203 = vmatpush2.msra.mxu0 0.0
        %1204 = vmatprep.subr.mxu0 0.0
        %1205 = vmatpush2.msra.mxu0 0.0
        %1206 = vmatprep.subr.mxu0 0.0
        %1207 = vmatpush2.msra.mxu0 0.0
        %1208 = vmatprep.subr.mxu0 0.0
        %1209 = vmatpush2.msra.mxu0 0.0
        %1210 = vmatprep.subr.mxu0 0.0
        %1211 = vmatpush2.msra.mxu0 0.0
        %1212 = vmatprep.subr.mxu0 0.0
        %1213 = vmatpush2.msra.mxu0 0.0
        %1214 = vmatprep.subr.mxu0 0.0
        %1215 = vmatpush2.msra.mxu0 0.0
        %1216 = vmatprep.subr.mxu0 0.0
        %1217 = vmatpush2.msra.mxu0 0.0
        %1218 = vmatprep.subr.mxu0 0.0
        %1219 = vmatpush2.msra.mxu0 0.0
        %1220 = vmatprep.subr.mxu0 0.0
        %1221 = vmatpush2.msra.mxu0 0.0
        %1222 = vmatprep.subr.mxu0 0.0
        %1223 = vmatpush2.msra.mxu0 0.0
        %1224 = vmatprep.subr.mxu0 0.0
        %1225 = vmatpush2.msra.mxu0 0.0
        %1226 = vmatprep.subr.mxu0 0.0
        %1227 = vmatpush2.msra.mxu0 0.0
        %1228 = vmatprep.subr.mxu0 0.0
        %1229 = vmatpush2.msra.mxu0 0.0
        %1230 = vmatprep.mubr.f32.mxu0 0.0
        %1231 = vmatmul.mubr.f32.gmra.mxu0 %v1094
        %v1232 = vpop.f32.mrf.mxu0
        %v1233 = vadd.f32 %v1039, %v1232
        %v1234 = vpop.f32.mrf.mxu0
        %1235 = vdwg.mxu0
        %1236 = vmatprep.subr.mxu0 0.0
        %1237 = vmatpush1.msra.mxu0 0.0
        %1238 = vmatprep.subr.mxu0 0.0
        %1239 = vmatpush1.msra.mxu0 0.0
        %1240 = vmatprep.subr.mxu0 0.0
        %1241 = vmatpush1.msra.mxu0 0.0
        %1242 = vmatprep.subr.mxu0 0.0
        %1243 = vmatpush1.msra.mxu0 0.0
        %1244 = vmatprep.subr.mxu0 0.0
        %1245 = vmatpush1.msra.mxu0 0.0
        %1246 = vmatprep.subr.mxu0 0.0
        %1247 = vmatpush1.msra.mxu0 0.0
        %1248 = vmatprep.subr.mxu0 0.0
        %1249 = vmatpush1.msra.mxu0 0.0
        %1250 = vmatprep.subr.mxu0 0.0
        %1251 = vmatpush1.msra.mxu0 0.0
        %1252 = vmatprep.subr.mxu0 0.0
        %1253 = vmatpush1.msra.mxu0 0.0
        %1254 = vmatprep.subr.mxu0 0.0
        %1255 = vmatpush1.msra.mxu0 0.0
        %1256 = vmatprep.subr.mxu0 0.0
        %1257 = vmatpush1.msra.mxu0 0.0
        %1258 = vmatprep.subr.mxu0 0.0
        %1259 = vmatpush1.msra.mxu0 0.0
        %1260 = vmatprep.subr.mxu0 0.0
        %1261 = vmatpush1.msra.mxu0 %v824
        %1262 = vmatprep.subr.mxu0 0.0
        %1263 = vmatpush1.msra.mxu0 %v823
        %1264 = vmatprep.subr.mxu0 0.0
        %1265 = vmatpush1.msra.mxu0 %v822
        %1266 = vmatprep.subr.mxu0 0.0
        %1267 = vmatpush1.msra.mxu0 %v821
        %1268 = vmatprep.subr.mxu0 0.0
        %1269 = vmatpush2.msra.mxu0 0.0
        %1270 = vmatprep.subr.mxu0 0.0
        %1271 = vmatpush2.msra.mxu0 0.0
        %1272 = vmatprep.subr.mxu0 0.0
        %1273 = vmatpush2.msra.mxu0 0.0
        %1274 = vmatprep.subr.mxu0 0.0
        %1275 = vmatpush2.msra.mxu0 0.0
        %1276 = vmatprep.subr.mxu0 0.0
        %1277 = vmatpush2.msra.mxu0 0.0
        %1278 = vmatprep.subr.mxu0 0.0
        %1279 = vmatpush2.msra.mxu0 0.0
        %1280 = vmatprep.subr.mxu0 0.0
        %1281 = vmatpush2.msra.mxu0 0.0
        %1282 = vmatprep.subr.mxu0 0.0
        %1283 = vmatpush2.msra.mxu0 0.0
        %1284 = vmatprep.subr.mxu0 0.0
        %1285 = vmatpush2.msra.mxu0 0.0
        %1286 = vmatprep.subr.mxu0 0.0
        %1287 = vmatpush2.msra.mxu0 0.0
        %1288 = vmatprep.subr.mxu0 0.0
        %1289 = vmatpush2.msra.mxu0 0.0
        %1290 = vmatprep.subr.mxu0 0.0
        %1291 = vmatpush2.msra.mxu0 0.0
        %1292 = vmatprep.subr.mxu0 0.0
        %1293 = vmatpush2.msra.mxu0 0.0
        %1294 = vmatprep.subr.mxu0 0.0
        %1295 = vmatpush2.msra.mxu0 0.0
        %1296 = vmatprep.subr.mxu0 0.0
        %1297 = vmatpush2.msra.mxu0 0.0
        %1298 = vmatprep.subr.mxu0 0.0
        %1299 = vmatpush2.msra.mxu0 0.0
        %1300 = vmatprep.mubr.f32.mxu0 0.0
        %1301 = vmatmul.mubr.f32.gmra.mxu0 %v1094
        %v1302 = vpop.f32.mrf.mxu0
        %v1303 = vadd.f32 %v1043, %v1302
        %v1304 = vpop.f32.mrf.mxu0
        %1305 = vdwg.mxu0
        %1306 = vmatprep.subr.mxu0 0.0
        %1307 = vmatpush1.msra.mxu0 0.0
        %1308 = vmatprep.subr.mxu0 0.0
        %1309 = vmatpush1.msra.mxu0 0.0
        %1310 = vmatprep.subr.mxu0 0.0
        %1311 = vmatpush1.msra.mxu0 0.0
        %1312 = vmatprep.subr.mxu0 0.0
        %1313 = vmatpush1.msra.mxu0 0.0
        %1314 = vmatprep.subr.mxu0 0.0
        %1315 = vmatpush1.msra.mxu0 0.0
        %1316 = vmatprep.subr.mxu0 0.0
        %1317 = vmatpush1.msra.mxu0 0.0
        %1318 = vmatprep.subr.mxu0 0.0
        %1319 = vmatpush1.msra.mxu0 0.0
        %1320 = vmatprep.subr.mxu0 0.0
        %1321 = vmatpush1.msra.mxu0 0.0
        %1322 = vmatprep.subr.mxu0 0.0
        %1323 = vmatpush1.msra.mxu0 0.0
        %1324 = vmatprep.subr.mxu0 0.0
        %1325 = vmatpush1.msra.mxu0 0.0
        %1326 = vmatprep.subr.mxu0 0.0
        %1327 = vmatpush1.msra.mxu0 0.0
        %1328 = vmatprep.subr.mxu0 0.0
        %1329 = vmatpush1.msra.mxu0 0.0
        %1330 = vmatprep.subr.mxu0 0.0
        %1331 = vmatpush1.msra.mxu0 %v828
        %1332 = vmatprep.subr.mxu0 0.0
        %1333 = vmatpush1.msra.mxu0 %v827
        %1334 = vmatprep.subr.mxu0 0.0
        %1335 = vmatpush1.msra.mxu0 %v826
        %1336 = vmatprep.subr.mxu0 0.0
        %1337 = vmatpush1.msra.mxu0 %v825
        %1338 = vmatprep.subr.mxu0 0.0
        %1339 = vmatpush2.msra.mxu0 0.0
        %1340 = vmatprep.subr.mxu0 0.0
        %1341 = vmatpush2.msra.mxu0 0.0
        %1342 = vmatprep.subr.mxu0 0.0
        %1343 = vmatpush2.msra.mxu0 0.0
        %1344 = vmatprep.subr.mxu0 0.0
        %1345 = vmatpush2.msra.mxu0 0.0
        %1346 = vmatprep.subr.mxu0 0.0
        %1347 = vmatpush2.msra.mxu0 0.0
        %1348 = vmatprep.subr.mxu0 0.0
        %1349 = vmatpush2.msra.mxu0 0.0
        %1350 = vmatprep.subr.mxu0 0.0
        %1351 = vmatpush2.msra.mxu0 0.0
        %1352 = vmatprep.subr.mxu0 0.0
        %1353 = vmatpush2.msra.mxu0 0.0
        %1354 = vmatprep.subr.mxu0 0.0
        %1355 = vmatpush2.msra.mxu0 0.0
        %1356 = vmatprep.subr.mxu0 0.0
        %1357 = vmatpush2.msra.mxu0 0.0
        %1358 = vmatprep.subr.mxu0 0.0
        %1359 = vmatpush2.msra.mxu0 0.0
        %1360 = vmatprep.subr.mxu0 0.0
        %1361 = vmatpush2.msra.mxu0 0.0
        %1362 = vmatprep.subr.mxu0 0.0
        %1363 = vmatpush2.msra.mxu0 0.0
        %1364 = vmatprep.subr.mxu0 0.0
        %1365 = vmatpush2.msra.mxu0 0.0
        %1366 = vmatprep.subr.mxu0 0.0
        %1367 = vmatpush2.msra.mxu0 0.0
        %1368 = vmatprep.subr.mxu0 0.0
        %1369 = vmatpush2.msra.mxu0 0.0
        %1370 = vmatprep.mubr.f32.mxu0 0.0
        %1371 = vmatmul.mubr.f32.gmra.mxu0 %v1094
        %v1372 = vpop.f32.mrf.mxu0
        %v1373 = vadd.f32 %v1047, %v1372
        %v1374 = vpop.f32.mrf.mxu0
        %1375 = vdwg.mxu0
        %1376 = vmatprep.subr.mxu0 0.0
        %1377 = vmatpush1.msra.mxu0 0.0
        %1378 = vmatprep.subr.mxu0 0.0
        %1379 = vmatpush1.msra.mxu0 0.0
        %1380 = vmatprep.subr.mxu0 0.0
        %1381 = vmatpush1.msra.mxu0 0.0
        %1382 = vmatprep.subr.mxu0 0.0
        %1383 = vmatpush1.msra.mxu0 0.0
        %1384 = vmatprep.subr.mxu0 0.0
        %1385 = vmatpush1.msra.mxu0 0.0
        %1386 = vmatprep.subr.mxu0 0.0
        %1387 = vmatpush1.msra.mxu0 0.0
        %1388 = vmatprep.subr.mxu0 0.0
        %1389 = vmatpush1.msra.mxu0 0.0
        %1390 = vmatprep.subr.mxu0 0.0
        %1391 = vmatpush1.msra.mxu0 0.0
        %1392 = vmatprep.subr.mxu0 0.0
        %1393 = vmatpush1.msra.mxu0 0.0
        %1394 = vmatprep.subr.mxu0 0.0
        %1395 = vmatpush1.msra.mxu0 0.0
        %1396 = vmatprep.subr.mxu0 0.0
        %1397 = vmatpush1.msra.mxu0 0.0
        %1398 = vmatprep.subr.mxu0 0.0
        %1399 = vmatpush1.msra.mxu0 0.0
        %1400 = vmatprep.subr.mxu0 0.0
        %1401 = vmatpush1.msra.mxu0 %v832
        %1402 = vmatprep.subr.mxu0 0.0
        %1403 = vmatpush1.msra.mxu0 %v831
        %1404 = vmatprep.subr.mxu0 0.0
        %1405 = vmatpush1.msra.mxu0 %v830
        %1406 = vmatprep.subr.mxu0 0.0
        %1407 = vmatpush1.msra.mxu0 %v829
        %1408 = vmatprep.subr.mxu0 0.0
        %1409 = vmatpush2.msra.mxu0 0.0
        %1410 = vmatprep.subr.mxu0 0.0
        %1411 = vmatpush2.msra.mxu0 0.0
        %1412 = vmatprep.subr.mxu0 0.0
        %1413 = vmatpush2.msra.mxu0 0.0
        %1414 = vmatprep.subr.mxu0 0.0
        %1415 = vmatpush2.msra.mxu0 0.0
        %1416 = vmatprep.subr.mxu0 0.0
        %1417 = vmatpush2.msra.mxu0 0.0
        %1418 = vmatprep.subr.mxu0 0.0
        %1419 = vmatpush2.msra.mxu0 0.0
        %1420 = vmatprep.subr.mxu0 0.0
        %1421 = vmatpush2.msra.mxu0 0.0
        %1422 = vmatprep.subr.mxu0 0.0
        %1423 = vmatpush2.msra.mxu0 0.0
        %1424 = vmatprep.subr.mxu0 0.0
        %1425 = vmatpush2.msra.mxu0 0.0
        %1426 = vmatprep.subr.mxu0 0.0
        %1427 = vmatpush2.msra.mxu0 0.0
        %1428 = vmatprep.subr.mxu0 0.0
        %1429 = vmatpush2.msra.mxu0 0.0
        %1430 = vmatprep.subr.mxu0 0.0
        %1431 = vmatpush2.msra.mxu0 0.0
        %1432 = vmatprep.subr.mxu0 0.0
        %1433 = vmatpush2.msra.mxu0 0.0
        %1434 = vmatprep.subr.mxu0 0.0
        %1435 = vmatpush2.msra.mxu0 0.0
        %1436 = vmatprep.subr.mxu0 0.0
        %1437 = vmatpush2.msra.mxu0 0.0
        %1438 = vmatprep.subr.mxu0 0.0
        %1439 = vmatpush2.msra.mxu0 0.0
        %1440 = vmatprep.mubr.f32.mxu0 0.0
        %1441 = vmatmul.mubr.f32.gmra.mxu0 %v1094
        %v1442 = vpop.f32.mrf.mxu0
        %v1443 = vadd.f32 %v1051, %v1442
        %v1444 = vpop.f32.mrf.mxu0
        %1445 = vdwg.mxu0
        %1446 = vmatprep.subr.mxu0 0.0
        %1447 = vmatpush1.msra.mxu0 0.0
        %1448 = vmatprep.subr.mxu0 0.0
        %1449 = vmatpush1.msra.mxu0 0.0
        %1450 = vmatprep.subr.mxu0 0.0
        %1451 = vmatpush1.msra.mxu0 0.0
        %1452 = vmatprep.subr.mxu0 0.0
        %1453 = vmatpush1.msra.mxu0 0.0
        %1454 = vmatprep.subr.mxu0 0.0
        %1455 = vmatpush1.msra.mxu0 0.0
        %1456 = vmatprep.subr.mxu0 0.0
        %1457 = vmatpush1.msra.mxu0 0.0
        %1458 = vmatprep.subr.mxu0 0.0
        %1459 = vmatpush1.msra.mxu0 0.0
        %1460 = vmatprep.subr.mxu0 0.0
        %1461 = vmatpush1.msra.mxu0 0.0
        %1462 = vmatprep.subr.mxu0 0.0
        %1463 = vmatpush1.msra.mxu0 0.0
        %1464 = vmatprep.subr.mxu0 0.0
        %1465 = vmatpush1.msra.mxu0 0.0
        %1466 = vmatprep.subr.mxu0 0.0
        %1467 = vmatpush1.msra.mxu0 0.0
        %1468 = vmatprep.subr.mxu0 0.0
        %1469 = vmatpush1.msra.mxu0 0.0
        %1470 = vmatprep.subr.mxu0 0.0
        %1471 = vmatpush1.msra.mxu0 %v836
        %1472 = vmatprep.subr.mxu0 0.0
        %1473 = vmatpush1.msra.mxu0 %v835
        %1474 = vmatprep.subr.mxu0 0.0
        %1475 = vmatpush1.msra.mxu0 %v834
        %1476 = vmatprep.subr.mxu0 0.0
        %1477 = vmatpush1.msra.mxu0 %v833
        %1478 = vmatprep.subr.mxu0 0.0
        %1479 = vmatpush2.msra.mxu0 0.0
        %1480 = vmatprep.subr.mxu0 0.0
        %1481 = vmatpush2.msra.mxu0 0.0
        %1482 = vmatprep.subr.mxu0 0.0
        %1483 = vmatpush2.msra.mxu0 0.0
        %1484 = vmatprep.subr.mxu0 0.0
        %1485 = vmatpush2.msra.mxu0 0.0
        %1486 = vmatprep.subr.mxu0 0.0
        %1487 = vmatpush2.msra.mxu0 0.0
        %1488 = vmatprep.subr.mxu0 0.0
        %1489 = vmatpush2.msra.mxu0 0.0
        %1490 = vmatprep.subr.mxu0 0.0
        %1491 = vmatpush2.msra.mxu0 0.0
        %1492 = vmatprep.subr.mxu0 0.0
        %1493 = vmatpush2.msra.mxu0 0.0
        %1494 = vmatprep.subr.mxu0 0.0
        %1495 = vmatpush2.msra.mxu0 0.0
        %1496 = vmatprep.subr.mxu0 0.0
        %1497 = vmatpush2.msra.mxu0 0.0
        %1498 = vmatprep.subr.mxu0 0.0
        %1499 = vmatpush2.msra.mxu0 0.0
        %1500 = vmatprep.subr.mxu0 0.0
        %1501 = vmatpush2.msra.mxu0 0.0
        %1502 = vmatprep.subr.mxu0 0.0
        %1503 = vmatpush2.msra.mxu0 0.0
        %1504 = vmatprep.subr.mxu0 0.0
        %1505 = vmatpush2.msra.mxu0 0.0
        %1506 = vmatprep.subr.mxu0 0.0
        %1507 = vmatpush2.msra.mxu0 0.0
        %1508 = vmatprep.subr.mxu0 0.0
        %1509 = vmatpush2.msra.mxu0 0.0
        %1510 = vmatprep.mubr.f32.mxu0 0.0
        %1511 = vmatmul.mubr.f32.gmra.mxu0 %v1094
        %v1512 = vpop.f32.mrf.mxu0
        %v1513 = vadd.f32 %v1055, %v1512
        %v1514 = vpop.f32.mrf.mxu0
        %1515 = vdwg.mxu0
        %1516 = vmatprep.subr.mxu0 0.0
        %1517 = vmatpush1.msra.mxu0 0.0
        %1518 = vmatprep.subr.mxu0 0.0
        %1519 = vmatpush1.msra.mxu0 0.0
        %1520 = vmatprep.subr.mxu0 0.0
        %1521 = vmatpush1.msra.mxu0 0.0
        %1522 = vmatprep.subr.mxu0 0.0
        %1523 = vmatpush1.msra.mxu0 0.0
        %1524 = vmatprep.subr.mxu0 0.0
        %1525 = vmatpush1.msra.mxu0 0.0
        %1526 = vmatprep.subr.mxu0 0.0
        %1527 = vmatpush1.msra.mxu0 0.0
        %1528 = vmatprep.subr.mxu0 0.0
        %1529 = vmatpush1.msra.mxu0 0.0
        %1530 = vmatprep.subr.mxu0 0.0
        %1531 = vmatpush1.msra.mxu0 0.0
        %1532 = vmatprep.subr.mxu0 0.0
        %1533 = vmatpush1.msra.mxu0 0.0
        %1534 = vmatprep.subr.mxu0 0.0
        %1535 = vmatpush1.msra.mxu0 0.0
        %1536 = vmatprep.subr.mxu0 0.0
        %1537 = vmatpush1.msra.mxu0 0.0
        %1538 = vmatprep.subr.mxu0 0.0
        %1539 = vmatpush1.msra.mxu0 0.0
        %1540 = vmatprep.subr.mxu0 0.0
        %1541 = vmatpush1.msra.mxu0 %v840
        %1542 = vmatprep.subr.mxu0 0.0
        %1543 = vmatpush1.msra.mxu0 %v839
        %1544 = vmatprep.subr.mxu0 0.0
        %1545 = vmatpush1.msra.mxu0 %v838
        %1546 = vmatprep.subr.mxu0 0.0
        %1547 = vmatpush1.msra.mxu0 %v837
        %1548 = vmatprep.subr.mxu0 0.0
        %1549 = vmatpush2.msra.mxu0 0.0
        %1550 = vmatprep.subr.mxu0 0.0
        %1551 = vmatpush2.msra.mxu0 0.0
        %1552 = vmatprep.subr.mxu0 0.0
        %1553 = vmatpush2.msra.mxu0 0.0
        %1554 = vmatprep.subr.mxu0 0.0
        %1555 = vmatpush2.msra.mxu0 0.0
        %1556 = vmatprep.subr.mxu0 0.0
        %1557 = vmatpush2.msra.mxu0 0.0
        %1558 = vmatprep.subr.mxu0 0.0
        %1559 = vmatpush2.msra.mxu0 0.0
        %1560 = vmatprep.subr.mxu0 0.0
        %1561 = vmatpush2.msra.mxu0 0.0
        %1562 = vmatprep.subr.mxu0 0.0
        %1563 = vmatpush2.msra.mxu0 0.0
        %1564 = vmatprep.subr.mxu0 0.0
        %1565 = vmatpush2.msra.mxu0 0.0
        %1566 = vmatprep.subr.mxu0 0.0
        %1567 = vmatpush2.msra.mxu0 0.0
        %1568 = vmatprep.subr.mxu0 0.0
        %1569 = vmatpush2.msra.mxu0 0.0
        %1570 = vmatprep.subr.mxu0 0.0
        %1571 = vmatpush2.msra.mxu0 0.0
        %1572 = vmatprep.subr.mxu0 0.0
        %1573 = vmatpush2.msra.mxu0 0.0
        %1574 = vmatprep.subr.mxu0 0.0
        %1575 = vmatpush2.msra.mxu0 0.0
        %1576 = vmatprep.subr.mxu0 0.0
        %1577 = vmatpush2.msra.mxu0 0.0
        %1578 = vmatprep.subr.mxu0 0.0
        %1579 = vmatpush2.msra.mxu0 0.0
        %1580 = vmatprep.mubr.f32.mxu0 0.0
        %1581 = vmatmul.mubr.f32.gmra.mxu0 %v1094
        %v1582 = vpop.f32.mrf.mxu0
        %v1583 = vadd.f32 %v1059, %v1582
        %v1584 = vpop.f32.mrf.mxu0
        %1585 = vdwg.mxu0
        %1586 = vmatprep.subr.mxu0 0.0
        %1587 = vmatpush1.msra.mxu0 0.0
        %1588 = vmatprep.subr.mxu0 0.0
        %1589 = vmatpush1.msra.mxu0 0.0
        %1590 = vmatprep.subr.mxu0 0.0
        %1591 = vmatpush1.msra.mxu0 0.0
        %1592 = vmatprep.subr.mxu0 0.0
        %1593 = vmatpush1.msra.mxu0 0.0
        %1594 = vmatprep.subr.mxu0 0.0
        %1595 = vmatpush1.msra.mxu0 0.0
        %1596 = vmatprep.subr.mxu0 0.0
        %1597 = vmatpush1.msra.mxu0 0.0
        %1598 = vmatprep.subr.mxu0 0.0
        %1599 = vmatpush1.msra.mxu0 0.0
        %1600 = vmatprep.subr.mxu0 0.0
        %1601 = vmatpush1.msra.mxu0 0.0
        %1602 = vmatprep.subr.mxu0 0.0
        %1603 = vmatpush1.msra.mxu0 0.0
        %1604 = vmatprep.subr.mxu0 0.0
        %1605 = vmatpush1.msra.mxu0 0.0
        %1606 = vmatprep.subr.mxu0 0.0
        %1607 = vmatpush1.msra.mxu0 0.0
        %1608 = vmatprep.subr.mxu0 0.0
        %1609 = vmatpush1.msra.mxu0 0.0
        %1610 = vmatprep.subr.mxu0 0.0
        %1611 = vmatpush1.msra.mxu0 %v844
        %1612 = vmatprep.subr.mxu0 0.0
        %1613 = vmatpush1.msra.mxu0 %v843
        %1614 = vmatprep.subr.mxu0 0.0
        %1615 = vmatpush1.msra.mxu0 %v842
        %1616 = vmatprep.subr.mxu0 0.0
        %1617 = vmatpush1.msra.mxu0 %v841
        %1618 = vmatprep.subr.mxu0 0.0
        %1619 = vmatpush2.msra.mxu0 0.0
        %1620 = vmatprep.subr.mxu0 0.0
        %1621 = vmatpush2.msra.mxu0 0.0
        %1622 = vmatprep.subr.mxu0 0.0
        %1623 = vmatpush2.msra.mxu0 0.0
        %1624 = vmatprep.subr.mxu0 0.0
        %1625 = vmatpush2.msra.mxu0 0.0
        %1626 = vmatprep.subr.mxu0 0.0
        %1627 = vmatpush2.msra.mxu0 0.0
        %1628 = vmatprep.subr.mxu0 0.0
        %1629 = vmatpush2.msra.mxu0 0.0
        %1630 = vmatprep.subr.mxu0 0.0
        %1631 = vmatpush2.msra.mxu0 0.0
        %1632 = vmatprep.subr.mxu0 0.0
        %1633 = vmatpush2.msra.mxu0 0.0
        %1634 = vmatprep.subr.mxu0 0.0
        %1635 = vmatpush2.msra.mxu0 0.0
        %1636 = vmatprep.subr.mxu0 0.0
        %1637 = vmatpush2.msra.mxu0 0.0
        %1638 = vmatprep.subr.mxu0 0.0
        %1639 = vmatpush2.msra.mxu0 0.0
        %1640 = vmatprep.subr.mxu0 0.0
        %1641 = vmatpush2.msra.mxu0 0.0
        %1642 = vmatprep.subr.mxu0 0.0
        %1643 = vmatpush2.msra.mxu0 0.0
        %1644 = vmatprep.subr.mxu0 0.0
        %1645 = vmatpush2.msra.mxu0 0.0
        %1646 = vmatprep.subr.mxu0 0.0
        %1647 = vmatpush2.msra.mxu0 0.0
        %1648 = vmatprep.subr.mxu0 0.0
        %1649 = vmatpush2.msra.mxu0 0.0
        %1650 = vmatprep.mubr.f32.mxu0 0.0
        %1651 = vmatmul.mubr.f32.gmra.mxu0 %v1094
        %v1652 = vpop.f32.mrf.mxu0
        %v1653 = vadd.f32 %v1063, %v1652
        %v1654 = vpop.f32.mrf.mxu0
        %1655 = vdwg.mxu0
        %1656 = vmatprep.subr.mxu0 0.0
        %1657 = vmatpush1.msra.mxu0 0.0
        %1658 = vmatprep.subr.mxu0 0.0
        %1659 = vmatpush1.msra.mxu0 0.0
        %1660 = vmatprep.subr.mxu0 0.0
        %1661 = vmatpush1.msra.mxu0 0.0
        %1662 = vmatprep.subr.mxu0 0.0
        %1663 = vmatpush1.msra.mxu0 0.0
        %1664 = vmatprep.subr.mxu0 0.0
        %1665 = vmatpush1.msra.mxu0 0.0
        %1666 = vmatprep.subr.mxu0 0.0
        %1667 = vmatpush1.msra.mxu0 0.0
        %1668 = vmatprep.subr.mxu0 0.0
        %1669 = vmatpush1.msra.mxu0 0.0
        %1670 = vmatprep.subr.mxu0 0.0
        %1671 = vmatpush1.msra.mxu0 0.0
        %1672 = vmatprep.subr.mxu0 0.0
        %1673 = vmatpush1.msra.mxu0 0.0
        %1674 = vmatprep.subr.mxu0 0.0
        %1675 = vmatpush1.msra.mxu0 0.0
        %1676 = vmatprep.subr.mxu0 0.0
        %1677 = vmatpush1.msra.mxu0 0.0
        %1678 = vmatprep.subr.mxu0 0.0
        %1679 = vmatpush1.msra.mxu0 0.0
        %1680 = vmatprep.subr.mxu0 0.0
        %1681 = vmatpush1.msra.mxu0 %v848
        %1682 = vmatprep.subr.mxu0 0.0
        %1683 = vmatpush1.msra.mxu0 %v847
        %1684 = vmatprep.subr.mxu0 0.0
        %1685 = vmatpush1.msra.mxu0 %v846
        %1686 = vmatprep.subr.mxu0 0.0
        %1687 = vmatpush1.msra.mxu0 %v845
        %1688 = vmatprep.subr.mxu0 0.0
        %1689 = vmatpush2.msra.mxu0 0.0
        %1690 = vmatprep.subr.mxu0 0.0
        %1691 = vmatpush2.msra.mxu0 0.0
        %1692 = vmatprep.subr.mxu0 0.0
        %1693 = vmatpush2.msra.mxu0 0.0
        %1694 = vmatprep.subr.mxu0 0.0
        %1695 = vmatpush2.msra.mxu0 0.0
        %1696 = vmatprep.subr.mxu0 0.0
        %1697 = vmatpush2.msra.mxu0 0.0
        %1698 = vmatprep.subr.mxu0 0.0
        %1699 = vmatpush2.msra.mxu0 0.0
        %1700 = vmatprep.subr.mxu0 0.0
        %1701 = vmatpush2.msra.mxu0 0.0
        %1702 = vmatprep.subr.mxu0 0.0
        %1703 = vmatpush2.msra.mxu0 0.0
        %1704 = vmatprep.subr.mxu0 0.0
        %1705 = vmatpush2.msra.mxu0 0.0
        %1706 = vmatprep.subr.mxu0 0.0
        %1707 = vmatpush2.msra.mxu0 0.0
        %1708 = vmatprep.subr.mxu0 0.0
        %1709 = vmatpush2.msra.mxu0 0.0
        %1710 = vmatprep.subr.mxu0 0.0
        %1711 = vmatpush2.msra.mxu0 0.0
        %1712 = vmatprep.subr.mxu0 0.0
        %1713 = vmatpush2.msra.mxu0 0.0
        %1714 = vmatprep.subr.mxu0 0.0
        %1715 = vmatpush2.msra.mxu0 0.0
        %1716 = vmatprep.subr.mxu0 0.0
        %1717 = vmatpush2.msra.mxu0 0.0
        %1718 = vmatprep.subr.mxu0 0.0
        %1719 = vmatpush2.msra.mxu0 0.0
        %1720 = vmatprep.mubr.f32.mxu0 0.0
        %1721 = vmatmul.mubr.f32.gmra.mxu0 %v1094
        %v1722 = vpop.f32.mrf.mxu0
        %v1723 = vadd.f32 %v1067, %v1722
        %v1724 = vpop.f32.mrf.mxu0
        %1725 = vdwg.mxu0
        %1726 = vmatprep.subr.mxu0 0.0
        %1727 = vmatpush1.msra.mxu0 0.0
        %1728 = vmatprep.subr.mxu0 0.0
        %1729 = vmatpush1.msra.mxu0 0.0
        %1730 = vmatprep.subr.mxu0 0.0
        %1731 = vmatpush1.msra.mxu0 0.0
        %1732 = vmatprep.subr.mxu0 0.0
        %1733 = vmatpush1.msra.mxu0 0.0
        %1734 = vmatprep.subr.mxu0 0.0
        %1735 = vmatpush1.msra.mxu0 0.0
        %1736 = vmatprep.subr.mxu0 0.0
        %1737 = vmatpush1.msra.mxu0 0.0
        %1738 = vmatprep.subr.mxu0 0.0
        %1739 = vmatpush1.msra.mxu0 0.0
        %1740 = vmatprep.subr.mxu0 0.0
        %1741 = vmatpush1.msra.mxu0 0.0
        %1742 = vmatprep.subr.mxu0 0.0
        %1743 = vmatpush1.msra.mxu0 0.0
        %1744 = vmatprep.subr.mxu0 0.0
        %1745 = vmatpush1.msra.mxu0 0.0
        %1746 = vmatprep.subr.mxu0 0.0
        %1747 = vmatpush1.msra.mxu0 0.0
        %1748 = vmatprep.subr.mxu0 0.0
        %1749 = vmatpush1.msra.mxu0 0.0
        %1750 = vmatprep.subr.mxu0 0.0
        %1751 = vmatpush1.msra.mxu0 %v852
        %1752 = vmatprep.subr.mxu0 0.0
        %1753 = vmatpush1.msra.mxu0 %v851
        %1754 = vmatprep.subr.mxu0 0.0
        %1755 = vmatpush1.msra.mxu0 %v850
        %1756 = vmatprep.subr.mxu0 0.0
        %1757 = vmatpush1.msra.mxu0 %v849
        %1758 = vmatprep.subr.mxu0 0.0
        %1759 = vmatpush2.msra.mxu0 0.0
        %1760 = vmatprep.subr.mxu0 0.0
        %1761 = vmatpush2.msra.mxu0 0.0
        %1762 = vmatprep.subr.mxu0 0.0
        %1763 = vmatpush2.msra.mxu0 0.0
        %1764 = vmatprep.subr.mxu0 0.0
        %1765 = vmatpush2.msra.mxu0 0.0
        %1766 = vmatprep.subr.mxu0 0.0
        %1767 = vmatpush2.msra.mxu0 0.0
        %1768 = vmatprep.subr.mxu0 0.0
        %1769 = vmatpush2.msra.mxu0 0.0
        %1770 = vmatprep.subr.mxu0 0.0
        %1771 = vmatpush2.msra.mxu0 0.0
        %1772 = vmatprep.subr.mxu0 0.0
        %1773 = vmatpush2.msra.mxu0 0.0
        %1774 = vmatprep.subr.mxu0 0.0
        %1775 = vmatpush2.msra.mxu0 0.0
        %1776 = vmatprep.subr.mxu0 0.0
        %1777 = vmatpush2.msra.mxu0 0.0
        %1778 = vmatprep.subr.mxu0 0.0
        %1779 = vmatpush2.msra.mxu0 0.0
        %1780 = vmatprep.subr.mxu0 0.0
        %1781 = vmatpush2.msra.mxu0 0.0
        %1782 = vmatprep.subr.mxu0 0.0
        %1783 = vmatpush2.msra.mxu0 0.0
        %1784 = vmatprep.subr.mxu0 0.0
        %1785 = vmatpush2.msra.mxu0 0.0
        %1786 = vmatprep.subr.mxu0 0.0
        %1787 = vmatpush2.msra.mxu0 0.0
        %1788 = vmatprep.subr.mxu0 0.0
        %1789 = vmatpush2.msra.mxu0 0.0
        %1790 = vmatprep.mubr.f32.mxu0 0.0
        %1791 = vmatmul.mubr.f32.gmra.mxu0 %v1094
        %v1792 = vpop.f32.mrf.mxu0
        %v1793 = vadd.f32 %v1071, %v1792
        %v1794 = vpop.f32.mrf.mxu0
        %1795 = vdwg.mxu0
        %1796 = vmatprep.subr.mxu0 0.0
        %1797 = vmatpush1.msra.mxu0 0.0
        %1798 = vmatprep.subr.mxu0 0.0
        %1799 = vmatpush1.msra.mxu0 0.0
        %1800 = vmatprep.subr.mxu0 0.0
        %1801 = vmatpush1.msra.mxu0 0.0
        %1802 = vmatprep.subr.mxu0 0.0
        %1803 = vmatpush1.msra.mxu0 0.0
        %1804 = vmatprep.subr.mxu0 0.0
        %1805 = vmatpush1.msra.mxu0 0.0
        %1806 = vmatprep.subr.mxu0 0.0
        %1807 = vmatpush1.msra.mxu0 0.0
        %1808 = vmatprep.subr.mxu0 0.0
        %1809 = vmatpush1.msra.mxu0 0.0
        %1810 = vmatprep.subr.mxu0 0.0
        %1811 = vmatpush1.msra.mxu0 0.0
        %1812 = vmatprep.subr.mxu0 0.0
        %1813 = vmatpush1.msra.mxu0 0.0
        %1814 = vmatprep.subr.mxu0 0.0
        %1815 = vmatpush1.msra.mxu0 0.0
        %1816 = vmatprep.subr.mxu0 0.0
        %1817 = vmatpush1.msra.mxu0 0.0
        %1818 = vmatprep.subr.mxu0 0.0
        %1819 = vmatpush1.msra.mxu0 0.0
        %1820 = vmatprep.subr.mxu0 0.0
        %1821 = vmatpush1.msra.mxu0 %v856
        %1822 = vmatprep.subr.mxu0 0.0
        %1823 = vmatpush1.msra.mxu0 %v855
        %1824 = vmatprep.subr.mxu0 0.0
        %1825 = vmatpush1.msra.mxu0 %v854
        %1826 = vmatprep.subr.mxu0 0.0
        %1827 = vmatpush1.msra.mxu0 %v853
        %1828 = vmatprep.subr.mxu0 0.0
        %1829 = vmatpush2.msra.mxu0 0.0
        %1830 = vmatprep.subr.mxu0 0.0
        %1831 = vmatpush2.msra.mxu0 0.0
        %1832 = vmatprep.subr.mxu0 0.0
        %1833 = vmatpush2.msra.mxu0 0.0
        %1834 = vmatprep.subr.mxu0 0.0
        %1835 = vmatpush2.msra.mxu0 0.0
        %1836 = vmatprep.subr.mxu0 0.0
        %1837 = vmatpush2.msra.mxu0 0.0
        %1838 = vmatprep.subr.mxu0 0.0
        %1839 = vmatpush2.msra.mxu0 0.0
        %1840 = vmatprep.subr.mxu0 0.0
        %1841 = vmatpush2.msra.mxu0 0.0
        %1842 = vmatprep.subr.mxu0 0.0
        %1843 = vmatpush2.msra.mxu0 0.0
        %1844 = vmatprep.subr.mxu0 0.0
        %1845 = vmatpush2.msra.mxu0 0.0
        %1846 = vmatprep.subr.mxu0 0.0
        %1847 = vmatpush2.msra.mxu0 0.0
        %1848 = vmatprep.subr.mxu0 0.0
        %1849 = vmatpush2.msra.mxu0 0.0
        %1850 = vmatprep.subr.mxu0 0.0
        %1851 = vmatpush2.msra.mxu0 0.0
        %1852 = vmatprep.subr.mxu0 0.0
        %1853 = vmatpush2.msra.mxu0 0.0
        %1854 = vmatprep.subr.mxu0 0.0
        %1855 = vmatpush2.msra.mxu0 0.0
        %1856 = vmatprep.subr.mxu0 0.0
        %1857 = vmatpush2.msra.mxu0 0.0
        %1858 = vmatprep.subr.mxu0 0.0
        %1859 = vmatpush2.msra.mxu0 0.0
        %1860 = vmatprep.mubr.f32.mxu0 0.0
        %1861 = vmatmul.mubr.f32.gmra.mxu0 %v1094
        %v1862 = vpop.f32.mrf.mxu0
        %v1863 = vadd.f32 %v1075, %v1862
        %v1864 = vpop.f32.mrf.mxu0
        %1865 = vdwg.mxu0
        %1866 = vmatprep.subr.mxu0 0.0
        %1867 = vmatpush1.msra.mxu0 0.0
        %1868 = vmatprep.subr.mxu0 0.0
        %1869 = vmatpush1.msra.mxu0 0.0
        %1870 = vmatprep.subr.mxu0 0.0
        %1871 = vmatpush1.msra.mxu0 0.0
        %1872 = vmatprep.subr.mxu0 0.0
        %1873 = vmatpush1.msra.mxu0 0.0
        %1874 = vmatprep.subr.mxu0 0.0
        %1875 = vmatpush1.msra.mxu0 0.0
        %1876 = vmatprep.subr.mxu0 0.0
        %1877 = vmatpush1.msra.mxu0 0.0
        %1878 = vmatprep.subr.mxu0 0.0
        %1879 = vmatpush1.msra.mxu0 0.0
        %1880 = vmatprep.subr.mxu0 0.0
        %1881 = vmatpush1.msra.mxu0 0.0
        %1882 = vmatprep.subr.mxu0 0.0
        %1883 = vmatpush1.msra.mxu0 0.0
        %1884 = vmatprep.subr.mxu0 0.0
        %1885 = vmatpush1.msra.mxu0 0.0
        %1886 = vmatprep.subr.mxu0 0.0
        %1887 = vmatpush1.msra.mxu0 0.0
        %1888 = vmatprep.subr.mxu0 0.0
        %1889 = vmatpush1.msra.mxu0 0.0
        %1890 = vmatprep.subr.mxu0 0.0
        %1891 = vmatpush1.msra.mxu0 %v860
        %1892 = vmatprep.subr.mxu0 0.0
        %1893 = vmatpush1.msra.mxu0 %v859
        %1894 = vmatprep.subr.mxu0 0.0
        %1895 = vmatpush1.msra.mxu0 %v858
        %1896 = vmatprep.subr.mxu0 0.0
        %1897 = vmatpush1.msra.mxu0 %v857
        %1898 = vmatprep.subr.mxu0 0.0
        %1899 = vmatpush2.msra.mxu0 0.0
        %1900 = vmatprep.subr.mxu0 0.0
        %1901 = vmatpush2.msra.mxu0 0.0
        %1902 = vmatprep.subr.mxu0 0.0
        %1903 = vmatpush2.msra.mxu0 0.0
        %1904 = vmatprep.subr.mxu0 0.0
        %1905 = vmatpush2.msra.mxu0 0.0
        %1906 = vmatprep.subr.mxu0 0.0
        %1907 = vmatpush2.msra.mxu0 0.0
        %1908 = vmatprep.subr.mxu0 0.0
        %1909 = vmatpush2.msra.mxu0 0.0
        %1910 = vmatprep.subr.mxu0 0.0
        %1911 = vmatpush2.msra.mxu0 0.0
        %1912 = vmatprep.subr.mxu0 0.0
        %1913 = vmatpush2.msra.mxu0 0.0
        %1914 = vmatprep.subr.mxu0 0.0
        %1915 = vmatpush2.msra.mxu0 0.0
        %1916 = vmatprep.subr.mxu0 0.0
        %1917 = vmatpush2.msra.mxu0 0.0
        %1918 = vmatprep.subr.mxu0 0.0
        %1919 = vmatpush2.msra.mxu0 0.0
        %1920 = vmatprep.subr.mxu0 0.0
        %1921 = vmatpush2.msra.mxu0 0.0
        %1922 = vmatprep.subr.mxu0 0.0
        %1923 = vmatpush2.msra.mxu0 0.0
        %1924 = vmatprep.subr.mxu0 0.0
        %1925 = vmatpush2.msra.mxu0 0.0
        %1926 = vmatprep.subr.mxu0 0.0
        %1927 = vmatpush2.msra.mxu0 0.0
        %1928 = vmatprep.subr.mxu0 0.0
        %1929 = vmatpush2.msra.mxu0 0.0
        %1930 = vmatprep.mubr.f32.mxu0 0.0
        %1931 = vmatmul.mubr.f32.gmra.mxu0 %v1094
        %v1932 = vpop.f32.mrf.mxu0
        %v1933 = vadd.f32 %v1079, %v1932
        %v1934 = vpop.f32.mrf.mxu0
        %1935 = vdwg.mxu0
        %v1936 = vmul.f32 %v1163, 0.35355338
        %v1937 = vmul.f32 %v1233, 0.35355338
        %v1938 = vmul.f32 %v1303, 0.35355338
        %v1939 = vmul.f32 %v1373, 0.35355338
        %vm1940 = vcmask 64512
        %v1942 = vsel %vm1940, %v1936, 0
        %v1945 = vsel %vm1940, %v1443, 0
        %1947 = vmatprep.subr.mxu0 0.0
        %1948 = vmatpush1.xpose.msra.mxu0 0.0
        %1949 = vmatprep.subr.mxu0 0.0
        %1950 = vmatpush1.xpose.msra.mxu0 0.0
        %1951 = vmatprep.subr.mxu0 0.0
        %1952 = vmatpush1.xpose.msra.mxu0 0.0
        %1953 = vmatprep.subr.mxu0 0.0
        %1954 = vmatpush1.xpose.msra.mxu0 0.0
        %1955 = vmatprep.subr.mxu0 0.0
        %1956 = vmatpush1.xpose.msra.mxu0 0.0
        %1957 = vmatprep.subr.mxu0 0.0
        %1958 = vmatpush1.xpose.msra.mxu0 0.0
        %1959 = vmatprep.subr.mxu0 0.0
        %1960 = vmatpush1.xpose.msra.mxu0 0.0
        %1961 = vmatprep.subr.mxu0 0.0
        %1962 = vmatpush1.xpose.msra.mxu0 0.0
        %1963 = vmatprep.subr.mxu0 0.0
        %1964 = vmatpush1.xpose.msra.mxu0 0.0
        %1965 = vmatprep.subr.mxu0 0.0
        %1966 = vmatpush1.xpose.msra.mxu0 0.0
        %1967 = vmatprep.subr.mxu0 0.0
        %1968 = vmatpush1.xpose.msra.mxu0 0.0
        %1969 = vmatprep.subr.mxu0 0.0
        %1970 = vmatpush1.xpose.msra.mxu0 0.0
        %1971 = vmatprep.subr.mxu0 0.0
        %1972 = vmatpush1.xpose.msra.mxu0 0.0
        %1973 = vmatprep.subr.mxu0 0.0
        %1974 = vmatpush1.xpose.msra.mxu0 0.0
        %1975 = vmatprep.subr.mxu0 0.0
        %1976 = vmatpush1.xpose.msra.mxu0 0.0
        %1977 = vmatprep.subr.mxu0 0.0
        %1978 = vmatpush1.xpose.msra.mxu0 %v1945
        %1979 = vmatprep.subr.mxu0 0.0
        %1980 = vmatpush2.xpose.msra.mxu0 0.0
        %1981 = vmatprep.subr.mxu0 0.0
        %1982 = vmatpush2.xpose.msra.mxu0 0.0
        %1983 = vmatprep.subr.mxu0 0.0
        %1984 = vmatpush2.xpose.msra.mxu0 0.0
        %1985 = vmatprep.subr.mxu0 0.0
        %1986 = vmatpush2.xpose.msra.mxu0 0.0
        %1987 = vmatprep.subr.mxu0 0.0
        %1988 = vmatpush2.xpose.msra.mxu0 0.0
        %1989 = vmatprep.subr.mxu0 0.0
        %1990 = vmatpush2.xpose.msra.mxu0 0.0
        %1991 = vmatprep.subr.mxu0 0.0
        %1992 = vmatpush2.xpose.msra.mxu0 0.0
        %1993 = vmatprep.subr.mxu0 0.0
        %1994 = vmatpush2.xpose.msra.mxu0 0.0
        %1995 = vmatprep.subr.mxu0 0.0
        %1996 = vmatpush2.xpose.msra.mxu0 0.0
        %1997 = vmatprep.subr.mxu0 0.0
        %1998 = vmatpush2.xpose.msra.mxu0 0.0
        %1999 = vmatprep.subr.mxu0 0.0
        %2000 = vmatpush2.xpose.msra.mxu0 0.0
        %2001 = vmatprep.subr.mxu0 0.0
        %2002 = vmatpush2.xpose.msra.mxu0 0.0
        %2003 = vmatprep.subr.mxu0 0.0
        %2004 = vmatpush2.xpose.msra.mxu0 0.0
        %2005 = vmatprep.subr.mxu0 0.0
        %2006 = vmatpush2.xpose.msra.mxu0 0.0
        %2007 = vmatprep.subr.mxu0 0.0
        %2008 = vmatpush2.xpose.msra.mxu0 0.0
        %2009 = vmatprep.subr.mxu0 0.0
        %2010 = vmatpush2.xpose.msra.mxu0 0.0
        %2011 = vmatprep.mubr.f32.mxu0 0.0
        %2012 = vmatmul.mubr.f32.gmra.mxu0 %v1942
        %v2013 = vpop.f32.mrf.mxu0
        %v2014 = vadd.f32 0.0, %v2013
        %v2015 = vpop.f32.mrf.mxu0
        %2016 = vdwg.mxu0
        %v2018 = vsel %vm1940, %v1937, 0
        %v2021 = vsel %vm1940, %v1513, 0
        %2023 = vmatprep.subr.mxu0 0.0
        %2024 = vmatpush1.xpose.msra.mxu0 0.0
        %2025 = vmatprep.subr.mxu0 0.0
        %2026 = vmatpush1.xpose.msra.mxu0 0.0
        %2027 = vmatprep.subr.mxu0 0.0
        %2028 = vmatpush1.xpose.msra.mxu0 0.0
        %2029 = vmatprep.subr.mxu0 0.0
        %2030 = vmatpush1.xpose.msra.mxu0 0.0
        %2031 = vmatprep.subr.mxu0 0.0
        %2032 = vmatpush1.xpose.msra.mxu0 0.0
        %2033 = vmatprep.subr.mxu0 0.0
        %2034 = vmatpush1.xpose.msra.mxu0 0.0
        %2035 = vmatprep.subr.mxu0 0.0
        %2036 = vmatpush1.xpose.msra.mxu0 0.0
        %2037 = vmatprep.subr.mxu0 0.0
        %2038 = vmatpush1.xpose.msra.mxu0 0.0
        %2039 = vmatprep.subr.mxu0 0.0
        %2040 = vmatpush1.xpose.msra.mxu0 0.0
        %2041 = vmatprep.subr.mxu0 0.0
        %2042 = vmatpush1.xpose.msra.mxu0 0.0
        %2043 = vmatprep.subr.mxu0 0.0
        %2044 = vmatpush1.xpose.msra.mxu0 0.0
        %2045 = vmatprep.subr.mxu0 0.0
        %2046 = vmatpush1.xpose.msra.mxu0 0.0
        %2047 = vmatprep.subr.mxu0 0.0
        %2048 = vmatpush1.xpose.msra.mxu0 0.0
        %2049 = vmatprep.subr.mxu0 0.0
        %2050 = vmatpush1.xpose.msra.mxu0 0.0
        %2051 = vmatprep.subr.mxu0 0.0
        %2052 = vmatpush1.xpose.msra.mxu0 0.0
        %2053 = vmatprep.subr.mxu0 0.0
        %2054 = vmatpush1.xpose.msra.mxu0 %v2021
        %2055 = vmatprep.subr.mxu0 0.0
        %2056 = vmatpush2.xpose.msra.mxu0 0.0
        %2057 = vmatprep.subr.mxu0 0.0
        %2058 = vmatpush2.xpose.msra.mxu0 0.0
        %2059 = vmatprep.subr.mxu0 0.0
        %2060 = vmatpush2.xpose.msra.mxu0 0.0
        %2061 = vmatprep.subr.mxu0 0.0
        %2062 = vmatpush2.xpose.msra.mxu0 0.0
        %2063 = vmatprep.subr.mxu0 0.0
        %2064 = vmatpush2.xpose.msra.mxu0 0.0
        %2065 = vmatprep.subr.mxu0 0.0
        %2066 = vmatpush2.xpose.msra.mxu0 0.0
        %2067 = vmatprep.subr.mxu0 0.0
        %2068 = vmatpush2.xpose.msra.mxu0 0.0
        %2069 = vmatprep.subr.mxu0 0.0
        %2070 = vmatpush2.xpose.msra.mxu0 0.0
        %2071 = vmatprep.subr.mxu0 0.0
        %2072 = vmatpush2.xpose.msra.mxu0 0.0
        %2073 = vmatprep.subr.mxu0 0.0
        %2074 = vmatpush2.xpose.msra.mxu0 0.0
        %2075 = vmatprep.subr.mxu0 0.0
        %2076 = vmatpush2.xpose.msra.mxu0 0.0
        %2077 = vmatprep.subr.mxu0 0.0
        %2078 = vmatpush2.xpose.msra.mxu0 0.0
        %2079 = vmatprep.subr.mxu0 0.0
        %2080 = vmatpush2.xpose.msra.mxu0 0.0
        %2081 = vmatprep.subr.mxu0 0.0
        %2082 = vmatpush2.xpose.msra.mxu0 0.0
        %2083 = vmatprep.subr.mxu0 0.0
        %2084 = vmatpush2.xpose.msra.mxu0 0.0
        %2085 = vmatprep.subr.mxu0 0.0
        %2086 = vmatpush2.xpose.msra.mxu0 0.0
        %2087 = vmatprep.mubr.f32.mxu0 0.0
        %2088 = vmatmul.mubr.f32.gmra.mxu0 %v2018
        %v2089 = vpop.f32.mrf.mxu0
        %v2090 = vadd.f32 0.0, %v2089
        %v2091 = vpop.f32.mrf.mxu0
        %2092 = vdwg.mxu0
        %v2094 = vsel %vm1940, %v1938, 0
        %v2097 = vsel %vm1940, %v1583, 0
        %2099 = vmatprep.subr.mxu0 0.0
        %2100 = vmatpush1.xpose.msra.mxu0 0.0
        %2101 = vmatprep.subr.mxu0 0.0
        %2102 = vmatpush1.xpose.msra.mxu0 0.0
        %2103 = vmatprep.subr.mxu0 0.0
        %2104 = vmatpush1.xpose.msra.mxu0 0.0
        %2105 = vmatprep.subr.mxu0 0.0
        %2106 = vmatpush1.xpose.msra.mxu0 0.0
        %2107 = vmatprep.subr.mxu0 0.0
        %2108 = vmatpush1.xpose.msra.mxu0 0.0
        %2109 = vmatprep.subr.mxu0 0.0
        %2110 = vmatpush1.xpose.msra.mxu0 0.0
        %2111 = vmatprep.subr.mxu0 0.0
        %2112 = vmatpush1.xpose.msra.mxu0 0.0
        %2113 = vmatprep.subr.mxu0 0.0
        %2114 = vmatpush1.xpose.msra.mxu0 0.0
        %2115 = vmatprep.subr.mxu0 0.0
        %2116 = vmatpush1.xpose.msra.mxu0 0.0
        %2117 = vmatprep.subr.mxu0 0.0
        %2118 = vmatpush1.xpose.msra.mxu0 0.0
        %2119 = vmatprep.subr.mxu0 0.0
        %2120 = vmatpush1.xpose.msra.mxu0 0.0
        %2121 = vmatprep.subr.mxu0 0.0
        %2122 = vmatpush1.xpose.msra.mxu0 0.0
        %2123 = vmatprep.subr.mxu0 0.0
        %2124 = vmatpush1.xpose.msra.mxu0 0.0
        %2125 = vmatprep.subr.mxu0 0.0
        %2126 = vmatpush1.xpose.msra.mxu0 0.0
        %2127 = vmatprep.subr.mxu0 0.0
        %2128 = vmatpush1.xpose.msra.mxu0 0.0
        %2129 = vmatprep.subr.mxu0 0.0
        %2130 = vmatpush1.xpose.msra.mxu0 %v2097
        %2131 = vmatprep.subr.mxu0 0.0
        %2132 = vmatpush2.xpose.msra.mxu0 0.0
        %2133 = vmatprep.subr.mxu0 0.0
        %2134 = vmatpush2.xpose.msra.mxu0 0.0
        %2135 = vmatprep.subr.mxu0 0.0
        %2136 = vmatpush2.xpose.msra.mxu0 0.0
        %2137 = vmatprep.subr.mxu0 0.0
        %2138 = vmatpush2.xpose.msra.mxu0 0.0
        %2139 = vmatprep.subr.mxu0 0.0
        %2140 = vmatpush2.xpose.msra.mxu0 0.0
        %2141 = vmatprep.subr.mxu0 0.0
        %2142 = vmatpush2.xpose.msra.mxu0 0.0
        %2143 = vmatprep.subr.mxu0 0.0
        %2144 = vmatpush2.xpose.msra.mxu0 0.0
        %2145 = vmatprep.subr.mxu0 0.0
        %2146 = vmatpush2.xpose.msra.mxu0 0.0
        %2147 = vmatprep.subr.mxu0 0.0
        %2148 = vmatpush2.xpose.msra.mxu0 0.0
        %2149 = vmatprep.subr.mxu0 0.0
        %2150 = vmatpush2.xpose.msra.mxu0 0.0
        %2151 = vmatprep.subr.mxu0 0.0
        %2152 = vmatpush2.xpose.msra.mxu0 0.0
        %2153 = vmatprep.subr.mxu0 0.0
        %2154 = vmatpush2.xpose.msra.mxu0 0.0
        %2155 = vmatprep.subr.mxu0 0.0
        %2156 = vmatpush2.xpose.msra.mxu0 0.0
        %2157 = vmatprep.subr.mxu0 0.0
        %2158 = vmatpush2.xpose.msra.mxu0 0.0
        %2159 = vmatprep.subr.mxu0 0.0
        %2160 = vmatpush2.xpose.msra.mxu0 0.0
        %2161 = vmatprep.subr.mxu0 0.0
        %2162 = vmatpush2.xpose.msra.mxu0 0.0
        %2163 = vmatprep.mubr.f32.mxu0 0.0
        %2164 = vmatmul.mubr.f32.gmra.mxu0 %v2094
        %v2165 = vpop.f32.mrf.mxu0
        %v2166 = vadd.f32 0.0, %v2165
        %v2167 = vpop.f32.mrf.mxu0
        %2168 = vdwg.mxu0
        %v2170 = vsel %vm1940, %v1939, 0
        %v2173 = vsel %vm1940, %v1653, 0
        %2175 = vmatprep.subr.mxu0 0.0
        %2176 = vmatpush1.xpose.msra.mxu0 0.0
        %2177 = vmatprep.subr.mxu0 0.0
        %2178 = vmatpush1.xpose.msra.mxu0 0.0
        %2179 = vmatprep.subr.mxu0 0.0
        %2180 = vmatpush1.xpose.msra.mxu0 0.0
        %2181 = vmatprep.subr.mxu0 0.0
        %2182 = vmatpush1.xpose.msra.mxu0 0.0
        %2183 = vmatprep.subr.mxu0 0.0
        %2184 = vmatpush1.xpose.msra.mxu0 0.0
        %2185 = vmatprep.subr.mxu0 0.0
        %2186 = vmatpush1.xpose.msra.mxu0 0.0
        %2187 = vmatprep.subr.mxu0 0.0
        %2188 = vmatpush1.xpose.msra.mxu0 0.0
        %2189 = vmatprep.subr.mxu0 0.0
        %2190 = vmatpush1.xpose.msra.mxu0 0.0
        %2191 = vmatprep.subr.mxu0 0.0
        %2192 = vmatpush1.xpose.msra.mxu0 0.0
        %2193 = vmatprep.subr.mxu0 0.0
        %2194 = vmatpush1.xpose.msra.mxu0 0.0
        %2195 = vmatprep.subr.mxu0 0.0
        %2196 = vmatpush1.xpose.msra.mxu0 0.0
        %2197 = vmatprep.subr.mxu0 0.0
        %2198 = vmatpush1.xpose.msra.mxu0 0.0
        %2199 = vmatprep.subr.mxu0 0.0
        %2200 = vmatpush1.xpose.msra.mxu0 0.0
        %2201 = vmatprep.subr.mxu0 0.0
        %2202 = vmatpush1.xpose.msra.mxu0 0.0
        %2203 = vmatprep.subr.mxu0 0.0
        %2204 = vmatpush1.xpose.msra.mxu0 0.0
        %2205 = vmatprep.subr.mxu0 0.0
        %2206 = vmatpush1.xpose.msra.mxu0 %v2173
        %2207 = vmatprep.subr.mxu0 0.0
        %2208 = vmatpush2.xpose.msra.mxu0 0.0
        %2209 = vmatprep.subr.mxu0 0.0
        %2210 = vmatpush2.xpose.msra.mxu0 0.0
        %2211 = vmatprep.subr.mxu0 0.0
        %2212 = vmatpush2.xpose.msra.mxu0 0.0
        %2213 = vmatprep.subr.mxu0 0.0
        %2214 = vmatpush2.xpose.msra.mxu0 0.0
        %2215 = vmatprep.subr.mxu0 0.0
        %2216 = vmatpush2.xpose.msra.mxu0 0.0
        %2217 = vmatprep.subr.mxu0 0.0
        %2218 = vmatpush2.xpose.msra.mxu0 0.0
        %2219 = vmatprep.subr.mxu0 0.0
        %2220 = vmatpush2.xpose.msra.mxu0 0.0
        %2221 = vmatprep.subr.mxu0 0.0
        %2222 = vmatpush2.xpose.msra.mxu0 0.0
        %2223 = vmatprep.subr.mxu0 0.0
        %2224 = vmatpush2.xpose.msra.mxu0 0.0
        %2225 = vmatprep.subr.mxu0 0.0
        %2226 = vmatpush2.xpose.msra.mxu0 0.0
        %2227 = vmatprep.subr.mxu0 0.0
        %2228 = vmatpush2.xpose.msra.mxu0 0.0
        %2229 = vmatprep.subr.mxu0 0.0
        %2230 = vmatpush2.xpose.msra.mxu0 0.0
        %2231 = vmatprep.subr.mxu0 0.0
        %2232 = vmatpush2.xpose.msra.mxu0 0.0
        %2233 = vmatprep.subr.mxu0 0.0
        %2234 = vmatpush2.xpose.msra.mxu0 0.0
        %2235 = vmatprep.subr.mxu0 0.0
        %2236 = vmatpush2.xpose.msra.mxu0 0.0
        %2237 = vmatprep.subr.mxu0 0.0
        %2238 = vmatpush2.xpose.msra.mxu0 0.0
        %2239 = vmatprep.mubr.f32.mxu0 0.0
        %2240 = vmatmul.mubr.f32.gmra.mxu0 %v2170
        %v2241 = vpop.f32.mrf.mxu0
        %v2242 = vadd.f32 0.0, %v2241
        %v2243 = vpop.f32.mrf.mxu0
        %2244 = vdwg.mxu0
        %vm2245 = vcmask 36864
        %v2246 = vsel %vm2245, %v2014, -inf
        %2247 = vmax.xlane.f32.xlu0 %v2246
        %v2248 = vpop.xlane.xlu0 %2247
        %v2249 = vsel %vm2245, %v2090, -inf
        %2250 = vmax.xlane.f32.xlu0 %v2249
        %v2251 = vpop.xlane.xlu0 %2250
        %v2252 = vsel %vm2245, %v2166, -inf
        %2253 = vmax.xlane.f32.xlu0 %v2252
        %v2254 = vpop.xlane.xlu0 %2253
        %v2255 = vsel %vm2245, %v2242, -inf
        %2256 = vmax.xlane.f32.xlu0 %v2255
        %v2257 = vpop.xlane.xlu0 %2256
        %v2258 = vsub.f32 %v2014, %v2248
        %v2259 = vsub.f32 %v2090, %v2251
        %v2260 = vsub.f32 %v2166, %v2254
        %v2261 = vsub.f32 %v2242, %v2257
        %v2262 = vmul.f32 %v2258, 1.442695
        %v2263 = vpow.pop %v2262
        %v2264 = vmul.f32 %v2259, 1.442695
        %v2265 = vpow.pop %v2264
        %v2266 = vmul.f32 %v2260, 1.442695
        %v2267 = vpow.pop %v2266
        %v2268 = vmul.f32 %v2261, 1.442695
        %v2269 = vpow.pop %v2268
        %v2270 = vsel %vm2245, %v2263, 0.0
        %2271 = vadd.xlane.f32.xlu0 %v2270
        %v2272 = vpop.xlane.xlu0 %2271
        %v2273 = vsel %vm2245, %v2265, 0.0
        %2274 = vadd.xlane.f32.xlu0 %v2273
        %v2275 = vpop.xlane.xlu0 %2274
        %v2276 = vsel %vm2245, %v2267, 0.0
        %2277 = vadd.xlane.f32.xlu0 %v2276
        %v2278 = vpop.xlane.xlu0 %2277
        %v2279 = vsel %vm2245, %v2269, 0.0
        %2280 = vadd.xlane.f32.xlu0 %v2279
        %v2281 = vpop.xlane.xlu0 %2280
        %v2282 = vrcp.pop %v2272
        %v2283 = vrcp.pop %v2275
        %v2284 = vrcp.pop %v2278
        %v2285 = vrcp.pop %v2281
        %v2286 = vmul.f32 %v2263, %v2282
        %v2287 = vmul.f32 %v2265, %v2283
        %v2288 = vmul.f32 %v2267, %v2284
        %v2289 = vmul.f32 %v2269, %v2285
        %vm2290 = vcmask 39936
        %v2292 = vsel %vm2290, %v2286, 0
        %vm2294 = vcmask 1044480
        %v2296 = vsel %vm2294, %v1723, 0
        %2298 = vmatprep.subr.mxu0 0.0
        %2299 = vmatpush1.msra.mxu0 0.0
        %2300 = vmatprep.subr.mxu0 0.0
        %2301 = vmatpush1.msra.mxu0 0.0
        %2302 = vmatprep.subr.mxu0 0.0
        %2303 = vmatpush1.msra.mxu0 0.0
        %2304 = vmatprep.subr.mxu0 0.0
        %2305 = vmatpush1.msra.mxu0 0.0
        %2306 = vmatprep.subr.mxu0 0.0
        %2307 = vmatpush1.msra.mxu0 0.0
        %2308 = vmatprep.subr.mxu0 0.0
        %2309 = vmatpush1.msra.mxu0 0.0
        %2310 = vmatprep.subr.mxu0 0.0
        %2311 = vmatpush1.msra.mxu0 0.0
        %2312 = vmatprep.subr.mxu0 0.0
        %2313 = vmatpush1.msra.mxu0 0.0
        %2314 = vmatprep.subr.mxu0 0.0
        %2315 = vmatpush1.msra.mxu0 0.0
        %2316 = vmatprep.subr.mxu0 0.0
        %2317 = vmatpush1.msra.mxu0 0.0
        %2318 = vmatprep.subr.mxu0 0.0
        %2319 = vmatpush1.msra.mxu0 0.0
        %2320 = vmatprep.subr.mxu0 0.0
        %2321 = vmatpush1.msra.mxu0 0.0
        %2322 = vmatprep.subr.mxu0 0.0
        %2323 = vmatpush1.msra.mxu0 0.0
        %2324 = vmatprep.subr.mxu0 0.0
        %2325 = vmatpush1.msra.mxu0 0.0
        %2326 = vmatprep.subr.mxu0 0.0
        %2327 = vmatpush1.msra.mxu0 0.0
        %2328 = vmatprep.subr.mxu0 0.0
        %2329 = vmatpush1.msra.mxu0 %v2296
        %2330 = vmatprep.subr.mxu0 0.0
        %2331 = vmatpush2.msra.mxu0 0.0
        %2332 = vmatprep.subr.mxu0 0.0
        %2333 = vmatpush2.msra.mxu0 0.0
        %2334 = vmatprep.subr.mxu0 0.0
        %2335 = vmatpush2.msra.mxu0 0.0
        %2336 = vmatprep.subr.mxu0 0.0
        %2337 = vmatpush2.msra.mxu0 0.0
        %2338 = vmatprep.subr.mxu0 0.0
        %2339 = vmatpush2.msra.mxu0 0.0
        %2340 = vmatprep.subr.mxu0 0.0
        %2341 = vmatpush2.msra.mxu0 0.0
        %2342 = vmatprep.subr.mxu0 0.0
        %2343 = vmatpush2.msra.mxu0 0.0
        %2344 = vmatprep.subr.mxu0 0.0
        %2345 = vmatpush2.msra.mxu0 0.0
        %2346 = vmatprep.subr.mxu0 0.0
        %2347 = vmatpush2.msra.mxu0 0.0
        %2348 = vmatprep.subr.mxu0 0.0
        %2349 = vmatpush2.msra.mxu0 0.0
        %2350 = vmatprep.subr.mxu0 0.0
        %2351 = vmatpush2.msra.mxu0 0.0
        %2352 = vmatprep.subr.mxu0 0.0
        %2353 = vmatpush2.msra.mxu0 0.0
        %2354 = vmatprep.subr.mxu0 0.0
        %2355 = vmatpush2.msra.mxu0 0.0
        %2356 = vmatprep.subr.mxu0 0.0
        %2357 = vmatpush2.msra.mxu0 0.0
        %2358 = vmatprep.subr.mxu0 0.0
        %2359 = vmatpush2.msra.mxu0 0.0
        %2360 = vmatprep.subr.mxu0 0.0
        %2361 = vmatpush2.msra.mxu0 0.0
        %2362 = vmatprep.mubr.f32.mxu0 0.0
        %2363 = vmatmul.mubr.f32.gmra.mxu0 %v2292
        %v2364 = vpop.f32.mrf.mxu0
        %v2365 = vadd.f32 0.0, %v2364
        %v2366 = vpop.f32.mrf.mxu0
        %2367 = vdwg.mxu0
        %v2369 = vsel %vm2290, %v2287, 0
        %v2372 = vsel %vm2294, %v1793, 0
        %2374 = vmatprep.subr.mxu0 0.0
        %2375 = vmatpush1.msra.mxu0 0.0
        %2376 = vmatprep.subr.mxu0 0.0
        %2377 = vmatpush1.msra.mxu0 0.0
        %2378 = vmatprep.subr.mxu0 0.0
        %2379 = vmatpush1.msra.mxu0 0.0
        %2380 = vmatprep.subr.mxu0 0.0
        %2381 = vmatpush1.msra.mxu0 0.0
        %2382 = vmatprep.subr.mxu0 0.0
        %2383 = vmatpush1.msra.mxu0 0.0
        %2384 = vmatprep.subr.mxu0 0.0
        %2385 = vmatpush1.msra.mxu0 0.0
        %2386 = vmatprep.subr.mxu0 0.0
        %2387 = vmatpush1.msra.mxu0 0.0
        %2388 = vmatprep.subr.mxu0 0.0
        %2389 = vmatpush1.msra.mxu0 0.0
        %2390 = vmatprep.subr.mxu0 0.0
        %2391 = vmatpush1.msra.mxu0 0.0
        %2392 = vmatprep.subr.mxu0 0.0
        %2393 = vmatpush1.msra.mxu0 0.0
        %2394 = vmatprep.subr.mxu0 0.0
        %2395 = vmatpush1.msra.mxu0 0.0
        %2396 = vmatprep.subr.mxu0 0.0
        %2397 = vmatpush1.msra.mxu0 0.0
        %2398 = vmatprep.subr.mxu0 0.0
        %2399 = vmatpush1.msra.mxu0 0.0
        %2400 = vmatprep.subr.mxu0 0.0
        %2401 = vmatpush1.msra.mxu0 0.0
        %2402 = vmatprep.subr.mxu0 0.0
        %2403 = vmatpush1.msra.mxu0 0.0
        %2404 = vmatprep.subr.mxu0 0.0
        %2405 = vmatpush1.msra.mxu0 %v2372
        %2406 = vmatprep.subr.mxu0 0.0
        %2407 = vmatpush2.msra.mxu0 0.0
        %2408 = vmatprep.subr.mxu0 0.0
        %2409 = vmatpush2.msra.mxu0 0.0
        %2410 = vmatprep.subr.mxu0 0.0
        %2411 = vmatpush2.msra.mxu0 0.0
        %2412 = vmatprep.subr.mxu0 0.0
        %2413 = vmatpush2.msra.mxu0 0.0
        %2414 = vmatprep.subr.mxu0 0.0
        %2415 = vmatpush2.msra.mxu0 0.0
        %2416 = vmatprep.subr.mxu0 0.0
        %2417 = vmatpush2.msra.mxu0 0.0
        %2418 = vmatprep.subr.mxu0 0.0
        %2419 = vmatpush2.msra.mxu0 0.0
        %2420 = vmatprep.subr.mxu0 0.0
        %2421 = vmatpush2.msra.mxu0 0.0
        %2422 = vmatprep.subr.mxu0 0.0
        %2423 = vmatpush2.msra.mxu0 0.0
        %2424 = vmatprep.subr.mxu0 0.0
        %2425 = vmatpush2.msra.mxu0 0.0
        %2426 = vmatprep.subr.mxu0 0.0
        %2427 = vmatpush2.msra.mxu0 0.0
        %2428 = vmatprep.subr.mxu0 0.0
        %2429 = vmatpush2.msra.mxu0 0.0
        %2430 = vmatprep.subr.mxu0 0.0
        %2431 = vmatpush2.msra.mxu0 0.0
        %2432 = vmatprep.subr.mxu0 0.0
        %2433 = vmatpush2.msra.mxu0 0.0
        %2434 = vmatprep.subr.mxu0 0.0
        %2435 = vmatpush2.msra.mxu0 0.0
        %2436 = vmatprep.subr.mxu0 0.0
        %2437 = vmatpush2.msra.mxu0 0.0
        %2438 = vmatprep.mubr.f32.mxu0 0.0
        %2439 = vmatmul.mubr.f32.gmra.mxu0 %v2369
        %v2440 = vpop.f32.mrf.mxu0
        %v2441 = vadd.f32 0.0, %v2440
        %v2442 = vpop.f32.mrf.mxu0
        %2443 = vdwg.mxu0
        %v2445 = vsel %vm2290, %v2288, 0
        %v2448 = vsel %vm2294, %v1863, 0
        %2450 = vmatprep.subr.mxu0 0.0
        %2451 = vmatpush1.msra.mxu0 0.0
        %2452 = vmatprep.subr.mxu0 0.0
        %2453 = vmatpush1.msra.mxu0 0.0
        %2454 = vmatprep.subr.mxu0 0.0
        %2455 = vmatpush1.msra.mxu0 0.0
        %2456 = vmatprep.subr.mxu0 0.0
        %2457 = vmatpush1.msra.mxu0 0.0
        %2458 = vmatprep.subr.mxu0 0.0
        %2459 = vmatpush1.msra.mxu0 0.0
        %2460 = vmatprep.subr.mxu0 0.0
        %2461 = vmatpush1.msra.mxu0 0.0
        %2462 = vmatprep.subr.mxu0 0.0
        %2463 = vmatpush1.msra.mxu0 0.0
        %2464 = vmatprep.subr.mxu0 0.0
        %2465 = vmatpush1.msra.mxu0 0.0
        %2466 = vmatprep.subr.mxu0 0.0
        %2467 = vmatpush1.msra.mxu0 0.0
        %2468 = vmatprep.subr.mxu0 0.0
        %2469 = vmatpush1.msra.mxu0 0.0
        %2470 = vmatprep.subr.mxu0 0.0
        %2471 = vmatpush1.msra.mxu0 0.0
        %2472 = vmatprep.subr.mxu0 0.0
        %2473 = vmatpush1.msra.mxu0 0.0
        %2474 = vmatprep.subr.mxu0 0.0
        %2475 = vmatpush1.msra.mxu0 0.0
        %2476 = vmatprep.subr.mxu0 0.0
        %2477 = vmatpush1.msra.mxu0 0.0
        %2478 = vmatprep.subr.mxu0 0.0
        %2479 = vmatpush1.msra.mxu0 0.0
        %2480 = vmatprep.subr.mxu0 0.0
        %2481 = vmatpush1.msra.mxu0 %v2448
        %2482 = vmatprep.subr.mxu0 0.0
        %2483 = vmatpush2.msra.mxu0 0.0
        %2484 = vmatprep.subr.mxu0 0.0
        %2485 = vmatpush2.msra.mxu0 0.0
        %2486 = vmatprep.subr.mxu0 0.0
        %2487 = vmatpush2.msra.mxu0 0.0
        %2488 = vmatprep.subr.mxu0 0.0
        %2489 = vmatpush2.msra.mxu0 0.0
        %2490 = vmatprep.subr.mxu0 0.0
        %2491 = vmatpush2.msra.mxu0 0.0
        %2492 = vmatprep.subr.mxu0 0.0
        %2493 = vmatpush2.msra.mxu0 0.0
        %2494 = vmatprep.subr.mxu0 0.0
        %2495 = vmatpush2.msra.mxu0 0.0
        %2496 = vmatprep.subr.mxu0 0.0
        %2497 = vmatpush2.msra.mxu0 0.0
        %2498 = vmatprep.subr.mxu0 0.0
        %2499 = vmatpush2.msra.mxu0 0.0
        %2500 = vmatprep.subr.mxu0 0.0
        %2501 = vmatpush2.msra.mxu0 0.0
        %2502 = vmatprep.subr.mxu0 0.0
        %2503 = vmatpush2.msra.mxu0 0.0
        %2504 = vmatprep.subr.mxu0 0.0
        %2505 = vmatpush2.msra.mxu0 0.0
        %2506 = vmatprep.subr.mxu0 0.0
        %2507 = vmatpush2.msra.mxu0 0.0
        %2508 = vmatprep.subr.mxu0 0.0
        %2509 = vmatpush2.msra.mxu0 0.0
        %2510 = vmatprep.subr.mxu0 0.0
        %2511 = vmatpush2.msra.mxu0 0.0
        %2512 = vmatprep.subr.mxu0 0.0
        %2513 = vmatpush2.msra.mxu0 0.0
        %2514 = vmatprep.mubr.f32.mxu0 0.0
        %2515 = vmatmul.mubr.f32.gmra.mxu0 %v2445
        %v2516 = vpop.f32.mrf.mxu0
        %v2517 = vadd.f32 0.0, %v2516
        %v2518 = vpop.f32.mrf.mxu0
        %2519 = vdwg.mxu0
        %v2521 = vsel %vm2290, %v2289, 0
        %v2524 = vsel %vm2294, %v1933, 0
        %2526 = vmatprep.subr.mxu0 0.0
        %2527 = vmatpush1.msra.mxu0 0.0
        %2528 = vmatprep.subr.mxu0 0.0
        %2529 = vmatpush1.msra.mxu0 0.0
        %2530 = vmatprep.subr.mxu0 0.0
        %2531 = vmatpush1.msra.mxu0 0.0
        %2532 = vmatprep.subr.mxu0 0.0
        %2533 = vmatpush1.msra.mxu0 0.0
        %2534 = vmatprep.subr.mxu0 0.0
        %2535 = vmatpush1.msra.mxu0 0.0
        %2536 = vmatprep.subr.mxu0 0.0
        %2537 = vmatpush1.msra.mxu0 0.0
        %2538 = vmatprep.subr.mxu0 0.0
        %2539 = vmatpush1.msra.mxu0 0.0
        %2540 = vmatprep.subr.mxu0 0.0
        %2541 = vmatpush1.msra.mxu0 0.0
        %2542 = vmatprep.subr.mxu0 0.0
        %2543 = vmatpush1.msra.mxu0 0.0
        %2544 = vmatprep.subr.mxu0 0.0
        %2545 = vmatpush1.msra.mxu0 0.0
        %2546 = vmatprep.subr.mxu0 0.0
        %2547 = vmatpush1.msra.mxu0 0.0
        %2548 = vmatprep.subr.mxu0 0.0
        %2549 = vmatpush1.msra.mxu0 0.0
        %2550 = vmatprep.subr.mxu0 0.0
        %2551 = vmatpush1.msra.mxu0 0.0
        %2552 = vmatprep.subr.mxu0 0.0
        %2553 = vmatpush1.msra.mxu0 0.0
        %2554 = vmatprep.subr.mxu0 0.0
        %2555 = vmatpush1.msra.mxu0 0.0
        %2556 = vmatprep.subr.mxu0 0.0
        %2557 = vmatpush1.msra.mxu0 %v2524
        %2558 = vmatprep.subr.mxu0 0.0
        %2559 = vmatpush2.msra.mxu0 0.0
        %2560 = vmatprep.subr.mxu0 0.0
        %2561 = vmatpush2.msra.mxu0 0.0
        %2562 = vmatprep.subr.mxu0 0.0
        %2563 = vmatpush2.msra.mxu0 0.0
        %2564 = vmatprep.subr.mxu0 0.0
        %2565 = vmatpush2.msra.mxu0 0.0
        %2566 = vmatprep.subr.mxu0 0.0
        %2567 = vmatpush2.msra.mxu0 0.0
        %2568 = vmatprep.subr.mxu0 0.0
        %2569 = vmatpush2.msra.mxu0 0.0
        %2570 = vmatprep.subr.mxu0 0.0
        %2571 = vmatpush2.msra.mxu0 0.0
        %2572 = vmatprep.subr.mxu0 0.0
        %2573 = vmatpush2.msra.mxu0 0.0
        %2574 = vmatprep.subr.mxu0 0.0
        %2575 = vmatpush2.msra.mxu0 0.0
        %2576 = vmatprep.subr.mxu0 0.0
        %2577 = vmatpush2.msra.mxu0 0.0
        %2578 = vmatprep.subr.mxu0 0.0
        %2579 = vmatpush2.msra.mxu0 0.0
        %2580 = vmatprep.subr.mxu0 0.0
        %2581 = vmatpush2.msra.mxu0 0.0
        %2582 = vmatprep.subr.mxu0 0.0
        %2583 = vmatpush2.msra.mxu0 0.0
        %2584 = vmatprep.subr.mxu0 0.0
        %2585 = vmatpush2.msra.mxu0 0.0
        %2586 = vmatprep.subr.mxu0 0.0
        %2587 = vmatpush2.msra.mxu0 0.0
        %2588 = vmatprep.subr.mxu0 0.0
        %2589 = vmatpush2.msra.mxu0 0.0
        %2590 = vmatprep.mubr.f32.mxu0 0.0
        %2591 = vmatmul.mubr.f32.gmra.mxu0 %v2521
        %v2592 = vpop.f32.mrf.mxu0
        %v2593 = vadd.f32 0.0, %v2592
        %v2594 = vpop.f32.mrf.mxu0
        %2595 = vdwg.mxu0
        %v2597 = vsel %vm1940, %v2365, 0
        %2599 = vmatprep.subr.mxu0 0.0
        %2600 = vmatpush1.msra.mxu0 0.0
        %2601 = vmatprep.subr.mxu0 0.0
        %2602 = vmatpush1.msra.mxu0 0.0
        %2603 = vmatprep.subr.mxu0 0.0
        %2604 = vmatpush1.msra.mxu0 0.0
        %2605 = vmatprep.subr.mxu0 0.0
        %2606 = vmatpush1.msra.mxu0 0.0
        %2607 = vmatprep.subr.mxu0 0.0
        %2608 = vmatpush1.msra.mxu0 0.0
        %2609 = vmatprep.subr.mxu0 0.0
        %2610 = vmatpush1.msra.mxu0 0.0
        %2611 = vmatprep.subr.mxu0 0.0
        %2612 = vmatpush1.msra.mxu0 0.0
        %2613 = vmatprep.subr.mxu0 0.0
        %2614 = vmatpush1.msra.mxu0 0.0
        %2615 = vmatprep.subr.mxu0 0.0
        %2616 = vmatpush1.msra.mxu0 0.0
        %2617 = vmatprep.subr.mxu0 0.0
        %2618 = vmatpush1.msra.mxu0 0.0
        %2619 = vmatprep.subr.mxu0 0.0
        %2620 = vmatpush1.msra.mxu0 0.0
        %2621 = vmatprep.subr.mxu0 0.0
        %2622 = vmatpush1.msra.mxu0 0.0
        %2623 = vmatprep.subr.mxu0 0.0
        %2624 = vmatpush1.msra.mxu0 0.0
        %2625 = vmatprep.subr.mxu0 0.0
        %2626 = vmatpush1.msra.mxu0 0.0
        %2627 = vmatprep.subr.mxu0 0.0
        %2628 = vmatpush1.msra.mxu0 0.0
        %2629 = vmatprep.subr.mxu0 0.0
        %2630 = vmatpush1.msra.mxu0 %v933
        %2631 = vmatprep.subr.mxu0 0.0
        %2632 = vmatpush2.msra.mxu0 0.0
        %2633 = vmatprep.subr.mxu0 0.0
        %2634 = vmatpush2.msra.mxu0 0.0
        %2635 = vmatprep.subr.mxu0 0.0
        %2636 = vmatpush2.msra.mxu0 0.0
        %2637 = vmatprep.subr.mxu0 0.0
        %2638 = vmatpush2.msra.mxu0 0.0
        %2639 = vmatprep.subr.mxu0 0.0
        %2640 = vmatpush2.msra.mxu0 0.0
        %2641 = vmatprep.subr.mxu0 0.0
        %2642 = vmatpush2.msra.mxu0 0.0
        %2643 = vmatprep.subr.mxu0 0.0
        %2644 = vmatpush2.msra.mxu0 0.0
        %2645 = vmatprep.subr.mxu0 0.0
        %2646 = vmatpush2.msra.mxu0 0.0
        %2647 = vmatprep.subr.mxu0 0.0
        %2648 = vmatpush2.msra.mxu0 0.0
        %2649 = vmatprep.subr.mxu0 0.0
        %2650 = vmatpush2.msra.mxu0 0.0
        %2651 = vmatprep.subr.mxu0 0.0
        %2652 = vmatpush2.msra.mxu0 0.0
        %2653 = vmatprep.subr.mxu0 0.0
        %2654 = vmatpush2.msra.mxu0 0.0
        %2655 = vmatprep.subr.mxu0 0.0
        %2656 = vmatpush2.msra.mxu0 0.0
        %2657 = vmatprep.subr.mxu0 0.0
        %2658 = vmatpush2.msra.mxu0 0.0
        %2659 = vmatprep.subr.mxu0 0.0
        %2660 = vmatpush2.msra.mxu0 0.0
        %2661 = vmatprep.subr.mxu0 0.0
        %2662 = vmatpush2.msra.mxu0 0.0
        %2663 = vmatprep.mubr.f32.mxu0 0.0
        %2664 = vmatmul.mubr.f32.gmra.mxu0 %v2597
        %v2665 = vpop.f32.mrf.mxu0
        %v2666 = vadd.f32 0.0, %v2665
        %v2667 = vpop.f32.mrf.mxu0
        %2668 = vdwg.mxu0
        %v2670 = vsel %vm1940, %v2441, 0
        %2672 = vmatprep.subr.mxu0 0.0
        %2673 = vmatpush1.msra.mxu0 0.0
        %2674 = vmatprep.subr.mxu0 0.0
        %2675 = vmatpush1.msra.mxu0 0.0
        %2676 = vmatprep.subr.mxu0 0.0
        %2677 = vmatpush1.msra.mxu0 0.0
        %2678 = vmatprep.subr.mxu0 0.0
        %2679 = vmatpush1.msra.mxu0 0.0
        %2680 = vmatprep.subr.mxu0 0.0
        %2681 = vmatpush1.msra.mxu0 0.0
        %2682 = vmatprep.subr.mxu0 0.0
        %2683 = vmatpush1.msra.mxu0 0.0
        %2684 = vmatprep.subr.mxu0 0.0
        %2685 = vmatpush1.msra.mxu0 0.0
        %2686 = vmatprep.subr.mxu0 0.0
        %2687 = vmatpush1.msra.mxu0 0.0
        %2688 = vmatprep.subr.mxu0 0.0
        %2689 = vmatpush1.msra.mxu0 0.0
        %2690 = vmatprep.subr.mxu0 0.0
        %2691 = vmatpush1.msra.mxu0 0.0
        %2692 = vmatprep.subr.mxu0 0.0
        %2693 = vmatpush1.msra.mxu0 0.0
        %2694 = vmatprep.subr.mxu0 0.0
        %2695 = vmatpush1.msra.mxu0 0.0
        %2696 = vmatprep.subr.mxu0 0.0
        %2697 = vmatpush1.msra.mxu0 0.0
        %2698 = vmatprep.subr.mxu0 0.0
        %2699 = vmatpush1.msra.mxu0 0.0
        %2700 = vmatprep.subr.mxu0 0.0
        %2701 = vmatpush1.msra.mxu0 0.0
        %2702 = vmatprep.subr.mxu0 0.0
        %2703 = vmatpush1.msra.mxu0 %v934
        %2704 = vmatprep.subr.mxu0 0.0
        %2705 = vmatpush2.msra.mxu0 0.0
        %2706 = vmatprep.subr.mxu0 0.0
        %2707 = vmatpush2.msra.mxu0 0.0
        %2708 = vmatprep.subr.mxu0 0.0
        %2709 = vmatpush2.msra.mxu0 0.0
        %2710 = vmatprep.subr.mxu0 0.0
        %2711 = vmatpush2.msra.mxu0 0.0
        %2712 = vmatprep.subr.mxu0 0.0
        %2713 = vmatpush2.msra.mxu0 0.0
        %2714 = vmatprep.subr.mxu0 0.0
        %2715 = vmatpush2.msra.mxu0 0.0
        %2716 = vmatprep.subr.mxu0 0.0
        %2717 = vmatpush2.msra.mxu0 0.0
        %2718 = vmatprep.subr.mxu0 0.0
        %2719 = vmatpush2.msra.mxu0 0.0
        %2720 = vmatprep.subr.mxu0 0.0
        %2721 = vmatpush2.msra.mxu0 0.0
        %2722 = vmatprep.subr.mxu0 0.0
        %2723 = vmatpush2.msra.mxu0 0.0
        %2724 = vmatprep.subr.mxu0 0.0
        %2725 = vmatpush2.msra.mxu0 0.0
        %2726 = vmatprep.subr.mxu0 0.0
        %2727 = vmatpush2.msra.mxu0 0.0
        %2728 = vmatprep.subr.mxu0 0.0
        %2729 = vmatpush2.msra.mxu0 0.0
        %2730 = vmatprep.subr.mxu0 0.0
        %2731 = vmatpush2.msra.mxu0 0.0
        %2732 = vmatprep.subr.mxu0 0.0
        %2733 = vmatpush2.msra.mxu0 0.0
        %2734 = vmatprep.subr.mxu0 0.0
        %2735 = vmatpush2.msra.mxu0 0.0
        %2736 = vmatprep.mubr.f32.mxu0 0.0
        %2737 = vmatmul.mubr.f32.gmra.mxu0 %v2670
        %v2738 = vpop.f32.mrf.mxu0
        %v2739 = vadd.f32 0.0, %v2738
        %v2740 = vpop.f32.mrf.mxu0
        %2741 = vdwg.mxu0
        %v2743 = vsel %vm1940, %v2517, 0
        %2745 = vmatprep.subr.mxu0 0.0
        %2746 = vmatpush1.msra.mxu0 0.0
        %2747 = vmatprep.subr.mxu0 0.0
        %2748 = vmatpush1.msra.mxu0 0.0
        %2749 = vmatprep.subr.mxu0 0.0
        %2750 = vmatpush1.msra.mxu0 0.0
        %2751 = vmatprep.subr.mxu0 0.0
        %2752 = vmatpush1.msra.mxu0 0.0
        %2753 = vmatprep.subr.mxu0 0.0
        %2754 = vmatpush1.msra.mxu0 0.0
        %2755 = vmatprep.subr.mxu0 0.0
        %2756 = vmatpush1.msra.mxu0 0.0
        %2757 = vmatprep.subr.mxu0 0.0
        %2758 = vmatpush1.msra.mxu0 0.0
        %2759 = vmatprep.subr.mxu0 0.0
        %2760 = vmatpush1.msra.mxu0 0.0
        %2761 = vmatprep.subr.mxu0 0.0
        %2762 = vmatpush1.msra.mxu0 0.0
        %2763 = vmatprep.subr.mxu0 0.0
        %2764 = vmatpush1.msra.mxu0 0.0
        %2765 = vmatprep.subr.mxu0 0.0
        %2766 = vmatpush1.msra.mxu0 0.0
        %2767 = vmatprep.subr.mxu0 0.0
        %2768 = vmatpush1.msra.mxu0 0.0
        %2769 = vmatprep.subr.mxu0 0.0
        %2770 = vmatpush1.msra.mxu0 0.0
        %2771 = vmatprep.subr.mxu0 0.0
        %2772 = vmatpush1.msra.mxu0 0.0
        %2773 = vmatprep.subr.mxu0 0.0
        %2774 = vmatpush1.msra.mxu0 0.0
        %2775 = vmatprep.subr.mxu0 0.0
        %2776 = vmatpush1.msra.mxu0 %v935
        %2777 = vmatprep.subr.mxu0 0.0
        %2778 = vmatpush2.msra.mxu0 0.0
        %2779 = vmatprep.subr.mxu0 0.0
        %2780 = vmatpush2.msra.mxu0 0.0
        %2781 = vmatprep.subr.mxu0 0.0
        %2782 = vmatpush2.msra.mxu0 0.0
        %2783 = vmatprep.subr.mxu0 0.0
        %2784 = vmatpush2.msra.mxu0 0.0
        %2785 = vmatprep.subr.mxu0 0.0
        %2786 = vmatpush2.msra.mxu0 0.0
        %2787 = vmatprep.subr.mxu0 0.0
        %2788 = vmatpush2.msra.mxu0 0.0
        %2789 = vmatprep.subr.mxu0 0.0
        %2790 = vmatpush2.msra.mxu0 0.0
        %2791 = vmatprep.subr.mxu0 0.0
        %2792 = vmatpush2.msra.mxu0 0.0
        %2793 = vmatprep.subr.mxu0 0.0
        %2794 = vmatpush2.msra.mxu0 0.0
        %2795 = vmatprep.subr.mxu0 0.0
        %2796 = vmatpush2.msra.mxu0 0.0
        %2797 = vmatprep.subr.mxu0 0.0
        %2798 = vmatpush2.msra.mxu0 0.0
        %2799 = vmatprep.subr.mxu0 0.0
        %2800 = vmatpush2.msra.mxu0 0.0
        %2801 = vmatprep.subr.mxu0 0.0
        %2802 = vmatpush2.msra.mxu0 0.0
        %2803 = vmatprep.subr.mxu0 0.0
        %2804 = vmatpush2.msra.mxu0 0.0
        %2805 = vmatprep.subr.mxu0 0.0
        %2806 = vmatpush2.msra.mxu0 0.0
        %2807 = vmatprep.subr.mxu0 0.0
        %2808 = vmatpush2.msra.mxu0 0.0
        %2809 = vmatprep.mubr.f32.mxu0 0.0
        %2810 = vmatmul.mubr.f32.gmra.mxu0 %v2743
        %v2811 = vpop.f32.mrf.mxu0
        %v2812 = vadd.f32 0.0, %v2811
        %v2813 = vpop.f32.mrf.mxu0
        %2814 = vdwg.mxu0
        %v2816 = vsel %vm1940, %v2593, 0
        %2818 = vmatprep.subr.mxu0 0.0
        %2819 = vmatpush1.msra.mxu0 0.0
        %2820 = vmatprep.subr.mxu0 0.0
        %2821 = vmatpush1.msra.mxu0 0.0
        %2822 = vmatprep.subr.mxu0 0.0
        %2823 = vmatpush1.msra.mxu0 0.0
        %2824 = vmatprep.subr.mxu0 0.0
        %2825 = vmatpush1.msra.mxu0 0.0
        %2826 = vmatprep.subr.mxu0 0.0
        %2827 = vmatpush1.msra.mxu0 0.0
        %2828 = vmatprep.subr.mxu0 0.0
        %2829 = vmatpush1.msra.mxu0 0.0
        %2830 = vmatprep.subr.mxu0 0.0
        %2831 = vmatpush1.msra.mxu0 0.0
        %2832 = vmatprep.subr.mxu0 0.0
        %2833 = vmatpush1.msra.mxu0 0.0
        %2834 = vmatprep.subr.mxu0 0.0
        %2835 = vmatpush1.msra.mxu0 0.0
        %2836 = vmatprep.subr.mxu0 0.0
        %2837 = vmatpush1.msra.mxu0 0.0
        %2838 = vmatprep.subr.mxu0 0.0
        %2839 = vmatpush1.msra.mxu0 0.0
        %2840 = vmatprep.subr.mxu0 0.0
        %2841 = vmatpush1.msra.mxu0 0.0
        %2842 = vmatprep.subr.mxu0 0.0
        %2843 = vmatpush1.msra.mxu0 0.0
        %2844 = vmatprep.subr.mxu0 0.0
        %2845 = vmatpush1.msra.mxu0 0.0
        %2846 = vmatprep.subr.mxu0 0.0
        %2847 = vmatpush1.msra.mxu0 0.0
        %2848 = vmatprep.subr.mxu0 0.0
        %2849 = vmatpush1.msra.mxu0 %v936
        %2850 = vmatprep.subr.mxu0 0.0
        %2851 = vmatpush2.msra.mxu0 0.0
        %2852 = vmatprep.subr.mxu0 0.0
        %2853 = vmatpush2.msra.mxu0 0.0
        %2854 = vmatprep.subr.mxu0 0.0
        %2855 = vmatpush2.msra.mxu0 0.0
        %2856 = vmatprep.subr.mxu0 0.0
        %2857 = vmatpush2.msra.mxu0 0.0
        %2858 = vmatprep.subr.mxu0 0.0
        %2859 = vmatpush2.msra.mxu0 0.0
        %2860 = vmatprep.subr.mxu0 0.0
        %2861 = vmatpush2.msra.mxu0 0.0
        %2862 = vmatprep.subr.mxu0 0.0
        %2863 = vmatpush2.msra.mxu0 0.0
        %2864 = vmatprep.subr.mxu0 0.0
        %2865 = vmatpush2.msra.mxu0 0.0
        %2866 = vmatprep.subr.mxu0 0.0
        %2867 = vmatpush2.msra.mxu0 0.0
        %2868 = vmatprep.subr.mxu0 0.0
        %2869 = vmatpush2.msra.mxu0 0.0
        %2870 = vmatprep.subr.mxu0 0.0
        %2871 = vmatpush2.msra.mxu0 0.0
        %2872 = vmatprep.subr.mxu0 0.0
        %2873 = vmatpush2.msra.mxu0 0.0
        %2874 = vmatprep.subr.mxu0 0.0
        %2875 = vmatpush2.msra.mxu0 0.0
        %2876 = vmatprep.subr.mxu0 0.0
        %2877 = vmatpush2.msra.mxu0 0.0
        %2878 = vmatprep.subr.mxu0 0.0
        %2879 = vmatpush2.msra.mxu0 0.0
        %2880 = vmatprep.subr.mxu0 0.0
        %2881 = vmatpush2.msra.mxu0 0.0
        %2882 = vmatprep.mubr.f32.mxu0 0.0
        %2883 = vmatmul.mubr.f32.gmra.mxu0 %v2816
        %v2884 = vpop.f32.mrf.mxu0
        %v2885 = vadd.f32 0.0, %v2884
        %v2886 = vpop.f32.mrf.mxu0
        %2887 = vdwg.mxu0
        %v2888 = vsel %vm991, %v2666, 0.0
        %v2889 = vsel %vm991, %v2739, 0.0
        %v2890 = vadd.f32 %v2888, %v2889
        %v2891 = vsel %vm991, %v2812, 0.0
        %v2892 = vadd.f32 %v2890, %v2891
        %v2893 = vsel %vm991, %v2885, 0.0
        %v2894 = vadd.f32 %v2892, %v2893
        %v2895 = vadd.f32 %v806, %v2894
        %v2897 = vlaneseq
        %v2898 = vshrl.u32 %v2897, 7
        %v2899 = vsub.s32 0, %v2898
        %v2900 = vrot.slane %v941, %v2899
        %v2902 = vadd.f32 %v2895, %v2900
        %v2903 = vsel %vm991, %v2902, 0.0
        %2904 = vadd.xlane.f32.xlu0 %v2903
        %v2905 = vpop.xlane.xlu0 %2904
        %v2906 = vmul.f32 %v2905, %v995
        %v2907 = vsub.f32 %v2902, %v2906
        %v2908 = vmul.f32 %v2907, %v2907
        %v2909 = vsel %vm991, %v2908, 0.0
        %2910 = vadd.xlane.f32.xlu0 %v2909
        %v2911 = vpop.xlane.xlu0 %2910
        %v2912 = vmul.f32 %v2911, %v995
        %v2913 = vadd.f32 %v2912, 1e-06
        %v2914 = vrsqrt.pop %v2913
        %v2915 = vmul.f32 %v2907, %v2914
        %v2917 = vlaneseq
        %v2918 = vshrl.u32 %v2917, 7
        %v2919 = vsub.s32 0, %v2918
        %v2920 = vrot.slane %v943, %v2919
        %v2922 = vmul.f32 %v2915, %v2920
        %v2924 = vlaneseq
        %v2925 = vshrl.u32 %v2924, 7
        %v2926 = vsub.s32 0, %v2925
        %v2927 = vrot.slane %v945, %v2926
        %v2929 = vadd.f32 %v2922, %v2927
        %v2931 = vlaneseq
        %v2932 = vshrl.u32 %v2931, 7
        %v2933 = vsub.s32 0, %v2932
        %v2934 = vrot.slane %v955, %v2933
        %v2937 = vsel %vm1092, %v2929, 0
        %2939 = vmatprep.subr.mxu0 0.0
        %2940 = vmatpush1.msra.mxu0 0.0
        %2941 = vmatprep.subr.mxu0 0.0
        %2942 = vmatpush1.msra.mxu0 0.0
        %2943 = vmatprep.subr.mxu0 0.0
        %2944 = vmatpush1.msra.mxu0 0.0
        %2945 = vmatprep.subr.mxu0 0.0
        %2946 = vmatpush1.msra.mxu0 0.0
        %2947 = vmatprep.subr.mxu0 0.0
        %2948 = vmatpush1.msra.mxu0 0.0
        %2949 = vmatprep.subr.mxu0 0.0
        %2950 = vmatpush1.msra.mxu0 0.0
        %2951 = vmatprep.subr.mxu0 0.0
        %2952 = vmatpush1.msra.mxu0 0.0
        %2953 = vmatprep.subr.mxu0 0.0
        %2954 = vmatpush1.msra.mxu0 0.0
        %2955 = vmatprep.subr.mxu0 0.0
        %2956 = vmatpush1.msra.mxu0 0.0
        %2957 = vmatprep.subr.mxu0 0.0
        %2958 = vmatpush1.msra.mxu0 0.0
        %2959 = vmatprep.subr.mxu0 0.0
        %2960 = vmatpush1.msra.mxu0 0.0
        %2961 = vmatprep.subr.mxu0 0.0
        %2962 = vmatpush1.msra.mxu0 0.0
        %2963 = vmatprep.subr.mxu0 0.0
        %2964 = vmatpush1.msra.mxu0 %v950
        %2965 = vmatprep.subr.mxu0 0.0
        %2966 = vmatpush1.msra.mxu0 %v949
        %2967 = vmatprep.subr.mxu0 0.0
        %2968 = vmatpush1.msra.mxu0 %v948
        %2969 = vmatprep.subr.mxu0 0.0
        %2970 = vmatpush1.msra.mxu0 %v947
        %2971 = vmatprep.subr.mxu0 0.0
        %2972 = vmatpush2.msra.mxu0 0.0
        %2973 = vmatprep.subr.mxu0 0.0
        %2974 = vmatpush2.msra.mxu0 0.0
        %2975 = vmatprep.subr.mxu0 0.0
        %2976 = vmatpush2.msra.mxu0 0.0
        %2977 = vmatprep.subr.mxu0 0.0
        %2978 = vmatpush2.msra.mxu0 0.0
        %2979 = vmatprep.subr.mxu0 0.0
        %2980 = vmatpush2.msra.mxu0 0.0
        %2981 = vmatprep.subr.mxu0 0.0
        %2982 = vmatpush2.msra.mxu0 0.0
        %2983 = vmatprep.subr.mxu0 0.0
        %2984 = vmatpush2.msra.mxu0 0.0
        %2985 = vmatprep.subr.mxu0 0.0
        %2986 = vmatpush2.msra.mxu0 0.0
        %2987 = vmatprep.subr.mxu0 0.0
        %2988 = vmatpush2.msra.mxu0 0.0
        %2989 = vmatprep.subr.mxu0 0.0
        %2990 = vmatpush2.msra.mxu0 0.0
        %2991 = vmatprep.subr.mxu0 0.0
        %2992 = vmatpush2.msra.mxu0 0.0
        %2993 = vmatprep.subr.mxu0 0.0
        %2994 = vmatpush2.msra.mxu0 0.0
        %2995 = vmatprep.subr.mxu0 0.0
        %2996 = vmatpush2.msra.mxu0 0.0
        %2997 = vmatprep.subr.mxu0 0.0
        %2998 = vmatpush2.msra.mxu0 0.0
        %2999 = vmatprep.subr.mxu0 0.0
        %3000 = vmatpush2.msra.mxu0 0.0
        %3001 = vmatprep.subr.mxu0 0.0
        %3002 = vmatpush2.msra.mxu0 0.0
        %3003 = vmatprep.mubr.f32.mxu0 0.0
        %3004 = vmatmul.mubr.f32.gmra.mxu0 %v2937
        %v3005 = vpop.f32.mrf.mxu0
        %v3006 = vadd.f32 %v2934, %v3005
        %v3007 = vpop.f32.mrf.mxu0
        %3008 = vdwg.mxu0
        %v3009 = vmul.f32 %v3006, 0.5
        %v3010 = vmul.f32 %v3006, 0.70710677
        %v3011 = verf.f32.pop %v3010
        %v3012 = vadd.f32 %v3011, 1.0
        %v3013 = vmul.f32 %v3009, %v3012
        %v3015 = vlaneseq
        %v3016 = vshrl.u32 %v3015, 7
        %v3017 = vsub.s32 0, %v3016
        %v3018 = vrot.slane %v989, %v3017
        %3020 = vmatprep.subr.mxu0 0.0
        %3021 = vmatpush1.msra.mxu0 %v972
        %3022 = vmatprep.subr.mxu0 0.0
        %3023 = vmatpush1.msra.mxu0 %v971
        %3024 = vmatprep.subr.mxu0 0.0
        %3025 = vmatpush1.msra.mxu0 %v970
        %3026 = vmatprep.subr.mxu0 0.0
        %3027 = vmatpush1.msra.mxu0 %v969
        %3028 = vmatprep.subr.mxu0 0.0
        %3029 = vmatpush1.msra.mxu0 %v968
        %3030 = vmatprep.subr.mxu0 0.0
        %3031 = vmatpush1.msra.mxu0 %v967
        %3032 = vmatprep.subr.mxu0 0.0
        %3033 = vmatpush1.msra.mxu0 %v966
        %3034 = vmatprep.subr.mxu0 0.0
        %3035 = vmatpush1.msra.mxu0 %v965
        %3036 = vmatprep.subr.mxu0 0.0
        %3037 = vmatpush1.msra.mxu0 %v964
        %3038 = vmatprep.subr.mxu0 0.0
        %3039 = vmatpush1.msra.mxu0 %v963
        %3040 = vmatprep.subr.mxu0 0.0
        %3041 = vmatpush1.msra.mxu0 %v962
        %3042 = vmatprep.subr.mxu0 0.0
        %3043 = vmatpush1.msra.mxu0 %v961
        %3044 = vmatprep.subr.mxu0 0.0
        %3045 = vmatpush1.msra.mxu0 %v960
        %3046 = vmatprep.subr.mxu0 0.0
        %3047 = vmatpush1.msra.mxu0 %v959
        %3048 = vmatprep.subr.mxu0 0.0
        %3049 = vmatpush1.msra.mxu0 %v958
        %3050 = vmatprep.subr.mxu0 0.0
        %3051 = vmatpush1.msra.mxu0 %v957
        %3052 = vmatprep.subr.mxu0 0.0
        %3053 = vmatpush2.msra.mxu0 0.0
        %3054 = vmatprep.subr.mxu0 0.0
        %3055 = vmatpush2.msra.mxu0 0.0
        %3056 = vmatprep.subr.mxu0 0.0
        %3057 = vmatpush2.msra.mxu0 0.0
        %3058 = vmatprep.subr.mxu0 0.0
        %3059 = vmatpush2.msra.mxu0 0.0
        %3060 = vmatprep.subr.mxu0 0.0
        %3061 = vmatpush2.msra.mxu0 0.0
        %3062 = vmatprep.subr.mxu0 0.0
        %3063 = vmatpush2.msra.mxu0 0.0
        %3064 = vmatprep.subr.mxu0 0.0
        %3065 = vmatpush2.msra.mxu0 0.0
        %3066 = vmatprep.subr.mxu0 0.0
        %3067 = vmatpush2.msra.mxu0 0.0
        %3068 = vmatprep.subr.mxu0 0.0
        %3069 = vmatpush2.msra.mxu0 0.0
        %3070 = vmatprep.subr.mxu0 0.0
        %3071 = vmatpush2.msra.mxu0 0.0
        %3072 = vmatprep.subr.mxu0 0.0
        %3073 = vmatpush2.msra.mxu0 0.0
        %3074 = vmatprep.subr.mxu0 0.0
        %3075 = vmatpush2.msra.mxu0 0.0
        %3076 = vmatprep.subr.mxu0 0.0
        %3077 = vmatpush2.msra.mxu0 0.0
        %3078 = vmatprep.subr.mxu0 0.0
        %3079 = vmatpush2.msra.mxu0 0.0
        %3080 = vmatprep.subr.mxu0 0.0
        %3081 = vmatpush2.msra.mxu0 0.0
        %3082 = vmatprep.subr.mxu0 0.0
        %3083 = vmatpush2.msra.mxu0 0.0
        %3084 = vmatprep.mubr.f32.mxu0 0.0
        %3085 = vmatmul.mubr.f32.gmra.mxu0 %v3013
        %v3086 = vpop.f32.mrf.mxu0
        %v3087 = vadd.f32 %v3018, %v3086
        %v3088 = vpop.f32.mrf.mxu0
        %3089 = vdwg.mxu0
        %v3090 = vadd.f32 %v2902, %v3087
        %v3091 = vsel %vm991, %v3090, 0.0
        %3092 = vadd.xlane.f32.xlu0 %v3091
        %v3093 = vpop.xlane.xlu0 %3092
        %v3094 = vmul.f32 %v3093, %v995
        %v3095 = vsub.f32 %v3090, %v3094
        %v3096 = vmul.f32 %v3095, %v3095
        %v3097 = vsel %vm991, %v3096, 0.0
        %3098 = vadd.xlane.f32.xlu0 %v3097
        %v3099 = vpop.xlane.xlu0 %3098
        %v3100 = vmul.f32 %v3099, %v995
        %v3101 = vadd.f32 %v3100, 1e-06
        %v3102 = vrsqrt.pop %v3101
        %v3103 = vmul.f32 %v3095, %v3102
        %v3105 = vlaneseq
        %v3106 = vshrl.u32 %v3105, 7
        %v3107 = vsub.s32 0, %v3106
        %v3108 = vrot.slane %v810, %v3107
        %v3110 = vmul.f32 %v3103, %v3108
        %v3112 = vlaneseq
        %v3113 = vshrl.u32 %v3112, 7
        %v3114 = vsub.s32 0, %v3113
        %v3115 = vrot.slane %v812, %v3114
        %v3117 = vadd.f32 %v3110, %v3115
        %v3130 = vlaneseq
        %v3131 = vshrl.u32 %v3130, 7
        %v3132 = vsub.s32 0, %v3131
        %v3133 = vrot.slane %v921, %v3132
        %v3134 = vlaneseq
        %v3135 = vshrl.u32 %v3134, 7
        %v3136 = vsub.s32 0, %v3135
        %v3137 = vrot.slane %v922, %v3136
        %v3138 = vlaneseq
        %v3139 = vshrl.u32 %v3138, 7
        %v3140 = vsub.s32 0, %v3139
        %v3141 = vrot.slane %v923, %v3140
        %v3142 = vlaneseq
        %v3143 = vshrl.u32 %v3142, 7
        %v3144 = vsub.s32 0, %v3143
        %v3145 = vrot.slane %v924, %v3144
        %v3146 = vlaneseq
        %v3147 = vshrl.u32 %v3146, 7
        %v3148 = vsub.s32 0, %v3147
        %v3149 = vrot.slane %v925, %v3148
        %v3150 = vlaneseq
        %v3151 = vshrl.u32 %v3150, 7
        %v3152 = vsub.s32 0, %v3151
        %v3153 = vrot.slane %v926, %v3152
        %v3154 = vlaneseq
        %v3155 = vshrl.u32 %v3154, 7
        %v3156 = vsub.s32 0, %v3155
        %v3157 = vrot.slane %v927, %v3156
        %v3158 = vlaneseq
        %v3159 = vshrl.u32 %v3158, 7
        %v3160 = vsub.s32 0, %v3159
        %v3161 = vrot.slane %v928, %v3160
        %v3162 = vlaneseq
        %v3163 = vshrl.u32 %v3162, 7
        %v3164 = vsub.s32 0, %v3163
        %v3165 = vrot.slane %v929, %v3164
        %v3166 = vlaneseq
        %v3167 = vshrl.u32 %v3166, 7
        %v3168 = vsub.s32 0, %v3167
        %v3169 = vrot.slane %v930, %v3168
        %v3170 = vlaneseq
        %v3171 = vshrl.u32 %v3170, 7
        %v3172 = vsub.s32 0, %v3171
        %v3173 = vrot.slane %v931, %v3172
        %v3174 = vlaneseq
        %v3175 = vshrl.u32 %v3174, 7
        %v3176 = vsub.s32 0, %v3175
        %v3177 = vrot.slane %v932, %v3176
        %v3191 = vsel %vm1092, %v3117, 0
        %3193 = vmatprep.subr.mxu0 0.0
        %3194 = vmatpush1.msra.mxu0 0.0
        %3195 = vmatprep.subr.mxu0 0.0
        %3196 = vmatpush1.msra.mxu0 0.0
        %3197 = vmatprep.subr.mxu0 0.0
        %3198 = vmatpush1.msra.mxu0 0.0
        %3199 = vmatprep.subr.mxu0 0.0
        %3200 = vmatpush1.msra.mxu0 0.0
        %3201 = vmatprep.subr.mxu0 0.0
        %3202 = vmatpush1.msra.mxu0 0.0
        %3203 = vmatprep.subr.mxu0 0.0
        %3204 = vmatpush1.msra.mxu0 0.0
        %3205 = vmatprep.subr.mxu0 0.0
        %3206 = vmatpush1.msra.mxu0 0.0
        %3207 = vmatprep.subr.mxu0 0.0
        %3208 = vmatpush1.msra.mxu0 0.0
        %3209 = vmatprep.subr.mxu0 0.0
        %3210 = vmatpush1.msra.mxu0 0.0
        %3211 = vmatprep.subr.mxu0 0.0
        %3212 = vmatpush1.msra.mxu0 0.0
        %3213 = vmatprep.subr.mxu0 0.0
        %3214 = vmatpush1.msra.mxu0 0.0
        %3215 = vmatprep.subr.mxu0 0.0
        %3216 = vmatpush1.msra.mxu0 0.0
        %3217 = vmatprep.subr.mxu0 0.0
        %3218 = vmatpush1.msra.mxu0 %v864
        %3219 = vmatprep.subr.mxu0 0.0
        %3220 = vmatpush1.msra.mxu0 %v863
        %3221 = vmatprep.subr.mxu0 0.0
        %3222 = vmatpush1.msra.mxu0 %v862
        %3223 = vmatprep.subr.mxu0 0.0
        %3224 = vmatpush1.msra.mxu0 %v861
        %3225 = vmatprep.subr.mxu0 0.0
        %3226 = vmatpush2.msra.mxu0 0.0
        %3227 = vmatprep.subr.mxu0 0.0
        %3228 = vmatpush2.msra.mxu0 0.0
        %3229 = vmatprep.subr.mxu0 0.0
        %3230 = vmatpush2.msra.mxu0 0.0
        %3231 = vmatprep.subr.mxu0 0.0
        %3232 = vmatpush2.msra.mxu0 0.0
        %3233 = vmatprep.subr.mxu0 0.0
        %3234 = vmatpush2.msra.mxu0 0.0
        %3235 = vmatprep.subr.mxu0 0.0
        %3236 = vmatpush2.msra.mxu0 0.0
        %3237 = vmatprep.subr.mxu0 0.0
        %3238 = vmatpush2.msra.mxu0 0.0
        %3239 = vmatprep.subr.mxu0 0.0
        %3240 = vmatpush2.msra.mxu0 0.0
        %3241 = vmatprep.subr.mxu0 0.0
        %3242 = vmatpush2.msra.mxu0 0.0
        %3243 = vmatprep.subr.mxu0 0.0
        %3244 = vmatpush2.msra.mxu0 0.0
        %3245 = vmatprep.subr.mxu0 0.0
        %3246 = vmatpush2.msra.mxu0 0.0
        %3247 = vmatprep.subr.mxu0 0.0
        %3248 = vmatpush2.msra.mxu0 0.0
        %3249 = vmatprep.subr.mxu0 0.0
        %3250 = vmatpush2.msra.mxu0 0.0
        %3251 = vmatprep.subr.mxu0 0.0
        %3252 = vmatpush2.msra.mxu0 0.0
        %3253 = vmatprep.subr.mxu0 0.0
        %3254 = vmatpush2.msra.mxu0 0.0
        %3255 = vmatprep.subr.mxu0 0.0
        %3256 = vmatpush2.msra.mxu0 0.0
        %3257 = vmatprep.mubr.f32.mxu0 0.0
        %3258 = vmatmul.mubr.f32.gmra.mxu0 %v3191
        %v3259 = vpop.f32.mrf.mxu0
        %v3260 = vadd.f32 %v3133, %v3259
        %v3261 = vpop.f32.mrf.mxu0
        %3262 = vdwg.mxu0
        %3263 = vmatprep.subr.mxu0 0.0
        %3264 = vmatpush1.msra.mxu0 0.0
        %3265 = vmatprep.subr.mxu0 0.0
        %3266 = vmatpush1.msra.mxu0 0.0
        %3267 = vmatprep.subr.mxu0 0.0
        %3268 = vmatpush1.msra.mxu0 0.0
        %3269 = vmatprep.subr.mxu0 0.0
        %3270 = vmatpush1.msra.mxu0 0.0
        %3271 = vmatprep.subr.mxu0 0.0
        %3272 = vmatpush1.msra.mxu0 0.0
        %3273 = vmatprep.subr.mxu0 0.0
        %3274 = vmatpush1.msra.mxu0 0.0
        %3275 = vmatprep.subr.mxu0 0.0
        %3276 = vmatpush1.msra.mxu0 0.0
        %3277 = vmatprep.subr.mxu0 0.0
        %3278 = vmatpush1.msra.mxu0 0.0
        %3279 = vmatprep.subr.mxu0 0.0
        %3280 = vmatpush1.msra.mxu0 0.0
        %3281 = vmatprep.subr.mxu0 0.0
        %3282 = vmatpush1.msra.mxu0 0.0
        %3283 = vmatprep.subr.mxu0 0.0
        %3284 = vmatpush1.msra.mxu0 0.0
        %3285 = vmatprep.subr.mxu0 0.0
        %3286 = vmatpush1.msra.mxu0 0.0
        %3287 = vmatprep.subr.mxu0 0.0
        %3288 = vmatpush1.msra.mxu0 %v868
        %3289 = vmatprep.subr.mxu0 0.0
        %3290 = vmatpush1.msra.mxu0 %v867
        %3291 = vmatprep.subr.mxu0 0.0
        %3292 = vmatpush1.msra.mxu0 %v866
        %3293 = vmatprep.subr.mxu0 0.0
        %3294 = vmatpush1.msra.mxu0 %v865
        %3295 = vmatprep.subr.mxu0 0.0
        %3296 = vmatpush2.msra.mxu0 0.0
        %3297 = vmatprep.subr.mxu0 0.0
        %3298 = vmatpush2.msra.mxu0 0.0
        %3299 = vmatprep.subr.mxu0 0.0
        %3300 = vmatpush2.msra.mxu0 0.0
        %3301 = vmatprep.subr.mxu0 0.0
        %3302 = vmatpush2.msra.mxu0 0.0
        %3303 = vmatprep.subr.mxu0 0.0
        %3304 = vmatpush2.msra.mxu0 0.0
        %3305 = vmatprep.subr.mxu0 0.0
        %3306 = vmatpush2.msra.mxu0 0.0
        %3307 = vmatprep.subr.mxu0 0.0
        %3308 = vmatpush2.msra.mxu0 0.0
        %3309 = vmatprep.subr.mxu0 0.0
        %3310 = vmatpush2.msra.mxu0 0.0
        %3311 = vmatprep.subr.mxu0 0.0
        %3312 = vmatpush2.msra.mxu0 0.0
        %3313 = vmatprep.subr.mxu0 0.0
        %3314 = vmatpush2.msra.mxu0 0.0
        %3315 = vmatprep.subr.mxu0 0.0
        %3316 = vmatpush2.msra.mxu0 0.0
        %3317 = vmatprep.subr.mxu0 0.0
        %3318 = vmatpush2.msra.mxu0 0.0
        %3319 = vmatprep.subr.mxu0 0.0
        %3320 = vmatpush2.msra.mxu0 0.0
        %3321 = vmatprep.subr.mxu0 0.0
        %3322 = vmatpush2.msra.mxu0 0.0
        %3323 = vmatprep.subr.mxu0 0.0
        %3324 = vmatpush2.msra.mxu0 0.0
        %3325 = vmatprep.subr.mxu0 0.0
        %3326 = vmatpush2.msra.mxu0 0.0
        %3327 = vmatprep.mubr.f32.mxu0 0.0
        %3328 = vmatmul.mubr.f32.gmra.mxu0 %v3191
        %v3329 = vpop.f32.mrf.mxu0
        %v3330 = vadd.f32 %v3137, %v3329
        %v3331 = vpop.f32.mrf.mxu0
        %3332 = vdwg.mxu0
        %3333 = vmatprep.subr.mxu0 0.0
        %3334 = vmatpush1.msra.mxu0 0.0
        %3335 = vmatprep.subr.mxu0 0.0
        %3336 = vmatpush1.msra.mxu0 0.0
        %3337 = vmatprep.subr.mxu0 0.0
        %3338 = vmatpush1.msra.mxu0 0.0
        %3339 = vmatprep.subr.mxu0 0.0
        %3340 = vmatpush1.msra.mxu0 0.0
        %3341 = vmatprep.subr.mxu0 0.0
        %3342 = vmatpush1.msra.mxu0 0.0
        %3343 = vmatprep.subr.mxu0 0.0
        %3344 = vmatpush1.msra.mxu0 0.0
        %3345 = vmatprep.subr.mxu0 0.0
        %3346 = vmatpush1.msra.mxu0 0.0
        %3347 = vmatprep.subr.mxu0 0.0
        %3348 = vmatpush1.msra.mxu0 0.0
        %3349 = vmatprep.subr.mxu0 0.0
        %3350 = vmatpush1.msra.mxu0 0.0
        %3351 = vmatprep.subr.mxu0 0.0
        %3352 = vmatpush1.msra.mxu0 0.0
        %3353 = vmatprep.subr.mxu0 0.0
        %3354 = vmatpush1.msra.mxu0 0.0
        %3355 = vmatprep.subr.mxu0 0.0
        %3356 = vmatpush1.msra.mxu0 0.0
        %3357 = vmatprep.subr.mxu0 0.0
        %3358 = vmatpush1.msra.mxu0 %v872
        %3359 = vmatprep.subr.mxu0 0.0
        %3360 = vmatpush1.msra.mxu0 %v871
        %3361 = vmatprep.subr.mxu0 0.0
        %3362 = vmatpush1.msra.mxu0 %v870
        %3363 = vmatprep.subr.mxu0 0.0
        %3364 = vmatpush1.msra.mxu0 %v869
        %3365 = vmatprep.subr.mxu0 0.0
        %3366 = vmatpush2.msra.mxu0 0.0
        %3367 = vmatprep.subr.mxu0 0.0
        %3368 = vmatpush2.msra.mxu0 0.0
        %3369 = vmatprep.subr.mxu0 0.0
        %3370 = vmatpush2.msra.mxu0 0.0
        %3371 = vmatprep.subr.mxu0 0.0
        %3372 = vmatpush2.msra.mxu0 0.0
        %3373 = vmatprep.subr.mxu0 0.0
        %3374 = vmatpush2.msra.mxu0 0.0
        %3375 = vmatprep.subr.mxu0 0.0
        %3376 = vmatpush2.msra.mxu0 0.0
        %3377 = vmatprep.subr.mxu0 0.0
        %3378 = vmatpush2.msra.mxu0 0.0
        %3379 = vmatprep.subr.mxu0 0.0
        %3380 = vmatpush2.msra.mxu0 0.0
        %3381 = vmatprep.subr.mxu0 0.0
        %3382 = vmatpush2.msra.mxu0 0.0
        %3383 = vmatprep.subr.mxu0 0.0
        %3384 = vmatpush2.msra.mxu0 0.0
        %3385 = vmatprep.subr.mxu0 0.0
        %3386 = vmatpush2.msra.mxu0 0.0
        %3387 = vmatprep.subr.mxu0 0.0
        %3388 = vmatpush2.msra.mxu0 0.0
        %3389 = vmatprep.subr.mxu0 0.0
        %3390 = vmatpush2.msra.mxu0 0.0
        %3391 = vmatprep.subr.mxu0 0.0
        %3392 = vmatpush2.msra.mxu0 0.0
        %3393 = vmatprep.subr.mxu0 0.0
        %3394 = vmatpush2.msra.mxu0 0.0
        %3395 = vmatprep.subr.mxu0 0.0
        %3396 = vmatpush2.msra.mxu0 0.0
        %3397 = vmatprep.mubr.f32.mxu0 0.0
        %3398 = vmatmul.mubr.f32.gmra.mxu0 %v3191
        %v3399 = vpop.f32.mrf.mxu0
        %v3400 = vadd.f32 %v3141, %v3399
        %v3401 = vpop.f32.mrf.mxu0
        %3402 = vdwg.mxu0
        %3403 = vmatprep.subr.mxu0 0.0
        %3404 = vmatpush1.msra.mxu0 0.0
        %3405 = vmatprep.subr.mxu0 0.0
        %3406 = vmatpush1.msra.mxu0 0.0
        %3407 = vmatprep.subr.mxu0 0.0
        %3408 = vmatpush1.msra.mxu0 0.0
        %3409 = vmatprep.subr.mxu0 0.0
        %3410 = vmatpush1.msra.mxu0 0.0
        %3411 = vmatprep.subr.mxu0 0.0
        %3412 = vmatpush1.msra.mxu0 0.0
        %3413 = vmatprep.subr.mxu0 0.0
        %3414 = vmatpush1.msra.mxu0 0.0
        %3415 = vmatprep.subr.mxu0 0.0
        %3416 = vmatpush1.msra.mxu0 0.0
        %3417 = vmatprep.subr.mxu0 0.0
        %3418 = vmatpush1.msra.mxu0 0.0
        %3419 = vmatprep.subr.mxu0 0.0
        %3420 = vmatpush1.msra.mxu0 0.0
        %3421 = vmatprep.subr.mxu0 0.0
        %3422 = vmatpush1.msra.mxu0 0.0
        %3423 = vmatprep.subr.mxu0 0.0
        %3424 = vmatpush1.msra.mxu0 0.0
        %3425 = vmatprep.subr.mxu0 0.0
        %3426 = vmatpush1.msra.mxu0 0.0
        %3427 = vmatprep.subr.mxu0 0.0
        %3428 = vmatpush1.msra.mxu0 %v876
        %3429 = vmatprep.subr.mxu0 0.0
        %3430 = vmatpush1.msra.mxu0 %v875
        %3431 = vmatprep.subr.mxu0 0.0
        %3432 = vmatpush1.msra.mxu0 %v874
        %3433 = vmatprep.subr.mxu0 0.0
        %3434 = vmatpush1.msra.mxu0 %v873
        %3435 = vmatprep.subr.mxu0 0.0
        %3436 = vmatpush2.msra.mxu0 0.0
        %3437 = vmatprep.subr.mxu0 0.0
        %3438 = vmatpush2.msra.mxu0 0.0
        %3439 = vmatprep.subr.mxu0 0.0
        %3440 = vmatpush2.msra.mxu0 0.0
        %3441 = vmatprep.subr.mxu0 0.0
        %3442 = vmatpush2.msra.mxu0 0.0
        %3443 = vmatprep.subr.mxu0 0.0
        %3444 = vmatpush2.msra.mxu0 0.0
        %3445 = vmatprep.subr.mxu0 0.0
        %3446 = vmatpush2.msra.mxu0 0.0
        %3447 = vmatprep.subr.mxu0 0.0
        %3448 = vmatpush2.msra.mxu0 0.0
        %3449 = vmatprep.subr.mxu0 0.0
        %3450 = vmatpush2.msra.mxu0 0.0
        %3451 = vmatprep.subr.mxu0 0.0
        %3452 = vmatpush2.msra.mxu0 0.0
        %3453 = vmatprep.subr.mxu0 0.0
        %3454 = vmatpush2.msra.mxu0 0.0
        %3455 = vmatprep.subr.mxu0 0.0
        %3456 = vmatpush2.msra.mxu0 0.0
        %3457 = vmatprep.subr.mxu0 0.0
        %3458 = vmatpush2.msra.mxu0 0.0
        %3459 = vmatprep.subr.mxu0 0.0
        %3460 = vmatpush2.msra.mxu0 0.0
        %3461 = vmatprep.subr.mxu0 0.0
        %3462 = vmatpush2.msra.mxu0 0.0
        %3463 = vmatprep.subr.mxu0 0.0
        %3464 = vmatpush2.msra.mxu0 0.0
        %3465 = vmatprep.subr.mxu0 0.0
        %3466 = vmatpush2.msra.mxu0 0.0
        %3467 = vmatprep.mubr.f32.mxu0 0.0
        %3468 = vmatmul.mubr.f32.gmra.mxu0 %v3191
        %v3469 = vpop.f32.mrf.mxu0
        %v3470 = vadd.f32 %v3145, %v3469
        %v3471 = vpop.f32.mrf.mxu0
        %3472 = vdwg.mxu0
        %3473 = vmatprep.subr.mxu0 0.0
        %3474 = vmatpush1.msra.mxu0 0.0
        %3475 = vmatprep.subr.mxu0 0.0
        %3476 = vmatpush1.msra.mxu0 0.0
        %3477 = vmatprep.subr.mxu0 0.0
        %3478 = vmatpush1.msra.mxu0 0.0
        %3479 = vmatprep.subr.mxu0 0.0
        %3480 = vmatpush1.msra.mxu0 0.0
        %3481 = vmatprep.subr.mxu0 0.0
        %3482 = vmatpush1.msra.mxu0 0.0
        %3483 = vmatprep.subr.mxu0 0.0
        %3484 = vmatpush1.msra.mxu0 0.0
        %3485 = vmatprep.subr.mxu0 0.0
        %3486 = vmatpush1.msra.mxu0 0.0
        %3487 = vmatprep.subr.mxu0 0.0
        %3488 = vmatpush1.msra.mxu0 0.0
        %3489 = vmatprep.subr.mxu0 0.0
        %3490 = vmatpush1.msra.mxu0 0.0
        %3491 = vmatprep.subr.mxu0 0.0
        %3492 = vmatpush1.msra.mxu0 0.0
        %3493 = vmatprep.subr.mxu0 0.0
        %3494 = vmatpush1.msra.mxu0 0.0
        %3495 = vmatprep.subr.mxu0 0.0
        %3496 = vmatpush1.msra.mxu0 0.0
        %3497 = vmatprep.subr.mxu0 0.0
        %3498 = vmatpush1.msra.mxu0 %v880
        %3499 = vmatprep.subr.mxu0 0.0
        %3500 = vmatpush1.msra.mxu0 %v879
        %3501 = vmatprep.subr.mxu0 0.0
        %3502 = vmatpush1.msra.mxu0 %v878
        %3503 = vmatprep.subr.mxu0 0.0
        %3504 = vmatpush1.msra.mxu0 %v877
        %3505 = vmatprep.subr.mxu0 0.0
        %3506 = vmatpush2.msra.mxu0 0.0
        %3507 = vmatprep.subr.mxu0 0.0
        %3508 = vmatpush2.msra.mxu0 0.0
        %3509 = vmatprep.subr.mxu0 0.0
        %3510 = vmatpush2.msra.mxu0 0.0
        %3511 = vmatprep.subr.mxu0 0.0
        %3512 = vmatpush2.msra.mxu0 0.0
        %3513 = vmatprep.subr.mxu0 0.0
        %3514 = vmatpush2.msra.mxu0 0.0
        %3515 = vmatprep.subr.mxu0 0.0
        %3516 = vmatpush2.msra.mxu0 0.0
        %3517 = vmatprep.subr.mxu0 0.0
        %3518 = vmatpush2.msra.mxu0 0.0
        %3519 = vmatprep.subr.mxu0 0.0
        %3520 = vmatpush2.msra.mxu0 0.0
        %3521 = vmatprep.subr.mxu0 0.0
        %3522 = vmatpush2.msra.mxu0 0.0
        %3523 = vmatprep.subr.mxu0 0.0
        %3524 = vmatpush2.msra.mxu0 0.0
        %3525 = vmatprep.subr.mxu0 0.0
        %3526 = vmatpush2.msra.mxu0 0.0
        %3527 = vmatprep.subr.mxu0 0.0
        %3528 = vmatpush2.msra.mxu0 0.0
        %3529 = vmatprep.subr.mxu0 0.0
        %3530 = vmatpush2.msra.mxu0 0.0
        %3531 = vmatprep.subr.mxu0 0.0
        %3532 = vmatpush2.msra.mxu0 0.0
        %3533 = vmatprep.subr.mxu0 0.0
        %3534 = vmatpush2.msra.mxu0 0.0
        %3535 = vmatprep.subr.mxu0 0.0
        %3536 = vmatpush2.msra.mxu0 0.0
        %3537 = vmatprep.mubr.f32.mxu0 0.0
        %3538 = vmatmul.mubr.f32.gmra.mxu0 %v3191
        %v3539 = vpop.f32.mrf.mxu0
        %v3540 = vadd.f32 %v3149, %v3539
        %v3541 = vpop.f32.mrf.mxu0
        %3542 = vdwg.mxu0
        %3543 = vmatprep.subr.mxu0 0.0
        %3544 = vmatpush1.msra.mxu0 0.0
        %3545 = vmatprep.subr.mxu0 0.0
        %3546 = vmatpush1.msra.mxu0 0.0
        %3547 = vmatprep.subr.mxu0 0.0
        %3548 = vmatpush1.msra.mxu0 0.0
        %3549 = vmatprep.subr.mxu0 0.0
        %3550 = vmatpush1.msra.mxu0 0.0
        %3551 = vmatprep.subr.mxu0 0.0
        %3552 = vmatpush1.msra.mxu0 0.0
        %3553 = vmatprep.subr.mxu0 0.0
        %3554 = vmatpush1.msra.mxu0 0.0
        %3555 = vmatprep.subr.mxu0 0.0
        %3556 = vmatpush1.msra.mxu0 0.0
        %3557 = vmatprep.subr.mxu0 0.0
        %3558 = vmatpush1.msra.mxu0 0.0
        %3559 = vmatprep.subr.mxu0 0.0
        %3560 = vmatpush1.msra.mxu0 0.0
        %3561 = vmatprep.subr.mxu0 0.0
        %3562 = vmatpush1.msra.mxu0 0.0
        %3563 = vmatprep.subr.mxu0 0.0
        %3564 = vmatpush1.msra.mxu0 0.0
        %3565 = vmatprep.subr.mxu0 0.0
        %3566 = vmatpush1.msra.mxu0 0.0
        %3567 = vmatprep.subr.mxu0 0.0
        %3568 = vmatpush1.msra.mxu0 %v884
        %3569 = vmatprep.subr.mxu0 0.0
        %3570 = vmatpush1.msra.mxu0 %v883
        %3571 = vmatprep.subr.mxu0 0.0
        %3572 = vmatpush1.msra.mxu0 %v882
        %3573 = vmatprep.subr.mxu0 0.0
        %3574 = vmatpush1.msra.mxu0 %v881
        %3575 = vmatprep.subr.mxu0 0.0
        %3576 = vmatpush2.msra.mxu0 0.0
        %3577 = vmatprep.subr.mxu0 0.0
        %3578 = vmatpush2.msra.mxu0 0.0
        %3579 = vmatprep.subr.mxu0 0.0
        %3580 = vmatpush2.msra.mxu0 0.0
        %3581 = vmatprep.subr.mxu0 0.0
        %3582 = vmatpush2.msra.mxu0 0.0
        %3583 = vmatprep.subr.mxu0 0.0
        %3584 = vmatpush2.msra.mxu0 0.0
        %3585 = vmatprep.subr.mxu0 0.0
        %3586 = vmatpush2.msra.mxu0 0.0
        %3587 = vmatprep.subr.mxu0 0.0
        %3588 = vmatpush2.msra.mxu0 0.0
        %3589 = vmatprep.subr.mxu0 0.0
        %3590 = vmatpush2.msra.mxu0 0.0
        %3591 = vmatprep.subr.mxu0 0.0
        %3592 = vmatpush2.msra.mxu0 0.0
        %3593 = vmatprep.subr.mxu0 0.0
        %3594 = vmatpush2.msra.mxu0 0.0
        %3595 = vmatprep.subr.mxu0 0.0
        %3596 = vmatpush2.msra.mxu0 0.0
        %3597 = vmatprep.subr.mxu0 0.0
        %3598 = vmatpush2.msra.mxu0 0.0
        %3599 = vmatprep.subr.mxu0 0.0
        %3600 = vmatpush2.msra.mxu0 0.0
        %3601 = vmatprep.subr.mxu0 0.0
        %3602 = vmatpush2.msra.mxu0 0.0
        %3603 = vmatprep.subr.mxu0 0.0
        %3604 = vmatpush2.msra.mxu0 0.0
        %3605 = vmatprep.subr.mxu0 0.0
        %3606 = vmatpush2.msra.mxu0 0.0
        %3607 = vmatprep.mubr.f32.mxu0 0.0
        %3608 = vmatmul.mubr.f32.gmra.mxu0 %v3191
        %v3609 = vpop.f32.mrf.mxu0
        %v3610 = vadd.f32 %v3153, %v3609
        %v3611 = vpop.f32.mrf.mxu0
        %3612 = vdwg.mxu0
        %3613 = vmatprep.subr.mxu0 0.0
        %3614 = vmatpush1.msra.mxu0 0.0
        %3615 = vmatprep.subr.mxu0 0.0
        %3616 = vmatpush1.msra.mxu0 0.0
        %3617 = vmatprep.subr.mxu0 0.0
        %3618 = vmatpush1.msra.mxu0 0.0
        %3619 = vmatprep.subr.mxu0 0.0
        %3620 = vmatpush1.msra.mxu0 0.0
        %3621 = vmatprep.subr.mxu0 0.0
        %3622 = vmatpush1.msra.mxu0 0.0
        %3623 = vmatprep.subr.mxu0 0.0
        %3624 = vmatpush1.msra.mxu0 0.0
        %3625 = vmatprep.subr.mxu0 0.0
        %3626 = vmatpush1.msra.mxu0 0.0
        %3627 = vmatprep.subr.mxu0 0.0
        %3628 = vmatpush1.msra.mxu0 0.0
        %3629 = vmatprep.subr.mxu0 0.0
        %3630 = vmatpush1.msra.mxu0 0.0
        %3631 = vmatprep.subr.mxu0 0.0
        %3632 = vmatpush1.msra.mxu0 0.0
        %3633 = vmatprep.subr.mxu0 0.0
        %3634 = vmatpush1.msra.mxu0 0.0
        %3635 = vmatprep.subr.mxu0 0.0
        %3636 = vmatpush1.msra.mxu0 0.0
        %3637 = vmatprep.subr.mxu0 0.0
        %3638 = vmatpush1.msra.mxu0 %v888
        %3639 = vmatprep.subr.mxu0 0.0
        %3640 = vmatpush1.msra.mxu0 %v887
        %3641 = vmatprep.subr.mxu0 0.0
        %3642 = vmatpush1.msra.mxu0 %v886
        %3643 = vmatprep.subr.mxu0 0.0
        %3644 = vmatpush1.msra.mxu0 %v885
        %3645 = vmatprep.subr.mxu0 0.0
        %3646 = vmatpush2.msra.mxu0 0.0
        %3647 = vmatprep.subr.mxu0 0.0
        %3648 = vmatpush2.msra.mxu0 0.0
        %3649 = vmatprep.subr.mxu0 0.0
        %3650 = vmatpush2.msra.mxu0 0.0
        %3651 = vmatprep.subr.mxu0 0.0
        %3652 = vmatpush2.msra.mxu0 0.0
        %3653 = vmatprep.subr.mxu0 0.0
        %3654 = vmatpush2.msra.mxu0 0.0
        %3655 = vmatprep.subr.mxu0 0.0
        %3656 = vmatpush2.msra.mxu0 0.0
        %3657 = vmatprep.subr.mxu0 0.0
        %3658 = vmatpush2.msra.mxu0 0.0
        %3659 = vmatprep.subr.mxu0 0.0
        %3660 = vmatpush2.msra.mxu0 0.0
        %3661 = vmatprep.subr.mxu0 0.0
        %3662 = vmatpush2.msra.mxu0 0.0
        %3663 = vmatprep.subr.mxu0 0.0
        %3664 = vmatpush2.msra.mxu0 0.0
        %3665 = vmatprep.subr.mxu0 0.0
        %3666 = vmatpush2.msra.mxu0 0.0
        %3667 = vmatprep.subr.mxu0 0.0
        %3668 = vmatpush2.msra.mxu0 0.0
        %3669 = vmatprep.subr.mxu0 0.0
        %3670 = vmatpush2.msra.mxu0 0.0
        %3671 = vmatprep.subr.mxu0 0.0
        %3672 = vmatpush2.msra.mxu0 0.0
        %3673 = vmatprep.subr.mxu0 0.0
        %3674 = vmatpush2.msra.mxu0 0.0
        %3675 = vmatprep.subr.mxu0 0.0
        %3676 = vmatpush2.msra.mxu0 0.0
        %3677 = vmatprep.mubr.f32.mxu0 0.0
        %3678 = vmatmul.mubr.f32.gmra.mxu0 %v3191
        %v3679 = vpop.f32.mrf.mxu0
        %v3680 = vadd.f32 %v3157, %v3679
        %v3681 = vpop.f32.mrf.mxu0
        %3682 = vdwg.mxu0
        %3683 = vmatprep.subr.mxu0 0.0
        %3684 = vmatpush1.msra.mxu0 0.0
        %3685 = vmatprep.subr.mxu0 0.0
        %3686 = vmatpush1.msra.mxu0 0.0
        %3687 = vmatprep.subr.mxu0 0.0
        %3688 = vmatpush1.msra.mxu0 0.0
        %3689 = vmatprep.subr.mxu0 0.0
        %3690 = vmatpush1.msra.mxu0 0.0
        %3691 = vmatprep.subr.mxu0 0.0
        %3692 = vmatpush1.msra.mxu0 0.0
        %3693 = vmatprep.subr.mxu0 0.0
        %3694 = vmatpush1.msra.mxu0 0.0
        %3695 = vmatprep.subr.mxu0 0.0
        %3696 = vmatpush1.msra.mxu0 0.0
        %3697 = vmatprep.subr.mxu0 0.0
        %3698 = vmatpush1.msra.mxu0 0.0
        %3699 = vmatprep.subr.mxu0 0.0
        %3700 = vmatpush1.msra.mxu0 0.0
        %3701 = vmatprep.subr.mxu0 0.0
        %3702 = vmatpush1.msra.mxu0 0.0
        %3703 = vmatprep.subr.mxu0 0.0
        %3704 = vmatpush1.msra.mxu0 0.0
        %3705 = vmatprep.subr.mxu0 0.0
        %3706 = vmatpush1.msra.mxu0 0.0
        %3707 = vmatprep.subr.mxu0 0.0
        %3708 = vmatpush1.msra.mxu0 %v892
        %3709 = vmatprep.subr.mxu0 0.0
        %3710 = vmatpush1.msra.mxu0 %v891
        %3711 = vmatprep.subr.mxu0 0.0
        %3712 = vmatpush1.msra.mxu0 %v890
        %3713 = vmatprep.subr.mxu0 0.0
        %3714 = vmatpush1.msra.mxu0 %v889
        %3715 = vmatprep.subr.mxu0 0.0
        %3716 = vmatpush2.msra.mxu0 0.0
        %3717 = vmatprep.subr.mxu0 0.0
        %3718 = vmatpush2.msra.mxu0 0.0
        %3719 = vmatprep.subr.mxu0 0.0
        %3720 = vmatpush2.msra.mxu0 0.0
        %3721 = vmatprep.subr.mxu0 0.0
        %3722 = vmatpush2.msra.mxu0 0.0
        %3723 = vmatprep.subr.mxu0 0.0
        %3724 = vmatpush2.msra.mxu0 0.0
        %3725 = vmatprep.subr.mxu0 0.0
        %3726 = vmatpush2.msra.mxu0 0.0
        %3727 = vmatprep.subr.mxu0 0.0
        %3728 = vmatpush2.msra.mxu0 0.0
        %3729 = vmatprep.subr.mxu0 0.0
        %3730 = vmatpush2.msra.mxu0 0.0
        %3731 = vmatprep.subr.mxu0 0.0
        %3732 = vmatpush2.msra.mxu0 0.0
        %3733 = vmatprep.subr.mxu0 0.0
        %3734 = vmatpush2.msra.mxu0 0.0
        %3735 = vmatprep.subr.mxu0 0.0
        %3736 = vmatpush2.msra.mxu0 0.0
        %3737 = vmatprep.subr.mxu0 0.0
        %3738 = vmatpush2.msra.mxu0 0.0
        %3739 = vmatprep.subr.mxu0 0.0
        %3740 = vmatpush2.msra.mxu0 0.0
        %3741 = vmatprep.subr.mxu0 0.0
        %3742 = vmatpush2.msra.mxu0 0.0
        %3743 = vmatprep.subr.mxu0 0.0
        %3744 = vmatpush2.msra.mxu0 0.0
        %3745 = vmatprep.subr.mxu0 0.0
        %3746 = vmatpush2.msra.mxu0 0.0
        %3747 = vmatprep.mubr.f32.mxu0 0.0
        %3748 = vmatmul.mubr.f32.gmra.mxu0 %v3191
        %v3749 = vpop.f32.mrf.mxu0
        %v3750 = vadd.f32 %v3161, %v3749
        %v3751 = vpop.f32.mrf.mxu0
        %3752 = vdwg.mxu0
        %3753 = vmatprep.subr.mxu0 0.0
        %3754 = vmatpush1.msra.mxu0 0.0
        %3755 = vmatprep.subr.mxu0 0.0
        %3756 = vmatpush1.msra.mxu0 0.0
        %3757 = vmatprep.subr.mxu0 0.0
        %3758 = vmatpush1.msra.mxu0 0.0
        %3759 = vmatprep.subr.mxu0 0.0
        %3760 = vmatpush1.msra.mxu0 0.0
        %3761 = vmatprep.subr.mxu0 0.0
        %3762 = vmatpush1.msra.mxu0 0.0
        %3763 = vmatprep.subr.mxu0 0.0
        %3764 = vmatpush1.msra.mxu0 0.0
        %3765 = vmatprep.subr.mxu0 0.0
        %3766 = vmatpush1.msra.mxu0 0.0
        %3767 = vmatprep.subr.mxu0 0.0
        %3768 = vmatpush1.msra.mxu0 0.0
        %3769 = vmatprep.subr.mxu0 0.0
        %3770 = vmatpush1.msra.mxu0 0.0
        %3771 = vmatprep.subr.mxu0 0.0
        %3772 = vmatpush1.msra.mxu0 0.0
        %3773 = vmatprep.subr.mxu0 0.0
        %3774 = vmatpush1.msra.mxu0 0.0
        %3775 = vmatprep.subr.mxu0 0.0
        %3776 = vmatpush1.msra.mxu0 0.0
        %3777 = vmatprep.subr.mxu0 0.0
        %3778 = vmatpush1.msra.mxu0 %v896
        %3779 = vmatprep.subr.mxu0 0.0
        %3780 = vmatpush1.msra.mxu0 %v895
        %3781 = vmatprep.subr.mxu0 0.0
        %3782 = vmatpush1.msra.mxu0 %v894
        %3783 = vmatprep.subr.mxu0 0.0
        %3784 = vmatpush1.msra.mxu0 %v893
        %3785 = vmatprep.subr.mxu0 0.0
        %3786 = vmatpush2.msra.mxu0 0.0
        %3787 = vmatprep.subr.mxu0 0.0
        %3788 = vmatpush2.msra.mxu0 0.0
        %3789 = vmatprep.subr.mxu0 0.0
        %3790 = vmatpush2.msra.mxu0 0.0
        %3791 = vmatprep.subr.mxu0 0.0
        %3792 = vmatpush2.msra.mxu0 0.0
        %3793 = vmatprep.subr.mxu0 0.0
        %3794 = vmatpush2.msra.mxu0 0.0
        %3795 = vmatprep.subr.mxu0 0.0
        %3796 = vmatpush2.msra.mxu0 0.0
        %3797 = vmatprep.subr.mxu0 0.0
        %3798 = vmatpush2.msra.mxu0 0.0
        %3799 = vmatprep.subr.mxu0 0.0
        %3800 = vmatpush2.msra.mxu0 0.0
        %3801 = vmatprep.subr.mxu0 0.0
        %3802 = vmatpush2.msra.mxu0 0.0
        %3803 = vmatprep.subr.mxu0 0.0
        %3804 = vmatpush2.msra.mxu0 0.0
        %3805 = vmatprep.subr.mxu0 0.0
        %3806 = vmatpush2.msra.mxu0 0.0
        %3807 = vmatprep.subr.mxu0 0.0
        %3808 = vmatpush2.msra.mxu0 0.0
        %3809 = vmatprep.subr.mxu0 0.0
        %3810 = vmatpush2.msra.mxu0 0.0
        %3811 = vmatprep.subr.mxu0 0.0
        %3812 = vmatpush2.msra.mxu0 0.0
        %3813 = vmatprep.subr.mxu0 0.0
        %3814 = vmatpush2.msra.mxu0 0.0
        %3815 = vmatprep.subr.mxu0 0.0
        %3816 = vmatpush2.msra.mxu0 0.0
        %3817 = vmatprep.mubr.f32.mxu0 0.0
        %3818 = vmatmul.mubr.f32.gmra.mxu0 %v3191
        %v3819 = vpop.f32.mrf.mxu0
        %v3820 = vadd.f32 %v3165, %v3819
        %v3821 = vpop.f32.mrf.mxu0
        %3822 = vdwg.mxu0
        %3823 = vmatprep.subr.mxu0 0.0
        %3824 = vmatpush1.msra.mxu0 0.0
        %3825 = vmatprep.subr.mxu0 0.0
        %3826 = vmatpush1.msra.mxu0 0.0
        %3827 = vmatprep.subr.mxu0 0.0
        %3828 = vmatpush1.msra.mxu0 0.0
        %3829 = vmatprep.subr.mxu0 0.0
        %3830 = vmatpush1.msra.mxu0 0.0
        %3831 = vmatprep.subr.mxu0 0.0
        %3832 = vmatpush1.msra.mxu0 0.0
        %3833 = vmatprep.subr.mxu0 0.0
        %3834 = vmatpush1.msra.mxu0 0.0
        %3835 = vmatprep.subr.mxu0 0.0
        %3836 = vmatpush1.msra.mxu0 0.0
        %3837 = vmatprep.subr.mxu0 0.0
        %3838 = vmatpush1.msra.mxu0 0.0
        %3839 = vmatprep.subr.mxu0 0.0
        %3840 = vmatpush1.msra.mxu0 0.0
        %3841 = vmatprep.subr.mxu0 0.0
        %3842 = vmatpush1.msra.mxu0 0.0
        %3843 = vmatprep.subr.mxu0 0.0
        %3844 = vmatpush1.msra.mxu0 0.0
        %3845 = vmatprep.subr.mxu0 0.0
        %3846 = vmatpush1.msra.mxu0 0.0
        %3847 = vmatprep.subr.mxu0 0.0
        %3848 = vmatpush1.msra.mxu0 %v900
        %3849 = vmatprep.subr.mxu0 0.0
        %3850 = vmatpush1.msra.mxu0 %v899
        %3851 = vmatprep.subr.mxu0 0.0
        %3852 = vmatpush1.msra.mxu0 %v898
        %3853 = vmatprep.subr.mxu0 0.0
        %3854 = vmatpush1.msra.mxu0 %v897
        %3855 = vmatprep.subr.mxu0 0.0
        %3856 = vmatpush2.msra.mxu0 0.0
        %3857 = vmatprep.subr.mxu0 0.0
        %3858 = vmatpush2.msra.mxu0 0.0
        %3859 = vmatprep.subr.mxu0 0.0
        %3860 = vmatpush2.msra.mxu0 0.0
        %3861 = vmatprep.subr.mxu0 0.0
        %3862 = vmatpush2.msra.mxu0 0.0
        %3863 = vmatprep.subr.mxu0 0.0
        %3864 = vmatpush2.msra.mxu0 0.0
        %3865 = vmatprep.subr.mxu0 0.0
        %3866 = vmatpush2.msra.mxu0 0.0
        %3867 = vmatprep.subr.mxu0 0.0
        %3868 = vmatpush2.msra.mxu0 0.0
        %3869 = vmatprep.subr.mxu0 0.0
        %3870 = vmatpush2.msra.mxu0 0.0
        %3871 = vmatprep.subr.mxu0 0.0
        %3872 = vmatpush2.msra.mxu0 0.0
        %3873 = vmatprep.subr.mxu0 0.0
        %3874 = vmatpush2.msra.mxu0 0.0
        %3875 = vmatprep.subr.mxu0 0.0
        %3876 = vmatpush2.msra.mxu0 0.0
        %3877 = vmatprep.subr.mxu0 0.0
        %3878 = vmatpush2.msra.mxu0 0.0
        %3879 = vmatprep.subr.mxu0 0.0
        %3880 = vmatpush2.msra.mxu0 0.0
        %3881 = vmatprep.subr.mxu0 0.0
        %3882 = vmatpush2.msra.mxu0 0.0
        %3883 = vmatprep.subr.mxu0 0.0
        %3884 = vmatpush2.msra.mxu0 0.0
        %3885 = vmatprep.subr.mxu0 0.0
        %3886 = vmatpush2.msra.mxu0 0.0
        %3887 = vmatprep.mubr.f32.mxu0 0.0
        %3888 = vmatmul.mubr.f32.gmra.mxu0 %v3191
        %v3889 = vpop.f32.mrf.mxu0
        %v3890 = vadd.f32 %v3169, %v3889
        %v3891 = vpop.f32.mrf.mxu0
        %3892 = vdwg.mxu0
        %3893 = vmatprep.subr.mxu0 0.0
        %3894 = vmatpush1.msra.mxu0 0.0
        %3895 = vmatprep.subr.mxu0 0.0
        %3896 = vmatpush1.msra.mxu0 0.0
        %3897 = vmatprep.subr.mxu0 0.0
        %3898 = vmatpush1.msra.mxu0 0.0
        %3899 = vmatprep.subr.mxu0 0.0
        %3900 = vmatpush1.msra.mxu0 0.0
        %3901 = vmatprep.subr.mxu0 0.0
        %3902 = vmatpush1.msra.mxu0 0.0
        %3903 = vmatprep.subr.mxu0 0.0
        %3904 = vmatpush1.msra.mxu0 0.0
        %3905 = vmatprep.subr.mxu0 0.0
        %3906 = vmatpush1.msra.mxu0 0.0
        %3907 = vmatprep.subr.mxu0 0.0
        %3908 = vmatpush1.msra.mxu0 0.0
        %3909 = vmatprep.subr.mxu0 0.0
        %3910 = vmatpush1.msra.mxu0 0.0
        %3911 = vmatprep.subr.mxu0 0.0
        %3912 = vmatpush1.msra.mxu0 0.0
        %3913 = vmatprep.subr.mxu0 0.0
        %3914 = vmatpush1.msra.mxu0 0.0
        %3915 = vmatprep.subr.mxu0 0.0
        %3916 = vmatpush1.msra.mxu0 0.0
        %3917 = vmatprep.subr.mxu0 0.0
        %3918 = vmatpush1.msra.mxu0 %v904
        %3919 = vmatprep.subr.mxu0 0.0
        %3920 = vmatpush1.msra.mxu0 %v903
        %3921 = vmatprep.subr.mxu0 0.0
        %3922 = vmatpush1.msra.mxu0 %v902
        %3923 = vmatprep.subr.mxu0 0.0
        %3924 = vmatpush1.msra.mxu0 %v901
        %3925 = vmatprep.subr.mxu0 0.0
        %3926 = vmatpush2.msra.mxu0 0.0
        %3927 = vmatprep.subr.mxu0 0.0
        %3928 = vmatpush2.msra.mxu0 0.0
        %3929 = vmatprep.subr.mxu0 0.0
        %3930 = vmatpush2.msra.mxu0 0.0
        %3931 = vmatprep.subr.mxu0 0.0
        %3932 = vmatpush2.msra.mxu0 0.0
        %3933 = vmatprep.subr.mxu0 0.0
        %3934 = vmatpush2.msra.mxu0 0.0
        %3935 = vmatprep.subr.mxu0 0.0
        %3936 = vmatpush2.msra.mxu0 0.0
        %3937 = vmatprep.subr.mxu0 0.0
        %3938 = vmatpush2.msra.mxu0 0.0
        %3939 = vmatprep.subr.mxu0 0.0
        %3940 = vmatpush2.msra.mxu0 0.0
        %3941 = vmatprep.subr.mxu0 0.0
        %3942 = vmatpush2.msra.mxu0 0.0
        %3943 = vmatprep.subr.mxu0 0.0
        %3944 = vmatpush2.msra.mxu0 0.0
        %3945 = vmatprep.subr.mxu0 0.0
        %3946 = vmatpush2.msra.mxu0 0.0
        %3947 = vmatprep.subr.mxu0 0.0
        %3948 = vmatpush2.msra.mxu0 0.0
        %3949 = vmatprep.subr.mxu0 0.0
        %3950 = vmatpush2.msra.mxu0 0.0
        %3951 = vmatprep.subr.mxu0 0.0
        %3952 = vmatpush2.msra.mxu0 0.0
        %3953 = vmatprep.subr.mxu0 0.0
        %3954 = vmatpush2.msra.mxu0 0.0
        %3955 = vmatprep.subr.mxu0 0.0
        %3956 = vmatpush2.msra.mxu0 0.0
        %3957 = vmatprep.mubr.f32.mxu0 0.0
        %3958 = vmatmul.mubr.f32.gmra.mxu0 %v3191
        %v3959 = vpop.f32.mrf.mxu0
        %v3960 = vadd.f32 %v3173, %v3959
        %v3961 = vpop.f32.mrf.mxu0
        %3962 = vdwg.mxu0
        %3963 = vmatprep.subr.mxu0 0.0
        %3964 = vmatpush1.msra.mxu0 0.0
        %3965 = vmatprep.subr.mxu0 0.0
        %3966 = vmatpush1.msra.mxu0 0.0
        %3967 = vmatprep.subr.mxu0 0.0
        %3968 = vmatpush1.msra.mxu0 0.0
        %3969 = vmatprep.subr.mxu0 0.0
        %3970 = vmatpush1.msra.mxu0 0.0
        %3971 = vmatprep.subr.mxu0 0.0
        %3972 = vmatpush1.msra.mxu0 0.0
        %3973 = vmatprep.subr.mxu0 0.0
        %3974 = vmatpush1.msra.mxu0 0.0
        %3975 = vmatprep.subr.mxu0 0.0
        %3976 = vmatpush1.msra.mxu0 0.0
        %3977 = vmatprep.subr.mxu0 0.0
        %3978 = vmatpush1.msra.mxu0 0.0
        %3979 = vmatprep.subr.mxu0 0.0
        %3980 = vmatpush1.msra.mxu0 0.0
        %3981 = vmatprep.subr.mxu0 0.0
        %3982 = vmatpush1.msra.mxu0 0.0
        %3983 = vmatprep.subr.mxu0 0.0
        %3984 = vmatpush1.msra.mxu0 0.0
        %3985 = vmatprep.subr.mxu0 0.0
        %3986 = vmatpush1.msra.mxu0 0.0
        %3987 = vmatprep.subr.mxu0 0.0
        %3988 = vmatpush1.msra.mxu0 %v908
        %3989 = vmatprep.subr.mxu0 0.0
        %3990 = vmatpush1.msra.mxu0 %v907
        %3991 = vmatprep.subr.mxu0 0.0
        %3992 = vmatpush1.msra.mxu0 %v906
        %3993 = vmatprep.subr.mxu0 0.0
        %3994 = vmatpush1.msra.mxu0 %v905
        %3995 = vmatprep.subr.mxu0 0.0
        %3996 = vmatpush2.msra.mxu0 0.0
        %3997 = vmatprep.subr.mxu0 0.0
        %3998 = vmatpush2.msra.mxu0 0.0
        %3999 = vmatprep.subr.mxu0 0.0
        %4000 = vmatpush2.msra.mxu0 0.0
        %4001 = vmatprep.subr.mxu0 0.0
        %4002 = vmatpush2.msra.mxu0 0.0
        %4003 = vmatprep.subr.mxu0 0.0
        %4004 = vmatpush2.msra.mxu0 0.0
        %4005 = vmatprep.subr.mxu0 0.0
        %4006 = vmatpush2.msra.mxu0 0.0
        %4007 = vmatprep.subr.mxu0 0.0
        %4008 = vmatpush2.msra.mxu0 0.0
        %4009 = vmatprep.subr.mxu0 0.0
        %4010 = vmatpush2.msra.mxu0 0.0
        %4011 = vmatprep.subr.mxu0 0.0
        %4012 = vmatpush2.msra.mxu0 0.0
        %4013 = vmatprep.subr.mxu0 0.0
        %4014 = vmatpush2.msra.mxu0 0.0
        %4015 = vmatprep.subr.mxu0 0.0
        %4016 = vmatpush2.msra.mxu0 0.0
        %4017 = vmatprep.subr.mxu0 0.0
        %4018 = vmatpush2.msra.mxu0 0.0
        %4019 = vmatprep.subr.mxu0 0.0
        %4020 = vmatpush2.msra.mxu0 0.0
        %4021 = vmatprep.subr.mxu0 0.0
        %4022 = vmatpush2.msra.mxu0 0.0
        %4023 = vmatprep.subr.mxu0 0.0
        %4024 = vmatpush2.msra.mxu0 0.0
        %4025 = vmatprep.subr.mxu0 0.0
        %4026 = vmatpush2.msra.mxu0 0.0
        %4027 = vmatprep.mubr.f32.mxu0 0.0
        %4028 = vmatmul.mubr.f32.gmra.mxu0 %v3191
        %v4029 = vpop.f32.mrf.mxu0
        %v4030 = vadd.f32 %v3177, %v4029
        %v4031 = vpop.f32.mrf.mxu0
        %4032 = vdwg.mxu0
        %v4033 = vmul.f32 %v3260, 0.35355338
        %v4034 = vmul.f32 %v3330, 0.35355338
        %v4035 = vmul.f32 %v3400, 0.35355338
        %v4036 = vmul.f32 %v3470, 0.35355338
        %v4038 = vsel %vm1940, %v4033, 0
        %v4041 = vsel %vm1940, %v3540, 0
        %4043 = vmatprep.subr.mxu0 0.0
        %4044 = vmatpush1.xpose.msra.mxu0 0.0
        %4045 = vmatprep.subr.mxu0 0.0
        %4046 = vmatpush1.xpose.msra.mxu0 0.0
        %4047 = vmatprep.subr.mxu0 0.0
        %4048 = vmatpush1.xpose.msra.mxu0 0.0
        %4049 = vmatprep.subr.mxu0 0.0
        %4050 = vmatpush1.xpose.msra.mxu0 0.0
        %4051 = vmatprep.subr.mxu0 0.0
        %4052 = vmatpush1.xpose.msra.mxu0 0.0
        %4053 = vmatprep.subr.mxu0 0.0
        %4054 = vmatpush1.xpose.msra.mxu0 0.0
        %4055 = vmatprep.subr.mxu0 0.0
        %4056 = vmatpush1.xpose.msra.mxu0 0.0
        %4057 = vmatprep.subr.mxu0 0.0
        %4058 = vmatpush1.xpose.msra.mxu0 0.0
        %4059 = vmatprep.subr.mxu0 0.0
        %4060 = vmatpush1.xpose.msra.mxu0 0.0
        %4061 = vmatprep.subr.mxu0 0.0
        %4062 = vmatpush1.xpose.msra.mxu0 0.0
        %4063 = vmatprep.subr.mxu0 0.0
        %4064 = vmatpush1.xpose.msra.mxu0 0.0
        %4065 = vmatprep.subr.mxu0 0.0
        %4066 = vmatpush1.xpose.msra.mxu0 0.0
        %4067 = vmatprep.subr.mxu0 0.0
        %4068 = vmatpush1.xpose.msra.mxu0 0.0
        %4069 = vmatprep.subr.mxu0 0.0
        %4070 = vmatpush1.xpose.msra.mxu0 0.0
        %4071 = vmatprep.subr.mxu0 0.0
        %4072 = vmatpush1.xpose.msra.mxu0 0.0
        %4073 = vmatprep.subr.mxu0 0.0
        %4074 = vmatpush1.xpose.msra.mxu0 %v4041
        %4075 = vmatprep.subr.mxu0 0.0
        %4076 = vmatpush2.xpose.msra.mxu0 0.0
        %4077 = vmatprep.subr.mxu0 0.0
        %4078 = vmatpush2.xpose.msra.mxu0 0.0
        %4079 = vmatprep.subr.mxu0 0.0
        %4080 = vmatpush2.xpose.msra.mxu0 0.0
        %4081 = vmatprep.subr.mxu0 0.0
        %4082 = vmatpush2.xpose.msra.mxu0 0.0
        %4083 = vmatprep.subr.mxu0 0.0
        %4084 = vmatpush2.xpose.msra.mxu0 0.0
        %4085 = vmatprep.subr.mxu0 0.0
        %4086 = vmatpush2.xpose.msra.mxu0 0.0
        %4087 = vmatprep.subr.mxu0 0.0
        %4088 = vmatpush2.xpose.msra.mxu0 0.0
        %4089 = vmatprep.subr.mxu0 0.0
        %4090 = vmatpush2.xpose.msra.mxu0 0.0
        %4091 = vmatprep.subr.mxu0 0.0
        %4092 = vmatpush2.xpose.msra.mxu0 0.0
        %4093 = vmatprep.subr.mxu0 0.0
        %4094 = vmatpush2.xpose.msra.mxu0 0.0
        %4095 = vmatprep.subr.mxu0 0.0
        %4096 = vmatpush2.xpose.msra.mxu0 0.0
        %4097 = vmatprep.subr.mxu0 0.0
        %4098 = vmatpush2.xpose.msra.mxu0 0.0
        %4099 = vmatprep.subr.mxu0 0.0
        %4100 = vmatpush2.xpose.msra.mxu0 0.0
        %4101 = vmatprep.subr.mxu0 0.0
        %4102 = vmatpush2.xpose.msra.mxu0 0.0
        %4103 = vmatprep.subr.mxu0 0.0
        %4104 = vmatpush2.xpose.msra.mxu0 0.0
        %4105 = vmatprep.subr.mxu0 0.0
        %4106 = vmatpush2.xpose.msra.mxu0 0.0
        %4107 = vmatprep.mubr.f32.mxu0 0.0
        %4108 = vmatmul.mubr.f32.gmra.mxu0 %v4038
        %v4109 = vpop.f32.mrf.mxu0
        %v4110 = vadd.f32 0.0, %v4109
        %v4111 = vpop.f32.mrf.mxu0
        %4112 = vdwg.mxu0
        %v4114 = vsel %vm1940, %v4034, 0
        %v4117 = vsel %vm1940, %v3610, 0
        %4119 = vmatprep.subr.mxu0 0.0
        %4120 = vmatpush1.xpose.msra.mxu0 0.0
        %4121 = vmatprep.subr.mxu0 0.0
        %4122 = vmatpush1.xpose.msra.mxu0 0.0
        %4123 = vmatprep.subr.mxu0 0.0
        %4124 = vmatpush1.xpose.msra.mxu0 0.0
        %4125 = vmatprep.subr.mxu0 0.0
        %4126 = vmatpush1.xpose.msra.mxu0 0.0
        %4127 = vmatprep.subr.mxu0 0.0
        %4128 = vmatpush1.xpose.msra.mxu0 0.0
        %4129 = vmatprep.subr.mxu0 0.0
        %4130 = vmatpush1.xpose.msra.mxu0 0.0
        %4131 = vmatprep.subr.mxu0 0.0
        %4132 = vmatpush1.xpose.msra.mxu0 0.0
        %4133 = vmatprep.subr.mxu0 0.0
        %4134 = vmatpush1.xpose.msra.mxu0 0.0
        %4135 = vmatprep.subr.mxu0 0.0
        %4136 = vmatpush1.xpose.msra.mxu0 0.0
        %4137 = vmatprep.subr.mxu0 0.0
        %4138 = vmatpush1.xpose.msra.mxu0 0.0
        %4139 = vmatprep.subr.mxu0 0.0
        %4140 = vmatpush1.xpose.msra.mxu0 0.0
        %4141 = vmatprep.subr.mxu0 0.0
        %4142 = vmatpush1.xpose.msra.mxu0 0.0
        %4143 = vmatprep.subr.mxu0 0.0
        %4144 = vmatpush1.xpose.msra.mxu0 0.0
        %4145 = vmatprep.subr.mxu0 0.0
        %4146 = vmatpush1.xpose.msra.mxu0 0.0
        %4147 = vmatprep.subr.mxu0 0.0
        %4148 = vmatpush1.xpose.msra.mxu0 0.0
        %4149 = vmatprep.subr.mxu0 0.0
        %4150 = vmatpush1.xpose.msra.mxu0 %v4117
        %4151 = vmatprep.subr.mxu0 0.0
        %4152 = vmatpush2.xpose.msra.mxu0 0.0
        %4153 = vmatprep.subr.mxu0 0.0
        %4154 = vmatpush2.xpose.msra.mxu0 0.0
        %4155 = vmatprep.subr.mxu0 0.0
        %4156 = vmatpush2.xpose.msra.mxu0 0.0
        %4157 = vmatprep.subr.mxu0 0.0
        %4158 = vmatpush2.xpose.msra.mxu0 0.0
        %4159 = vmatprep.subr.mxu0 0.0
        %4160 = vmatpush2.xpose.msra.mxu0 0.0
        %4161 = vmatprep.subr.mxu0 0.0
        %4162 = vmatpush2.xpose.msra.mxu0 0.0
        %4163 = vmatprep.subr.mxu0 0.0
        %4164 = vmatpush2.xpose.msra.mxu0 0.0
        %4165 = vmatprep.subr.mxu0 0.0
        %4166 = vmatpush2.xpose.msra.mxu0 0.0
        %4167 = vmatprep.subr.mxu0 0.0
        %4168 = vmatpush2.xpose.msra.mxu0 0.0
        %4169 = vmatprep.subr.mxu0 0.0
        %4170 = vmatpush2.xpose.msra.mxu0 0.0
        %4171 = vmatprep.subr.mxu0 0.0
        %4172 = vmatpush2.xpose.msra.mxu0 0.0
        %4173 = vmatprep.subr.mxu0 0.0
        %4174 = vmatpush2.xpose.msra.mxu0 0.0
        %4175 = vmatprep.subr.mxu0 0.0
        %4176 = vmatpush2.xpose.msra.mxu0 0.0
        %4177 = vmatprep.subr.mxu0 0.0
        %4178 = vmatpush2.xpose.msra.mxu0 0.0
        %4179 = vmatprep.subr.mxu0 0.0
        %4180 = vmatpush2.xpose.msra.mxu0 0.0
        %4181 = vmatprep.subr.mxu0 0.0
        %4182 = vmatpush2.xpose.msra.mxu0 0.0
        %4183 = vmatprep.mubr.f32.mxu0 0.0
        %4184 = vmatmul.mubr.f32.gmra.mxu0 %v4114
        %v4185 = vpop.f32.mrf.mxu0
        %v4186 = vadd.f32 0.0, %v4185
        %v4187 = vpop.f32.mrf.mxu0
        %4188 = vdwg.mxu0
        %v4190 = vsel %vm1940, %v4035, 0
        %v4193 = vsel %vm1940, %v3680, 0
        %4195 = vmatprep.subr.mxu0 0.0
        %4196 = vmatpush1.xpose.msra.mxu0 0.0
        %4197 = vmatprep.subr.mxu0 0.0
        %4198 = vmatpush1.xpose.msra.mxu0 0.0
        %4199 = vmatprep.subr.mxu0 0.0
        %4200 = vmatpush1.xpose.msra.mxu0 0.0
        %4201 = vmatprep.subr.mxu0 0.0
        %4202 = vmatpush1.xpose.msra.mxu0 0.0
        %4203 = vmatprep.subr.mxu0 0.0
        %4204 = vmatpush1.xpose.msra.mxu0 0.0
        %4205 = vmatprep.subr.mxu0 0.0
        %4206 = vmatpush1.xpose.msra.mxu0 0.0
        %4207 = vmatprep.subr.mxu0 0.0
        %4208 = vmatpush1.xpose.msra.mxu0 0.0
        %4209 = vmatprep.subr.mxu0 0.0
        %4210 = vmatpush1.xpose.msra.mxu0 0.0
        %4211 = vmatprep.subr.mxu0 0.0
        %4212 = vmatpush1.xpose.msra.mxu0 0.0
        %4213 = vmatprep.subr.mxu0 0.0
        %4214 = vmatpush1.xpose.msra.mxu0 0.0
        %4215 = vmatprep.subr.mxu0 0.0
        %4216 = vmatpush1.xpose.msra.mxu0 0.0
        %4217 = vmatprep.subr.mxu0 0.0
        %4218 = vmatpush1.xpose.msra.mxu0 0.0
        %4219 = vmatprep.subr.mxu0 0.0
        %4220 = vmatpush1.xpose.msra.mxu0 0.0
        %4221 = vmatprep.subr.mxu0 0.0
        %4222 = vmatpush1.xpose.msra.mxu0 0.0
        %4223 = vmatprep.subr.mxu0 0.0
        %4224 = vmatpush1.xpose.msra.mxu0 0.0
        %4225 = vmatprep.subr.mxu0 0.0
        %4226 = vmatpush1.xpose.msra.mxu0 %v4193
        %4227 = vmatprep.subr.mxu0 0.0
        %4228 = vmatpush2.xpose.msra.mxu0 0.0
        %4229 = vmatprep.subr.mxu0 0.0
        %4230 = vmatpush2.xpose.msra.mxu0 0.0
        %4231 = vmatprep.subr.mxu0 0.0
        %4232 = vmatpush2.xpose.msra.mxu0 0.0
        %4233 = vmatprep.subr.mxu0 0.0
        %4234 = vmatpush2.xpose.msra.mxu0 0.0
        %4235 = vmatprep.subr.mxu0 0.0
        %4236 = vmatpush2.xpose.msra.mxu0 0.0
        %4237 = vmatprep.subr.mxu0 0.0
        %4238 = vmatpush2.xpose.msra.mxu0 0.0
        %4239 = vmatprep.subr.mxu0 0.0
        %4240 = vmatpush2.xpose.msra.mxu0 0.0
        %4241 = vmatprep.subr.mxu0 0.0
        %4242 = vmatpush2.xpose.msra.mxu0 0.0
        %4243 = vmatprep.subr.mxu0 0.0
        %4244 = vmatpush2.xpose.msra.mxu0 0.0
        %4245 = vmatprep.subr.mxu0 0.0
        %4246 = vmatpush2.xpose.msra.mxu0 0.0
        %4247 = vmatprep.subr.mxu0 0.0
        %4248 = vmatpush2.xpose.msra.mxu0 0.0
        %4249 = vmatprep.subr.mxu0 0.0
        %4250 = vmatpush2.xpose.msra.mxu0 0.0
        %4251 = vmatprep.subr.mxu0 0.0
        %4252 = vmatpush2.xpose.msra.mxu0 0.0
        %4253 = vmatprep.subr.mxu0 0.0
        %4254 = vmatpush2.xpose.msra.mxu0 0.0
        %4255 = vmatprep.subr.mxu0 0.0
        %4256 = vmatpush2.xpose.msra.mxu0 0.0
        %4257 = vmatprep.subr.mxu0 0.0
        %4258 = vmatpush2.xpose.msra.mxu0 0.0
        %4259 = vmatprep.mubr.f32.mxu0 0.0
        %4260 = vmatmul.mubr.f32.gmra.mxu0 %v4190
        %v4261 = vpop.f32.mrf.mxu0
        %v4262 = vadd.f32 0.0, %v4261
        %v4263 = vpop.f32.mrf.mxu0
        %4264 = vdwg.mxu0
        %v4266 = vsel %vm1940, %v4036, 0
        %v4269 = vsel %vm1940, %v3750, 0
        %4271 = vmatprep.subr.mxu0 0.0
        %4272 = vmatpush1.xpose.msra.mxu0 0.0
        %4273 = vmatprep.subr.mxu0 0.0
        %4274 = vmatpush1.xpose.msra.mxu0 0.0
        %4275 = vmatprep.subr.mxu0 0.0
        %4276 = vmatpush1.xpose.msra.mxu0 0.0
        %4277 = vmatprep.subr.mxu0 0.0
        %4278 = vmatpush1.xpose.msra.mxu0 0.0
        %4279 = vmatprep.subr.mxu0 0.0
        %4280 = vmatpush1.xpose.msra.mxu0 0.0
        %4281 = vmatprep.subr.mxu0 0.0
        %4282 = vmatpush1.xpose.msra.mxu0 0.0
        %4283 = vmatprep.subr.mxu0 0.0
        %4284 = vmatpush1.xpose.msra.mxu0 0.0
        %4285 = vmatprep.subr.mxu0 0.0
        %4286 = vmatpush1.xpose.msra.mxu0 0.0
        %4287 = vmatprep.subr.mxu0 0.0
        %4288 = vmatpush1.xpose.msra.mxu0 0.0
        %4289 = vmatprep.subr.mxu0 0.0
        %4290 = vmatpush1.xpose.msra.mxu0 0.0
        %4291 = vmatprep.subr.mxu0 0.0
        %4292 = vmatpush1.xpose.msra.mxu0 0.0
        %4293 = vmatprep.subr.mxu0 0.0
        %4294 = vmatpush1.xpose.msra.mxu0 0.0
        %4295 = vmatprep.subr.mxu0 0.0
        %4296 = vmatpush1.xpose.msra.mxu0 0.0
        %4297 = vmatprep.subr.mxu0 0.0
        %4298 = vmatpush1.xpose.msra.mxu0 0.0
        %4299 = vmatprep.subr.mxu0 0.0
        %4300 = vmatpush1.xpose.msra.mxu0 0.0
        %4301 = vmatprep.subr.mxu0 0.0
        %4302 = vmatpush1.xpose.msra.mxu0 %v4269
        %4303 = vmatprep.subr.mxu0 0.0
        %4304 = vmatpush2.xpose.msra.mxu0 0.0
        %4305 = vmatprep.subr.mxu0 0.0
        %4306 = vmatpush2.xpose.msra.mxu0 0.0
        %4307 = vmatprep.subr.mxu0 0.0
        %4308 = vmatpush2.xpose.msra.mxu0 0.0
        %4309 = vmatprep.subr.mxu0 0.0
        %4310 = vmatpush2.xpose.msra.mxu0 0.0
        %4311 = vmatprep.subr.mxu0 0.0
        %4312 = vmatpush2.xpose.msra.mxu0 0.0
        %4313 = vmatprep.subr.mxu0 0.0
        %4314 = vmatpush2.xpose.msra.mxu0 0.0
        %4315 = vmatprep.subr.mxu0 0.0
        %4316 = vmatpush2.xpose.msra.mxu0 0.0
        %4317 = vmatprep.subr.mxu0 0.0
        %4318 = vmatpush2.xpose.msra.mxu0 0.0
        %4319 = vmatprep.subr.mxu0 0.0
        %4320 = vmatpush2.xpose.msra.mxu0 0.0
        %4321 = vmatprep.subr.mxu0 0.0
        %4322 = vmatpush2.xpose.msra.mxu0 0.0
        %4323 = vmatprep.subr.mxu0 0.0
        %4324 = vmatpush2.xpose.msra.mxu0 0.0
        %4325 = vmatprep.subr.mxu0 0.0
        %4326 = vmatpush2.xpose.msra.mxu0 0.0
        %4327 = vmatprep.subr.mxu0 0.0
        %4328 = vmatpush2.xpose.msra.mxu0 0.0
        %4329 = vmatprep.subr.mxu0 0.0
        %4330 = vmatpush2.xpose.msra.mxu0 0.0
        %4331 = vmatprep.subr.mxu0 0.0
        %4332 = vmatpush2.xpose.msra.mxu0 0.0
        %4333 = vmatprep.subr.mxu0 0.0
        %4334 = vmatpush2.xpose.msra.mxu0 0.0
        %4335 = vmatprep.mubr.f32.mxu0 0.0
        %4336 = vmatmul.mubr.f32.gmra.mxu0 %v4266
        %v4337 = vpop.f32.mrf.mxu0
        %v4338 = vadd.f32 0.0, %v4337
        %v4339 = vpop.f32.mrf.mxu0
        %4340 = vdwg.mxu0
        %v4341 = vsel %vm2245, %v4110, -inf
        %4342 = vmax.xlane.f32.xlu0 %v4341
        %v4343 = vpop.xlane.xlu0 %4342
        %v4344 = vsel %vm2245, %v4186, -inf
        %4345 = vmax.xlane.f32.xlu0 %v4344
        %v4346 = vpop.xlane.xlu0 %4345
        %v4347 = vsel %vm2245, %v4262, -inf
        %4348 = vmax.xlane.f32.xlu0 %v4347
        %v4349 = vpop.xlane.xlu0 %4348
        %v4350 = vsel %vm2245, %v4338, -inf
        %4351 = vmax.xlane.f32.xlu0 %v4350
        %v4352 = vpop.xlane.xlu0 %4351
        %v4353 = vsub.f32 %v4110, %v4343
        %v4354 = vsub.f32 %v4186, %v4346
        %v4355 = vsub.f32 %v4262, %v4349
        %v4356 = vsub.f32 %v4338, %v4352
        %v4357 = vmul.f32 %v4353, 1.442695
        %v4358 = vpow.pop %v4357
        %v4359 = vmul.f32 %v4354, 1.442695
        %v4360 = vpow.pop %v4359
        %v4361 = vmul.f32 %v4355, 1.442695
        %v4362 = vpow.pop %v4361
        %v4363 = vmul.f32 %v4356, 1.442695
        %v4364 = vpow.pop %v4363
        %v4365 = vsel %vm2245, %v4358, 0.0
        %4366 = vadd.xlane.f32.xlu0 %v4365
        %v4367 = vpop.xlane.xlu0 %4366
        %v4368 = vsel %vm2245, %v4360, 0.0
        %4369 = vadd.xlane.f32.xlu0 %v4368
        %v4370 = vpop.xlane.xlu0 %4369
        %v4371 = vsel %vm2245, %v4362, 0.0
        %4372 = vadd.xlane.f32.xlu0 %v4371
        %v4373 = vpop.xlane.xlu0 %4372
        %v4374 = vsel %vm2245, %v4364, 0.0
        %4375 = vadd.xlane.f32.xlu0 %v4374
        %v4376 = vpop.xlane.xlu0 %4375
        %v4377 = vrcp.pop %v4367
        %v4378 = vrcp.pop %v4370
        %v4379 = vrcp.pop %v4373
        %v4380 = vrcp.pop %v4376
        %v4381 = vmul.f32 %v4358, %v4377
        %v4382 = vmul.f32 %v4360, %v4378
        %v4383 = vmul.f32 %v4362, %v4379
        %v4384 = vmul.f32 %v4364, %v4380
        %v4386 = vsel %vm2290, %v4381, 0
        %v4389 = vsel %vm2294, %v3820, 0
        %4391 = vmatprep.subr.mxu0 0.0
        %4392 = vmatpush1.msra.mxu0 0.0
        %4393 = vmatprep.subr.mxu0 0.0
        %4394 = vmatpush1.msra.mxu0 0.0
        %4395 = vmatprep.subr.mxu0 0.0
        %4396 = vmatpush1.msra.mxu0 0.0
        %4397 = vmatprep.subr.mxu0 0.0
        %4398 = vmatpush1.msra.mxu0 0.0
        %4399 = vmatprep.subr.mxu0 0.0
        %4400 = vmatpush1.msra.mxu0 0.0
        %4401 = vmatprep.subr.mxu0 0.0
        %4402 = vmatpush1.msra.mxu0 0.0
        %4403 = vmatprep.subr.mxu0 0.0
        %4404 = vmatpush1.msra.mxu0 0.0
        %4405 = vmatprep.subr.mxu0 0.0
        %4406 = vmatpush1.msra.mxu0 0.0
        %4407 = vmatprep.subr.mxu0 0.0
        %4408 = vmatpush1.msra.mxu0 0.0
        %4409 = vmatprep.subr.mxu0 0.0
        %4410 = vmatpush1.msra.mxu0 0.0
        %4411 = vmatprep.subr.mxu0 0.0
        %4412 = vmatpush1.msra.mxu0 0.0
        %4413 = vmatprep.subr.mxu0 0.0
        %4414 = vmatpush1.msra.mxu0 0.0
        %4415 = vmatprep.subr.mxu0 0.0
        %4416 = vmatpush1.msra.mxu0 0.0
        %4417 = vmatprep.subr.mxu0 0.0
        %4418 = vmatpush1.msra.mxu0 0.0
        %4419 = vmatprep.subr.mxu0 0.0
        %4420 = vmatpush1.msra.mxu0 0.0
        %4421 = vmatprep.subr.mxu0 0.0
        %4422 = vmatpush1.msra.mxu0 %v4389
        %4423 = vmatprep.subr.mxu0 0.0
        %4424 = vmatpush2.msra.mxu0 0.0
        %4425 = vmatprep.subr.mxu0 0.0
        %4426 = vmatpush2.msra.mxu0 0.0
        %4427 = vmatprep.subr.mxu0 0.0
        %4428 = vmatpush2.msra.mxu0 0.0
        %4429 = vmatprep.subr.mxu0 0.0
        %4430 = vmatpush2.msra.mxu0 0.0
        %4431 = vmatprep.subr.mxu0 0.0
        %4432 = vmatpush2.msra.mxu0 0.0
        %4433 = vmatprep.subr.mxu0 0.0
        %4434 = vmatpush2.msra.mxu0 0.0
        %4435 = vmatprep.subr.mxu0 0.0
        %4436 = vmatpush2.msra.mxu0 0.0
        %4437 = vmatprep.subr.mxu0 0.0
        %4438 = vmatpush2.msra.mxu0 0.0
        %4439 = vmatprep.subr.mxu0 0.0
        %4440 = vmatpush2.msra.mxu0 0.0
        %4441 = vmatprep.subr.mxu0 0.0
        %4442 = vmatpush2.msra.mxu0 0.0
        %4443 = vmatprep.subr.mxu0 0.0
        %4444 = vmatpush2.msra.mxu0 0.0
        %4445 = vmatprep.subr.mxu0 0.0
        %4446 = vmatpush2.msra.mxu0 0.0
        %4447 = vmatprep.subr.mxu0 0.0
        %4448 = vmatpush2.msra.mxu0 0.0
        %4449 = vmatprep.subr.mxu0 0.0
        %4450 = vmatpush2.msra.mxu0 0.0
        %4451 = vmatprep.subr.mxu0 0.0
        %4452 = vmatpush2.msra.mxu0 0.0
        %4453 = vmatprep.subr.mxu0 0.0
        %4454 = vmatpush2.msra.mxu0 0.0
        %4455 = vmatprep.mubr.f32.mxu0 0.0
        %4456 = vmatmul.mubr.f32.gmra.mxu0 %v4386
        %v4457 = vpop.f32.mrf.mxu0
        %v4458 = vadd.f32 0.0, %v4457
        %v4459 = vpop.f32.mrf.mxu0
        %4460 = vdwg.mxu0
        %v4462 = vsel %vm2290, %v4382, 0
        %v4465 = vsel %vm2294, %v3890, 0
        %4467 = vmatprep.subr.mxu0 0.0
        %4468 = vmatpush1.msra.mxu0 0.0
        %4469 = vmatprep.subr.mxu0 0.0
        %4470 = vmatpush1.msra.mxu0 0.0
        %4471 = vmatprep.subr.mxu0 0.0
        %4472 = vmatpush1.msra.mxu0 0.0
        %4473 = vmatprep.subr.mxu0 0.0
        %4474 = vmatpush1.msra.mxu0 0.0
        %4475 = vmatprep.subr.mxu0 0.0
        %4476 = vmatpush1.msra.mxu0 0.0
        %4477 = vmatprep.subr.mxu0 0.0
        %4478 = vmatpush1.msra.mxu0 0.0
        %4479 = vmatprep.subr.mxu0 0.0
        %4480 = vmatpush1.msra.mxu0 0.0
        %4481 = vmatprep.subr.mxu0 0.0
        %4482 = vmatpush1.msra.mxu0 0.0
        %4483 = vmatprep.subr.mxu0 0.0
        %4484 = vmatpush1.msra.mxu0 0.0
        %4485 = vmatprep.subr.mxu0 0.0
        %4486 = vmatpush1.msra.mxu0 0.0
        %4487 = vmatprep.subr.mxu0 0.0
        %4488 = vmatpush1.msra.mxu0 0.0
        %4489 = vmatprep.subr.mxu0 0.0
        %4490 = vmatpush1.msra.mxu0 0.0
        %4491 = vmatprep.subr.mxu0 0.0
        %4492 = vmatpush1.msra.mxu0 0.0
        %4493 = vmatprep.subr.mxu0 0.0
        %4494 = vmatpush1.msra.mxu0 0.0
        %4495 = vmatprep.subr.mxu0 0.0
        %4496 = vmatpush1.msra.mxu0 0.0
        %4497 = vmatprep.subr.mxu0 0.0
        %4498 = vmatpush1.msra.mxu0 %v4465
        %4499 = vmatprep.subr.mxu0 0.0
        %4500 = vmatpush2.msra.mxu0 0.0
        %4501 = vmatprep.subr.mxu0 0.0
        %4502 = vmatpush2.msra.mxu0 0.0
        %4503 = vmatprep.subr.mxu0 0.0
        %4504 = vmatpush2.msra.mxu0 0.0
        %4505 = vmatprep.subr.mxu0 0.0
        %4506 = vmatpush2.msra.mxu0 0.0
        %4507 = vmatprep.subr.mxu0 0.0
        %4508 = vmatpush2.msra.mxu0 0.0
        %4509 = vmatprep.subr.mxu0 0.0
        %4510 = vmatpush2.msra.mxu0 0.0
        %4511 = vmatprep.subr.mxu0 0.0
        %4512 = vmatpush2.msra.mxu0 0.0
        %4513 = vmatprep.subr.mxu0 0.0
        %4514 = vmatpush2.msra.mxu0 0.0
        %4515 = vmatprep.subr.mxu0 0.0
        %4516 = vmatpush2.msra.mxu0 0.0
        %4517 = vmatprep.subr.mxu0 0.0
        %4518 = vmatpush2.msra.mxu0 0.0
        %4519 = vmatprep.subr.mxu0 0.0
        %4520 = vmatpush2.msra.mxu0 0.0
        %4521 = vmatprep.subr.mxu0 0.0
        %4522 = vmatpush2.msra.mxu0 0.0
        %4523 = vmatprep.subr.mxu0 0.0
        %4524 = vmatpush2.msra.mxu0 0.0
        %4525 = vmatprep.subr.mxu0 0.0
        %4526 = vmatpush2.msra.mxu0 0.0
        %4527 = vmatprep.subr.mxu0 0.0
        %4528 = vmatpush2.msra.mxu0 0.0
        %4529 = vmatprep.subr.mxu0 0.0
        %4530 = vmatpush2.msra.mxu0 0.0
        %4531 = vmatprep.mubr.f32.mxu0 0.0
        %4532 = vmatmul.mubr.f32.gmra.mxu0 %v4462
        %v4533 = vpop.f32.mrf.mxu0
        %v4534 = vadd.f32 0.0, %v4533
        %v4535 = vpop.f32.mrf.mxu0
        %4536 = vdwg.mxu0
        %v4538 = vsel %vm2290, %v4383, 0
        %v4541 = vsel %vm2294, %v3960, 0
        %4543 = vmatprep.subr.mxu0 0.0
        %4544 = vmatpush1.msra.mxu0 0.0
        %4545 = vmatprep.subr.mxu0 0.0
        %4546 = vmatpush1.msra.mxu0 0.0
        %4547 = vmatprep.subr.mxu0 0.0
        %4548 = vmatpush1.msra.mxu0 0.0
        %4549 = vmatprep.subr.mxu0 0.0
        %4550 = vmatpush1.msra.mxu0 0.0
        %4551 = vmatprep.subr.mxu0 0.0
        %4552 = vmatpush1.msra.mxu0 0.0
        %4553 = vmatprep.subr.mxu0 0.0
        %4554 = vmatpush1.msra.mxu0 0.0
        %4555 = vmatprep.subr.mxu0 0.0
        %4556 = vmatpush1.msra.mxu0 0.0
        %4557 = vmatprep.subr.mxu0 0.0
        %4558 = vmatpush1.msra.mxu0 0.0
        %4559 = vmatprep.subr.mxu0 0.0
        %4560 = vmatpush1.msra.mxu0 0.0
        %4561 = vmatprep.subr.mxu0 0.0
        %4562 = vmatpush1.msra.mxu0 0.0
        %4563 = vmatprep.subr.mxu0 0.0
        %4564 = vmatpush1.msra.mxu0 0.0
        %4565 = vmatprep.subr.mxu0 0.0
        %4566 = vmatpush1.msra.mxu0 0.0
        %4567 = vmatprep.subr.mxu0 0.0
        %4568 = vmatpush1.msra.mxu0 0.0
        %4569 = vmatprep.subr.mxu0 0.0
        %4570 = vmatpush1.msra.mxu0 0.0
        %4571 = vmatprep.subr.mxu0 0.0
        %4572 = vmatpush1.msra.mxu0 0.0
        %4573 = vmatprep.subr.mxu0 0.0
        %4574 = vmatpush1.msra.mxu0 %v4541
        %4575 = vmatprep.subr.mxu0 0.0
        %4576 = vmatpush2.msra.mxu0 0.0
        %4577 = vmatprep.subr.mxu0 0.0
        %4578 = vmatpush2.msra.mxu0 0.0
        %4579 = vmatprep.subr.mxu0 0.0
        %4580 = vmatpush2.msra.mxu0 0.0
        %4581 = vmatprep.subr.mxu0 0.0
        %4582 = vmatpush2.msra.mxu0 0.0
        %4583 = vmatprep.subr.mxu0 0.0
        %4584 = vmatpush2.msra.mxu0 0.0
        %4585 = vmatprep.subr.mxu0 0.0
        %4586 = vmatpush2.msra.mxu0 0.0
        %4587 = vmatprep.subr.mxu0 0.0
        %4588 = vmatpush2.msra.mxu0 0.0
        %4589 = vmatprep.subr.mxu0 0.0
        %4590 = vmatpush2.msra.mxu0 0.0
        %4591 = vmatprep.subr.mxu0 0.0
        %4592 = vmatpush2.msra.mxu0 0.0
        %4593 = vmatprep.subr.mxu0 0.0
        %4594 = vmatpush2.msra.mxu0 0.0
        %4595 = vmatprep.subr.mxu0 0.0
        %4596 = vmatpush2.msra.mxu0 0.0
        %4597 = vmatprep.subr.mxu0 0.0
        %4598 = vmatpush2.msra.mxu0 0.0
        %4599 = vmatprep.subr.mxu0 0.0
        %4600 = vmatpush2.msra.mxu0 0.0
        %4601 = vmatprep.subr.mxu0 0.0
        %4602 = vmatpush2.msra.mxu0 0.0
        %4603 = vmatprep.subr.mxu0 0.0
        %4604 = vmatpush2.msra.mxu0 0.0
        %4605 = vmatprep.subr.mxu0 0.0
        %4606 = vmatpush2.msra.mxu0 0.0
        %4607 = vmatprep.mubr.f32.mxu0 0.0
        %4608 = vmatmul.mubr.f32.gmra.mxu0 %v4538
        %v4609 = vpop.f32.mrf.mxu0
        %v4610 = vadd.f32 0.0, %v4609
        %v4611 = vpop.f32.mrf.mxu0
        %4612 = vdwg.mxu0
        %v4614 = vsel %vm2290, %v4384, 0
        %v4617 = vsel %vm2294, %v4030, 0
        %4619 = vmatprep.subr.mxu0 0.0
        %4620 = vmatpush1.msra.mxu0 0.0
        %4621 = vmatprep.subr.mxu0 0.0
        %4622 = vmatpush1.msra.mxu0 0.0
        %4623 = vmatprep.subr.mxu0 0.0
        %4624 = vmatpush1.msra.mxu0 0.0
        %4625 = vmatprep.subr.mxu0 0.0
        %4626 = vmatpush1.msra.mxu0 0.0
        %4627 = vmatprep.subr.mxu0 0.0
        %4628 = vmatpush1.msra.mxu0 0.0
        %4629 = vmatprep.subr.mxu0 0.0
        %4630 = vmatpush1.msra.mxu0 0.0
        %4631 = vmatprep.subr.mxu0 0.0
        %4632 = vmatpush1.msra.mxu0 0.0
        %4633 = vmatprep.subr.mxu0 0.0
        %4634 = vmatpush1.msra.mxu0 0.0
        %4635 = vmatprep.subr.mxu0 0.0
        %4636 = vmatpush1.msra.mxu0 0.0
        %4637 = vmatprep.subr.mxu0 0.0
        %4638 = vmatpush1.msra.mxu0 0.0
        %4639 = vmatprep.subr.mxu0 0.0
        %4640 = vmatpush1.msra.mxu0 0.0
        %4641 = vmatprep.subr.mxu0 0.0
        %4642 = vmatpush1.msra.mxu0 0.0
        %4643 = vmatprep.subr.mxu0 0.0
        %4644 = vmatpush1.msra.mxu0 0.0
        %4645 = vmatprep.subr.mxu0 0.0
        %4646 = vmatpush1.msra.mxu0 0.0
        %4647 = vmatprep.subr.mxu0 0.0
        %4648 = vmatpush1.msra.mxu0 0.0
        %4649 = vmatprep.subr.mxu0 0.0
        %4650 = vmatpush1.msra.mxu0 %v4617
        %4651 = vmatprep.subr.mxu0 0.0
        %4652 = vmatpush2.msra.mxu0 0.0
        %4653 = vmatprep.subr.mxu0 0.0
        %4654 = vmatpush2.msra.mxu0 0.0
        %4655 = vmatprep.subr.mxu0 0.0
        %4656 = vmatpush2.msra.mxu0 0.0
        %4657 = vmatprep.subr.mxu0 0.0
        %4658 = vmatpush2.msra.mxu0 0.0
        %4659 = vmatprep.subr.mxu0 0.0
        %4660 = vmatpush2.msra.mxu0 0.0
        %4661 = vmatprep.subr.mxu0 0.0
        %4662 = vmatpush2.msra.mxu0 0.0
        %4663 = vmatprep.subr.mxu0 0.0
        %4664 = vmatpush2.msra.mxu0 0.0
        %4665 = vmatprep.subr.mxu0 0.0
        %4666 = vmatpush2.msra.mxu0 0.0
        %4667 = vmatprep.subr.mxu0 0.0
        %4668 = vmatpush2.msra.mxu0 0.0
        %4669 = vmatprep.subr.mxu0 0.0
        %4670 = vmatpush2.msra.mxu0 0.0
        %4671 = vmatprep.subr.mxu0 0.0
        %4672 = vmatpush2.msra.mxu0 0.0
        %4673 = vmatprep.subr.mxu0 0.0
        %4674 = vmatpush2.msra.mxu0 0.0
        %4675 = vmatprep.subr.mxu0 0.0
        %4676 = vmatpush2.msra.mxu0 0.0
        %4677 = vmatprep.subr.mxu0 0.0
        %4678 = vmatpush2.msra.mxu0 0.0
        %4679 = vmatprep.subr.mxu0 0.0
        %4680 = vmatpush2.msra.mxu0 0.0
        %4681 = vmatprep.subr.mxu0 0.0
        %4682 = vmatpush2.msra.mxu0 0.0
        %4683 = vmatprep.mubr.f32.mxu0 0.0
        %4684 = vmatmul.mubr.f32.gmra.mxu0 %v4614
        %v4685 = vpop.f32.mrf.mxu0
        %v4686 = vadd.f32 0.0, %v4685
        %v4687 = vpop.f32.mrf.mxu0
        %4688 = vdwg.mxu0
        %v4690 = vsel %vm1940, %v4458, 0
        %4692 = vmatprep.subr.mxu0 0.0
        %4693 = vmatpush1.msra.mxu0 0.0
        %4694 = vmatprep.subr.mxu0 0.0
        %4695 = vmatpush1.msra.mxu0 0.0
        %4696 = vmatprep.subr.mxu0 0.0
        %4697 = vmatpush1.msra.mxu0 0.0
        %4698 = vmatprep.subr.mxu0 0.0
        %4699 = vmatpush1.msra.mxu0 0.0
        %4700 = vmatprep.subr.mxu0 0.0
        %4701 = vmatpush1.msra.mxu0 0.0
        %4702 = vmatprep.subr.mxu0 0.0
        %4703 = vmatpush1.msra.mxu0 0.0
        %4704 = vmatprep.subr.mxu0 0.0
        %4705 = vmatpush1.msra.mxu0 0.0
        %4706 = vmatprep.subr.mxu0 0.0
        %4707 = vmatpush1.msra.mxu0 0.0
        %4708 = vmatprep.subr.mxu0 0.0
        %4709 = vmatpush1.msra.mxu0 0.0
        %4710 = vmatprep.subr.mxu0 0.0
        %4711 = vmatpush1.msra.mxu0 0.0
        %4712 = vmatprep.subr.mxu0 0.0
        %4713 = vmatpush1.msra.mxu0 0.0
        %4714 = vmatprep.subr.mxu0 0.0
        %4715 = vmatpush1.msra.mxu0 0.0
        %4716 = vmatprep.subr.mxu0 0.0
        %4717 = vmatpush1.msra.mxu0 0.0
        %4718 = vmatprep.subr.mxu0 0.0
        %4719 = vmatpush1.msra.mxu0 0.0
        %4720 = vmatprep.subr.mxu0 0.0
        %4721 = vmatpush1.msra.mxu0 0.0
        %4722 = vmatprep.subr.mxu0 0.0
        %4723 = vmatpush1.msra.mxu0 %v937
        %4724 = vmatprep.subr.mxu0 0.0
        %4725 = vmatpush2.msra.mxu0 0.0
        %4726 = vmatprep.subr.mxu0 0.0
        %4727 = vmatpush2.msra.mxu0 0.0
        %4728 = vmatprep.subr.mxu0 0.0
        %4729 = vmatpush2.msra.mxu0 0.0
        %4730 = vmatprep.subr.mxu0 0.0
        %4731 = vmatpush2.msra.mxu0 0.0
        %4732 = vmatprep.subr.mxu0 0.0
        %4733 = vmatpush2.msra.mxu0 0.0
        %4734 = vmatprep.subr.mxu0 0.0
        %4735 = vmatpush2.msra.mxu0 0.0
        %4736 = vmatprep.subr.mxu0 0.0
        %4737 = vmatpush2.msra.mxu0 0.0
        %4738 = vmatprep.subr.mxu0 0.0
        %4739 = vmatpush2.msra.mxu0 0.0
        %4740 = vmatprep.subr.mxu0 0.0
        %4741 = vmatpush2.msra.mxu0 0.0
        %4742 = vmatprep.subr.mxu0 0.0
        %4743 = vmatpush2.msra.mxu0 0.0
        %4744 = vmatprep.subr.mxu0 0.0
        %4745 = vmatpush2.msra.mxu0 0.0
        %4746 = vmatprep.subr.mxu0 0.0
        %4747 = vmatpush2.msra.mxu0 0.0
        %4748 = vmatprep.subr.mxu0 0.0
        %4749 = vmatpush2.msra.mxu0 0.0
        %4750 = vmatprep.subr.mxu0 0.0
        %4751 = vmatpush2.msra.mxu0 0.0
        %4752 = vmatprep.subr.mxu0 0.0
        %4753 = vmatpush2.msra.mxu0 0.0
        %4754 = vmatprep.subr.mxu0 0.0
        %4755 = vmatpush2.msra.mxu0 0.0
        %4756 = vmatprep.mubr.f32.mxu0 0.0
        %4757 = vmatmul.mubr.f32.gmra.mxu0 %v4690
        %v4758 = vpop.f32.mrf.mxu0
        %v4759 = vadd.f32 0.0, %v4758
        %v4760 = vpop.f32.mrf.mxu0
        %4761 = vdwg.mxu0
        %v4763 = vsel %vm1940, %v4534, 0
        %4765 = vmatprep.subr.mxu0 0.0
        %4766 = vmatpush1.msra.mxu0 0.0
        %4767 = vmatprep.subr.mxu0 0.0
        %4768 = vmatpush1.msra.mxu0 0.0
        %4769 = vmatprep.subr.mxu0 0.0
        %4770 = vmatpush1.msra.mxu0 0.0
        %4771 = vmatprep.subr.mxu0 0.0
        %4772 = vmatpush1.msra.mxu0 0.0
        %4773 = vmatprep.subr.mxu0 0.0
        %4774 = vmatpush1.msra.mxu0 0.0
        %4775 = vmatprep.subr.mxu0 0.0
        %4776 = vmatpush1.msra.mxu0 0.0
        %4777 = vmatprep.subr.mxu0 0.0
        %4778 = vmatpush1.msra.mxu0 0.0
        %4779 = vmatprep.subr.mxu0 0.0
        %4780 = vmatpush1.msra.mxu0 0.0
        %4781 = vmatprep.subr.mxu0 0.0
        %4782 = vmatpush1.msra.mxu0 0.0
        %4783 = vmatprep.subr.mxu0 0.0
        %4784 = vmatpush1.msra.mxu0 0.0
        %4785 = vmatprep.subr.mxu0 0.0
        %4786 = vmatpush1.msra.mxu0 0.0
        %4787 = vmatprep.subr.mxu0 0.0
        %4788 = vmatpush1.msra.mxu0 0.0
        %4789 = vmatprep.subr.mxu0 0.0
        %4790 = vmatpush1.msra.mxu0 0.0
        %4791 = vmatprep.subr.mxu0 0.0
        %4792 = vmatpush1.msra.mxu0 0.0
        %4793 = vmatprep.subr.mxu0 0.0
        %4794 = vmatpush1.msra.mxu0 0.0
        %4795 = vmatprep.subr.mxu0 0.0
        %4796 = vmatpush1.msra.mxu0 %v938
        %4797 = vmatprep.subr.mxu0 0.0
        %4798 = vmatpush2.msra.mxu0 0.0
        %4799 = vmatprep.subr.mxu0 0.0
        %4800 = vmatpush2.msra.mxu0 0.0
        %4801 = vmatprep.subr.mxu0 0.0
        %4802 = vmatpush2.msra.mxu0 0.0
        %4803 = vmatprep.subr.mxu0 0.0
        %4804 = vmatpush2.msra.mxu0 0.0
        %4805 = vmatprep.subr.mxu0 0.0
        %4806 = vmatpush2.msra.mxu0 0.0
        %4807 = vmatprep.subr.mxu0 0.0
        %4808 = vmatpush2.msra.mxu0 0.0
        %4809 = vmatprep.subr.mxu0 0.0
        %4810 = vmatpush2.msra.mxu0 0.0
        %4811 = vmatprep.subr.mxu0 0.0
        %4812 = vmatpush2.msra.mxu0 0.0
        %4813 = vmatprep.subr.mxu0 0.0
        %4814 = vmatpush2.msra.mxu0 0.0
        %4815 = vmatprep.subr.mxu0 0.0
        %4816 = vmatpush2.msra.mxu0 0.0
        %4817 = vmatprep.subr.mxu0 0.0
        %4818 = vmatpush2.msra.mxu0 0.0
        %4819 = vmatprep.subr.mxu0 0.0
        %4820 = vmatpush2.msra.mxu0 0.0
        %4821 = vmatprep.subr.mxu0 0.0
        %4822 = vmatpush2.msra.mxu0 0.0
        %4823 = vmatprep.subr.mxu0 0.0
        %4824 = vmatpush2.msra.mxu0 0.0
        %4825 = vmatprep.subr.mxu0 0.0
        %4826 = vmatpush2.msra.mxu0 0.0
        %4827 = vmatprep.subr.mxu0 0.0
        %4828 = vmatpush2.msra.mxu0 0.0
        %4829 = vmatprep.mubr.f32.mxu0 0.0
        %4830 = vmatmul.mubr.f32.gmra.mxu0 %v4763
        %v4831 = vpop.f32.mrf.mxu0
        %v4832 = vadd.f32 0.0, %v4831
        %v4833 = vpop.f32.mrf.mxu0
        %4834 = vdwg.mxu0
        %v4836 = vsel %vm1940, %v4610, 0
        %4838 = vmatprep.subr.mxu0 0.0
        %4839 = vmatpush1.msra.mxu0 0.0
        %4840 = vmatprep.subr.mxu0 0.0
        %4841 = vmatpush1.msra.mxu0 0.0
        %4842 = vmatprep.subr.mxu0 0.0
        %4843 = vmatpush1.msra.mxu0 0.0
        %4844 = vmatprep.subr.mxu0 0.0
        %4845 = vmatpush1.msra.mxu0 0.0
        %4846 = vmatprep.subr.mxu0 0.0
        %4847 = vmatpush1.msra.mxu0 0.0
        %4848 = vmatprep.subr.mxu0 0.0
        %4849 = vmatpush1.msra.mxu0 0.0
        %4850 = vmatprep.subr.mxu0 0.0
        %4851 = vmatpush1.msra.mxu0 0.0
        %4852 = vmatprep.subr.mxu0 0.0
        %4853 = vmatpush1.msra.mxu0 0.0
        %4854 = vmatprep.subr.mxu0 0.0
        %4855 = vmatpush1.msra.mxu0 0.0
        %4856 = vmatprep.subr.mxu0 0.0
        %4857 = vmatpush1.msra.mxu0 0.0
        %4858 = vmatprep.subr.mxu0 0.0
        %4859 = vmatpush1.msra.mxu0 0.0
        %4860 = vmatprep.subr.mxu0 0.0
        %4861 = vmatpush1.msra.mxu0 0.0
        %4862 = vmatprep.subr.mxu0 0.0
        %4863 = vmatpush1.msra.mxu0 0.0
        %4864 = vmatprep.subr.mxu0 0.0
        %4865 = vmatpush1.msra.mxu0 0.0
        %4866 = vmatprep.subr.mxu0 0.0
        %4867 = vmatpush1.msra.mxu0 0.0
        %4868 = vmatprep.subr.mxu0 0.0
        %4869 = vmatpush1.msra.mxu0 %v939
        %4870 = vmatprep.subr.mxu0 0.0
        %4871 = vmatpush2.msra.mxu0 0.0
        %4872 = vmatprep.subr.mxu0 0.0
        %4873 = vmatpush2.msra.mxu0 0.0
        %4874 = vmatprep.subr.mxu0 0.0
        %4875 = vmatpush2.msra.mxu0 0.0
        %4876 = vmatprep.subr.mxu0 0.0
        %4877 = vmatpush2.msra.mxu0 0.0
        %4878 = vmatprep.subr.mxu0 0.0
        %4879 = vmatpush2.msra.mxu0 0.0
        %4880 = vmatprep.subr.mxu0 0.0
        %4881 = vmatpush2.msra.mxu0 0.0
        %4882 = vmatprep.subr.mxu0 0.0
        %4883 = vmatpush2.msra.mxu0 0.0
        %4884 = vmatprep.subr.mxu0 0.0
        %4885 = vmatpush2.msra.mxu0 0.0
        %4886 = vmatprep.subr.mxu0 0.0
        %4887 = vmatpush2.msra.mxu0 0.0
        %4888 = vmatprep.subr.mxu0 0.0
        %4889 = vmatpush2.msra.mxu0 0.0
        %4890 = vmatprep.subr.mxu0 0.0
        %4891 = vmatpush2.msra.mxu0 0.0
        %4892 = vmatprep.subr.mxu0 0.0
        %4893 = vmatpush2.msra.mxu0 0.0
        %4894 = vmatprep.subr.mxu0 0.0
        %4895 = vmatpush2.msra.mxu0 0.0
        %4896 = vmatprep.subr.mxu0 0.0
        %4897 = vmatpush2.msra.mxu0 0.0
        %4898 = vmatprep.subr.mxu0 0.0
        %4899 = vmatpush2.msra.mxu0 0.0
        %4900 = vmatprep.subr.mxu0 0.0
        %4901 = vmatpush2.msra.mxu0 0.0
        %4902 = vmatprep.mubr.f32.mxu0 0.0
        %4903 = vmatmul.mubr.f32.gmra.mxu0 %v4836
        %v4904 = vpop.f32.mrf.mxu0
        %v4905 = vadd.f32 0.0, %v4904
        %v4906 = vpop.f32.mrf.mxu0
        %4907 = vdwg.mxu0
        %v4909 = vsel %vm1940, %v4686, 0
        %4911 = vmatprep.subr.mxu0 0.0
        %4912 = vmatpush1.msra.mxu0 0.0
        %4913 = vmatprep.subr.mxu0 0.0
        %4914 = vmatpush1.msra.mxu0 0.0
        %4915 = vmatprep.subr.mxu0 0.0
        %4916 = vmatpush1.msra.mxu0 0.0
        %4917 = vmatprep.subr.mxu0 0.0
        %4918 = vmatpush1.msra.mxu0 0.0
        %4919 = vmatprep.subr.mxu0 0.0
        %4920 = vmatpush1.msra.mxu0 0.0
        %4921 = vmatprep.subr.mxu0 0.0
        %4922 = vmatpush1.msra.mxu0 0.0
        %4923 = vmatprep.subr.mxu0 0.0
        %4924 = vmatpush1.msra.mxu0 0.0
        %4925 = vmatprep.subr.mxu0 0.0
        %4926 = vmatpush1.msra.mxu0 0.0
        %4927 = vmatprep.subr.mxu0 0.0
        %4928 = vmatpush1.msra.mxu0 0.0
        %4929 = vmatprep.subr.mxu0 0.0
        %4930 = vmatpush1.msra.mxu0 0.0
        %4931 = vmatprep.subr.mxu0 0.0
        %4932 = vmatpush1.msra.mxu0 0.0
        %4933 = vmatprep.subr.mxu0 0.0
        %4934 = vmatpush1.msra.mxu0 0.0
        %4935 = vmatprep.subr.mxu0 0.0
        %4936 = vmatpush1.msra.mxu0 0.0
        %4937 = vmatprep.subr.mxu0 0.0
        %4938 = vmatpush1.msra.mxu0 0.0
        %4939 = vmatprep.subr.mxu0 0.0
        %4940 = vmatpush1.msra.mxu0 0.0
        %4941 = vmatprep.subr.mxu0 0.0
        %4942 = vmatpush1.msra.mxu0 %v940
        %4943 = vmatprep.subr.mxu0 0.0
        %4944 = vmatpush2.msra.mxu0 0.0
        %4945 = vmatprep.subr.mxu0 0.0
        %4946 = vmatpush2.msra.mxu0 0.0
        %4947 = vmatprep.subr.mxu0 0.0
        %4948 = vmatpush2.msra.mxu0 0.0
        %4949 = vmatprep.subr.mxu0 0.0
        %4950 = vmatpush2.msra.mxu0 0.0
        %4951 = vmatprep.subr.mxu0 0.0
        %4952 = vmatpush2.msra.mxu0 0.0
        %4953 = vmatprep.subr.mxu0 0.0
        %4954 = vmatpush2.msra.mxu0 0.0
        %4955 = vmatprep.subr.mxu0 0.0
        %4956 = vmatpush2.msra.mxu0 0.0
        %4957 = vmatprep.subr.mxu0 0.0
        %4958 = vmatpush2.msra.mxu0 0.0
        %4959 = vmatprep.subr.mxu0 0.0
        %4960 = vmatpush2.msra.mxu0 0.0
        %4961 = vmatprep.subr.mxu0 0.0
        %4962 = vmatpush2.msra.mxu0 0.0
        %4963 = vmatprep.subr.mxu0 0.0
        %4964 = vmatpush2.msra.mxu0 0.0
        %4965 = vmatprep.subr.mxu0 0.0
        %4966 = vmatpush2.msra.mxu0 0.0
        %4967 = vmatprep.subr.mxu0 0.0
        %4968 = vmatpush2.msra.mxu0 0.0
        %4969 = vmatprep.subr.mxu0 0.0
        %4970 = vmatpush2.msra.mxu0 0.0
        %4971 = vmatprep.subr.mxu0 0.0
        %4972 = vmatpush2.msra.mxu0 0.0
        %4973 = vmatprep.subr.mxu0 0.0
        %4974 = vmatpush2.msra.mxu0 0.0
        %4975 = vmatprep.mubr.f32.mxu0 0.0
        %4976 = vmatmul.mubr.f32.gmra.mxu0 %v4909
        %v4977 = vpop.f32.mrf.mxu0
        %v4978 = vadd.f32 0.0, %v4977
        %v4979 = vpop.f32.mrf.mxu0
        %4980 = vdwg.mxu0
        %v4981 = vsel %vm991, %v4759, 0.0
        %v4982 = vsel %vm991, %v4832, 0.0
        %v4983 = vadd.f32 %v4981, %v4982
        %v4984 = vsel %vm991, %v4905, 0.0
        %v4985 = vadd.f32 %v4983, %v4984
        %v4986 = vsel %vm991, %v4978, 0.0
        %v4987 = vadd.f32 %v4985, %v4986
        %v4988 = vadd.f32 %v3090, %v4987
        %v4990 = vlaneseq
        %v4991 = vshrl.u32 %v4990, 7
        %v4992 = vsub.s32 0, %v4991
        %v4993 = vrot.slane %v942, %v4992
        %v4995 = vadd.f32 %v4988, %v4993
        %v4996 = vsel %vm991, %v4995, 0.0
        %4997 = vadd.xlane.f32.xlu0 %v4996
        %v4998 = vpop.xlane.xlu0 %4997
        %v4999 = vmul.f32 %v4998, %v995
        %v5000 = vsub.f32 %v4995, %v4999
        %v5001 = vmul.f32 %v5000, %v5000
        %v5002 = vsel %vm991, %v5001, 0.0
        %5003 = vadd.xlane.f32.xlu0 %v5002
        %v5004 = vpop.xlane.xlu0 %5003
        %v5005 = vmul.f32 %v5004, %v995
        %v5006 = vadd.f32 %v5005, 1e-06
        %v5007 = vrsqrt.pop %v5006
        %v5008 = vmul.f32 %v5000, %v5007
        %v5010 = vlaneseq
        %v5011 = vshrl.u32 %v5010, 7
        %v5012 = vsub.s32 0, %v5011
        %v5013 = vrot.slane %v944, %v5012
        %v5015 = vmul.f32 %v5008, %v5013
        %v5017 = vlaneseq
        %v5018 = vshrl.u32 %v5017, 7
        %v5019 = vsub.s32 0, %v5018
        %v5020 = vrot.slane %v946, %v5019
        %v5022 = vadd.f32 %v5015, %v5020
        %v5024 = vlaneseq
        %v5025 = vshrl.u32 %v5024, 7
        %v5026 = vsub.s32 0, %v5025
        %v5027 = vrot.slane %v956, %v5026
        %v5030 = vsel %vm1092, %v5022, 0
        %5032 = vmatprep.subr.mxu0 0.0
        %5033 = vmatpush1.msra.mxu0 0.0
        %5034 = vmatprep.subr.mxu0 0.0
        %5035 = vmatpush1.msra.mxu0 0.0
        %5036 = vmatprep.subr.mxu0 0.0
        %5037 = vmatpush1.msra.mxu0 0.0
        %5038 = vmatprep.subr.mxu0 0.0
        %5039 = vmatpush1.msra.mxu0 0.0
        %5040 = vmatprep.subr.mxu0 0.0
        %5041 = vmatpush1.msra.mxu0 0.0
        %5042 = vmatprep.subr.mxu0 0.0
        %5043 = vmatpush1.msra.mxu0 0.0
        %5044 = vmatprep.subr.mxu0 0.0
        %5045 = vmatpush1.msra.mxu0 0.0
        %5046 = vmatprep.subr.mxu0 0.0
        %5047 = vmatpush1.msra.mxu0 0.0
        %5048 = vmatprep.subr.mxu0 0.0
        %5049 = vmatpush1.msra.mxu0 0.0
        %5050 = vmatprep.subr.mxu0 0.0
        %5051 = vmatpush1.msra.mxu0 0.0
        %5052 = vmatprep.subr.mxu0 0.0
        %5053 = vmatpush1.msra.mxu0 0.0
        %5054 = vmatprep.subr.mxu0 0.0
        %5055 = vmatpush1.msra.mxu0 0.0
        %5056 = vmatprep.subr.mxu0 0.0
        %5057 = vmatpush1.msra.mxu0 %v954
        %5058 = vmatprep.subr.mxu0 0.0
        %5059 = vmatpush1.msra.mxu0 %v953
        %5060 = vmatprep.subr.mxu0 0.0
        %5061 = vmatpush1.msra.mxu0 %v952
        %5062 = vmatprep.subr.mxu0 0.0
        %5063 = vmatpush1.msra.mxu0 %v951
        %5064 = vmatprep.subr.mxu0 0.0
        %5065 = vmatpush2.msra.mxu0 0.0
        %5066 = vmatprep.subr.mxu0 0.0
        %5067 = vmatpush2.msra.mxu0 0.0
        %5068 = vmatprep.subr.mxu0 0.0
        %5069 = vmatpush2.msra.mxu0 0.0
        %5070 = vmatprep.subr.mxu0 0.0
        %5071 = vmatpush2.msra.mxu0 0.0
        %5072 = vmatprep.subr.mxu0 0.0
        %5073 = vmatpush2.msra.mxu0 0.0
        %5074 = vmatprep.subr.mxu0 0.0
        %5075 = vmatpush2.msra.mxu0 0.0
        %5076 = vmatprep.subr.mxu0 0.0
        %5077 = vmatpush2.msra.mxu0 0.0
        %5078 = vmatprep.subr.mxu0 0.0
        %5079 = vmatpush2.msra.mxu0 0.0
        %5080 = vmatprep.subr.mxu0 0.0
        %5081 = vmatpush2.msra.mxu0 0.0
        %5082 = vmatprep.subr.mxu0 0.0
        %5083 = vmatpush2.msra.mxu0 0.0
        %5084 = vmatprep.subr.mxu0 0.0
        %5085 = vmatpush2.msra.mxu0 0.0
        %5086 = vmatprep.subr.mxu0 0.0
        %5087 = vmatpush2.msra.mxu0 0.0
        %5088 = vmatprep.subr.mxu0 0.0
        %5089 = vmatpush2.msra.mxu0 0.0
        %5090 = vmatprep.subr.mxu0 0.0
        %5091 = vmatpush2.msra.mxu0 0.0
        %5092 = vmatprep.subr.mxu0 0.0
        %5093 = vmatpush2.msra.mxu0 0.0
        %5094 = vmatprep.subr.mxu0 0.0
        %5095 = vmatpush2.msra.mxu0 0.0
        %5096 = vmatprep.mubr.f32.mxu0 0.0
        %5097 = vmatmul.mubr.f32.gmra.mxu0 %v5030
        %v5098 = vpop.f32.mrf.mxu0
        %v5099 = vadd.f32 %v5027, %v5098
        %v5100 = vpop.f32.mrf.mxu0
        %5101 = vdwg.mxu0
        %v5102 = vmul.f32 %v5099, 0.5
        %v5103 = vmul.f32 %v5099, 0.70710677
        %v5104 = verf.f32.pop %v5103
        %v5105 = vadd.f32 %v5104, 1.0
        %v5106 = vmul.f32 %v5102, %v5105
        %v5108 = vlaneseq
        %v5109 = vshrl.u32 %v5108, 7
        %v5110 = vsub.s32 0, %v5109
        %v5111 = vrot.slane %v990, %v5110
        %5113 = vmatprep.subr.mxu0 0.0
        %5114 = vmatpush1.msra.mxu0 %v988
        %5115 = vmatprep.subr.mxu0 0.0
        %5116 = vmatpush1.msra.mxu0 %v987
        %5117 = vmatprep.subr.mxu0 0.0
        %5118 = vmatpush1.msra.mxu0 %v986
        %5119 = vmatprep.subr.mxu0 0.0
        %5120 = vmatpush1.msra.mxu0 %v985
        %5121 = vmatprep.subr.mxu0 0.0
        %5122 = vmatpush1.msra.mxu0 %v984
        %5123 = vmatprep.subr.mxu0 0.0
        %5124 = vmatpush1.msra.mxu0 %v983
        %5125 = vmatprep.subr.mxu0 0.0
        %5126 = vmatpush1.msra.mxu0 %v982
        %5127 = vmatprep.subr.mxu0 0.0
        %5128 = vmatpush1.msra.mxu0 %v981
        %5129 = vmatprep.subr.mxu0 0.0
        %5130 = vmatpush1.msra.mxu0 %v980
        %5131 = vmatprep.subr.mxu0 0.0
        %5132 = vmatpush1.msra.mxu0 %v979
        %5133 = vmatprep.subr.mxu0 0.0
        %5134 = vmatpush1.msra.mxu0 %v978
        %5135 = vmatprep.subr.mxu0 0.0
        %5136 = vmatpush1.msra.mxu0 %v977
        %5137 = vmatprep.subr.mxu0 0.0
        %5138 = vmatpush1.msra.mxu0 %v976
        %5139 = vmatprep.subr.mxu0 0.0
        %5140 = vmatpush1.msra.mxu0 %v975
        %5141 = vmatprep.subr.mxu0 0.0
        %5142 = vmatpush1.msra.mxu0 %v974
        %5143 = vmatprep.subr.mxu0 0.0
        %5144 = vmatpush1.msra.mxu0 %v973
        %5145 = vmatprep.subr.mxu0 0.0
        %5146 = vmatpush2.msra.mxu0 0.0
        %5147 = vmatprep.subr.mxu0 0.0
        %5148 = vmatpush2.msra.mxu0 0.0
        %5149 = vmatprep.subr.mxu0 0.0
        %5150 = vmatpush2.msra.mxu0 0.0
        %5151 = vmatprep.subr.mxu0 0.0
        %5152 = vmatpush2.msra.mxu0 0.0
        %5153 = vmatprep.subr.mxu0 0.0
        %5154 = vmatpush2.msra.mxu0 0.0
        %5155 = vmatprep.subr.mxu0 0.0
        %5156 = vmatpush2.msra.mxu0 0.0
        %5157 = vmatprep.subr.mxu0 0.0
        %5158 = vmatpush2.msra.mxu0 0.0
        %5159 = vmatprep.subr.mxu0 0.0
        %5160 = vmatpush2.msra.mxu0 0.0
        %5161 = vmatprep.subr.mxu0 0.0
        %5162 = vmatpush2.msra.mxu0 0.0
        %5163 = vmatprep.subr.mxu0 0.0
        %5164 = vmatpush2.msra.mxu0 0.0
        %5165 = vmatprep.subr.mxu0 0.0
        %5166 = vmatpush2.msra.mxu0 0.0
        %5167 = vmatprep.subr.mxu0 0.0
        %5168 = vmatpush2.msra.mxu0 0.0
        %5169 = vmatprep.subr.mxu0 0.0
        %5170 = vmatpush2.msra.mxu0 0.0
        %5171 = vmatprep.subr.mxu0 0.0
        %5172 = vmatpush2.msra.mxu0 0.0
        %5173 = vmatprep.subr.mxu0 0.0
        %5174 = vmatpush2.msra.mxu0 0.0
        %5175 = vmatprep.subr.mxu0 0.0
        %5176 = vmatpush2.msra.mxu0 0.0
        %5177 = vmatprep.mubr.f32.mxu0 0.0
        %5178 = vmatmul.mubr.f32.gmra.mxu0 %v5106
        %v5179 = vpop.f32.mrf.mxu0
        %v5180 = vadd.f32 %v5111, %v5179
        %v5181 = vpop.f32.mrf.mxu0
        %5182 = vdwg.mxu0
        %v5183 = vadd.f32 %v4995, %v5180
        %v5184 = vld [vmem:[%s15] sm:$0x1]
        %v5185 = vld [vmem:[%s16] sm:$0x1]
        %vm5186 = vcmask 253952
        %v5187 = vsel %vm5186, %v5183, 0.0
        %5188 = vadd.xlane.f32.xlu0 %v5187
        %v5189 = vpop.xlane.xlu0 %5188
        %v5190 = vmul.f32 %v5189, %v995
        %v5191 = vsub.f32 %v5183, %v5190
        %v5192 = vmul.f32 %v5191, %v5191
        %v5193 = vsel %vm5186, %v5192, 0.0
        %5194 = vadd.xlane.f32.xlu0 %v5193
        %v5195 = vpop.xlane.xlu0 %5194
        %v5196 = vmul.f32 %v5195, %v995
        %v5197 = vadd.f32 %v5196, 1e-06
        %v5198 = vrsqrt.pop %v5197
        %v5199 = vmul.f32 %v5191, %v5198
        %v5200 = vmul.f32 %v5199, %v5184
        %v5201 = vadd.f32 %v5200, %v5185
        %v5202 = vld [vmem:[%s17] sm:$0xff]
        %v5203 = vld [vmem:[%s17 + $0x8] sm:$0xff]
        %v5204 = vld [vmem:[%s17 + $0x10] sm:$0xff]
        %v5205 = vld [vmem:[%s17 + $0x18] sm:$0xff]
        %v5206 = vld [vmem:[%s18] sm:$0x1]
        %v5208 = vsel %vm1092, %v5201, 0
        %5210 = vmatprep.subr.mxu0 0.0
        %5211 = vmatpush1.msra.mxu0 0.0
        %5212 = vmatprep.subr.mxu0 0.0
        %5213 = vmatpush1.msra.mxu0 0.0
        %5214 = vmatprep.subr.mxu0 0.0
        %5215 = vmatpush1.msra.mxu0 0.0
        %5216 = vmatprep.subr.mxu0 0.0
        %5217 = vmatpush1.msra.mxu0 0.0
        %5218 = vmatprep.subr.mxu0 0.0
        %5219 = vmatpush1.msra.mxu0 0.0
        %5220 = vmatprep.subr.mxu0 0.0
        %5221 = vmatpush1.msra.mxu0 0.0
        %5222 = vmatprep.subr.mxu0 0.0
        %5223 = vmatpush1.msra.mxu0 0.0
        %5224 = vmatprep.subr.mxu0 0.0
        %5225 = vmatpush1.msra.mxu0 0.0
        %5226 = vmatprep.subr.mxu0 0.0
        %5227 = vmatpush1.msra.mxu0 0.0
        %5228 = vmatprep.subr.mxu0 0.0
        %5229 = vmatpush1.msra.mxu0 0.0
        %5230 = vmatprep.subr.mxu0 0.0
        %5231 = vmatpush1.msra.mxu0 0.0
        %5232 = vmatprep.subr.mxu0 0.0
        %5233 = vmatpush1.msra.mxu0 0.0
        %5234 = vmatprep.subr.mxu0 0.0
        %5235 = vmatpush1.msra.mxu0 %v5205
        %5236 = vmatprep.subr.mxu0 0.0
        %5237 = vmatpush1.msra.mxu0 %v5204
        %5238 = vmatprep.subr.mxu0 0.0
        %5239 = vmatpush1.msra.mxu0 %v5203
        %5240 = vmatprep.subr.mxu0 0.0
        %5241 = vmatpush1.msra.mxu0 %v5202
        %5242 = vmatprep.subr.mxu0 0.0
        %5243 = vmatpush2.msra.mxu0 0.0
        %5244 = vmatprep.subr.mxu0 0.0
        %5245 = vmatpush2.msra.mxu0 0.0
        %5246 = vmatprep.subr.mxu0 0.0
        %5247 = vmatpush2.msra.mxu0 0.0
        %5248 = vmatprep.subr.mxu0 0.0
        %5249 = vmatpush2.msra.mxu0 0.0
        %5250 = vmatprep.subr.mxu0 0.0
        %5251 = vmatpush2.msra.mxu0 0.0
        %5252 = vmatprep.subr.mxu0 0.0
        %5253 = vmatpush2.msra.mxu0 0.0
        %5254 = vmatprep.subr.mxu0 0.0
        %5255 = vmatpush2.msra.mxu0 0.0
        %5256 = vmatprep.subr.mxu0 0.0
        %5257 = vmatpush2.msra.mxu0 0.0
        %5258 = vmatprep.subr.mxu0 0.0
        %5259 = vmatpush2.msra.mxu0 0.0
        %5260 = vmatprep.subr.mxu0 0.0
        %5261 = vmatpush2.msra.mxu0 0.0
        %5262 = vmatprep.subr.mxu0 0.0
        %5263 = vmatpush2.msra.mxu0 0.0
        %5264 = vmatprep.subr.mxu0 0.0
        %5265 = vmatpush2.msra.mxu0 0.0
        %5266 = vmatprep.subr.mxu0 0.0
        %5267 = vmatpush2.msra.mxu0 0.0
        %5268 = vmatprep.subr.mxu0 0.0
        %5269 = vmatpush2.msra.mxu0 0.0
        %5270 = vmatprep.subr.mxu0 0.0
        %5271 = vmatpush2.msra.mxu0 0.0
        %5272 = vmatprep.subr.mxu0 0.0
        %5273 = vmatpush2.msra.mxu0 0.0
        %5274 = vmatprep.mubr.f32.mxu0 0.0
        %5275 = vmatmul.mubr.f32.gmra.mxu0 %v5208
        %v5276 = vpop.f32.mrf.mxu0
        %v5277 = vadd.f32 %v5206, %v5276
        %v5278 = vpop.f32.mrf.mxu0
        %5279 = vdwg.mxu0
        %vm5280 = vcmask 73728
        %5281 = vst.msk [vmem:[%s594] sm:$0x1] %vm5280, %v5277
        %s5282 = sand.u32 %s445, 1
        %s5283 = scalar_lea.sflag [#allocation3], %s5282
        %s5284 = sand.u32 %s445, 1
        %s5285 = scalar_lea.vmem [#allocation2], %s5284
        // Predicated region
        $region97: #{hybrid_transformer_forward.7} parent=95 // pred_check
          %p5286 = pneg %p455
        $region98: #{hybrid_transformer_forward.7} parent=95 // pred_check_branch
          %5288 = sbr.rel (%p5286) target = $region100
        $region99: #{hybrid_transformer_forward.7} parent=95 // pred_region
          %s5290 = ssub.s32 16, 16
          %5291 = vsyncadd %s5283, %s5290
          %s5292 = smul.addr %s33, 16
          %s5293 = scalar_lea.hbm %s19, %s5292
          %s5295 = sshll.u32 %s5285, 4
          %s5296 = int_to_ptr.vmem [resolvable:$true] %s5295
          %5298 = dma.vmem_to_hbm [thread:$0]  %s5296, 16, %s5293, %s5283
        $region100: #{hybrid_transformer_forward.7} parent=95 // pred_fallthru
          _
      $region96: #{hybrid_transformer_forward.7} parent=5 // pred_fallthru
        _
      %p5299 = scmp.le.s32.totalorder 2, %s28
      // Predicated region
      $region101: #{hybrid_transformer_forward.7} parent=5 // pred_check
        %p5300 = pneg %p5299
      $region102: #{hybrid_transformer_forward.7} parent=5 // pred_check_branch
        %5302 = sbr.rel (%p5300) target = $region104
      $region103: #{hybrid_transformer_forward.7} parent=5 // pred_region
        %s5303 = ssub.s32 %s28, 2
        // Predicated region
        $region105: #{hybrid_transformer_forward.7} parent=103 // pred_check
          %p5304 = pneg %p461
        $region106: #{hybrid_transformer_forward.7} parent=103 // pred_check_branch
          %5306 = sbr.rel (%p5304) target = $region108
        $region107: #{hybrid_transformer_forward.7} parent=103 // pred_region
          %s5307 = sand.u32 %s446, 1
          %s5308 = scalar_lea.sflag [#allocation3], %s5307
          %s5309 = sand.u32 %s446, 1
          %s5310 = scalar_lea.vmem [#allocation2], %s5309
          %5311 = dma.done %s5308, 16
        $region108: #{hybrid_transformer_forward.7} parent=103 // pred_fallthru
          _
      $region104: #{hybrid_transformer_forward.7} parent=5 // pred_fallthru
        _
    $region6: #{hybrid_transformer_forward.7} parent=1 // loop_footer
      %s32 = sadd.s32 1, %s28
    $region7: #{hybrid_transformer_forward.7} parent=1 // loop_footer_branch
      %27 = sbr.rel target = $region3
    $region8: #{hybrid_transformer_forward.7} parent=1 // loop_exit
      _
    %5312 = vsyncpa [#allocation3], 1
    %s5313 = scalar_lea.sflag [#allocation3], 1
    %5314 = vsyncpa %s5313, 1

</llo_original>
